<compile_context>
chip_gen: v7x
topology: tpu7x:2x2x1
jax: 0.10.0
libtpu: 0.0.40
codegen_flags: <defaults>
</compile_context>

<pallas_src>
import functools

import jax
import jax.numpy as jnp
from jax.experimental import pallas as pl
from jax.experimental.pallas import tpu as pltpu


def _leaky(y):
    return jnp.where(y > 0, y, 0.01 * y)


def _round_up(v, m):
    return (v + m - 1) // m * m


# 3x3 tap offsets, kh-major / kw-minor (matches wd's tap axis ordering).
_TAPS = tuple((kh, kw) for kh in (-1, 0, 1) for kw in (-1, 0, 1))


def _aspp_kernel(x_hbm, acc0_ref, w2_ref, wd_hbm, wb_ref,
                 sc_ref, bi_ref, sb_ref, bb_ref, o_ref,
                 xbuf, wdbuf, sem, acc_ref,
                 *, TH, W, PH, PW, dilations, active_taps):
    """One (batch, row-tile) step of the fused ASPP forward.

    x_hbm   : (N, Ht+2PH, W+2PW, Cp) bf16 HBM ref (memory_space=pl.ANY)
    acc0_ref: (1, 1, Op) f32   pooled-branch bottleneck contribution (per image)
    w2_ref  : (Cp, Ip)  bf16   1x1 conv weight of branch 2
    wd_hbm  : (3, 9, Cp, Ip) bf16 HBM ref, 3x3 dilated conv weights (streamed)
    wb_ref  : (4, Ip, Op) bf16 bottleneck weight slices for branches 2..5
    sc_ref/bi_ref : (4, Ip) f32   folded BN scale/bias for branches 2..5
    sb_ref/bb_ref : (1, Op) f32   folded BN scale/bias of the bottleneck
    o_ref   : (1, TH, W, Op) f32
    xbuf    : VMEM (TH+2PH, W+2PW, Cp) bf16   halo'd input row slab
    wdbuf   : VMEM (2, 9, Cp, Ip) bf16        double-buffered branch weights
    sem     : DMA semaphores (3,)
    acc_ref : VMEM (TH*W, Op) f32             bottleneck accumulator
    """
    n = pl.program_id(0)
    r = pl.program_id(1)
    Cp = xbuf.shape[-1]
    Op = o_ref.shape[-1]
    THW = TH * W
    RB = TH + 2 * PH

    row0 = r * TH

    # ---- manual DMA: halo'd input row slab + first dilated-weight slab -----
    xcopy = pltpu.make_async_copy(x_hbm.at[n, pl.ds(row0, RB)], xbuf, sem.at[0])
    xcopy.start()
    wcopy = [None] * len(dilations)
    wcopy[0] = pltpu.make_async_copy(wd_hbm.at[0], wdbuf.at[0], sem.at[1])
    wcopy[0].start()
    xcopy.wait()

    def bn_act(y, idx):
        return _leaky(y * sc_ref[idx] + bi_ref[idx])

    # branch 1 (global pool) precomputed in the wrapper: constant per-pixel add.
    acc_ref[...] = jnp.broadcast_to(acc0_ref[0], (THW, Op))

    # ---- branch 2: 1x1 conv -> ABN, folded into the bottleneck -------------
    xc = xbuf[PH:PH + TH, PW:PW + W, :].reshape(THW, Cp)
    f2 = bn_act(jnp.dot(xc, w2_ref[...], preferred_element_type=jnp.float32), 0)
    acc_ref[...] += jnp.dot(f2.astype(jnp.bfloat16), wb_ref[0],
                            preferred_element_type=jnp.float32)

    # ---- branches 3..5: 3x3 dilated convs, streamed + double-buffered ------
    for b, d in enumerate(dilations):
        slot = b % 2
        wcopy[b].wait()
        if b + 1 < len(dilations):
            nslot = (b + 1) % 2
            wcopy[b + 1] = pltpu.make_async_copy(
                wd_hbm.at[b + 1], wdbuf.at[nslot], sem.at[1 + nslot])
            wcopy[b + 1].start()

        y = None
        for k in active_taps[b]:          # taps reading only padding are skipped
            kh, kw = _TAPS[k]
            h0 = PH + kh * d
            w0 = PW + kw * d
            sl = xbuf[h0:h0 + TH, w0:w0 + W, :].reshape(THW, Cp)
            t = jnp.dot(sl, wdbuf[slot, k], preferred_element_type=jnp.float32)
            y = t if y is None else y + t
        f = bn_act(y, 1 + b)
        acc_ref[...] += jnp.dot(f.astype(jnp.bfloat16), wb_ref[1 + b],
                                preferred_element_type=jnp.float32)

    # ---- bottleneck ABN (Dropout2d is identity at inference) ---------------
    out = _leaky(acc_ref[...] * sb_ref[0] + bb_ref[0])
    o_ref[0] = out.reshape(TH, W, Op)


def aspp_forward(x_nchw, params, dilations=(6, 12, 18), row_tile=8):
    w1, w2, wd, wb, sc, bi, sb, bb = params
    N, C, H, W = x_nchw.shape
    I = w1.shape[1]
    O = wb.shape[-1]
    nd = len(dilations)

    # Lane-align the channel dims (128) for dense MXU / unmasked stores.
    Cp = _round_up(C, 128)
    Ip = _round_up(I, 128)
    Op = _round_up(O, 128)

    # Row tiling.
    TH = max(1, min(row_tile, H))
    Ht = _round_up(H, TH)
    R = Ht // TH

    # Halo only as large as taps that can actually reach valid pixels; taps
    # whose shifted window is entirely in zero padding are skipped statically.
    PH = max([d for d in dilations if d < H], default=0)
    PW = max([d for d in dilations if d < W], default=0)
    active = tuple(
        tuple(k for k, (kh, kw) in enumerate(_TAPS)
              if (kh == 0 or d < H) and (kw == 0 or d < W))
        for d in dilations)

    RB = TH + 2 * PH
    Wp2 = W + 2 * PW

    x = jnp.transpose(x_nchw, (0, 2, 3, 1)).astype(jnp.float32)      # NHWC

    # --- branch 1 hoisted to the wrapper: global mean -> 1x1 -> ABN, and its
    #     bottleneck contribution folded to a per-image (1, O) bias.
    xm = jnp.mean(x, axis=(1, 2))                                    # (N, C)
    f1 = _leaky(jnp.dot(xm, w1) * sc[0] + bi[0])                     # (N, I)
    acc0 = jnp.dot(f1.astype(jnp.bfloat16), wb[0].astype(jnp.bfloat16),
                   preferred_element_type=jnp.float32)               # (N, O)
    acc0_p = jnp.pad(acc0[:, None, :], ((0, 0), (0, 0), (0, Op - O)))

    # --- bf16 MXU operands; spatial halo padding only as large as needed ----
    xb = x.astype(jnp.bfloat16)
    xpad = jnp.pad(xb, ((0, 0), (PH, PH + Ht - H), (PW, PW), (0, Cp - C)))

    w2p = jnp.pad(w2, ((0, Cp - C), (0, Ip - I))).astype(jnp.bfloat16)
    wdp = jnp.pad(wd, ((0, 0), (0, 0), (0, Cp - C), (0, Ip - I))).astype(jnp.bfloat16)
    wb2p = jnp.pad(wb[1:], ((0, 0), (0, Ip - I), (0, Op - O))).astype(jnp.bfloat16)
    sc2p = jnp.pad(sc[1:], ((0, 0), (0, Ip - I))).astype(jnp.float32)
    bi2p = jnp.pad(bi[1:], ((0, 0), (0, Ip - I))).astype(jnp.float32)
    sbp = jnp.pad(sb, ((0, 0), (0, Op - O))).astype(jnp.float32)
    bbp = jnp.pad(bb, ((0, 0), (0, Op - O))).astype(jnp.float32)

    kernel = functools.partial(
        _aspp_kernel, TH=TH, W=W, PH=PH, PW=PW,
        dilations=tuple(dilations), active_taps=active)

    n_tap = sum(len(a) for a in active)
    flops = 2 * N * Ht * W * (Cp * Ip * (1 + n_tap) + Ip * Op * (1 + nd))
    bytes_accessed = (N * R * (RB * Wp2 * Cp + nd * 9 * Cp * Ip) * 2
                      + N * Ht * W * Op * 4
                      + (Cp * Ip + (nd + 1) * Ip * Op) * 2)

    grid_spec = pltpu.PrefetchScalarGridSpec(
        num_scalar_prefetch=0,
        grid=(N, R),
        in_specs=[
            pl.BlockSpec(memory_space=pl.ANY),                     # x (HBM)
            pl.BlockSpec((1, 1, Op), lambda n, r: (n, 0, 0)),      # acc0
            pl.BlockSpec((Cp, Ip), lambda n, r: (0, 0)),           # w2
            pl.BlockSpec(memory_space=pl.ANY),                     # wd (HBM)
            pl.BlockSpec((nd + 1, Ip, Op), lambda n, r: (0, 0, 0)),  # wb[1:]
            pl.BlockSpec((nd + 1, Ip), lambda n, r: (0, 0)),       # sc[1:]
            pl.BlockSpec((nd + 1, Ip), lambda n, r: (0, 0)),       # bi[1:]
            pl.BlockSpec((1, Op), lambda n, r: (0, 0)),            # sb
            pl.BlockSpec((1, Op), lambda n, r: (0, 0)),            # bb
        ],
        out_specs=pl.BlockSpec((1, TH, W, Op), lambda n, r: (n, r, 0, 0)),
        scratch_shapes=[
            pltpu.VMEM((RB, Wp2, Cp), jnp.bfloat16),     # halo'd input slab
            pltpu.VMEM((2, 9, Cp, Ip), jnp.bfloat16),    # streamed wd (2 slots)
            pltpu.SemaphoreType.DMA((3,)),
            pltpu.VMEM((TH * W, Op), jnp.float32),       # bottleneck accumulator
        ])

    out = pl.pallas_call(
        kernel,
        out_shape=jax.ShapeDtypeStruct((N, Ht, W, Op), jnp.float32),
        grid_spec=grid_spec,
        compiler_params=pltpu.CompilerParams(
            dimension_semantics=("parallel", "parallel"),
            vmem_limit_bytes=64 * 1024 * 1024),
        cost_estimate=pl.CostEstimate(
            flops=int(flops), transcendentals=0,
            bytes_accessed=int(bytes_accessed)),
    )(xpad, acc0_p, w2p, wdp, wb2p, sc2p, bi2p, sbp, bbp)

    out = out[:, :H, :, :O]
    # NOTE: callers that consume NHWC can drop this transpose entirely.
    return jnp.transpose(out, (0, 3, 1, 2))                          # NCHW


def aspp_reference(x_nchw, params, dilations=(6, 12, 18)):
    """Pure-JAX reference (mirrors the kernel's bf16 MXU operand rounding)."""
    w1, w2, wd, wb, sc, bi, sb, bb = params
    x = jnp.transpose(x_nchw, (0, 2, 3, 1)).astype(jnp.float32)      # NHWC
    N, H, W, C = x.shape
    I = w1.shape[1]
    O = wb.shape[-1]

    def r16(a):  # bf16 rounding of MXU operands, accumulation kept in f32
        return a.astype(jnp.bfloat16).astype(jnp.float32)

    def bn_act(y, s, b):
        y = y * s + b
        return jnp.where(y > 0, y, 0.01 * y)

    xb = r16(x)
    feats = []
    xm = jnp.mean(x, axis=(1, 2))                                    # (N, C)
    f1 = bn_act(jnp.dot(xm, w1), sc[0], bi[0])                       # (N, I)
    feats.append(jnp.broadcast_to(f1[:, None, None, :], (N, H, W, I)))
    feats.append(bn_act(jnp.einsum('nhwc,ci->nhwi', xb, r16(w2)), sc[1], bi[1]))
    for b, d in enumerate(dilations):
        wk = r16(wd[b]).reshape(3, 3, C, I)                          # HWIO
        y = jax.lax.conv_general_dilated(
            xb, wk, window_strides=(1, 1),
            padding=((d, d), (d, d)), rhs_dilation=(d, d),
            dimension_numbers=('NHWC', 'HWIO', 'NHWC'))
        feats.append(bn_act(y, sc[2 + b], bi[2 + b]))
    cat = jnp.concatenate([r16(f) for f in feats], axis=-1)          # (N,H,W,5I)
    out = bn_act(jnp.einsum('nhwk,ko->nhwo', cat, r16(wb.reshape(5 * I, O))),
                 sb[0], bb[0])
    return jnp.transpose(out, (0, 3, 1, 2))


def init_params(key, features, inner_features, out_features):
    ks = jax.random.split(key, 9)
    C, I, O = features, inner_features, out_features
    w1 = 0.1 * jax.random.normal(ks[0], (C, I), jnp.float32)
    w2 = 0.1 * jax.random.normal(ks[1], (C, I), jnp.float32)
    wd = 0.1 * jax.random.normal(ks[2], (3, 9, C, I), jnp.float32)
    wb = 0.1 * jax.random.normal(ks[3], (5, I, O), jnp.float32)
    # eval-mode BN folded into affine scale / bias
    sc = 0.5 + jax.random.uniform(ks[4], (5, I), jnp.float32)
    bi = 0.1 * jax.random.normal(ks[5], (5, I), jnp.float32)
    sb = 0.5 + jax.random.uniform(ks[6], (1, O), jnp.float32)
    bb = 0.1 * jax.random.normal(ks[7], (1, O), jnp.float32)
    return (w1, w2, wd, wb, sc, bi, sb, bb)


if __name__ == "__main__":
    # Small shapes consistent with the module: NCHW input.
    N, C, H, W = 2, 4, 16, 16
    inner_features, out_features = 8, 16
    dilations = (6, 12, 18)

    key = jax.random.PRNGKey(0)
    kx, kp = jax.random.split(key)
    x = jax.random.normal(kx, (N, C, H, W), jnp.float32)
    params = init_params(kp, C, inner_features, out_features)

    out = jax.block_until_ready(aspp_forward(x, params, dilations))
    ref = jax.block_until_ready(aspp_reference(x, params, dilations))

    assert out.shape == (N, out_features, H, W)
    max_err = float(jnp.max(jnp.abs(out - ref)))
    assert jnp.allclose(out, ref, atol=5e-3, rtol=5e-3), f"mismatch {max_err}"

    print("KERNEL_OK")
</pallas_src>

<mosaic_0001>
module attributes {stable_mosaic.version = 11 : i64} {
  func.func @_aspp_kernel(%arg0: i32, %arg1: i32, %arg2: memref<2x40x40x128xbf16, #tpu.memory_space<any>>, %arg3: memref<1x1x128xf32, #tpu.memory_space<vmem>>, %arg4: memref<128x128xbf16, #tpu.memory_space<vmem>>, %arg5: memref<3x9x128x128xbf16, #tpu.memory_space<any>>, %arg6: memref<4x128x128xbf16, #tpu.memory_space<vmem>>, %arg7: memref<4x128xf32, #tpu.memory_space<vmem>>, %arg8: memref<4x128xf32, #tpu.memory_space<vmem>>, %arg9: memref<1x128xf32, #tpu.memory_space<vmem>>, %arg10: memref<1x128xf32, #tpu.memory_space<vmem>>, %arg11: memref<1x8x16x128xf32, #tpu.memory_space<vmem>>, %arg12: memref<32x40x128xbf16, #tpu.memory_space<vmem>>, %arg13: memref<2x9x128x128xbf16, #tpu.memory_space<vmem>>, %arg14: memref<3x!tpu.dma_semaphore, #tpu.memory_space<semaphore_mem>>, %arg15: memref<128x128xf32, #tpu.memory_space<vmem>>) attributes {dimension_semantics = [#tpu.dimension_semantics<parallel>, #tpu.dimension_semantics<parallel>], iteration_bounds = array<i64: 2, 2>, scalar_prefetch = 0 : i64, scratch_operands = 4 : i64, tpu.core_type = #tpu.core_type<tc>, window_params = [{}, {transform_indices = @transform_1, window_bounds = array<i64: 1, 1, 128>}, {pipeline_mode = #tpu.pipeline_mode<synchronous>, transform_indices = @transform_2, window_bounds = array<i64: 128, 128>}, {}, {pipeline_mode = #tpu.pipeline_mode<synchronous>, transform_indices = @transform_4, window_bounds = array<i64: 4, 128, 128>}, {pipeline_mode = #tpu.pipeline_mode<synchronous>, transform_indices = @transform_5, window_bounds = array<i64: 4, 128>}, {pipeline_mode = #tpu.pipeline_mode<synchronous>, transform_indices = @transform_6, window_bounds = array<i64: 4, 128>}, {pipeline_mode = #tpu.pipeline_mode<synchronous>, transform_indices = @transform_7, window_bounds = array<i64: 1, 128>}, {pipeline_mode = #tpu.pipeline_mode<synchronous>, transform_indices = @transform_8, window_bounds = array<i64: 1, 128>}, {transform_indices = @transform_9, window_bounds = array<i64: 1, 8, 16, 128>}]} {
    %c8_i32 = arith.constant 8 : i32
    %0 = arith.muli %arg1, %c8_i32 : i32
    %c0_i32 = arith.constant 0 : i32
    %c0_i32_0 = arith.constant 0 : i32
    %c0_i32_1 = arith.constant 0 : i32
    %1 = tpu.memref_slice %arg2[%arg0, %0, %c0_i32_0, %c0_i32_1] : memref<2x40x40x128xbf16, #tpu.memory_space<any>> -> memref<1x32x40x128xbf16, #tpu.memory_space<any>>
    %2 = tpu.memref_squeeze %1 : memref<1x32x40x128xbf16, #tpu.memory_space<any>> -> memref<32x40x128xbf16, #tpu.memory_space<any>>
    %3 = tpu.memref_slice %arg14[%c0_i32] : memref<3x!tpu.dma_semaphore, #tpu.memory_space<semaphore_mem>> -> memref<1x!tpu.dma_semaphore, #tpu.memory_space<semaphore_mem>>
    %4 = tpu.memref_squeeze %3 : memref<1x!tpu.dma_semaphore, #tpu.memory_space<semaphore_mem>> -> memref<!tpu.dma_semaphore, #tpu.memory_space<semaphore_mem>>
    tpu.enqueue_dma source(%2 : memref<32x40x128xbf16, #tpu.memory_space<any>>) target(%arg12 : memref<32x40x128xbf16, #tpu.memory_space<vmem>>) target_semaphore(%4 : memref<!tpu.dma_semaphore, #tpu.memory_space<semaphore_mem>>)
    %c0_i32_2 = arith.constant 0 : i32
    %c0_i32_3 = arith.constant 0 : i32
    %c1_i32 = arith.constant 1 : i32
    %c0_i32_4 = arith.constant 0 : i32
    %c0_i32_5 = arith.constant 0 : i32
    %c0_i32_6 = arith.constant 0 : i32
    %5 = tpu.memref_slice %arg5[%c0_i32_2, %c0_i32_4, %c0_i32_5, %c0_i32_6] : memref<3x9x128x128xbf16, #tpu.memory_space<any>> -> memref<1x9x128x128xbf16, #tpu.memory_space<any>>
    %6 = tpu.memref_squeeze %5 : memref<1x9x128x128xbf16, #tpu.memory_space<any>> -> memref<9x128x128xbf16, #tpu.memory_space<any>>
    %c0_i32_7 = arith.constant 0 : i32
    %c0_i32_8 = arith.constant 0 : i32
    %c0_i32_9 = arith.constant 0 : i32
    %7 = tpu.memref_slice %arg13[%c0_i32_3, %c0_i32_7, %c0_i32_8, %c0_i32_9] : memref<2x9x128x128xbf16, #tpu.memory_space<vmem>> -> memref<1x9x128x128xbf16, #tpu.memory_space<vmem>>
    %8 = tpu.memref_squeeze %7 : memref<1x9x128x128xbf16, #tpu.memory_space<vmem>> -> memref<9x128x128xbf16, #tpu.memory_space<vmem>>
    %9 = tpu.memref_slice %arg14[%c1_i32] : memref<3x!tpu.dma_semaphore, #tpu.memory_space<semaphore_mem>> -> memref<1x!tpu.dma_semaphore, #tpu.memory_space<semaphore_mem>>
    %10 = tpu.memref_squeeze %9 : memref<1x!tpu.dma_semaphore, #tpu.memory_space<semaphore_mem>> -> memref<!tpu.dma_semaphore, #tpu.memory_space<semaphore_mem>>
    tpu.enqueue_dma source(%6 : memref<9x128x128xbf16, #tpu.memory_space<any>>) target(%8 : memref<9x128x128xbf16, #tpu.memory_space<vmem>>) target_semaphore(%10 : memref<!tpu.dma_semaphore, #tpu.memory_space<semaphore_mem>>)
    %c0_i32_10 = arith.constant 0 : i32
    %c0_i32_11 = arith.constant 0 : i32
    %c0_i32_12 = arith.constant 0 : i32
    %11 = tpu.memref_slice %arg2[%arg0, %0, %c0_i32_11, %c0_i32_12] : memref<2x40x40x128xbf16, #tpu.memory_space<any>> -> memref<1x32x40x128xbf16, #tpu.memory_space<any>>
    %12 = tpu.memref_squeeze %11 : memref<1x32x40x128xbf16, #tpu.memory_space<any>> -> memref<32x40x128xbf16, #tpu.memory_space<any>>
    %13 = tpu.memref_slice %arg14[%c0_i32_10] : memref<3x!tpu.dma_semaphore, #tpu.memory_space<semaphore_mem>> -> memref<1x!tpu.dma_semaphore, #tpu.memory_space<semaphore_mem>>
    %14 = tpu.memref_squeeze %13 : memref<1x!tpu.dma_semaphore, #tpu.memory_space<semaphore_mem>> -> memref<!tpu.dma_semaphore, #tpu.memory_space<semaphore_mem>>
    tpu.wait_dma2 semaphore(%14 : memref<!tpu.dma_semaphore, #tpu.memory_space<semaphore_mem>>) src(%12 : memref<32x40x128xbf16, #tpu.memory_space<any>>) dst(%arg12 : memref<32x40x128xbf16, #tpu.memory_space<vmem>>)
    %c0 = arith.constant 0 : index
    %c0_13 = arith.constant 0 : index
    %c0_14 = arith.constant 0 : index
    %15 = vector.load %arg3[%c0, %c0_13, %c0_14] : memref<1x1x128xf32, #tpu.memory_space<vmem>>, vector<1x1x128xf32>
    %16 = vector.shape_cast %15 : vector<1x1x128xf32> to vector<1x128xf32>
    %17 = vector.shape_cast %16 : vector<1x128xf32> to vector<1x128xf32>
    %18 = vector.broadcast %17 : vector<1x128xf32> to vector<128x128xf32>
    %c0_15 = arith.constant 0 : index
    %c0_16 = arith.constant 0 : index
    %19 = vector.load %arg15[%c0_15, %c0_16] : memref<128x128xf32, #tpu.memory_space<vmem>>, vector<128x128xf32>
    tpu.vector_store %arg15[%c0_15, %c0_16], %18 {strides = array<i32>} : memref<128x128xf32, #tpu.memory_space<vmem>>, vector<128x128xf32>,
    %c12 = arith.constant 12 : index
    %c12_17 = arith.constant 12 : index
    %c0_18 = arith.constant 0 : index
    %20 = vector.load %arg12[%c12, %c12_17, %c0_18] : memref<32x40x128xbf16, #tpu.memory_space<vmem>>, vector<8x16x128xbf16>
    %21 = vector.shape_cast %20 : vector<8x16x128xbf16> to vector<128x128xbf16>
    %c0_19 = arith.constant 0 : index
    %c0_20 = arith.constant 0 : index
    %22 = vector.load %arg4[%c0_19, %c0_20] : memref<128x128xbf16, #tpu.memory_space<vmem>>, vector<128x128xbf16>
    %cst = arith.constant dense<0.000000e+00> : vector<128x128xf32>
    %23 = tpu.matmul %21, %22, %cst {dimension_numbers = #tpu.dot_dimension_numbers<[1], [0], [0], [1], [0, 0, 1, 1], [], []>} : vector<128x128xbf16>, vector<128x128xbf16>, vector<128x128xf32> -> vector<128x128xf32>
    %c0_21 = arith.constant 0 : index
    %c0_22 = arith.constant 0 : index
    %24 = vector.load %arg7[%c0_21, %c0_22] : memref<4x128xf32, #tpu.memory_space<vmem>>, vector<1x128xf32>
    %25 = vector.shape_cast %24 : vector<1x128xf32> to vector<128xf32>
    %26 = vector.shape_cast %25 : vector<128xf32> to vector<1x128xf32>
    %27 = vector.broadcast %26 : vector<1x128xf32> to vector<128x128xf32>
    %28 = arith.mulf %23, %27 : vector<128x128xf32>
    %c0_23 = arith.constant 0 : index
    %c0_24 = arith.constant 0 : index
    %29 = vector.load %arg8[%c0_23, %c0_24] : memref<4x128xf32, #tpu.memory_space<vmem>>, vector<1x128xf32>
    %30 = vector.shape_cast %29 : vector<1x128xf32> to vector<128xf32>
    %31 = vector.shape_cast %30 : vector<128xf32> to vector<1x128xf32>
    %32 = vector.broadcast %31 : vector<1x128xf32> to vector<128x128xf32>
    %33 = arith.addf %28, %32 : vector<128x128xf32>
    %cst_25 = arith.constant 0.000000e+00 : f32
    %34 = vector.broadcast %cst_25 : f32 to vector<128x128xf32>
    %35 = arith.cmpf ogt, %33, %34 : vector<128x128xf32>
    %cst_26 = arith.constant 0.00999999977 : f32
    %36 = vector.broadcast %cst_26 : f32 to vector<128x128xf32>
    %37 = arith.mulf %36, %33 : vector<128x128xf32>
    %38 = arith.select %35, %33, %37 : vector<128x128xi1>, vector<128x128xf32>
    %c0_27 = arith.constant 0 : index
    %c0_28 = arith.constant 0 : index
    %39 = vector.load %arg15[%c0_27, %c0_28] : memref<128x128xf32, #tpu.memory_space<vmem>>, vector<128x128xf32>
    %40 = arith.truncf %38 : vector<128x128xf32> to vector<128x128xbf16>
    %c0_29 = arith.constant 0 : index
    %c0_30 = arith.constant 0 : index
    %c0_31 = arith.constant 0 : index
    %41 = vector.load %arg6[%c0_29, %c0_30, %c0_31] : memref<4x128x128xbf16, #tpu.memory_space<vmem>>, vector<1x128x128xbf16>
    %42 = vector.shape_cast %41 : vector<1x128x128xbf16> to vector<128x128xbf16>
    %cst_32 = arith.constant dense<0.000000e+00> : vector<128x128xf32>
    %43 = tpu.matmul %40, %42, %cst_32 {dimension_numbers = #tpu.dot_dimension_numbers<[1], [0], [0], [1], [0, 0, 1, 1], [], []>} : vector<128x128xbf16>, vector<128x128xbf16>, vector<128x128xf32> -> vector<128x128xf32>
    %44 = arith.addf %39, %43 : vector<128x128xf32>
    %c0_33 = arith.constant 0 : index
    %c0_34 = arith.constant 0 : index
    %45 = vector.load %arg15[%c0_33, %c0_34] : memref<128x128xf32, #tpu.memory_space<vmem>>, vector<128x128xf32>
    tpu.vector_store %arg15[%c0_33, %c0_34], %44 {strides = array<i32>} : memref<128x128xf32, #tpu.memory_space<vmem>>, vector<128x128xf32>,
    %c0_i32_35 = arith.constant 0 : i32
    %c0_i32_36 = arith.constant 0 : i32
    %c1_i32_37 = arith.constant 1 : i32
    %c0_i32_38 = arith.constant 0 : i32
    %c0_i32_39 = arith.constant 0 : i32
    %c0_i32_40 = arith.constant 0 : i32
    %46 = tpu.memref_slice %arg5[%c0_i32_35, %c0_i32_38, %c0_i32_39, %c0_i32_40] : memref<3x9x128x128xbf16, #tpu.memory_space<any>> -> memref<1x9x128x128xbf16, #tpu.memory_space<any>>
    %47 = tpu.memref_squeeze %46 : memref<1x9x128x128xbf16, #tpu.memory_space<any>> -> memref<9x128x128xbf16, #tpu.memory_space<any>>
    %c0_i32_41 = arith.constant 0 : i32
    %c0_i32_42 = arith.constant 0 : i32
    %c0_i32_43 = arith.constant 0 : i32
    %48 = tpu.memref_slice %arg13[%c0_i32_36, %c0_i32_41, %c0_i32_42, %c0_i32_43] : memref<2x9x128x128xbf16, #tpu.memory_space<vmem>> -> memref<1x9x128x128xbf16, #tpu.memory_space<vmem>>
    %49 = tpu.memref_squeeze %48 : memref<1x9x128x128xbf16, #tpu.memory_space<vmem>> -> memref<9x128x128xbf16, #tpu.memory_space<vmem>>
    %50 = tpu.memref_slice %arg14[%c1_i32_37] : memref<3x!tpu.dma_semaphore, #tpu.memory_space<semaphore_mem>> -> memref<1x!tpu.dma_semaphore, #tpu.memory_space<semaphore_mem>>
    %51 = tpu.memref_squeeze %50 : memref<1x!tpu.dma_semaphore, #tpu.memory_space<semaphore_mem>> -> memref<!tpu.dma_semaphore, #tpu.memory_space<semaphore_mem>>
    tpu.wait_dma2 semaphore(%51 : memref<!tpu.dma_semaphore, #tpu.memory_space<semaphore_mem>>) src(%47 : memref<9x128x128xbf16, #tpu.memory_space<any>>) dst(%49 : memref<9x128x128xbf16, #tpu.memory_space<vmem>>)
    %c1_i32_44 = arith.constant 1 : i32
    %c1_i32_45 = arith.constant 1 : i32
    %c2_i32 = arith.constant 2 : i32
    %c0_i32_46 = arith.constant 0 : i32
    %c0_i32_47 = arith.constant 0 : i32
    %c0_i32_48 = arith.constant 0 : i32
    %52 = tpu.memref_slice %arg5[%c1_i32_44, %c0_i32_46, %c0_i32_47, %c0_i32_48] : memref<3x9x128x128xbf16, #tpu.memory_space<any>> -> memref<1x9x128x128xbf16, #tpu.memory_space<any>>
    %53 = tpu.memref_squeeze %52 : memref<1x9x128x128xbf16, #tpu.memory_space<any>> -> memref<9x128x128xbf16, #tpu.memory_space<any>>
    %c0_i32_49 = arith.constant 0 : i32
    %c0_i32_50 = arith.constant 0 : i32
    %c0_i32_51 = arith.constant 0 : i32
    %54 = tpu.memref_slice %arg13[%c1_i32_45, %c0_i32_49, %c0_i32_50, %c0_i32_51] : memref<2x9x128x128xbf16, #tpu.memory_space<vmem>> -> memref<1x9x128x128xbf16, #tpu.memory_space<vmem>>
    %55 = tpu.memref_squeeze %54 : memref<1x9x128x128xbf16, #tpu.memory_space<vmem>> -> memref<9x128x128xbf16, #tpu.memory_space<vmem>>
    %56 = tpu.memref_slice %arg14[%c2_i32] : memref<3x!tpu.dma_semaphore, #tpu.memory_space<semaphore_mem>> -> memref<1x!tpu.dma_semaphore, #tpu.memory_space<semaphore_mem>>
    %57 = tpu.memref_squeeze %56 : memref<1x!tpu.dma_semaphore, #tpu.memory_space<semaphore_mem>> -> memref<!tpu.dma_semaphore, #tpu.memory_space<semaphore_mem>>
    tpu.enqueue_dma source(%53 : memref<9x128x128xbf16, #tpu.memory_space<any>>) target(%55 : memref<9x128x128xbf16, #tpu.memory_space<vmem>>) target_semaphore(%57 : memref<!tpu.dma_semaphore, #tpu.memory_space<semaphore_mem>>)
    %c6 = arith.constant 6 : index
    %c6_52 = arith.constant 6 : index
    %c0_53 = arith.constant 0 : index
    %58 = vector.load %arg12[%c6, %c6_52, %c0_53] : memref<32x40x128xbf16, #tpu.memory_space<vmem>>, vector<8x16x128xbf16>
    %59 = vector.shape_cast %58 : vector<8x16x128xbf16> to vector<128x128xbf16>
    %c0_54 = arith.constant 0 : index
    %c0_55 = arith.constant 0 : index
    %c0_56 = arith.constant 0 : index
    %c0_57 = arith.constant 0 : index
    %60 = vector.load %arg13[%c0_54, %c0_55, %c0_56, %c0_57] : memref<2x9x128x128xbf16, #tpu.memory_space<vmem>>, vector<1x1x128x128xbf16>
    %61 = vector.shape_cast %60 : vector<1x1x128x128xbf16> to vector<128x128xbf16>
    %cst_58 = arith.constant dense<0.000000e+00> : vector<128x128xf32>
    %62 = tpu.matmul %59, %61, %cst_58 {dimension_numbers = #tpu.dot_dimension_numbers<[1], [0], [0], [1], [0, 0, 1, 1], [], []>} : vector<128x128xbf16>, vector<128x128xbf16>, vector<128x128xf32> -> vector<128x128xf32>
    %c6_59 = arith.constant 6 : index
    %c12_60 = arith.constant 12 : index
    %c0_61 = arith.constant 0 : index
    %63 = vector.load %arg12[%c6_59, %c12_60, %c0_61] : memref<32x40x128xbf16, #tpu.memory_space<vmem>>, vector<8x16x128xbf16>
    %64 = vector.shape_cast %63 : vector<8x16x128xbf16> to vector<128x128xbf16>
    %c0_62 = arith.constant 0 : index
    %c1 = arith.constant 1 : index
    %c0_63 = arith.constant 0 : index
    %c0_64 = arith.constant 0 : index
    %65 = vector.load %arg13[%c0_62, %c1, %c0_63, %c0_64] : memref<2x9x128x128xbf16, #tpu.memory_space<vmem>>, vector<1x1x128x128xbf16>
    %66 = vector.shape_cast %65 : vector<1x1x128x128xbf16> to vector<128x128xbf16>
    %cst_65 = arith.constant dense<0.000000e+00> : vector<128x128xf32>
    %67 = tpu.matmul %64, %66, %cst_65 {dimension_numbers = #tpu.dot_dimension_numbers<[1], [0], [0], [1], [0, 0, 1, 1], [], []>} : vector<128x128xbf16>, vector<128x128xbf16>, vector<128x128xf32> -> vector<128x128xf32>
    %68 = arith.addf %62, %67 : vector<128x128xf32>
    %c6_66 = arith.constant 6 : index
    %c18 = arith.constant 18 : index
    %c0_67 = arith.constant 0 : index
    %69 = vector.load %arg12[%c6_66, %c18, %c0_67] : memref<32x40x128xbf16, #tpu.memory_space<vmem>>, vector<8x16x128xbf16>
    %70 = vector.shape_cast %69 : vector<8x16x128xbf16> to vector<128x128xbf16>
    %c0_68 = arith.constant 0 : index
    %c2 = arith.constant 2 : index
    %c0_69 = arith.constant 0 : index
    %c0_70 = arith.constant 0 : index
    %71 = vector.load %arg13[%c0_68, %c2, %c0_69, %c0_70] : memref<2x9x128x128xbf16, #tpu.memory_space<vmem>>, vector<1x1x128x128xbf16>
    %72 = vector.shape_cast %71 : vector<1x1x128x128xbf16> to vector<128x128xbf16>
    %cst_71 = arith.constant dense<0.000000e+00> : vector<128x128xf32>
    %73 = tpu.matmul %70, %72, %cst_71 {dimension_numbers = #tpu.dot_dimension_numbers<[1], [0], [0], [1], [0, 0, 1, 1], [], []>} : vector<128x128xbf16>, vector<128x128xbf16>, vector<128x128xf32> -> vector<128x128xf32>
    %74 = arith.addf %68, %73 : vector<128x128xf32>
    %c12_72 = arith.constant 12 : index
    %c6_73 = arith.constant 6 : index
    %c0_74 = arith.constant 0 : index
    %75 = vector.load %arg12[%c12_72, %c6_73, %c0_74] : memref<32x40x128xbf16, #tpu.memory_space<vmem>>, vector<8x16x128xbf16>
    %76 = vector.shape_cast %75 : vector<8x16x128xbf16> to vector<128x128xbf16>
    %c0_75 = arith.constant 0 : index
    %c3 = arith.constant 3 : index
    %c0_76 = arith.constant 0 : index
    %c0_77 = arith.constant 0 : index
    %77 = vector.load %arg13[%c0_75, %c3, %c0_76, %c0_77] : memref<2x9x128x128xbf16, #tpu.memory_space<vmem>>, vector<1x1x128x128xbf16>
    %78 = vector.shape_cast %77 : vector<1x1x128x128xbf16> to vector<128x128xbf16>
    %cst_78 = arith.constant dense<0.000000e+00> : vector<128x128xf32>
    %79 = tpu.matmul %76, %78, %cst_78 {dimension_numbers = #tpu.dot_dimension_numbers<[1], [0], [0], [1], [0, 0, 1, 1], [], []>} : vector<128x128xbf16>, vector<128x128xbf16>, vector<128x128xf32> -> vector<128x128xf32>
    %80 = arith.addf %74, %79 : vector<128x128xf32>
    %c12_79 = arith.constant 12 : index
    %c12_80 = arith.constant 12 : index
    %c0_81 = arith.constant 0 : index
    %81 = vector.load %arg12[%c12_79, %c12_80, %c0_81] : memref<32x40x128xbf16, #tpu.memory_space<vmem>>, vector<8x16x128xbf16>
    %82 = vector.shape_cast %81 : vector<8x16x128xbf16> to vector<128x128xbf16>
    %c0_82 = arith.constant 0 : index
    %c4 = arith.constant 4 : index
    %c0_83 = arith.constant 0 : index
    %c0_84 = arith.constant 0 : index
    %83 = vector.load %arg13[%c0_82, %c4, %c0_83, %c0_84] : memref<2x9x128x128xbf16, #tpu.memory_space<vmem>>, vector<1x1x128x128xbf16>
    %84 = vector.shape_cast %83 : vector<1x1x128x128xbf16> to vector<128x128xbf16>
    %cst_85 = arith.constant dense<0.000000e+00> : vector<128x128xf32>
    %85 = tpu.matmul %82, %84, %cst_85 {dimension_numbers = #tpu.dot_dimension_numbers<[1], [0], [0], [1], [0, 0, 1, 1], [], []>} : vector<128x128xbf16>, vector<128x128xbf16>, vector<128x128xf32> -> vector<128x128xf32>
    %86 = arith.addf %80, %85 : vector<128x128xf32>
    %c12_86 = arith.constant 12 : index
    %c18_87 = arith.constant 18 : index
    %c0_88 = arith.constant 0 : index
    %87 = vector.load %arg12[%c12_86, %c18_87, %c0_88] : memref<32x40x128xbf16, #tpu.memory_space<vmem>>, vector<8x16x128xbf16>
    %88 = vector.shape_cast %87 : vector<8x16x128xbf16> to vector<128x128xbf16>
    %c0_89 = arith.constant 0 : index
    %c5 = arith.constant 5 : index
    %c0_90 = arith.constant 0 : index
    %c0_91 = arith.constant 0 : index
    %89 = vector.load %arg13[%c0_89, %c5, %c0_90, %c0_91] : memref<2x9x128x128xbf16, #tpu.memory_space<vmem>>, vector<1x1x128x128xbf16>
    %90 = vector.shape_cast %89 : vector<1x1x128x128xbf16> to vector<128x128xbf16>
    %cst_92 = arith.constant dense<0.000000e+00> : vector<128x128xf32>
    %91 = tpu.matmul %88, %90, %cst_92 {dimension_numbers = #tpu.dot_dimension_numbers<[1], [0], [0], [1], [0, 0, 1, 1], [], []>} : vector<128x128xbf16>, vector<128x128xbf16>, vector<128x128xf32> -> vector<128x128xf32>
    %92 = arith.addf %86, %91 : vector<128x128xf32>
    %c18_93 = arith.constant 18 : index
    %c6_94 = arith.constant 6 : index
    %c0_95 = arith.constant 0 : index
    %93 = vector.load %arg12[%c18_93, %c6_94, %c0_95] : memref<32x40x128xbf16, #tpu.memory_space<vmem>>, vector<8x16x128xbf16>
    %94 = vector.shape_cast %93 : vector<8x16x128xbf16> to vector<128x128xbf16>
    %c0_96 = arith.constant 0 : index
    %c6_97 = arith.constant 6 : index
    %c0_98 = arith.constant 0 : index
    %c0_99 = arith.constant 0 : index
    %95 = vector.load %arg13[%c0_96, %c6_97, %c0_98, %c0_99] : memref<2x9x128x128xbf16, #tpu.memory_space<vmem>>, vector<1x1x128x128xbf16>
    %96 = vector.shape_cast %95 : vector<1x1x128x128xbf16> to vector<128x128xbf16>
    %cst_100 = arith.constant dense<0.000000e+00> : vector<128x128xf32>
    %97 = tpu.matmul %94, %96, %cst_100 {dimension_numbers = #tpu.dot_dimension_numbers<[1], [0], [0], [1], [0, 0, 1, 1], [], []>} : vector<128x128xbf16>, vector<128x128xbf16>, vector<128x128xf32> -> vector<128x128xf32>
    %98 = arith.addf %92, %97 : vector<128x128xf32>
    %c18_101 = arith.constant 18 : index
    %c12_102 = arith.constant 12 : index
    %c0_103 = arith.constant 0 : index
    %99 = vector.load %arg12[%c18_101, %c12_102, %c0_103] : memref<32x40x128xbf16, #tpu.memory_space<vmem>>, vector<8x16x128xbf16>
    %100 = vector.shape_cast %99 : vector<8x16x128xbf16> to vector<128x128xbf16>
    %c0_104 = arith.constant 0 : index
    %c7 = arith.constant 7 : index
    %c0_105 = arith.constant 0 : index
    %c0_106 = arith.constant 0 : index
    %101 = vector.load %arg13[%c0_104, %c7, %c0_105, %c0_106] : memref<2x9x128x128xbf16, #tpu.memory_space<vmem>>, vector<1x1x128x128xbf16>
    %102 = vector.shape_cast %101 : vector<1x1x128x128xbf16> to vector<128x128xbf16>
    %cst_107 = arith.constant dense<0.000000e+00> : vector<128x128xf32>
    %103 = tpu.matmul %100, %102, %cst_107 {dimension_numbers = #tpu.dot_dimension_numbers<[1], [0], [0], [1], [0, 0, 1, 1], [], []>} : vector<128x128xbf16>, vector<128x128xbf16>, vector<128x128xf32> -> vector<128x128xf32>
    %104 = arith.addf %98, %103 : vector<128x128xf32>
    %c18_108 = arith.constant 18 : index
    %c18_109 = arith.constant 18 : index
    %c0_110 = arith.constant 0 : index
    %105 = vector.load %arg12[%c18_108, %c18_109, %c0_110] : memref<32x40x128xbf16, #tpu.memory_space<vmem>>, vector<8x16x128xbf16>
    %106 = vector.shape_cast %105 : vector<8x16x128xbf16> to vector<128x128xbf16>
    %c0_111 = arith.constant 0 : index
    %c8 = arith.constant 8 : index
    %c0_112 = arith.constant 0 : index
    %c0_113 = arith.constant 0 : index
    %107 = vector.load %arg13[%c0_111, %c8, %c0_112, %c0_113] : memref<2x9x128x128xbf16, #tpu.memory_space<vmem>>, vector<1x1x128x128xbf16>
    %108 = vector.shape_cast %107 : vector<1x1x128x128xbf16> to vector<128x128xbf16>
    %cst_114 = arith.constant dense<0.000000e+00> : vector<128x128xf32>
    %109 = tpu.matmul %106, %108, %cst_114 {dimension_numbers = #tpu.dot_dimension_numbers<[1], [0], [0], [1], [0, 0, 1, 1], [], []>} : vector<128x128xbf16>, vector<128x128xbf16>, vector<128x128xf32> -> vector<128x128xf32>
    %110 = arith.addf %104, %109 : vector<128x128xf32>
    %c1_115 = arith.constant 1 : index
    %c0_116 = arith.constant 0 : index
    %111 = vector.load %arg7[%c1_115, %c0_116] : memref<4x128xf32, #tpu.memory_space<vmem>>, vector<1x128xf32>
    %112 = vector.shape_cast %111 : vector<1x128xf32> to vector<128xf32>
    %113 = vector.shape_cast %112 : vector<128xf32> to vector<1x128xf32>
    %114 = vector.broadcast %113 : vector<1x128xf32> to vector<128x128xf32>
    %115 = arith.mulf %110, %114 : vector<128x128xf32>
    %c1_117 = arith.constant 1 : index
    %c0_118 = arith.constant 0 : index
    %116 = vector.load %arg8[%c1_117, %c0_118] : memref<4x128xf32, #tpu.memory_space<vmem>>, vector<1x128xf32>
    %117 = vector.shape_cast %116 : vector<1x128xf32> to vector<128xf32>
    %118 = vector.shape_cast %117 : vector<128xf32> to vector<1x128xf32>
    %119 = vector.broadcast %118 : vector<1x128xf32> to vector<128x128xf32>
    %120 = arith.addf %115, %119 : vector<128x128xf32>
    %cst_119 = arith.constant 0.000000e+00 : f32
    %121 = vector.broadcast %cst_119 : f32 to vector<128x128xf32>
    %122 = arith.cmpf ogt, %120, %121 : vector<128x128xf32>
    %cst_120 = arith.constant 0.00999999977 : f32
    %123 = vector.broadcast %cst_120 : f32 to vector<128x128xf32>
    %124 = arith.mulf %123, %120 : vector<128x128xf32>
    %125 = arith.select %122, %120, %124 : vector<128x128xi1>, vector<128x128xf32>
    %c0_121 = arith.constant 0 : index
    %c0_122 = arith.constant 0 : index
    %126 = vector.load %arg15[%c0_121, %c0_122] : memref<128x128xf32, #tpu.memory_space<vmem>>, vector<128x128xf32>
    %127 = arith.truncf %125 : vector<128x128xf32> to vector<128x128xbf16>
    %c1_123 = arith.constant 1 : index
    %c0_124 = arith.constant 0 : index
    %c0_125 = arith.constant 0 : index
    %128 = vector.load %arg6[%c1_123, %c0_124, %c0_125] : memref<4x128x128xbf16, #tpu.memory_space<vmem>>, vector<1x128x128xbf16>
    %129 = vector.shape_cast %128 : vector<1x128x128xbf16> to vector<128x128xbf16>
    %cst_126 = arith.constant dense<0.000000e+00> : vector<128x128xf32>
    %130 = tpu.matmul %127, %129, %cst_126 {dimension_numbers = #tpu.dot_dimension_numbers<[1], [0], [0], [1], [0, 0, 1, 1], [], []>} : vector<128x128xbf16>, vector<128x128xbf16>, vector<128x128xf32> -> vector<128x128xf32>
    %131 = arith.addf %126, %130 : vector<128x128xf32>
    %c0_127 = arith.constant 0 : index
    %c0_128 = arith.constant 0 : index
    %132 = vector.load %arg15[%c0_127, %c0_128] : memref<128x128xf32, #tpu.memory_space<vmem>>, vector<128x128xf32>
    tpu.vector_store %arg15[%c0_127, %c0_128], %131 {strides = array<i32>} : memref<128x128xf32, #tpu.memory_space<vmem>>, vector<128x128xf32>,
    %c1_i32_129 = arith.constant 1 : i32
    %c1_i32_130 = arith.constant 1 : i32
    %c2_i32_131 = arith.constant 2 : i32
    %c0_i32_132 = arith.constant 0 : i32
    %c0_i32_133 = arith.constant 0 : i32
    %c0_i32_134 = arith.constant 0 : i32
    %133 = tpu.memref_slice %arg5[%c1_i32_129, %c0_i32_132, %c0_i32_133, %c0_i32_134] : memref<3x9x128x128xbf16, #tpu.memory_space<any>> -> memref<1x9x128x128xbf16, #tpu.memory_space<any>>
    %134 = tpu.memref_squeeze %133 : memref<1x9x128x128xbf16, #tpu.memory_space<any>> -> memref<9x128x128xbf16, #tpu.memory_space<any>>
    %c0_i32_135 = arith.constant 0 : i32
    %c0_i32_136 = arith.constant 0 : i32
    %c0_i32_137 = arith.constant 0 : i32
    %135 = tpu.memref_slice %arg13[%c1_i32_130, %c0_i32_135, %c0_i32_136, %c0_i32_137] : memref<2x9x128x128xbf16, #tpu.memory_space<vmem>> -> memref<1x9x128x128xbf16, #tpu.memory_space<vmem>>
    %136 = tpu.memref_squeeze %135 : memref<1x9x128x128xbf16, #tpu.memory_space<vmem>> -> memref<9x128x128xbf16, #tpu.memory_space<vmem>>
    %137 = tpu.memref_slice %arg14[%c2_i32_131] : memref<3x!tpu.dma_semaphore, #tpu.memory_space<semaphore_mem>> -> memref<1x!tpu.dma_semaphore, #tpu.memory_space<semaphore_mem>>
    %138 = tpu.memref_squeeze %137 : memref<1x!tpu.dma_semaphore, #tpu.memory_space<semaphore_mem>> -> memref<!tpu.dma_semaphore, #tpu.memory_space<semaphore_mem>>
    tpu.wait_dma2 semaphore(%138 : memref<!tpu.dma_semaphore, #tpu.memory_space<semaphore_mem>>) src(%134 : memref<9x128x128xbf16, #tpu.memory_space<any>>) dst(%136 : memref<9x128x128xbf16, #tpu.memory_space<vmem>>)
    %c2_i32_138 = arith.constant 2 : i32
    %c0_i32_139 = arith.constant 0 : i32
    %c1_i32_140 = arith.constant 1 : i32
    %c0_i32_141 = arith.constant 0 : i32
    %c0_i32_142 = arith.constant 0 : i32
    %c0_i32_143 = arith.constant 0 : i32
    %139 = tpu.memref_slice %arg5[%c2_i32_138, %c0_i32_141, %c0_i32_142, %c0_i32_143] : memref<3x9x128x128xbf16, #tpu.memory_space<any>> -> memref<1x9x128x128xbf16, #tpu.memory_space<any>>
    %140 = tpu.memref_squeeze %139 : memref<1x9x128x128xbf16, #tpu.memory_space<any>> -> memref<9x128x128xbf16, #tpu.memory_space<any>>
    %c0_i32_144 = arith.constant 0 : i32
    %c0_i32_145 = arith.constant 0 : i32
    %c0_i32_146 = arith.constant 0 : i32
    %141 = tpu.memref_slice %arg13[%c0_i32_139, %c0_i32_144, %c0_i32_145, %c0_i32_146] : memref<2x9x128x128xbf16, #tpu.memory_space<vmem>> -> memref<1x9x128x128xbf16, #tpu.memory_space<vmem>>
    %142 = tpu.memref_squeeze %141 : memref<1x9x128x128xbf16, #tpu.memory_space<vmem>> -> memref<9x128x128xbf16, #tpu.memory_space<vmem>>
    %143 = tpu.memref_slice %arg14[%c1_i32_140] : memref<3x!tpu.dma_semaphore, #tpu.memory_space<semaphore_mem>> -> memref<1x!tpu.dma_semaphore, #tpu.memory_space<semaphore_mem>>
    %144 = tpu.memref_squeeze %143 : memref<1x!tpu.dma_semaphore, #tpu.memory_space<semaphore_mem>> -> memref<!tpu.dma_semaphore, #tpu.memory_space<semaphore_mem>>
    tpu.enqueue_dma source(%140 : memref<9x128x128xbf16, #tpu.memory_space<any>>) target(%142 : memref<9x128x128xbf16, #tpu.memory_space<vmem>>) target_semaphore(%144 : memref<!tpu.dma_semaphore, #tpu.memory_space<semaphore_mem>>)
    %c0_147 = arith.constant 0 : index
    %c0_148 = arith.constant 0 : index
    %c0_149 = arith.constant 0 : index
    %145 = vector.load %arg12[%c0_147, %c0_148, %c0_149] : memref<32x40x128xbf16, #tpu.memory_space<vmem>>, vector<8x16x128xbf16>
    %146 = vector.shape_cast %145 : vector<8x16x128xbf16> to vector<128x128xbf16>
    %c1_150 = arith.constant 1 : index
    %c0_151 = arith.constant 0 : index
    %c0_152 = arith.constant 0 : index
    %c0_153 = arith.constant 0 : index
    %147 = vector.load %arg13[%c1_150, %c0_151, %c0_152, %c0_153] : memref<2x9x128x128xbf16, #tpu.memory_space<vmem>>, vector<1x1x128x128xbf16>
    %148 = vector.shape_cast %147 : vector<1x1x128x128xbf16> to vector<128x128xbf16>
    %cst_154 = arith.constant dense<0.000000e+00> : vector<128x128xf32>
    %149 = tpu.matmul %146, %148, %cst_154 {dimension_numbers = #tpu.dot_dimension_numbers<[1], [0], [0], [1], [0, 0, 1, 1], [], []>} : vector<128x128xbf16>, vector<128x128xbf16>, vector<128x128xf32> -> vector<128x128xf32>
    %c0_155 = arith.constant 0 : index
    %c12_156 = arith.constant 12 : index
    %c0_157 = arith.constant 0 : index
    %150 = vector.load %arg12[%c0_155, %c12_156, %c0_157] : memref<32x40x128xbf16, #tpu.memory_space<vmem>>, vector<8x16x128xbf16>
    %151 = vector.shape_cast %150 : vector<8x16x128xbf16> to vector<128x128xbf16>
    %c1_158 = arith.constant 1 : index
    %c1_159 = arith.constant 1 : index
    %c0_160 = arith.constant 0 : index
    %c0_161 = arith.constant 0 : index
    %152 = vector.load %arg13[%c1_158, %c1_159, %c0_160, %c0_161] : memref<2x9x128x128xbf16, #tpu.memory_space<vmem>>, vector<1x1x128x128xbf16>
    %153 = vector.shape_cast %152 : vector<1x1x128x128xbf16> to vector<128x128xbf16>
    %cst_162 = arith.constant dense<0.000000e+00> : vector<128x128xf32>
    %154 = tpu.matmul %151, %153, %cst_162 {dimension_numbers = #tpu.dot_dimension_numbers<[1], [0], [0], [1], [0, 0, 1, 1], [], []>} : vector<128x128xbf16>, vector<128x128xbf16>, vector<128x128xf32> -> vector<128x128xf32>
    %155 = arith.addf %149, %154 : vector<128x128xf32>
    %c0_163 = arith.constant 0 : index
    %c24 = arith.constant 24 : index
    %c0_164 = arith.constant 0 : index
    %156 = vector.load %arg12[%c0_163, %c24, %c0_164] : memref<32x40x128xbf16, #tpu.memory_space<vmem>>, vector<8x16x128xbf16>
    %157 = vector.shape_cast %156 : vector<8x16x128xbf16> to vector<128x128xbf16>
    %c1_165 = arith.constant 1 : index
    %c2_166 = arith.constant 2 : index
    %c0_167 = arith.constant 0 : index
    %c0_168 = arith.constant 0 : index
    %158 = vector.load %arg13[%c1_165, %c2_166, %c0_167, %c0_168] : memref<2x9x128x128xbf16, #tpu.memory_space<vmem>>, vector<1x1x128x128xbf16>
    %159 = vector.shape_cast %158 : vector<1x1x128x128xbf16> to vector<128x128xbf16>
    %cst_169 = arith.constant dense<0.000000e+00> : vector<128x128xf32>
    %160 = tpu.matmul %157, %159, %cst_169 {dimension_numbers = #tpu.dot_dimension_numbers<[1], [0], [0], [1], [0, 0, 1, 1], [], []>} : vector<128x128xbf16>, vector<128x128xbf16>, vector<128x128xf32> -> vector<128x128xf32>
    %161 = arith.addf %155, %160 : vector<128x128xf32>
    %c12_170 = arith.constant 12 : index
    %c0_171 = arith.constant 0 : index
    %c0_172 = arith.constant 0 : index
    %162 = vector.load %arg12[%c12_170, %c0_171, %c0_172] : memref<32x40x128xbf16, #tpu.memory_space<vmem>>, vector<8x16x128xbf16>
    %163 = vector.shape_cast %162 : vector<8x16x128xbf16> to vector<128x128xbf16>
    %c1_173 = arith.constant 1 : index
    %c3_174 = arith.constant 3 : index
    %c0_175 = arith.constant 0 : index
    %c0_176 = arith.constant 0 : index
    %164 = vector.load %arg13[%c1_173, %c3_174, %c0_175, %c0_176] : memref<2x9x128x128xbf16, #tpu.memory_space<vmem>>, vector<1x1x128x128xbf16>
    %165 = vector.shape_cast %164 : vector<1x1x128x128xbf16> to vector<128x128xbf16>
    %cst_177 = arith.constant dense<0.000000e+00> : vector<128x128xf32>
    %166 = tpu.matmul %163, %165, %cst_177 {dimension_numbers = #tpu.dot_dimension_numbers<[1], [0], [0], [1], [0, 0, 1, 1], [], []>} : vector<128x128xbf16>, vector<128x128xbf16>, vector<128x128xf32> -> vector<128x128xf32>
    %167 = arith.addf %161, %166 : vector<128x128xf32>
    %c12_178 = arith.constant 12 : index
    %c12_179 = arith.constant 12 : index
    %c0_180 = arith.constant 0 : index
    %168 = vector.load %arg12[%c12_178, %c12_179, %c0_180] : memref<32x40x128xbf16, #tpu.memory_space<vmem>>, vector<8x16x128xbf16>
    %169 = vector.shape_cast %168 : vector<8x16x128xbf16> to vector<128x128xbf16>
    %c1_181 = arith.constant 1 : index
    %c4_182 = arith.constant 4 : index
    %c0_183 = arith.constant 0 : index
    %c0_184 = arith.constant 0 : index
    %170 = vector.load %arg13[%c1_181, %c4_182, %c0_183, %c0_184] : memref<2x9x128x128xbf16, #tpu.memory_space<vmem>>, vector<1x1x128x128xbf16>
    %171 = vector.shape_cast %170 : vector<1x1x128x128xbf16> to vector<128x128xbf16>
    %cst_185 = arith.constant dense<0.000000e+00> : vector<128x128xf32>
    %172 = tpu.matmul %169, %171, %cst_185 {dimension_numbers = #tpu.dot_dimension_numbers<[1], [0], [0], [1], [0, 0, 1, 1], [], []>} : vector<128x128xbf16>, vector<128x128xbf16>, vector<128x128xf32> -> vector<128x128xf32>
    %173 = arith.addf %167, %172 : vector<128x128xf32>
    %c12_186 = arith.constant 12 : index
    %c24_187 = arith.constant 24 : index
    %c0_188 = arith.constant 0 : index
    %174 = vector.load %arg12[%c12_186, %c24_187, %c0_188] : memref<32x40x128xbf16, #tpu.memory_space<vmem>>, vector<8x16x128xbf16>
    %175 = vector.shape_cast %174 : vector<8x16x128xbf16> to vector<128x128xbf16>
    %c1_189 = arith.constant 1 : index
    %c5_190 = arith.constant 5 : index
    %c0_191 = arith.constant 0 : index
    %c0_192 = arith.constant 0 : index
    %176 = vector.load %arg13[%c1_189, %c5_190, %c0_191, %c0_192] : memref<2x9x128x128xbf16, #tpu.memory_space<vmem>>, vector<1x1x128x128xbf16>
    %177 = vector.shape_cast %176 : vector<1x1x128x128xbf16> to vector<128x128xbf16>
    %cst_193 = arith.constant dense<0.000000e+00> : vector<128x128xf32>
    %178 = tpu.matmul %175, %177, %cst_193 {dimension_numbers = #tpu.dot_dimension_numbers<[1], [0], [0], [1], [0, 0, 1, 1], [], []>} : vector<128x128xbf16>, vector<128x128xbf16>, vector<128x128xf32> -> vector<128x128xf32>
    %179 = arith.addf %173, %178 : vector<128x128xf32>
    %c24_194 = arith.constant 24 : index
    %c0_195 = arith.constant 0 : index
    %c0_196 = arith.constant 0 : index
    %180 = vector.load %arg12[%c24_194, %c0_195, %c0_196] : memref<32x40x128xbf16, #tpu.memory_space<vmem>>, vector<8x16x128xbf16>
    %181 = vector.shape_cast %180 : vector<8x16x128xbf16> to vector<128x128xbf16>
    %c1_197 = arith.constant 1 : index
    %c6_198 = arith.constant 6 : index
    %c0_199 = arith.constant 0 : index
    %c0_200 = arith.constant 0 : index
    %182 = vector.load %arg13[%c1_197, %c6_198, %c0_199, %c0_200] : memref<2x9x128x128xbf16, #tpu.memory_space<vmem>>, vector<1x1x128x128xbf16>
    %183 = vector.shape_cast %182 : vector<1x1x128x128xbf16> to vector<128x128xbf16>
    %cst_201 = arith.constant dense<0.000000e+00> : vector<128x128xf32>
    %184 = tpu.matmul %181, %183, %cst_201 {dimension_numbers = #tpu.dot_dimension_numbers<[1], [0], [0], [1], [0, 0, 1, 1], [], []>} : vector<128x128xbf16>, vector<128x128xbf16>, vector<128x128xf32> -> vector<128x128xf32>
    %185 = arith.addf %179, %184 : vector<128x128xf32>
    %c24_202 = arith.constant 24 : index
    %c12_203 = arith.constant 12 : index
    %c0_204 = arith.constant 0 : index
    %186 = vector.load %arg12[%c24_202, %c12_203, %c0_204] : memref<32x40x128xbf16, #tpu.memory_space<vmem>>, vector<8x16x128xbf16>
    %187 = vector.shape_cast %186 : vector<8x16x128xbf16> to vector<128x128xbf16>
    %c1_205 = arith.constant 1 : index
    %c7_206 = arith.constant 7 : index
    %c0_207 = arith.constant 0 : index
    %c0_208 = arith.constant 0 : index
    %188 = vector.load %arg13[%c1_205, %c7_206, %c0_207, %c0_208] : memref<2x9x128x128xbf16, #tpu.memory_space<vmem>>, vector<1x1x128x128xbf16>
    %189 = vector.shape_cast %188 : vector<1x1x128x128xbf16> to vector<128x128xbf16>
    %cst_209 = arith.constant dense<0.000000e+00> : vector<128x128xf32>
    %190 = tpu.matmul %187, %189, %cst_209 {dimension_numbers = #tpu.dot_dimension_numbers<[1], [0], [0], [1], [0, 0, 1, 1], [], []>} : vector<128x128xbf16>, vector<128x128xbf16>, vector<128x128xf32> -> vector<128x128xf32>
    %191 = arith.addf %185, %190 : vector<128x128xf32>
    %c24_210 = arith.constant 24 : index
    %c24_211 = arith.constant 24 : index
    %c0_212 = arith.constant 0 : index
    %192 = vector.load %arg12[%c24_210, %c24_211, %c0_212] : memref<32x40x128xbf16, #tpu.memory_space<vmem>>, vector<8x16x128xbf16>
    %193 = vector.shape_cast %192 : vector<8x16x128xbf16> to vector<128x128xbf16>
    %c1_213 = arith.constant 1 : index
    %c8_214 = arith.constant 8 : index
    %c0_215 = arith.constant 0 : index
    %c0_216 = arith.constant 0 : index
    %194 = vector.load %arg13[%c1_213, %c8_214, %c0_215, %c0_216] : memref<2x9x128x128xbf16, #tpu.memory_space<vmem>>, vector<1x1x128x128xbf16>
    %195 = vector.shape_cast %194 : vector<1x1x128x128xbf16> to vector<128x128xbf16>
    %cst_217 = arith.constant dense<0.000000e+00> : vector<128x128xf32>
    %196 = tpu.matmul %193, %195, %cst_217 {dimension_numbers = #tpu.dot_dimension_numbers<[1], [0], [0], [1], [0, 0, 1, 1], [], []>} : vector<128x128xbf16>, vector<128x128xbf16>, vector<128x128xf32> -> vector<128x128xf32>
    %197 = arith.addf %191, %196 : vector<128x128xf32>
    %c2_218 = arith.constant 2 : index
    %c0_219 = arith.constant 0 : index
    %198 = vector.load %arg7[%c2_218, %c0_219] : memref<4x128xf32, #tpu.memory_space<vmem>>, vector<1x128xf32>
    %199 = vector.shape_cast %198 : vector<1x128xf32> to vector<128xf32>
    %200 = vector.shape_cast %199 : vector<128xf32> to vector<1x128xf32>
    %201 = vector.broadcast %200 : vector<1x128xf32> to vector<128x128xf32>
    %202 = arith.mulf %197, %201 : vector<128x128xf32>
    %c2_220 = arith.constant 2 : index
    %c0_221 = arith.constant 0 : index
    %203 = vector.load %arg8[%c2_220, %c0_221] : memref<4x128xf32, #tpu.memory_space<vmem>>, vector<1x128xf32>
    %204 = vector.shape_cast %203 : vector<1x128xf32> to vector<128xf32>
    %205 = vector.shape_cast %204 : vector<128xf32> to vector<1x128xf32>
    %206 = vector.broadcast %205 : vector<1x128xf32> to vector<128x128xf32>
    %207 = arith.addf %202, %206 : vector<128x128xf32>
    %cst_222 = arith.constant 0.000000e+00 : f32
    %208 = vector.broadcast %cst_222 : f32 to vector<128x128xf32>
    %209 = arith.cmpf ogt, %207, %208 : vector<128x128xf32>
    %cst_223 = arith.constant 0.00999999977 : f32
    %210 = vector.broadcast %cst_223 : f32 to vector<128x128xf32>
    %211 = arith.mulf %210, %207 : vector<128x128xf32>
    %212 = arith.select %209, %207, %211 : vector<128x128xi1>, vector<128x128xf32>
    %c0_224 = arith.constant 0 : index
    %c0_225 = arith.constant 0 : index
    %213 = vector.load %arg15[%c0_224, %c0_225] : memref<128x128xf32, #tpu.memory_space<vmem>>, vector<128x128xf32>
    %214 = arith.truncf %212 : vector<128x128xf32> to vector<128x128xbf16>
    %c2_226 = arith.constant 2 : index
    %c0_227 = arith.constant 0 : index
    %c0_228 = arith.constant 0 : index
    %215 = vector.load %arg6[%c2_226, %c0_227, %c0_228] : memref<4x128x128xbf16, #tpu.memory_space<vmem>>, vector<1x128x128xbf16>
    %216 = vector.shape_cast %215 : vector<1x128x128xbf16> to vector<128x128xbf16>
    %cst_229 = arith.constant dense<0.000000e+00> : vector<128x128xf32>
    %217 = tpu.matmul %214, %216, %cst_229 {dimension_numbers = #tpu.dot_dimension_numbers<[1], [0], [0], [1], [0, 0, 1, 1], [], []>} : vector<128x128xbf16>, vector<128x128xbf16>, vector<128x128xf32> -> vector<128x128xf32>
    %218 = arith.addf %213, %217 : vector<128x128xf32>
    %c0_230 = arith.constant 0 : index
    %c0_231 = arith.constant 0 : index
    %219 = vector.load %arg15[%c0_230, %c0_231] : memref<128x128xf32, #tpu.memory_space<vmem>>, vector<128x128xf32>
    tpu.vector_store %arg15[%c0_230, %c0_231], %218 {strides = array<i32>} : memref<128x128xf32, #tpu.memory_space<vmem>>, vector<128x128xf32>,
    %c2_i32_232 = arith.constant 2 : i32
    %c0_i32_233 = arith.constant 0 : i32
    %c1_i32_234 = arith.constant 1 : i32
    %c0_i32_235 = arith.constant 0 : i32
    %c0_i32_236 = arith.constant 0 : i32
    %c0_i32_237 = arith.constant 0 : i32
    %220 = tpu.memref_slice %arg5[%c2_i32_232, %c0_i32_235, %c0_i32_236, %c0_i32_237] : memref<3x9x128x128xbf16, #tpu.memory_space<any>> -> memref<1x9x128x128xbf16, #tpu.memory_space<any>>
    %221 = tpu.memref_squeeze %220 : memref<1x9x128x128xbf16, #tpu.memory_space<any>> -> memref<9x128x128xbf16, #tpu.memory_space<any>>
    %c0_i32_238 = arith.constant 0 : i32
    %c0_i32_239 = arith.constant 0 : i32
    %c0_i32_240 = arith.constant 0 : i32
    %222 = tpu.memref_slice %arg13[%c0_i32_233, %c0_i32_238, %c0_i32_239, %c0_i32_240] : memref<2x9x128x128xbf16, #tpu.memory_space<vmem>> -> memref<1x9x128x128xbf16, #tpu.memory_space<vmem>>
    %223 = tpu.memref_squeeze %222 : memref<1x9x128x128xbf16, #tpu.memory_space<vmem>> -> memref<9x128x128xbf16, #tpu.memory_space<vmem>>
    %224 = tpu.memref_slice %arg14[%c1_i32_234] : memref<3x!tpu.dma_semaphore, #tpu.memory_space<semaphore_mem>> -> memref<1x!tpu.dma_semaphore, #tpu.memory_space<semaphore_mem>>
    %225 = tpu.memref_squeeze %224 : memref<1x!tpu.dma_semaphore, #tpu.memory_space<semaphore_mem>> -> memref<!tpu.dma_semaphore, #tpu.memory_space<semaphore_mem>>
    tpu.wait_dma2 semaphore(%225 : memref<!tpu.dma_semaphore, #tpu.memory_space<semaphore_mem>>) src(%221 : memref<9x128x128xbf16, #tpu.memory_space<any>>) dst(%223 : memref<9x128x128xbf16, #tpu.memory_space<vmem>>)
    %c12_241 = arith.constant 12 : index
    %c12_242 = arith.constant 12 : index
    %c0_243 = arith.constant 0 : index
    %226 = vector.load %arg12[%c12_241, %c12_242, %c0_243] : memref<32x40x128xbf16, #tpu.memory_space<vmem>>, vector<8x16x128xbf16>
    %227 = vector.shape_cast %226 : vector<8x16x128xbf16> to vector<128x128xbf16>
    %c0_244 = arith.constant 0 : index
    %c4_245 = arith.constant 4 : index
    %c0_246 = arith.constant 0 : index
    %c0_247 = arith.constant 0 : index
    %228 = vector.load %arg13[%c0_244, %c4_245, %c0_246, %c0_247] : memref<2x9x128x128xbf16, #tpu.memory_space<vmem>>, vector<1x1x128x128xbf16>
    %229 = vector.shape_cast %228 : vector<1x1x128x128xbf16> to vector<128x128xbf16>
    %cst_248 = arith.constant dense<0.000000e+00> : vector<128x128xf32>
    %230 = tpu.matmul %227, %229, %cst_248 {dimension_numbers = #tpu.dot_dimension_numbers<[1], [0], [0], [1], [0, 0, 1, 1], [], []>} : vector<128x128xbf16>, vector<128x128xbf16>, vector<128x128xf32> -> vector<128x128xf32>
    %c3_249 = arith.constant 3 : index
    %c0_250 = arith.constant 0 : index
    %231 = vector.load %arg7[%c3_249, %c0_250] : memref<4x128xf32, #tpu.memory_space<vmem>>, vector<1x128xf32>
    %232 = vector.shape_cast %231 : vector<1x128xf32> to vector<128xf32>
    %233 = vector.shape_cast %232 : vector<128xf32> to vector<1x128xf32>
    %234 = vector.broadcast %233 : vector<1x128xf32> to vector<128x128xf32>
    %235 = arith.mulf %230, %234 : vector<128x128xf32>
    %c3_251 = arith.constant 3 : index
    %c0_252 = arith.constant 0 : index
    %236 = vector.load %arg8[%c3_251, %c0_252] : memref<4x128xf32, #tpu.memory_space<vmem>>, vector<1x128xf32>
    %237 = vector.shape_cast %236 : vector<1x128xf32> to vector<128xf32>
    %238 = vector.shape_cast %237 : vector<128xf32> to vector<1x128xf32>
    %239 = vector.broadcast %238 : vector<1x128xf32> to vector<128x128xf32>
    %240 = arith.addf %235, %239 : vector<128x128xf32>
    %cst_253 = arith.constant 0.000000e+00 : f32
    %241 = vector.broadcast %cst_253 : f32 to vector<128x128xf32>
    %242 = arith.cmpf ogt, %240, %241 : vector<128x128xf32>
    %cst_254 = arith.constant 0.00999999977 : f32
    %243 = vector.broadcast %cst_254 : f32 to vector<128x128xf32>
    %244 = arith.mulf %243, %240 : vector<128x128xf32>
    %245 = arith.select %242, %240, %244 : vector<128x128xi1>, vector<128x128xf32>
    %c0_255 = arith.constant 0 : index
    %c0_256 = arith.constant 0 : index
    %246 = vector.load %arg15[%c0_255, %c0_256] : memref<128x128xf32, #tpu.memory_space<vmem>>, vector<128x128xf32>
    %247 = arith.truncf %245 : vector<128x128xf32> to vector<128x128xbf16>
    %c3_257 = arith.constant 3 : index
    %c0_258 = arith.constant 0 : index
    %c0_259 = arith.constant 0 : index
    %248 = vector.load %arg6[%c3_257, %c0_258, %c0_259] : memref<4x128x128xbf16, #tpu.memory_space<vmem>>, vector<1x128x128xbf16>
    %249 = vector.shape_cast %248 : vector<1x128x128xbf16> to vector<128x128xbf16>
    %cst_260 = arith.constant dense<0.000000e+00> : vector<128x128xf32>
    %250 = tpu.matmul %247, %249, %cst_260 {dimension_numbers = #tpu.dot_dimension_numbers<[1], [0], [0], [1], [0, 0, 1, 1], [], []>} : vector<128x128xbf16>, vector<128x128xbf16>, vector<128x128xf32> -> vector<128x128xf32>
    %251 = arith.addf %246, %250 : vector<128x128xf32>
    %c0_261 = arith.constant 0 : index
    %c0_262 = arith.constant 0 : index
    %252 = vector.load %arg15[%c0_261, %c0_262] : memref<128x128xf32, #tpu.memory_space<vmem>>, vector<128x128xf32>
    tpu.vector_store %arg15[%c0_261, %c0_262], %251 {strides = array<i32>} : memref<128x128xf32, #tpu.memory_space<vmem>>, vector<128x128xf32>,
    %c0_263 = arith.constant 0 : index
    %c0_264 = arith.constant 0 : index
    %253 = vector.load %arg15[%c0_263, %c0_264] : memref<128x128xf32, #tpu.memory_space<vmem>>, vector<128x128xf32>
    %c0_265 = arith.constant 0 : index
    %c0_266 = arith.constant 0 : index
    %254 = vector.load %arg9[%c0_265, %c0_266] : memref<1x128xf32, #tpu.memory_space<vmem>>, vector<1x128xf32>
    %255 = vector.shape_cast %254 : vector<1x128xf32> to vector<128xf32>
    %256 = vector.shape_cast %255 : vector<128xf32> to vector<1x128xf32>
    %257 = vector.broadcast %256 : vector<1x128xf32> to vector<128x128xf32>
    %258 = arith.mulf %253, %257 : vector<128x128xf32>
    %c0_267 = arith.constant 0 : index
    %c0_268 = arith.constant 0 : index
    %259 = vector.load %arg10[%c0_267, %c0_268] : memref<1x128xf32, #tpu.memory_space<vmem>>, vector<1x128xf32>
    %260 = vector.shape_cast %259 : vector<1x128xf32> to vector<128xf32>
    %261 = vector.shape_cast %260 : vector<128xf32> to vector<1x128xf32>
    %262 = vector.broadcast %261 : vector<1x128xf32> to vector<128x128xf32>
    %263 = arith.addf %258, %262 : vector<128x128xf32>
    %cst_269 = arith.constant 0.000000e+00 : f32
    %264 = vector.broadcast %cst_269 : f32 to vector<128x128xf32>
    %265 = arith.cmpf ogt, %263, %264 : vector<128x128xf32>
    %cst_270 = arith.constant 0.00999999977 : f32
    %266 = vector.broadcast %cst_270 : f32 to vector<128x128xf32>
    %267 = arith.mulf %266, %263 : vector<128x128xf32>
    %268 = arith.select %265, %263, %267 : vector<128x128xi1>, vector<128x128xf32>
    %269 = vector.shape_cast %268 : vector<128x128xf32> to vector<8x16x128xf32>
    %c0_271 = arith.constant 0 : index
    %c0_272 = arith.constant 0 : index
    %c0_273 = arith.constant 0 : index
    %c0_274 = arith.constant 0 : index
    %270 = vector.load %arg11[%c0_271, %c0_272, %c0_273, %c0_274] : memref<1x8x16x128xf32, #tpu.memory_space<vmem>>, vector<1x8x16x128xf32>
    %271 = vector.shape_cast %270 : vector<1x8x16x128xf32> to vector<8x16x128xf32>
    %272 = vector.shape_cast %269 : vector<8x16x128xf32> to vector<1x8x16x128xf32>
    tpu.vector_store %arg11[%c0_271, %c0_272, %c0_273, %c0_274], %272 {strides = array<i32>} : memref<1x8x16x128xf32, #tpu.memory_space<vmem>>, vector<1x8x16x128xf32>,
    return
  }
  func.func @transform_1(%arg0: i32, %arg1: i32) -> (i32, i32, i32) {
    %c0_i32 = arith.constant 0 : i32
    %c0_i32_0 = arith.constant 0 : i32
    %c0_i32_1 = arith.constant 0 : i32
    return %arg0, %c0_i32, %c0_i32_0 : i32, i32, i32
  }
  func.func @transform_2(%arg0: i32, %arg1: i32) -> (i32, i32) {
    %c0_i32 = arith.constant 0 : i32
    %c0_i32_0 = arith.constant 0 : i32
    %c0_i32_1 = arith.constant 0 : i32
    return %c0_i32, %c0_i32_0 : i32, i32
  }
  func.func @transform_4(%arg0: i32, %arg1: i32) -> (i32, i32, i32) {
    %c0_i32 = arith.constant 0 : i32
    %c0_i32_0 = arith.constant 0 : i32
    %c0_i32_1 = arith.constant 0 : i32
    %c0_i32_2 = arith.constant 0 : i32
    return %c0_i32, %c0_i32_0, %c0_i32_1 : i32, i32, i32
  }
  func.func @transform_5(%arg0: i32, %arg1: i32) -> (i32, i32) {
    %c0_i32 = arith.constant 0 : i32
    %c0_i32_0 = arith.constant 0 : i32
    %c0_i32_1 = arith.constant 0 : i32
    return %c0_i32, %c0_i32_0 : i32, i32
  }
  func.func @transform_6(%arg0: i32, %arg1: i32) -> (i32, i32) {
    %c0_i32 = arith.constant 0 : i32
    %c0_i32_0 = arith.constant 0 : i32
    %c0_i32_1 = arith.constant 0 : i32
    return %c0_i32, %c0_i32_0 : i32, i32
  }
  func.func @transform_7(%arg0: i32, %arg1: i32) -> (i32, i32) {
    %c0_i32 = arith.constant 0 : i32
    %c0_i32_0 = arith.constant 0 : i32
    %c0_i32_1 = arith.constant 0 : i32
    return %c0_i32, %c0_i32_0 : i32, i32
  }
  func.func @transform_8(%arg0: i32, %arg1: i32) -> (i32, i32) {
    %c0_i32 = arith.constant 0 : i32
    %c0_i32_0 = arith.constant 0 : i32
    %c0_i32_1 = arith.constant 0 : i32
    return %c0_i32, %c0_i32_0 : i32, i32
  }
  func.func @transform_9(%arg0: i32, %arg1: i32) -> (i32, i32, i32, i32) {
    %c0_i32 = arith.constant 0 : i32
    %c0_i32_0 = arith.constant 0 : i32
    %c0_i32_1 = arith.constant 0 : i32
    return %arg0, %arg1, %c0_i32, %c0_i32_0 : i32, i32, i32, i32
  }
}

</mosaic_0001>

<llo_original>
// kernel: tpu_custom_call.1
$region0: #{tpu_custom_call.1}
  #allocation0 [shape = 'u32[]', space=smem, size = 0x4, offset = 0x4, fixed_abs, tag = 'smem constant byte address 0x4 - core index']
  #allocation1 [shape = 'u32[144,128]{1,0:T(1,128)}', space=vmem, size = 0x12000, scoped, tag = 'internal scratch']
  #allocation2 [shape = 'bf16[32,40,128]{2,1,0:T(8,128)(2,1)}', space=vmem, size = 0x50000, scoped, tag = 'scratch operand']
  #allocation3 [shape = 'bf16[2,9,128,128]{3,2,1,0:T(16,128)(2,1)}', space=vmem, size = 0x90000, scoped, tag = 'scratch operand']
  #allocation4 [shape = 's32[3]{0}', space=sflag, size = 0xc, scoped, tag = 'scratch operand']
  #allocation5 [shape = 'f32[128,128]{1,0:T(8,128)}', space=vmem, size = 0x10000, scoped, tag = 'scratch operand']
  #allocation19 [shape = 's32[]', space=sflag, size = 0x4, offset = 0, fixed_abs, tag = 'sflag constant byte address 0x0 - dummy sync flag']
  #allocation20 [shape = 's32[]', space=sflag, size = 0x4, offset = 0, fixed_abs, tag = 'sflag constant byte address 0x0 - dummy sync flag']
  #allocation21 [shape = 'u32[]', space=smem, size = 0x4, offset = 0x44, fixed_abs, tag = 'smem constant byte address 0x44 - assertion arg 0']
  #allocation22 [shape = 'u32[]', space=smem, size = 0x4, offset = 0x48, fixed_abs, tag = 'smem constant byte address 0x48 - assertion arg 1']
  #allocation23 [shape = 's32[]', space=sflag, size = 0x4, offset = 0, fixed_abs, tag = 'sflag constant byte address 0x0 - dummy sync flag']
  #allocation24 [shape = 's32[]', space=sflag, size = 0x4, offset = 0, fixed_abs, tag = 'sflag constant byte address 0x0 - dummy sync flag']
  #allocation25 [shape = 's32[]', space=sflag, size = 0x4, offset = 0, fixed_abs, tag = 'sflag constant byte address 0x0 - dummy sync flag']
  #allocation26 [shape = 's32[]', space=sflag, size = 0x4, offset = 0, fixed_abs, tag = 'sflag constant byte address 0x0 - dummy sync flag']
  #allocation27 [shape = 's32[]', space=sflag, size = 0x4, offset = 0, fixed_abs, tag = 'sflag constant byte address 0x0 - dummy sync flag']
  #allocation28 [shape = 's32[]', space=sflag, size = 0x4, offset = 0, fixed_abs, tag = 'sflag constant byte address 0x0 - dummy sync flag']
  %s0 = inlined_call_operand.hbm [shape: bf16[2,40,40,128], index: 0, kind: input, shape index: {}]
  %s1 = inlined_call_operand.hbm [shape: f32[2,1,128], index: 1, kind: input, shape index: {}]
  %s2 = inlined_call_operand.hbm [shape: bf16[128,128], index: 2, kind: input, shape index: {}]
  %s3 = inlined_call_operand.hbm [shape: bf16[3,9,128,128], index: 3, kind: input, shape index: {}]
  %s4 = inlined_call_operand.hbm [shape: bf16[4,128,128], index: 4, kind: input, shape index: {}]
  %s5 = inlined_call_operand.hbm [shape: f32[4,128], index: 5, kind: input, shape index: {}]
  %s6 = inlined_call_operand.hbm [shape: f32[4,128], index: 6, kind: input, shape index: {}]
  %s7 = inlined_call_operand.hbm [shape: f32[1,128], index: 7, kind: input, shape index: {}]
  %s8 = inlined_call_operand.hbm [shape: f32[1,128], index: 8, kind: input, shape index: {}]
  %s9 = inlined_call_operand.hbm [shape: f32[2,16,16,128], index: 9, kind: output, shape index: {}]
  %s10 = sld [smem:[#allocation0]]
  $region105: #{tpu_custom_call.1} parent=0
    _
  %s12 = ssub.s32 1, %s10
  %s13 = scalar_select 0, %s12, %s10
  $region1: #{tpu_custom_call.1} parent=0
    #allocation6 [shape = 'u8[1024]{0}', space=vmem, size = 0x400, scoped, tag = 'input window, operand 1']
    #allocation7 [shape = 's32[2]{0}', space=sflag, size = 0x8, scoped, tag = 'scoped memory for tpu_custom_call.1']
    #allocation8 [shape = 's32[2]{0}', space=sflag, size = 0x8, scoped, tag = 'scoped memory for tpu_custom_call.1']
    #allocation9 [shape = 'u8[32768]{0}', space=vmem, size = 0x8000, scoped, tag = 'input window, operand 2, single buffered']
    #allocation10 [shape = 's32[1]{0}', space=sflag, size = 0x4, scoped, tag = 'scoped memory for tpu_custom_call.1']
    #allocation11 [shape = 'u8[131072]{0}', space=vmem, size = 0x20000, scoped, tag = 'input window, operand 4, single buffered']
    #allocation12 [shape = 'u8[2048]{0}', space=vmem, size = 0x800, scoped, tag = 'input window, operand 5, single buffered']
    #allocation13 [shape = 's32[1]{0}', space=sflag, size = 0x4, scoped, tag = 'scoped memory for tpu_custom_call.1']
    #allocation14 [shape = 'u8[2048]{0}', space=vmem, size = 0x800, scoped, tag = 'input window, operand 6, single buffered']
    #allocation15 [shape = 'u8[512]{0}', space=vmem, size = 0x400, scoped, tag = 'input window, operand 7, single buffered']
    #allocation16 [shape = 's32[1]{0}', space=sflag, size = 0x4, scoped, tag = 'scoped memory for tpu_custom_call.1']
    #allocation17 [shape = 'u8[512]{0}', space=vmem, size = 0x400, scoped, tag = 'input window, operand 8, single buffered']
    #allocation18 [shape = 'u8[131072]{0}', space=vmem, size = 0x20000, scoped, tag = 'output window, operand 0']
    %14 = vsyncpa [#allocation7], 0
    %s15 = scalar_lea.sflag [#allocation7], 1
    %16 = vsyncpa %s15, 0
    %17 = vsyncpa [#allocation10], 0
    %18 = vsyncpa [#allocation13], 0
    %19 = vsyncpa [#allocation16], 0
    %20 = vsyncpa [#allocation8], 0
    %s21 = scalar_lea.sflag [#allocation8], 1
    %22 = vsyncpa %s21, 0
    loop: start=0, step=1, limit=6
    $region2: #{tpu_custom_call.1} parent=1 // loop_pre_header
      _
    $region3: #{tpu_custom_call.1} parent=1 // loop_header
      %s24 = sphi 0, %s28
      %p25 = scmp.ge.s32.totalorder %s24, 6
      %s31 = sphi 0, %s43
      %s32 = sphi 0, %s39
      %s33 = sphi 0, %s31
      %s34 = sphi 0, %s32
      %s35 = sphi 0, %s33
      %s36 = sphi 0, %s34
      %s46 = sphi 0, %s48
      %s49 = sphi 0, %s46
      %s50 = sphi 0, %s49
      %s66 = sphi 0, %s50
      %s70 = sphi 0, %s70
      %s72 = sphi 0, %s70
      %s73 = sphi 0, %s72
      %s87 = sphi 0, %s73
      %s91 = sphi 0, %s91
      %s93 = sphi 0, %s91
      %s94 = sphi 0, %s93
      %s108 = sphi 0, %s94
      %s112 = sphi 0, %s112
      %s114 = sphi 0, %s112
      %s115 = sphi 0, %s114
      %s129 = sphi 0, %s115
      %s133 = sphi 0, %s133
      %s135 = sphi 0, %s133
      %s136 = sphi 0, %s135
      %s150 = sphi 0, %s136
      %s154 = sphi 0, %s154
      %s156 = sphi 0, %s154
      %s157 = sphi 0, %s156
      %s171 = sphi 0, %s157
      %s175 = sphi 0, %s175
      %s177 = sphi 0, %s175
      %s178 = sphi 0, %s177
      %s192 = sphi 0, %s178
      %s200 = sphi 0, %s202
      %s203 = sphi 0, %s200
      %s204 = sphi 0, %s203
      %s220 = sphi 0, %s204
    $region4: #{tpu_custom_call.1} parent=1 // loop_header_branch
      %27 = sbr.rel (%p25) target = $region8
    $region5: #{tpu_custom_call.1} parent=1 // loop_body
      %s29 = ssub.s32 %s24, 1
      %s30 = ssub.s32 %s24, 2
      %s37 = sadd.s32 1, %s32
      %p38 = scmp.ge.s32.totalorder %s37, 2
      %s39 = scalar_select %p38, 0, %s37
      %s40 = sadd.s32 1, %s31
      %s41 = scalar_select %p38, %s40, %s31
      %p42 = scmp.ge.s32.totalorder %s41, 2
      %s43 = scalar_select %p42, 0, %s41
      %s44 = ssub.s32 %s31, %s43
      %p45 = scmp.eq.s32.totalorder %s44, 0
      %s47 = sadd.s32 %s46, 1
      %s48 = scalar_select %p45, %s46, %s47
      %p51 = pneg %p45
      %p52 = scmp.eq.s32.totalorder %s24, 3
      %p53 = por %p51, %p52
      %p54 = scmp.ne.s32.totalorder %s46, %s49
      %p55 = scmp.eq.s32.totalorder %s24, 0
      %p56 = por %p54, %p55
      %p57 = scmp.ne.s32.totalorder %s46, %s49
      %p58 = scmp.eq.s32.totalorder %s29, 3
      %p59 = por %p57, %p58
      %p60 = scmp.ne.s32.totalorder %s49, %s50
      %p61 = scmp.eq.s32.totalorder %s29, 0
      %p62 = por %p60, %p61
      %p63 = scmp.ne.s32.totalorder %s49, %s50
      %p64 = scmp.eq.s32.totalorder %s30, 3
      %p65 = por %p63, %p64
      %p67 = scmp.ne.s32.totalorder %s50, %s66
      %p68 = scmp.eq.s32.totalorder %s30, 0
      %p69 = por %p67, %p68
      %s71 = sadd.s32 %s70, 1
      %p74 = scmp.eq.s32.totalorder %s24, 3
      %p75 = scmp.ne.s32.totalorder %s70, %s72
      %p76 = scmp.eq.s32.totalorder %s24, 0
      %p77 = por %p75, %p76
      %p78 = scmp.ne.s32.totalorder %s70, %s72
      %p79 = scmp.eq.s32.totalorder %s29, 3
      %p80 = por %p78, %p79
      %p81 = scmp.ne.s32.totalorder %s72, %s73
      %p82 = scmp.eq.s32.totalorder %s29, 0
      %p83 = por %p81, %p82
      %p84 = scmp.ne.s32.totalorder %s72, %s73
      %p85 = scmp.eq.s32.totalorder %s30, 3
      %p86 = por %p84, %p85
      %p88 = scmp.ne.s32.totalorder %s73, %s87
      %p89 = scmp.eq.s32.totalorder %s30, 0
      %p90 = por %p88, %p89
      %s92 = sadd.s32 %s91, 1
      %p95 = scmp.eq.s32.totalorder %s24, 3
      %p96 = scmp.ne.s32.totalorder %s91, %s93
      %p97 = scmp.eq.s32.totalorder %s24, 0
      %p98 = por %p96, %p97
      %p99 = scmp.ne.s32.totalorder %s91, %s93
      %p100 = scmp.eq.s32.totalorder %s29, 3
      %p101 = por %p99, %p100
      %p102 = scmp.ne.s32.totalorder %s93, %s94
      %p103 = scmp.eq.s32.totalorder %s29, 0
      %p104 = por %p102, %p103
      %p105 = scmp.ne.s32.totalorder %s93, %s94
      %p106 = scmp.eq.s32.totalorder %s30, 3
      %p107 = por %p105, %p106
      %p109 = scmp.ne.s32.totalorder %s94, %s108
      %p110 = scmp.eq.s32.totalorder %s30, 0
      %p111 = por %p109, %p110
      %s113 = sadd.s32 %s112, 1
      %p116 = scmp.eq.s32.totalorder %s24, 3
      %p117 = scmp.ne.s32.totalorder %s112, %s114
      %p118 = scmp.eq.s32.totalorder %s24, 0
      %p119 = por %p117, %p118
      %p120 = scmp.ne.s32.totalorder %s112, %s114
      %p121 = scmp.eq.s32.totalorder %s29, 3
      %p122 = por %p120, %p121
      %p123 = scmp.ne.s32.totalorder %s114, %s115
      %p124 = scmp.eq.s32.totalorder %s29, 0
      %p125 = por %p123, %p124
      %p126 = scmp.ne.s32.totalorder %s114, %s115
      %p127 = scmp.eq.s32.totalorder %s30, 3
      %p128 = por %p126, %p127
      %p130 = scmp.ne.s32.totalorder %s115, %s129
      %p131 = scmp.eq.s32.totalorder %s30, 0
      %p132 = por %p130, %p131
      %s134 = sadd.s32 %s133, 1
      %p137 = scmp.eq.s32.totalorder %s24, 3
      %p138 = scmp.ne.s32.totalorder %s133, %s135
      %p139 = scmp.eq.s32.totalorder %s24, 0
      %p140 = por %p138, %p139
      %p141 = scmp.ne.s32.totalorder %s133, %s135
      %p142 = scmp.eq.s32.totalorder %s29, 3
      %p143 = por %p141, %p142
      %p144 = scmp.ne.s32.totalorder %s135, %s136
      %p145 = scmp.eq.s32.totalorder %s29, 0
      %p146 = por %p144, %p145
      %p147 = scmp.ne.s32.totalorder %s135, %s136
      %p148 = scmp.eq.s32.totalorder %s30, 3
      %p149 = por %p147, %p148
      %p151 = scmp.ne.s32.totalorder %s136, %s150
      %p152 = scmp.eq.s32.totalorder %s30, 0
      %p153 = por %p151, %p152
      %s155 = sadd.s32 %s154, 1
      %p158 = scmp.eq.s32.totalorder %s24, 3
      %p159 = scmp.ne.s32.totalorder %s154, %s156
      %p160 = scmp.eq.s32.totalorder %s24, 0
      %p161 = por %p159, %p160
      %p162 = scmp.ne.s32.totalorder %s154, %s156
      %p163 = scmp.eq.s32.totalorder %s29, 3
      %p164 = por %p162, %p163
      %p165 = scmp.ne.s32.totalorder %s156, %s157
      %p166 = scmp.eq.s32.totalorder %s29, 0
      %p167 = por %p165, %p166
      %p168 = scmp.ne.s32.totalorder %s156, %s157
      %p169 = scmp.eq.s32.totalorder %s30, 3
      %p170 = por %p168, %p169
      %p172 = scmp.ne.s32.totalorder %s157, %s171
      %p173 = scmp.eq.s32.totalorder %s30, 0
      %p174 = por %p172, %p173
      %s176 = sadd.s32 %s175, 1
      %p179 = scmp.eq.s32.totalorder %s24, 3
      %p180 = scmp.ne.s32.totalorder %s175, %s177
      %p181 = scmp.eq.s32.totalorder %s24, 0
      %p182 = por %p180, %p181
      %p183 = scmp.ne.s32.totalorder %s175, %s177
      %p184 = scmp.eq.s32.totalorder %s29, 3
      %p185 = por %p183, %p184
      %p186 = scmp.ne.s32.totalorder %s177, %s178
      %p187 = scmp.eq.s32.totalorder %s29, 0
      %p188 = por %p186, %p187
      %p189 = scmp.ne.s32.totalorder %s177, %s178
      %p190 = scmp.eq.s32.totalorder %s30, 3
      %p191 = por %p189, %p190
      %p193 = scmp.ne.s32.totalorder %s178, %s192
      %p194 = scmp.eq.s32.totalorder %s30, 0
      %p195 = por %p193, %p194
      %s196 = ssub.s32 %s31, %s43
      %s197 = ssub.s32 %s32, %s39
      %s198 = sor.u32 %s196, %s197
      %p199 = scmp.eq.s32.totalorder %s198, 0
      %s201 = sadd.s32 %s200, 1
      %s202 = scalar_select %p199, %s200, %s201
      %p205 = pneg %p199
      %p206 = scmp.eq.s32.totalorder %s24, 3
      %p207 = por %p205, %p206
      %p208 = scmp.ne.s32.totalorder %s200, %s203
      %p209 = scmp.eq.s32.totalorder %s24, 0
      %p210 = por %p208, %p209
      %p211 = scmp.ne.s32.totalorder %s200, %s203
      %p212 = scmp.eq.s32.totalorder %s29, 3
      %p213 = por %p211, %p212
      %p214 = scmp.ne.s32.totalorder %s203, %s204
      %p215 = scmp.eq.s32.totalorder %s29, 0
      %p216 = por %p214, %p215
      %p217 = scmp.ne.s32.totalorder %s203, %s204
      %p218 = scmp.eq.s32.totalorder %s30, 3
      %p219 = por %p217, %p218
      %p221 = scmp.ne.s32.totalorder %s204, %s220
      %p222 = scmp.eq.s32.totalorder %s30, 0
      %p223 = por %p221, %p222
      %p224 = scmp.le.s32.totalorder 1, %s24
      %p225 = scmp.lt.s32.totalorder %s24, 5
      %p226 = pnand %p224, %p225
      %p227 = pneg %p226
      // Predicated region
      $region9: #{tpu_custom_call.1} parent=5 // pred_check
        _
      $region10: #{tpu_custom_call.1} parent=5 // pred_check_branch
        %229 = sbr.rel (%p226) target = $region12
      $region11: #{tpu_custom_call.1} parent=5 // pred_region
        %s230 = ssub.s32 %s24, 1
        // Predicated region
        $region13: #{tpu_custom_call.1} parent=11 // pred_check
          %p231 = pneg %p83
        $region14: #{tpu_custom_call.1} parent=11 // pred_check_branch
          %233 = sbr.rel (%p231) target = $region16
        $region15: #{tpu_custom_call.1} parent=11 // pred_region
          %s235 = ssub.s32 1024, 1024
          %236 = vsyncadd [#allocation10], %s235
          %s237 = sshll.u32 [#allocation9], 4
          %s238 = int_to_ptr.vmem [resolvable:$true] %s237
          %243 = dma.hbm_to_vmem [thread:$0]  %s2, 1024, %s238, [#allocation10], 64, 64, 4
        $region16: #{tpu_custom_call.1} parent=11 // pred_fallthru
          _
        // Predicated region
        $region17: #{tpu_custom_call.1} parent=11 // pred_check
          %p244 = pneg %p104
        $region18: #{tpu_custom_call.1} parent=11 // pred_check_branch
          %246 = sbr.rel (%p244) target = $region20
        $region19: #{tpu_custom_call.1} parent=11 // pred_region
          %s248 = ssub.s32 4096, 4096
          %249 = vsyncadd [#allocation10], %s248
          %s250 = sshll.u32 [#allocation11], 4
          %s251 = int_to_ptr.vmem [resolvable:$true] %s250
          %256 = dma.hbm_to_vmem [thread:$0]  %s4, 4096, %s251, [#allocation10], 64, 64, 4
        $region20: #{tpu_custom_call.1} parent=11 // pred_fallthru
          _
        // Predicated region
        $region21: #{tpu_custom_call.1} parent=11 // pred_check
          %p257 = pneg %p125
        $region22: #{tpu_custom_call.1} parent=11 // pred_check_branch
          %259 = sbr.rel (%p257) target = $region24
        $region23: #{tpu_custom_call.1} parent=11 // pred_region
          %s261 = ssub.s32 64, 64
          %262 = vsyncadd [#allocation13], %s261
          %s264 = sshll.u32 [#allocation12], 4
          %s265 = int_to_ptr.vmem [resolvable:$true] %s264
          %267 = dma.hbm_to_vmem [thread:$0]  %s5, 64, %s265, [#allocation13]
        $region24: #{tpu_custom_call.1} parent=11 // pred_fallthru
          _
        // Predicated region
        $region25: #{tpu_custom_call.1} parent=11 // pred_check
          %p268 = pneg %p146
        $region26: #{tpu_custom_call.1} parent=11 // pred_check_branch
          %270 = sbr.rel (%p268) target = $region28
        $region27: #{tpu_custom_call.1} parent=11 // pred_region
          %s272 = ssub.s32 64, 64
          %273 = vsyncadd [#allocation13], %s272
          %s275 = sshll.u32 [#allocation14], 4
          %s276 = int_to_ptr.vmem [resolvable:$true] %s275
          %278 = dma.hbm_to_vmem [thread:$0]  %s6, 64, %s276, [#allocation13]
        $region28: #{tpu_custom_call.1} parent=11 // pred_fallthru
          _
        // Predicated region
        $region29: #{tpu_custom_call.1} parent=11 // pred_check
          %p279 = pneg %p167
        $region30: #{tpu_custom_call.1} parent=11 // pred_check_branch
          %281 = sbr.rel (%p279) target = $region32
        $region31: #{tpu_custom_call.1} parent=11 // pred_region
          %s283 = ssub.s32 16, 16
          %284 = vsyncadd [#allocation16], %s283
          %s286 = sshll.u32 [#allocation15], 4
          %s287 = int_to_ptr.vmem [resolvable:$true] %s286
          %289 = dma.hbm_to_vmem [thread:$0]  %s7, 16, %s287, [#allocation16]
        $region32: #{tpu_custom_call.1} parent=11 // pred_fallthru
          _
        // Predicated region
        $region33: #{tpu_custom_call.1} parent=11 // pred_check
          %p290 = pneg %p188
        $region34: #{tpu_custom_call.1} parent=11 // pred_check_branch
          %292 = sbr.rel (%p290) target = $region36
        $region35: #{tpu_custom_call.1} parent=11 // pred_region
          %s294 = ssub.s32 16, 16
          %295 = vsyncadd [#allocation16], %s294
          %s297 = sshll.u32 [#allocation17], 4
          %s298 = int_to_ptr.vmem [resolvable:$true] %s297
          %300 = dma.hbm_to_vmem [thread:$0]  %s8, 16, %s298, [#allocation16]
        $region36: #{tpu_custom_call.1} parent=11 // pred_fallthru
          _
      $region12: #{tpu_custom_call.1} parent=5 // pred_fallthru
        _
      %p301 = scmp.lt.s32.totalorder %s24, 4
      // Predicated region
      $region37: #{tpu_custom_call.1} parent=5 // pred_check
        %p302 = pneg %p301
      $region38: #{tpu_custom_call.1} parent=5 // pred_check_branch
        %304 = sbr.rel (%p302) target = $region40
      $region39: #{tpu_custom_call.1} parent=5 // pred_region
        // Predicated region
        $region41: #{tpu_custom_call.1} parent=39 // pred_check
          %p305 = pneg %p56
        $region42: #{tpu_custom_call.1} parent=39 // pred_check_branch
          %307 = sbr.rel (%p305) target = $region44
        $region43: #{tpu_custom_call.1} parent=39 // pred_region
          %s308 = sand.u32 %s46, 1
          %s309 = scalar_lea.sflag [#allocation7], %s308
          %s310 = sand.u32 %s46, 1
          %s311 = scalar_lea.vmem [#allocation6], %s310
          %s313 = ssub.s32 16, 16
          %314 = vsyncadd %s309, %s313
          %s315 = smul.addr %s31, 16
          %s316 = scalar_lea.hbm %s1, %s315
          %s318 = sshll.u32 %s311, 4
          %s319 = int_to_ptr.vmem [resolvable:$true] %s318
          %321 = dma.hbm_to_vmem [thread:$0]  %s316, 16, %s319, %s309
        $region44: #{tpu_custom_call.1} parent=39 // pred_fallthru
          _
      $region40: #{tpu_custom_call.1} parent=5 // pred_fallthru
        _
      %p322 = scmp.le.s32.totalorder 1, %s24
      %p323 = scmp.lt.s32.totalorder %s24, 5
      %p324 = pnand %p322, %p323
      %p325 = pneg %p324
      // Predicated region
      $region45: #{tpu_custom_call.1} parent=5 // pred_check
        _
      $region46: #{tpu_custom_call.1} parent=5 // pred_check_branch
        %327 = sbr.rel (%p324) target = $region48
      $region47: #{tpu_custom_call.1} parent=5 // pred_region
        %s328 = ssub.s32 %s24, 1
        %s329 = sand.u32 %s49, 1
        %s330 = scalar_lea.sflag [#allocation7], %s329
        %s331 = sand.u32 %s49, 1
        %s332 = scalar_lea.vmem [#allocation6], %s331
        // Predicated region
        $region49: #{tpu_custom_call.1} parent=47 // pred_check
          %p333 = pneg %p62
        $region50: #{tpu_custom_call.1} parent=47 // pred_check_branch
          %335 = sbr.rel (%p333) target = $region52
        $region51: #{tpu_custom_call.1} parent=47 // pred_region
          %336 = dma.done %s330, 16
        $region52: #{tpu_custom_call.1} parent=47 // pred_fallthru
          _
        // Predicated region
        $region53: #{tpu_custom_call.1} parent=47 // pred_check
          %p337 = pneg %p83
        $region54: #{tpu_custom_call.1} parent=47 // pred_check_branch
          %339 = sbr.rel (%p337) target = $region56
        $region55: #{tpu_custom_call.1} parent=47 // pred_region
          %340 = dma.done [#allocation10], 1024
        $region56: #{tpu_custom_call.1} parent=47 // pred_fallthru
          _
        // Predicated region
        $region57: #{tpu_custom_call.1} parent=47 // pred_check
          %p341 = pneg %p104
        $region58: #{tpu_custom_call.1} parent=47 // pred_check_branch
          %343 = sbr.rel (%p341) target = $region60
        $region59: #{tpu_custom_call.1} parent=47 // pred_region
          %344 = dma.done [#allocation10], 4096
        $region60: #{tpu_custom_call.1} parent=47 // pred_fallthru
          _
        // Predicated region
        $region61: #{tpu_custom_call.1} parent=47 // pred_check
          %p345 = pneg %p125
        $region62: #{tpu_custom_call.1} parent=47 // pred_check_branch
          %347 = sbr.rel (%p345) target = $region64
        $region63: #{tpu_custom_call.1} parent=47 // pred_region
          %348 = dma.done [#allocation13], 64
        $region64: #{tpu_custom_call.1} parent=47 // pred_fallthru
          _
        // Predicated region
        $region65: #{tpu_custom_call.1} parent=47 // pred_check
          %p349 = pneg %p146
        $region66: #{tpu_custom_call.1} parent=47 // pred_check_branch
          %351 = sbr.rel (%p349) target = $region68
        $region67: #{tpu_custom_call.1} parent=47 // pred_region
          %352 = dma.done [#allocation13], 64
        $region68: #{tpu_custom_call.1} parent=47 // pred_fallthru
          _
        // Predicated region
        $region69: #{tpu_custom_call.1} parent=47 // pred_check
          %p353 = pneg %p167
        $region70: #{tpu_custom_call.1} parent=47 // pred_check_branch
          %355 = sbr.rel (%p353) target = $region72
        $region71: #{tpu_custom_call.1} parent=47 // pred_region
          %356 = dma.done [#allocation16], 16
        $region72: #{tpu_custom_call.1} parent=47 // pred_fallthru
          _
        // Predicated region
        $region73: #{tpu_custom_call.1} parent=47 // pred_check
          %p357 = pneg %p188
        $region74: #{tpu_custom_call.1} parent=47 // pred_check_branch
          %359 = sbr.rel (%p357) target = $region76
        $region75: #{tpu_custom_call.1} parent=47 // pred_region
          %360 = dma.done [#allocation16], 16
        $region76: #{tpu_custom_call.1} parent=47 // pred_fallthru
          _
        %s361 = sand.u32 %s49, 1
        %s362 = scalar_lea.sflag [#allocation7], %s361
        %s363 = sand.u32 %s49, 1
        %s364 = scalar_lea.vmem [#allocation6], %s363
        %p365 = pneg %p62
        %p366 = pneg %p59
        %p367 = pneg %p83
        %p368 = pneg %p80
        %p369 = pneg %p104
        %p370 = pneg %p101
        %p371 = pneg %p125
        %p372 = pneg %p122
        %p373 = pneg %p146
        %p374 = pneg %p143
        %p375 = pneg %p167
        %p376 = pneg %p164
        %p377 = pneg %p188
        %p378 = pneg %p185
        %p379 = pneg %p216
        %p380 = pneg %p213
        %s381 = sand.u32 %s203, 1
        %s382 = scalar_lea.sflag [#allocation8], %s381
        %s383 = sand.u32 %s203, 1
        %s384 = smul.addr %s383, 128
        %s385 = scalar_lea.vmem [#allocation18], %s384
        %s386 = smul.u32 8, %s34
        %s388 = smul.u32 %s34, 8
        %s389 = smul.u32 %s388, 5
        %s390 = smul.u32 %s33, 200
        %s391 = sadd.s32 %s389, %s390
        %s392 = smul.addr %s391, 64
        %s393 = scalar_lea.hbm %s0, %s392
        // Predicated region
        $region77: #{tpu_custom_call.1} parent=47 // pred_check
          _
        $region78: #{tpu_custom_call.1} parent=47 // pred_check_branch
          %395 = sbr.rel target = $region80
        $region79: #{tpu_custom_call.1} parent=47 // pred_region
          %396 = sst [smem:[#allocation21]] [#allocation20]
          %397 = sst [smem:[#allocation22]] [#allocation19]
        $region80: #{tpu_custom_call.1} parent=47 // pred_fallthru
          _
        %399 = shalt.err (0)
        %s401 = sshll.u32 [#allocation2], 4
        %s402 = int_to_ptr.vmem [resolvable:$true] %s401
        %404 = dma.hbm_to_vmem [thread:$0]  %s393, 10240, %s402, [#allocation4]
        %s405 = scalar_lea.sflag [#allocation4], 1
        // Predicated region
        $region81: #{tpu_custom_call.1} parent=47 // pred_check
          _
        $region82: #{tpu_custom_call.1} parent=47 // pred_check_branch
          %407 = sbr.rel target = $region84
        $region83: #{tpu_custom_call.1} parent=47 // pred_region
          %408 = sst [smem:[#allocation21]] [#allocation24]
          %409 = sst [smem:[#allocation22]] [#allocation23]
        $region84: #{tpu_custom_call.1} parent=47 // pred_fallthru
          _
        %411 = shalt.err (0)
        %s413 = sshll.u32 [#allocation3], 4
        %s414 = int_to_ptr.vmem [resolvable:$true] %s413
        %416 = dma.hbm_to_vmem [thread:$0]  %s3, 9216, %s414, %s405
        %s417 = smul.u32 4, 32
        %s418 = smul.u32 %s417, 5
        %s419 = smul.u32 %s418, 1
        %s420 = sshll.u32 %s419, 4
        %421 = dma.done [#allocation4], %s420
        %v422 = vld [vmem:[%s332] sm:$0x1]
        %v424 = vlaneseq
        %v425 = vshrl.u32 %v424, 7
        %v426 = vsub.s32 0, %v425
        %v427 = vrot.slane %v422, %v426
        %429 = vst [vmem:[#allocation5] sm:$0xff] %v427
        %430 = vst [vmem:[#allocation5 + $0x8] sm:$0xff] %v427
        %431 = vst [vmem:[#allocation5 + $0x10] sm:$0xff] %v427
        %432 = vst [vmem:[#allocation5 + $0x18] sm:$0xff] %v427
        %433 = vst [vmem:[#allocation5 + $0x20] sm:$0xff] %v427
        %434 = vst [vmem:[#allocation5 + $0x28] sm:$0xff] %v427
        %435 = vst [vmem:[#allocation5 + $0x30] sm:$0xff] %v427
        %436 = vst [vmem:[#allocation5 + $0x38] sm:$0xff] %v427
        %437 = vst [vmem:[#allocation5 + $0x40] sm:$0xff] %v427
        %438 = vst [vmem:[#allocation5 + $0x48] sm:$0xff] %v427
        %439 = vst [vmem:[#allocation5 + $0x50] sm:$0xff] %v427
        %440 = vst [vmem:[#allocation5 + $0x58] sm:$0xff] %v427
        %441 = vst [vmem:[#allocation5 + $0x60] sm:$0xff] %v427
        %442 = vst [vmem:[#allocation5 + $0x68] sm:$0xff] %v427
        %443 = vst [vmem:[#allocation5 + $0x70] sm:$0xff] %v427
        %444 = vst [vmem:[#allocation5 + $0x78] sm:$0xff] %v427
        %s445 = scalar_lea.vmem [#allocation2], 240
        %v446 = vld [vmem:[%s445 + $0x4] sm:$0xc]
        %v447 = vld [vmem:[%s445 + $0x8] sm:$0xf]
        %v448 = vld [vmem:[%s445 + $0xc] sm:$0x3]
        %v449 = vld [vmem:[%s445 + $0x18] sm:$0xc]
        %v450 = vld [vmem:[%s445 + $0x1c] sm:$0xf]
        %v451 = vld [vmem:[%s445 + $0x20] sm:$0x3]
        %v452 = vld [vmem:[%s445 + $0x2c] sm:$0xc]
        %v453 = vld [vmem:[%s445 + $0x30] sm:$0xf]
        %v454 = vld [vmem:[%s445 + $0x34] sm:$0x3]
        %v455 = vld [vmem:[%s445 + $0x40] sm:$0xc]
        %v456 = vld [vmem:[%s445 + $0x44] sm:$0xf]
        %v457 = vld [vmem:[%s445 + $0x48] sm:$0x3]
        %v458 = vld [vmem:[%s445 + $0x54] sm:$0xc]
        %v459 = vld [vmem:[%s445 + $0x58] sm:$0xf]
        %v460 = vld [vmem:[%s445 + $0x5c] sm:$0x3]
        %v461 = vld [vmem:[%s445 + $0x68] sm:$0xc]
        %v462 = vld [vmem:[%s445 + $0x6c] sm:$0xf]
        %v463 = vld [vmem:[%s445 + $0x70] sm:$0x3]
        %v464 = vld [vmem:[%s445 + $0x7c] sm:$0xc]
        %v465 = vld [vmem:[%s445 + $0x80] sm:$0xf]
        %v466 = vld [vmem:[%s445 + $0x84] sm:$0x3]
        %v467 = vld [vmem:[%s445 + $0x90] sm:$0xc]
        %v468 = vld [vmem:[%s445 + $0x94] sm:$0xf]
        %v469 = vld [vmem:[%s445 + $0x98] sm:$0x3]
        %vm494 = vcmask 1041408
        %vm495 = vcmask 1045508
        %vm496 = vmor %vm494, %vm495
        %v497 = vrot.slane %v446, 6
        %v498 = vrot.slane %v497, 4
        %v499 = vrot.slane %v447, 6
        %v500 = vsel %vm496, %v498, %v499
        %v501 = vrot.slane %v499, 4
        %v502 = vrot.slane %v448, 6
        %v503 = vsel %vm496, %v501, %v502
        %v504 = vrot.slane %v449, 6
        %v505 = vrot.slane %v504, 4
        %v506 = vrot.slane %v450, 6
        %v507 = vsel %vm496, %v505, %v506
        %v508 = vrot.slane %v506, 4
        %v509 = vrot.slane %v451, 6
        %v510 = vsel %vm496, %v508, %v509
        %v511 = vrot.slane %v452, 6
        %v512 = vrot.slane %v511, 4
        %v513 = vrot.slane %v453, 6
        %v514 = vsel %vm496, %v512, %v513
        %v515 = vrot.slane %v513, 4
        %v516 = vrot.slane %v454, 6
        %v517 = vsel %vm496, %v515, %v516
        %v518 = vrot.slane %v455, 6
        %v519 = vrot.slane %v518, 4
        %v520 = vrot.slane %v456, 6
        %v521 = vsel %vm496, %v519, %v520
        %v522 = vrot.slane %v520, 4
        %v523 = vrot.slane %v457, 6
        %v524 = vsel %vm496, %v522, %v523
        %v525 = vrot.slane %v458, 6
        %v526 = vrot.slane %v525, 4
        %v527 = vrot.slane %v459, 6
        %v528 = vsel %vm496, %v526, %v527
        %v529 = vrot.slane %v527, 4
        %v530 = vrot.slane %v460, 6
        %v531 = vsel %vm496, %v529, %v530
        %v532 = vrot.slane %v461, 6
        %v533 = vrot.slane %v532, 4
        %v534 = vrot.slane %v462, 6
        %v535 = vsel %vm496, %v533, %v534
        %v536 = vrot.slane %v534, 4
        %v537 = vrot.slane %v463, 6
        %v538 = vsel %vm496, %v536, %v537
        %v539 = vrot.slane %v464, 6
        %v540 = vrot.slane %v539, 4
        %v541 = vrot.slane %v465, 6
        %v542 = vsel %vm496, %v540, %v541
        %v543 = vrot.slane %v541, 4
        %v544 = vrot.slane %v466, 6
        %v545 = vsel %vm496, %v543, %v544
        %v546 = vrot.slane %v467, 6
        %v547 = vrot.slane %v546, 4
        %v548 = vrot.slane %v468, 6
        %v549 = vsel %vm496, %v547, %v548
        %v550 = vrot.slane %v548, 4
        %v551 = vrot.slane %v469, 6
        %v552 = vsel %vm496, %v550, %v551
        %v553 = vld [vmem:[#allocation9] sm:$0xf]
        %v554 = vld [vmem:[#allocation9 + $0x4] sm:$0xf]
        %v555 = vld [vmem:[#allocation9 + $0x8] sm:$0xf]
        %v556 = vld [vmem:[#allocation9 + $0xc] sm:$0xf]
        %v557 = vld [vmem:[#allocation9 + $0x10] sm:$0xf]
        %v558 = vld [vmem:[#allocation9 + $0x14] sm:$0xf]
        %v559 = vld [vmem:[#allocation9 + $0x18] sm:$0xf]
        %v560 = vld [vmem:[#allocation9 + $0x1c] sm:$0xf]
        %v561 = vld [vmem:[#allocation9 + $0x20] sm:$0xf]
        %v562 = vld [vmem:[#allocation9 + $0x24] sm:$0xf]
        %v563 = vld [vmem:[#allocation9 + $0x28] sm:$0xf]
        %v564 = vld [vmem:[#allocation9 + $0x2c] sm:$0xf]
        %v565 = vld [vmem:[#allocation9 + $0x30] sm:$0xf]
        %v566 = vld [vmem:[#allocation9 + $0x34] sm:$0xf]
        %v567 = vld [vmem:[#allocation9 + $0x38] sm:$0xf]
        %v568 = vld [vmem:[#allocation9 + $0x3c] sm:$0xf]
        %v569 = vunpack.c.l.b16 %v500
        %v570 = vunpack.c.l.b16 %v503
        %v571 = vunpack.c.l.b16 %v507
        %v572 = vunpack.c.l.b16 %v510
        %v573 = vunpack.c.l.b16 %v514
        %v574 = vunpack.c.l.b16 %v517
        %v575 = vunpack.c.l.b16 %v521
        %v576 = vunpack.c.l.b16 %v524
        %v577 = vunpack.c.l.b16 %v528
        %v578 = vunpack.c.l.b16 %v531
        %v579 = vunpack.c.l.b16 %v535
        %v580 = vunpack.c.l.b16 %v538
        %v581 = vunpack.c.l.b16 %v542
        %v582 = vunpack.c.l.b16 %v545
        %v583 = vunpack.c.l.b16 %v549
        %v584 = vunpack.c.l.b16 %v552
        %v585 = vpack.c.b16 %v570, %v569
        %v586 = vpack.c.b16 %v572, %v571
        %v587 = vpack.c.b16 %v574, %v573
        %v588 = vpack.c.b16 %v576, %v575
        %v589 = vpack.c.b16 %v578, %v577
        %v590 = vpack.c.b16 %v580, %v579
        %v591 = vpack.c.b16 %v582, %v581
        %v592 = vpack.c.b16 %v584, %v583
        %v617 = vunpack.c.l.b16 %v553
        %v618 = vunpack.c.l.b16 %v554
        %v619 = vunpack.c.l.b16 %v555
        %v620 = vunpack.c.l.b16 %v556
        %v621 = vunpack.c.l.b16 %v557
        %v622 = vunpack.c.l.b16 %v558
        %v623 = vunpack.c.l.b16 %v559
        %v624 = vunpack.c.l.b16 %v560
        %v625 = vunpack.c.l.b16 %v561
        %v626 = vunpack.c.l.b16 %v562
        %v627 = vunpack.c.l.b16 %v563
        %v628 = vunpack.c.l.b16 %v564
        %v629 = vunpack.c.l.b16 %v565
        %v630 = vunpack.c.l.b16 %v566
        %v631 = vunpack.c.l.b16 %v567
        %v632 = vunpack.c.l.b16 %v568
        %v633 = vpack.c.b16 %v618, %v617
        %v634 = vpack.c.b16 %v620, %v619
        %v635 = vpack.c.b16 %v622, %v621
        %v636 = vpack.c.b16 %v624, %v623
        %v637 = vpack.c.b16 %v626, %v625
        %v638 = vpack.c.b16 %v628, %v627
        %v639 = vpack.c.b16 %v630, %v629
        %v640 = vpack.c.b16 %v632, %v631
        %649 = vmatprep.subr.bf16.mxu0 0
        %650 = vmatpush1.bf16.msra.mxu0 %v633
        %651 = vmatprep.subr.bf16.mxu0 0
        %652 = vmatpush1.bf16.msra.mxu0 %v634
        %653 = vmatprep.subr.bf16.mxu0 0
        %654 = vmatpush1.bf16.msra.mxu0 %v635
        %655 = vmatprep.subr.bf16.mxu0 0
        %656 = vmatpush1.bf16.msra.mxu0 %v636
        %657 = vmatprep.subr.bf16.mxu0 0
        %658 = vmatpush1.bf16.msra.mxu0 %v637
        %659 = vmatprep.subr.bf16.mxu0 0
        %660 = vmatpush1.bf16.msra.mxu0 %v638
        %661 = vmatprep.subr.bf16.mxu0 0
        %662 = vmatpush1.bf16.msra.mxu0 %v639
        %663 = vmatprep.subr.bf16.mxu0 0
        %664 = vmatpush1.bf16.msra.mxu0 %v640
        %665 = vmatprep.subr.bf16.mxu0 0
        %666 = vmatpush1.bf16.msra.mxu0 0
        %667 = vmatprep.subr.bf16.mxu0 0
        %668 = vmatpush1.bf16.msra.mxu0 0
        %669 = vmatprep.subr.bf16.mxu0 0
        %670 = vmatpush1.bf16.msra.mxu0 0
        %671 = vmatprep.subr.bf16.mxu0 0
        %672 = vmatpush1.bf16.msra.mxu0 0
        %673 = vmatprep.subr.bf16.mxu0 0
        %674 = vmatpush1.bf16.msra.mxu0 0
        %675 = vmatprep.subr.bf16.mxu0 0
        %676 = vmatpush1.bf16.msra.mxu0 0
        %677 = vmatprep.subr.bf16.mxu0 0
        %678 = vmatpush1.bf16.msra.mxu0 0
        %679 = vmatprep.subr.bf16.mxu0 0
        %680 = vmatpush1.bf16.msra.mxu0 0
        %681 = vmatprep.mubr.bf16.mxu0 0
        %682 = vmatmul.mubr.bf16.gmra.mrb[0].mxu0 %v585
        %v683 = vpop.f32.mrb[0].mxu0
        %v684 = vadd.f32 0.0, %v683
        %v685 = vpop.f32.mrb[0].mxu0
        %v686 = vpop.f32.mrb[0].mxu0
        %v687 = vadd.f32 0.0, %v686
        %v688 = vpop.f32.mrb[0].mxu0
        %689 = vmatprep.mubr.bf16.mxu0 0
        %690 = vmatmul.mubr.bf16.gmra.mrb[0].mxu0 %v586
        %v691 = vpop.f32.mrb[0].mxu0
        %v692 = vadd.f32 0.0, %v691
        %v693 = vpop.f32.mrb[0].mxu0
        %v694 = vpop.f32.mrb[0].mxu0
        %v695 = vadd.f32 0.0, %v694
        %v696 = vpop.f32.mrb[0].mxu0
        %697 = vmatprep.mubr.bf16.mxu0 0
        %698 = vmatmul.mubr.bf16.gmra.mrb[0].mxu0 %v587
        %v699 = vpop.f32.mrb[0].mxu0
        %v700 = vadd.f32 0.0, %v699
        %v701 = vpop.f32.mrb[0].mxu0
        %v702 = vpop.f32.mrb[0].mxu0
        %v703 = vadd.f32 0.0, %v702
        %v704 = vpop.f32.mrb[0].mxu0
        %705 = vmatprep.mubr.bf16.mxu0 0
        %706 = vmatmul.mubr.bf16.gmra.mrb[0].mxu0 %v588
        %v707 = vpop.f32.mrb[0].mxu0
        %v708 = vadd.f32 0.0, %v707
        %v709 = vpop.f32.mrb[0].mxu0
        %v710 = vpop.f32.mrb[0].mxu0
        %v711 = vadd.f32 0.0, %v710
        %v712 = vpop.f32.mrb[0].mxu0
        %713 = vmatprep.mubr.bf16.mxu0 0
        %714 = vmatmul.mubr.bf16.gmra.mrb[0].mxu0 %v589
        %v715 = vpop.f32.mrb[0].mxu0
        %v716 = vadd.f32 0.0, %v715
        %v717 = vpop.f32.mrb[0].mxu0
        %v718 = vpop.f32.mrb[0].mxu0
        %v719 = vadd.f32 0.0, %v718
        %v720 = vpop.f32.mrb[0].mxu0
        %721 = vmatprep.mubr.bf16.mxu0 0
        %722 = vmatmul.mubr.bf16.gmra.mrb[0].mxu0 %v590
        %v723 = vpop.f32.mrb[0].mxu0
        %v724 = vadd.f32 0.0, %v723
        %v725 = vpop.f32.mrb[0].mxu0
        %v726 = vpop.f32.mrb[0].mxu0
        %v727 = vadd.f32 0.0, %v726
        %v728 = vpop.f32.mrb[0].mxu0
        %729 = vmatprep.mubr.bf16.mxu0 0
        %730 = vmatmul.mubr.bf16.gmra.mrb[0].mxu0 %v591
        %v731 = vpop.f32.mrb[0].mxu0
        %v732 = vadd.f32 0.0, %v731
        %v733 = vpop.f32.mrb[0].mxu0
        %v734 = vpop.f32.mrb[0].mxu0
        %v735 = vadd.f32 0.0, %v734
        %v736 = vpop.f32.mrb[0].mxu0
        %737 = vmatprep.mubr.bf16.mxu0 0
        %738 = vmatmul.mubr.bf16.gmra.mrb[0].mxu0 %v592
        %v739 = vpop.f32.mrb[0].mxu0
        %v740 = vadd.f32 0.0, %v739
        %v741 = vpop.f32.mrb[0].mxu0
        %v742 = vpop.f32.mrb[0].mxu0
        %v743 = vadd.f32 0.0, %v742
        %v744 = vpop.f32.mrb[0].mxu0
        %745 = vdwg.mxu0
        %v746 = vld [vmem:[#allocation12] sm:$0x1]
        %v747 = vlaneseq
        %v748 = vshrl.u32 %v747, 7
        %v749 = vsub.s32 0, %v748
        %v750 = vrot.slane %v746, %v749
        %v751 = vmul.f32 %v684, %v750
        %v752 = vmul.f32 %v687, %v750
        %v753 = vmul.f32 %v692, %v750
        %v754 = vmul.f32 %v695, %v750
        %v755 = vmul.f32 %v700, %v750
        %v756 = vmul.f32 %v703, %v750
        %v757 = vmul.f32 %v708, %v750
        %v758 = vmul.f32 %v711, %v750
        %v759 = vmul.f32 %v716, %v750
        %v760 = vmul.f32 %v719, %v750
        %v761 = vmul.f32 %v724, %v750
        %v762 = vmul.f32 %v727, %v750
        %v763 = vmul.f32 %v732, %v750
        %v764 = vmul.f32 %v735, %v750
        %v765 = vmul.f32 %v740, %v750
        %v766 = vmul.f32 %v743, %v750
        %v767 = vld [vmem:[#allocation14] sm:$0x1]
        %v768 = vlaneseq
        %v769 = vshrl.u32 %v768, 7
        %v770 = vsub.s32 0, %v769
        %v771 = vrot.slane %v767, %v770
        %v772 = vadd.f32 %v751, %v771
        %v773 = vadd.f32 %v752, %v771
        %v774 = vadd.f32 %v753, %v771
        %v775 = vadd.f32 %v754, %v771
        %v776 = vadd.f32 %v755, %v771
        %v777 = vadd.f32 %v756, %v771
        %v778 = vadd.f32 %v757, %v771
        %v779 = vadd.f32 %v758, %v771
        %v780 = vadd.f32 %v759, %v771
        %v781 = vadd.f32 %v760, %v771
        %v782 = vadd.f32 %v761, %v771
        %v783 = vadd.f32 %v762, %v771
        %v784 = vadd.f32 %v763, %v771
        %v785 = vadd.f32 %v764, %v771
        %v786 = vadd.f32 %v765, %v771
        %v787 = vadd.f32 %v766, %v771
        %vm788 = vcmp.gt.f32.partialorder %v772, 0.0
        %vm789 = vcmp.gt.f32.partialorder %v773, 0.0
        %vm790 = vcmp.gt.f32.partialorder %v774, 0.0
        %vm791 = vcmp.gt.f32.partialorder %v775, 0.0
        %vm792 = vcmp.gt.f32.partialorder %v776, 0.0
        %vm793 = vcmp.gt.f32.partialorder %v777, 0.0
        %vm794 = vcmp.gt.f32.partialorder %v778, 0.0
        %vm795 = vcmp.gt.f32.partialorder %v779, 0.0
        %vm796 = vcmp.gt.f32.partialorder %v780, 0.0
        %vm797 = vcmp.gt.f32.partialorder %v781, 0.0
        %vm798 = vcmp.gt.f32.partialorder %v782, 0.0
        %vm799 = vcmp.gt.f32.partialorder %v783, 0.0
        %vm800 = vcmp.gt.f32.partialorder %v784, 0.0
        %vm801 = vcmp.gt.f32.partialorder %v785, 0.0
        %vm802 = vcmp.gt.f32.partialorder %v786, 0.0
        %vm803 = vcmp.gt.f32.partialorder %v787, 0.0
        %v804 = vmul.f32 %v772, 0.01
        %v805 = vmul.f32 %v773, 0.01
        %v806 = vmul.f32 %v774, 0.01
        %v807 = vmul.f32 %v775, 0.01
        %v808 = vmul.f32 %v776, 0.01
        %v809 = vmul.f32 %v777, 0.01
        %v810 = vmul.f32 %v778, 0.01
        %v811 = vmul.f32 %v779, 0.01
        %v812 = vmul.f32 %v780, 0.01
        %v813 = vmul.f32 %v781, 0.01
        %v814 = vmul.f32 %v782, 0.01
        %v815 = vmul.f32 %v783, 0.01
        %v816 = vmul.f32 %v784, 0.01
        %v817 = vmul.f32 %v785, 0.01
        %v818 = vmul.f32 %v786, 0.01
        %v819 = vmul.f32 %v787, 0.01
        %v820 = vsel %vm788, %v772, %v804
        %v821 = vsel %vm789, %v773, %v805
        %v822 = vsel %vm790, %v774, %v806
        %v823 = vsel %vm791, %v775, %v807
        %v824 = vsel %vm792, %v776, %v808
        %v825 = vsel %vm793, %v777, %v809
        %v826 = vsel %vm794, %v778, %v810
        %v827 = vsel %vm795, %v779, %v811
        %v828 = vsel %vm796, %v780, %v812
        %v829 = vsel %vm797, %v781, %v813
        %v830 = vsel %vm798, %v782, %v814
        %v831 = vsel %vm799, %v783, %v815
        %v832 = vsel %vm800, %v784, %v816
        %v833 = vsel %vm801, %v785, %v817
        %v834 = vsel %vm802, %v786, %v818
        %v835 = vsel %vm803, %v787, %v819
        %v836 = vld [vmem:[#allocation5] sm:$0xff]
        %v837 = vld [vmem:[#allocation5 + $0x8] sm:$0xff]
        %v838 = vld [vmem:[#allocation5 + $0x10] sm:$0xff]
        %v839 = vld [vmem:[#allocation5 + $0x18] sm:$0xff]
        %v840 = vld [vmem:[#allocation5 + $0x20] sm:$0xff]
        %v841 = vld [vmem:[#allocation5 + $0x28] sm:$0xff]
        %v842 = vld [vmem:[#allocation5 + $0x30] sm:$0xff]
        %v843 = vld [vmem:[#allocation5 + $0x38] sm:$0xff]
        %v844 = vld [vmem:[#allocation5 + $0x40] sm:$0xff]
        %v845 = vld [vmem:[#allocation5 + $0x48] sm:$0xff]
        %v846 = vld [vmem:[#allocation5 + $0x50] sm:$0xff]
        %v847 = vld [vmem:[#allocation5 + $0x58] sm:$0xff]
        %v848 = vld [vmem:[#allocation5 + $0x60] sm:$0xff]
        %v849 = vld [vmem:[#allocation5 + $0x68] sm:$0xff]
        %v850 = vld [vmem:[#allocation5 + $0x70] sm:$0xff]
        %v851 = vld [vmem:[#allocation5 + $0x78] sm:$0xff]
        %v852 = vpack.c.bf16 %v821, %v820
        %v853 = vpack.c.bf16 %v823, %v822
        %v854 = vpack.c.bf16 %v825, %v824
        %v855 = vpack.c.bf16 %v827, %v826
        %v856 = vpack.c.bf16 %v829, %v828
        %v857 = vpack.c.bf16 %v831, %v830
        %v858 = vpack.c.bf16 %v833, %v832
        %v859 = vpack.c.bf16 %v835, %v834
        %v860 = vld [vmem:[#allocation11] sm:$0xf]
        %v861 = vld [vmem:[#allocation11 + $0x4] sm:$0xf]
        %v862 = vld [vmem:[#allocation11 + $0x8] sm:$0xf]
        %v863 = vld [vmem:[#allocation11 + $0xc] sm:$0xf]
        %v864 = vld [vmem:[#allocation11 + $0x10] sm:$0xf]
        %v865 = vld [vmem:[#allocation11 + $0x14] sm:$0xf]
        %v866 = vld [vmem:[#allocation11 + $0x18] sm:$0xf]
        %v867 = vld [vmem:[#allocation11 + $0x1c] sm:$0xf]
        %v868 = vld [vmem:[#allocation11 + $0x20] sm:$0xf]
        %v869 = vld [vmem:[#allocation11 + $0x24] sm:$0xf]
        %v870 = vld [vmem:[#allocation11 + $0x28] sm:$0xf]
        %v871 = vld [vmem:[#allocation11 + $0x2c] sm:$0xf]
        %v872 = vld [vmem:[#allocation11 + $0x30] sm:$0xf]
        %v873 = vld [vmem:[#allocation11 + $0x34] sm:$0xf]
        %v874 = vld [vmem:[#allocation11 + $0x38] sm:$0xf]
        %v875 = vld [vmem:[#allocation11 + $0x3c] sm:$0xf]
        %v892 = vunpack.c.l.b16 %v860
        %v893 = vunpack.c.l.b16 %v861
        %v894 = vunpack.c.l.b16 %v862
        %v895 = vunpack.c.l.b16 %v863
        %v896 = vunpack.c.l.b16 %v864
        %v897 = vunpack.c.l.b16 %v865
        %v898 = vunpack.c.l.b16 %v866
        %v899 = vunpack.c.l.b16 %v867
        %v900 = vunpack.c.l.b16 %v868
        %v901 = vunpack.c.l.b16 %v869
        %v902 = vunpack.c.l.b16 %v870
        %v903 = vunpack.c.l.b16 %v871
        %v904 = vunpack.c.l.b16 %v872
        %v905 = vunpack.c.l.b16 %v873
        %v906 = vunpack.c.l.b16 %v874
        %v907 = vunpack.c.l.b16 %v875
        %v908 = vpack.c.b16 %v893, %v892
        %v909 = vpack.c.b16 %v895, %v894
        %v910 = vpack.c.b16 %v897, %v896
        %v911 = vpack.c.b16 %v899, %v898
        %v912 = vpack.c.b16 %v901, %v900
        %v913 = vpack.c.b16 %v903, %v902
        %v914 = vpack.c.b16 %v905, %v904
        %v915 = vpack.c.b16 %v907, %v906
        %924 = vmatprep.subr.bf16.mxu0 0
        %925 = vmatpush1.bf16.msra.mxu0 %v908
        %926 = vmatprep.subr.bf16.mxu0 0
        %927 = vmatpush1.bf16.msra.mxu0 %v909
        %928 = vmatprep.subr.bf16.mxu0 0
        %929 = vmatpush1.bf16.msra.mxu0 %v910
        %930 = vmatprep.subr.bf16.mxu0 0
        %931 = vmatpush1.bf16.msra.mxu0 %v911
        %932 = vmatprep.subr.bf16.mxu0 0
        %933 = vmatpush1.bf16.msra.mxu0 %v912
        %934 = vmatprep.subr.bf16.mxu0 0
        %935 = vmatpush1.bf16.msra.mxu0 %v913
        %936 = vmatprep.subr.bf16.mxu0 0
        %937 = vmatpush1.bf16.msra.mxu0 %v914
        %938 = vmatprep.subr.bf16.mxu0 0
        %939 = vmatpush1.bf16.msra.mxu0 %v915
        %940 = vmatprep.subr.bf16.mxu0 0
        %941 = vmatpush1.bf16.msra.mxu0 0
        %942 = vmatprep.subr.bf16.mxu0 0
        %943 = vmatpush1.bf16.msra.mxu0 0
        %944 = vmatprep.subr.bf16.mxu0 0
        %945 = vmatpush1.bf16.msra.mxu0 0
        %946 = vmatprep.subr.bf16.mxu0 0
        %947 = vmatpush1.bf16.msra.mxu0 0
        %948 = vmatprep.subr.bf16.mxu0 0
        %949 = vmatpush1.bf16.msra.mxu0 0
        %950 = vmatprep.subr.bf16.mxu0 0
        %951 = vmatpush1.bf16.msra.mxu0 0
        %952 = vmatprep.subr.bf16.mxu0 0
        %953 = vmatpush1.bf16.msra.mxu0 0
        %954 = vmatprep.subr.bf16.mxu0 0
        %955 = vmatpush1.bf16.msra.mxu0 0
        %956 = vmatprep.mubr.bf16.mxu0 0
        %957 = vmatmul.mubr.bf16.gmra.mrb[0].mxu0 %v852
        %v958 = vpop.f32.mrb[0].mxu0
        %v959 = vadd.f32 0.0, %v958
        %v960 = vpop.f32.mrb[0].mxu0
        %v961 = vpop.f32.mrb[0].mxu0
        %v962 = vadd.f32 0.0, %v961
        %v963 = vpop.f32.mrb[0].mxu0
        %964 = vmatprep.mubr.bf16.mxu0 0
        %965 = vmatmul.mubr.bf16.gmra.mrb[0].mxu0 %v853
        %v966 = vpop.f32.mrb[0].mxu0
        %v967 = vadd.f32 0.0, %v966
        %v968 = vpop.f32.mrb[0].mxu0
        %v969 = vpop.f32.mrb[0].mxu0
        %v970 = vadd.f32 0.0, %v969
        %v971 = vpop.f32.mrb[0].mxu0
        %972 = vmatprep.mubr.bf16.mxu0 0
        %973 = vmatmul.mubr.bf16.gmra.mrb[0].mxu0 %v854
        %v974 = vpop.f32.mrb[0].mxu0
        %v975 = vadd.f32 0.0, %v974
        %v976 = vpop.f32.mrb[0].mxu0
        %v977 = vpop.f32.mrb[0].mxu0
        %v978 = vadd.f32 0.0, %v977
        %v979 = vpop.f32.mrb[0].mxu0
        %980 = vmatprep.mubr.bf16.mxu0 0
        %981 = vmatmul.mubr.bf16.gmra.mrb[0].mxu0 %v855
        %v982 = vpop.f32.mrb[0].mxu0
        %v983 = vadd.f32 0.0, %v982
        %v984 = vpop.f32.mrb[0].mxu0
        %v985 = vpop.f32.mrb[0].mxu0
        %v986 = vadd.f32 0.0, %v985
        %v987 = vpop.f32.mrb[0].mxu0
        %988 = vmatprep.mubr.bf16.mxu0 0
        %989 = vmatmul.mubr.bf16.gmra.mrb[0].mxu0 %v856
        %v990 = vpop.f32.mrb[0].mxu0
        %v991 = vadd.f32 0.0, %v990
        %v992 = vpop.f32.mrb[0].mxu0
        %v993 = vpop.f32.mrb[0].mxu0
        %v994 = vadd.f32 0.0, %v993
        %v995 = vpop.f32.mrb[0].mxu0
        %996 = vmatprep.mubr.bf16.mxu0 0
        %997 = vmatmul.mubr.bf16.gmra.mrb[0].mxu0 %v857
        %v998 = vpop.f32.mrb[0].mxu0
        %v999 = vadd.f32 0.0, %v998
        %v1000 = vpop.f32.mrb[0].mxu0
        %v1001 = vpop.f32.mrb[0].mxu0
        %v1002 = vadd.f32 0.0, %v1001
        %v1003 = vpop.f32.mrb[0].mxu0
        %1004 = vmatprep.mubr.bf16.mxu0 0
        %1005 = vmatmul.mubr.bf16.gmra.mrb[0].mxu0 %v858
        %v1006 = vpop.f32.mrb[0].mxu0
        %v1007 = vadd.f32 0.0, %v1006
        %v1008 = vpop.f32.mrb[0].mxu0
        %v1009 = vpop.f32.mrb[0].mxu0
        %v1010 = vadd.f32 0.0, %v1009
        %v1011 = vpop.f32.mrb[0].mxu0
        %1012 = vmatprep.mubr.bf16.mxu0 0
        %1013 = vmatmul.mubr.bf16.gmra.mrb[0].mxu0 %v859
        %v1014 = vpop.f32.mrb[0].mxu0
        %v1015 = vadd.f32 0.0, %v1014
        %v1016 = vpop.f32.mrb[0].mxu0
        %v1017 = vpop.f32.mrb[0].mxu0
        %v1018 = vadd.f32 0.0, %v1017
        %v1019 = vpop.f32.mrb[0].mxu0
        %1020 = vdwg.mxu0
        %v1021 = vadd.f32 %v836, %v959
        %v1022 = vadd.f32 %v837, %v962
        %v1023 = vadd.f32 %v838, %v967
        %v1024 = vadd.f32 %v839, %v970
        %v1025 = vadd.f32 %v840, %v975
        %v1026 = vadd.f32 %v841, %v978
        %v1027 = vadd.f32 %v842, %v983
        %v1028 = vadd.f32 %v843, %v986
        %v1029 = vadd.f32 %v844, %v991
        %v1030 = vadd.f32 %v845, %v994
        %v1031 = vadd.f32 %v846, %v999
        %v1032 = vadd.f32 %v847, %v1002
        %v1033 = vadd.f32 %v848, %v1007
        %v1034 = vadd.f32 %v849, %v1010
        %v1035 = vadd.f32 %v850, %v1015
        %v1036 = vadd.f32 %v851, %v1018
        %1037 = vst [vmem:[#allocation5] sm:$0xff] %v1021
        %1038 = vst [vmem:[#allocation5 + $0x8] sm:$0xff] %v1022
        %1039 = vst [vmem:[#allocation5 + $0x10] sm:$0xff] %v1023
        %1040 = vst [vmem:[#allocation5 + $0x18] sm:$0xff] %v1024
        %1041 = vst [vmem:[#allocation5 + $0x20] sm:$0xff] %v1025
        %1042 = vst [vmem:[#allocation5 + $0x28] sm:$0xff] %v1026
        %1043 = vst [vmem:[#allocation5 + $0x30] sm:$0xff] %v1027
        %1044 = vst [vmem:[#allocation5 + $0x38] sm:$0xff] %v1028
        %1045 = vst [vmem:[#allocation5 + $0x40] sm:$0xff] %v1029
        %1046 = vst [vmem:[#allocation5 + $0x48] sm:$0xff] %v1030
        %1047 = vst [vmem:[#allocation5 + $0x50] sm:$0xff] %v1031
        %1048 = vst [vmem:[#allocation5 + $0x58] sm:$0xff] %v1032
        %1049 = vst [vmem:[#allocation5 + $0x60] sm:$0xff] %v1033
        %1050 = vst [vmem:[#allocation5 + $0x68] sm:$0xff] %v1034
        %1051 = vst [vmem:[#allocation5 + $0x70] sm:$0xff] %v1035
        %1052 = vst [vmem:[#allocation5 + $0x78] sm:$0xff] %v1036
        %s1053 = smul.u32 4, 9
        %s1054 = smul.u32 %s1053, 16
        %s1055 = smul.u32 %s1054, 1
        %s1056 = sshll.u32 %s1055, 4
        %1057 = dma.done %s405, %s1056
        %s1058 = scalar_lea.hbm %s3, 9216
        %s1059 = scalar_lea.vmem [#allocation3], 576
        %s1060 = scalar_lea.sflag [#allocation4], 2
        // Predicated region
        $region85: #{tpu_custom_call.1} parent=47 // pred_check
          _
        $region86: #{tpu_custom_call.1} parent=47 // pred_check_branch
          %1062 = sbr.rel target = $region88
        $region87: #{tpu_custom_call.1} parent=47 // pred_region
          %1063 = sst [smem:[#allocation21]] [#allocation26]
          %1064 = sst [smem:[#allocation22]] [#allocation25]
        $region88: #{tpu_custom_call.1} parent=47 // pred_fallthru
          _
        %1066 = shalt.err (0)
        %s1068 = sshll.u32 %s1059, 4
        %s1069 = int_to_ptr.vmem [resolvable:$true] %s1068
        %1071 = dma.hbm_to_vmem [thread:$0]  %s1058, 9216, %s1069, %s1060
        %s1072 = scalar_lea.vmem [#allocation2], 120
        %v1073 = vld [vmem:[%s1072] sm:$0x8]
        %v1074 = vld [vmem:[%s1072 + $0x4] sm:$0xf]
        %v1075 = vld [vmem:[%s1072 + $0x8] sm:$0x7]
        %v1076 = vld [vmem:[%s1072 + $0x14] sm:$0x8]
        %v1077 = vld [vmem:[%s1072 + $0x18] sm:$0xf]
        %v1078 = vld [vmem:[%s1072 + $0x1c] sm:$0x7]
        %v1079 = vld [vmem:[%s1072 + $0x28] sm:$0x8]
        %v1080 = vld [vmem:[%s1072 + $0x2c] sm:$0xf]
        %v1081 = vld [vmem:[%s1072 + $0x30] sm:$0x7]
        %v1082 = vld [vmem:[%s1072 + $0x3c] sm:$0x8]
        %v1083 = vld [vmem:[%s1072 + $0x40] sm:$0xf]
        %v1084 = vld [vmem:[%s1072 + $0x44] sm:$0x7]
        %v1085 = vld [vmem:[%s1072 + $0x50] sm:$0x8]
        %v1086 = vld [vmem:[%s1072 + $0x54] sm:$0xf]
        %v1087 = vld [vmem:[%s1072 + $0x58] sm:$0x7]
        %v1088 = vld [vmem:[%s1072 + $0x64] sm:$0x8]
        %v1089 = vld [vmem:[%s1072 + $0x68] sm:$0xf]
        %v1090 = vld [vmem:[%s1072 + $0x6c] sm:$0x7]
        %v1091 = vld [vmem:[%s1072 + $0x78] sm:$0x8]
        %v1092 = vld [vmem:[%s1072 + $0x7c] sm:$0xf]
        %v1093 = vld [vmem:[%s1072 + $0x80] sm:$0x7]
        %v1094 = vld [vmem:[%s1072 + $0x8c] sm:$0x8]
        %v1095 = vld [vmem:[%s1072 + $0x90] sm:$0xf]
        %v1096 = vld [vmem:[%s1072 + $0x94] sm:$0x7]
        %vm1121 = vcmask 1040384
        %vm1122 = vcmask 1044484
        %vm1123 = vmor %vm1121, %vm1122
        %v1124 = vrot.slane %v1073, 7
        %v1125 = vrot.slane %v1124, 4
        %v1126 = vrot.slane %v1074, 7
        %v1127 = vsel %vm1123, %v1125, %v1126
        %v1128 = vrot.slane %v1126, 4
        %v1129 = vrot.slane %v1075, 7
        %v1130 = vsel %vm1123, %v1128, %v1129
        %v1131 = vrot.slane %v1076, 7
        %v1132 = vrot.slane %v1131, 4
        %v1133 = vrot.slane %v1077, 7
        %v1134 = vsel %vm1123, %v1132, %v1133
        %v1135 = vrot.slane %v1133, 4
        %v1136 = vrot.slane %v1078, 7
        %v1137 = vsel %vm1123, %v1135, %v1136
        %v1138 = vrot.slane %v1079, 7
        %v1139 = vrot.slane %v1138, 4
        %v1140 = vrot.slane %v1080, 7
        %v1141 = vsel %vm1123, %v1139, %v1140
        %v1142 = vrot.slane %v1140, 4
        %v1143 = vrot.slane %v1081, 7
        %v1144 = vsel %vm1123, %v1142, %v1143
        %v1145 = vrot.slane %v1082, 7
        %v1146 = vrot.slane %v1145, 4
        %v1147 = vrot.slane %v1083, 7
        %v1148 = vsel %vm1123, %v1146, %v1147
        %v1149 = vrot.slane %v1147, 4
        %v1150 = vrot.slane %v1084, 7
        %v1151 = vsel %vm1123, %v1149, %v1150
        %v1152 = vrot.slane %v1085, 7
        %v1153 = vrot.slane %v1152, 4
        %v1154 = vrot.slane %v1086, 7
        %v1155 = vsel %vm1123, %v1153, %v1154
        %v1156 = vrot.slane %v1154, 4
        %v1157 = vrot.slane %v1087, 7
        %v1158 = vsel %vm1123, %v1156, %v1157
        %v1159 = vrot.slane %v1088, 7
        %v1160 = vrot.slane %v1159, 4
        %v1161 = vrot.slane %v1089, 7
        %v1162 = vsel %vm1123, %v1160, %v1161
        %v1163 = vrot.slane %v1161, 4
        %v1164 = vrot.slane %v1090, 7
        %v1165 = vsel %vm1123, %v1163, %v1164
        %v1166 = vrot.slane %v1091, 7
        %v1167 = vrot.slane %v1166, 4
        %v1168 = vrot.slane %v1092, 7
        %v1169 = vsel %vm1123, %v1167, %v1168
        %v1170 = vrot.slane %v1168, 4
        %v1171 = vrot.slane %v1093, 7
        %v1172 = vsel %vm1123, %v1170, %v1171
        %v1173 = vrot.slane %v1094, 7
        %v1174 = vrot.slane %v1173, 4
        %v1175 = vrot.slane %v1095, 7
        %v1176 = vsel %vm1123, %v1174, %v1175
        %v1177 = vrot.slane %v1175, 4
        %v1178 = vrot.slane %v1096, 7
        %v1179 = vsel %vm1123, %v1177, %v1178
        %v1180 = vld [vmem:[#allocation3] sm:$0xff]
        %v1181 = vld [vmem:[#allocation3 + $0x8] sm:$0xff]
        %v1182 = vld [vmem:[#allocation3 + $0x10] sm:$0xff]
        %v1183 = vld [vmem:[#allocation3 + $0x18] sm:$0xff]
        %v1184 = vld [vmem:[#allocation3 + $0x20] sm:$0xff]
        %v1185 = vld [vmem:[#allocation3 + $0x28] sm:$0xff]
        %v1186 = vld [vmem:[#allocation3 + $0x30] sm:$0xff]
        %v1187 = vld [vmem:[#allocation3 + $0x38] sm:$0xff]
        %v1188 = vld [vmem:[%s1072 + $0x4] sm:$0xc]
        %v1189 = vld [vmem:[%s1072 + $0x8] sm:$0xf]
        %v1190 = vld [vmem:[%s1072 + $0xc] sm:$0x3]
        %v1191 = vld [vmem:[%s1072 + $0x18] sm:$0xc]
        %v1192 = vld [vmem:[%s1072 + $0x1c] sm:$0xf]
        %v1193 = vld [vmem:[%s1072 + $0x20] sm:$0x3]
        %v1194 = vld [vmem:[%s1072 + $0x2c] sm:$0xc]
        %v1195 = vld [vmem:[%s1072 + $0x30] sm:$0xf]
        %v1196 = vld [vmem:[%s1072 + $0x34] sm:$0x3]
        %v1197 = vld [vmem:[%s1072 + $0x40] sm:$0xc]
        %v1198 = vld [vmem:[%s1072 + $0x44] sm:$0xf]
        %v1199 = vld [vmem:[%s1072 + $0x48] sm:$0x3]
        %v1200 = vld [vmem:[%s1072 + $0x54] sm:$0xc]
        %v1201 = vld [vmem:[%s1072 + $0x58] sm:$0xf]
        %v1202 = vld [vmem:[%s1072 + $0x5c] sm:$0x3]
        %v1203 = vld [vmem:[%s1072 + $0x68] sm:$0xc]
        %v1204 = vld [vmem:[%s1072 + $0x6c] sm:$0xf]
        %v1205 = vld [vmem:[%s1072 + $0x70] sm:$0x3]
        %v1206 = vld [vmem:[%s1072 + $0x7c] sm:$0xc]
        %v1207 = vld [vmem:[%s1072 + $0x80] sm:$0xf]
        %v1208 = vld [vmem:[%s1072 + $0x84] sm:$0x3]
        %v1209 = vld [vmem:[%s1072 + $0x90] sm:$0xc]
        %v1210 = vld [vmem:[%s1072 + $0x94] sm:$0xf]
        %v1211 = vld [vmem:[%s1072 + $0x98] sm:$0x3]
        %v1236 = vrot.slane %v1188, 6
        %v1237 = vrot.slane %v1236, 4
        %v1238 = vrot.slane %v1189, 6
        %v1239 = vsel %vm496, %v1237, %v1238
        %v1240 = vrot.slane %v1238, 4
        %v1241 = vrot.slane %v1190, 6
        %v1242 = vsel %vm496, %v1240, %v1241
        %v1243 = vrot.slane %v1191, 6
        %v1244 = vrot.slane %v1243, 4
        %v1245 = vrot.slane %v1192, 6
        %v1246 = vsel %vm496, %v1244, %v1245
        %v1247 = vrot.slane %v1245, 4
        %v1248 = vrot.slane %v1193, 6
        %v1249 = vsel %vm496, %v1247, %v1248
        %v1250 = vrot.slane %v1194, 6
        %v1251 = vrot.slane %v1250, 4
        %v1252 = vrot.slane %v1195, 6
        %v1253 = vsel %vm496, %v1251, %v1252
        %v1254 = vrot.slane %v1252, 4
        %v1255 = vrot.slane %v1196, 6
        %v1256 = vsel %vm496, %v1254, %v1255
        %v1257 = vrot.slane %v1197, 6
        %v1258 = vrot.slane %v1257, 4
        %v1259 = vrot.slane %v1198, 6
        %v1260 = vsel %vm496, %v1258, %v1259
        %v1261 = vrot.slane %v1259, 4
        %v1262 = vrot.slane %v1199, 6
        %v1263 = vsel %vm496, %v1261, %v1262
        %v1264 = vrot.slane %v1200, 6
        %v1265 = vrot.slane %v1264, 4
        %v1266 = vrot.slane %v1201, 6
        %v1267 = vsel %vm496, %v1265, %v1266
        %v1268 = vrot.slane %v1266, 4
        %v1269 = vrot.slane %v1202, 6
        %v1270 = vsel %vm496, %v1268, %v1269
        %v1271 = vrot.slane %v1203, 6
        %v1272 = vrot.slane %v1271, 4
        %v1273 = vrot.slane %v1204, 6
        %v1274 = vsel %vm496, %v1272, %v1273
        %v1275 = vrot.slane %v1273, 4
        %v1276 = vrot.slane %v1205, 6
        %v1277 = vsel %vm496, %v1275, %v1276
        %v1278 = vrot.slane %v1206, 6
        %v1279 = vrot.slane %v1278, 4
        %v1280 = vrot.slane %v1207, 6
        %v1281 = vsel %vm496, %v1279, %v1280
        %v1282 = vrot.slane %v1280, 4
        %v1283 = vrot.slane %v1208, 6
        %v1284 = vsel %vm496, %v1282, %v1283
        %v1285 = vrot.slane %v1209, 6
        %v1286 = vrot.slane %v1285, 4
        %v1287 = vrot.slane %v1210, 6
        %v1288 = vsel %vm496, %v1286, %v1287
        %v1289 = vrot.slane %v1287, 4
        %v1290 = vrot.slane %v1211, 6
        %v1291 = vsel %vm496, %v1289, %v1290
        %s1292 = scalar_lea.vmem [#allocation3], 64
        %v1293 = vld [vmem:[%s1292] sm:$0xff]
        %v1294 = vld [vmem:[%s1292 + $0x8] sm:$0xff]
        %v1295 = vld [vmem:[%s1292 + $0x10] sm:$0xff]
        %v1296 = vld [vmem:[%s1292 + $0x18] sm:$0xff]
        %v1297 = vld [vmem:[%s1292 + $0x20] sm:$0xff]
        %v1298 = vld [vmem:[%s1292 + $0x28] sm:$0xff]
        %v1299 = vld [vmem:[%s1292 + $0x30] sm:$0xff]
        %v1300 = vld [vmem:[%s1292 + $0x38] sm:$0xff]
        %v1301 = vunpack.c.l.b16 %v1239
        %v1302 = vunpack.c.l.b16 %v1242
        %v1303 = vunpack.c.l.b16 %v1246
        %v1304 = vunpack.c.l.b16 %v1249
        %v1305 = vunpack.c.l.b16 %v1253
        %v1306 = vunpack.c.l.b16 %v1256
        %v1307 = vunpack.c.l.b16 %v1260
        %v1308 = vunpack.c.l.b16 %v1263
        %v1309 = vunpack.c.l.b16 %v1267
        %v1310 = vunpack.c.l.b16 %v1270
        %v1311 = vunpack.c.l.b16 %v1274
        %v1312 = vunpack.c.l.b16 %v1277
        %v1313 = vunpack.c.l.b16 %v1281
        %v1314 = vunpack.c.l.b16 %v1284
        %v1315 = vunpack.c.l.b16 %v1288
        %v1316 = vunpack.c.l.b16 %v1291
        %v1317 = vpack.c.b16 %v1302, %v1301
        %v1318 = vpack.c.b16 %v1304, %v1303
        %v1319 = vpack.c.b16 %v1306, %v1305
        %v1320 = vpack.c.b16 %v1308, %v1307
        %v1321 = vpack.c.b16 %v1310, %v1309
        %v1322 = vpack.c.b16 %v1312, %v1311
        %v1323 = vpack.c.b16 %v1314, %v1313
        %v1324 = vpack.c.b16 %v1316, %v1315
        %1333 = vmatprep.subr.bf16.mxu0 0
        %1334 = vmatpush1.bf16.msra.mxu0 %v1293
        %1335 = vmatprep.subr.bf16.mxu0 0
        %1336 = vmatpush1.bf16.msra.mxu0 %v1294
        %1337 = vmatprep.subr.bf16.mxu0 0
        %1338 = vmatpush1.bf16.msra.mxu0 %v1295
        %1339 = vmatprep.subr.bf16.mxu0 0
        %1340 = vmatpush1.bf16.msra.mxu0 %v1296
        %1341 = vmatprep.subr.bf16.mxu0 0
        %1342 = vmatpush1.bf16.msra.mxu0 %v1297
        %1343 = vmatprep.subr.bf16.mxu0 0
        %1344 = vmatpush1.bf16.msra.mxu0 %v1298
        %1345 = vmatprep.subr.bf16.mxu0 0
        %1346 = vmatpush1.bf16.msra.mxu0 %v1299
        %1347 = vmatprep.subr.bf16.mxu0 0
        %1348 = vmatpush1.bf16.msra.mxu0 %v1300
        %1349 = vmatprep.subr.bf16.mxu0 0
        %1350 = vmatpush1.bf16.msra.mxu0 0
        %1351 = vmatprep.subr.bf16.mxu0 0
        %1352 = vmatpush1.bf16.msra.mxu0 0
        %1353 = vmatprep.subr.bf16.mxu0 0
        %1354 = vmatpush1.bf16.msra.mxu0 0
        %1355 = vmatprep.subr.bf16.mxu0 0
        %1356 = vmatpush1.bf16.msra.mxu0 0
        %1357 = vmatprep.subr.bf16.mxu0 0
        %1358 = vmatpush1.bf16.msra.mxu0 0
        %1359 = vmatprep.subr.bf16.mxu0 0
        %1360 = vmatpush1.bf16.msra.mxu0 0
        %1361 = vmatprep.subr.bf16.mxu0 0
        %1362 = vmatpush1.bf16.msra.mxu0 0
        %1363 = vmatprep.subr.bf16.mxu0 0
        %1364 = vmatpush1.bf16.msra.mxu0 0
        %1365 = vmatprep.mubr.bf16.mxu0 0
        %1366 = vmatmul.mubr.bf16.gmra.mrb[0].mxu0 %v1317
        %v1367 = vpop.f32.mrb[0].mxu0
        %v1368 = vadd.f32 0.0, %v1367
        %v1369 = vpop.f32.mrb[0].mxu0
        %v1370 = vpop.f32.mrb[0].mxu0
        %v1371 = vadd.f32 0.0, %v1370
        %v1372 = vpop.f32.mrb[0].mxu0
        %1373 = vmatprep.mubr.bf16.mxu0 0
        %1374 = vmatmul.mubr.bf16.gmra.mrb[0].mxu0 %v1318
        %v1375 = vpop.f32.mrb[0].mxu0
        %v1376 = vadd.f32 0.0, %v1375
        %v1377 = vpop.f32.mrb[0].mxu0
        %v1378 = vpop.f32.mrb[0].mxu0
        %v1379 = vadd.f32 0.0, %v1378
        %v1380 = vpop.f32.mrb[0].mxu0
        %1381 = vmatprep.mubr.bf16.mxu0 0
        %1382 = vmatmul.mubr.bf16.gmra.mrb[0].mxu0 %v1319
        %v1383 = vpop.f32.mrb[0].mxu0
        %v1384 = vadd.f32 0.0, %v1383
        %v1385 = vpop.f32.mrb[0].mxu0
        %v1386 = vpop.f32.mrb[0].mxu0
        %v1387 = vadd.f32 0.0, %v1386
        %v1388 = vpop.f32.mrb[0].mxu0
        %1389 = vmatprep.mubr.bf16.mxu0 0
        %1390 = vmatmul.mubr.bf16.gmra.mrb[0].mxu0 %v1320
        %v1391 = vpop.f32.mrb[0].mxu0
        %v1392 = vadd.f32 0.0, %v1391
        %v1393 = vpop.f32.mrb[0].mxu0
        %v1394 = vpop.f32.mrb[0].mxu0
        %v1395 = vadd.f32 0.0, %v1394
        %v1396 = vpop.f32.mrb[0].mxu0
        %1397 = vmatprep.mubr.bf16.mxu0 0
        %1398 = vmatmul.mubr.bf16.gmra.mrb[0].mxu0 %v1321
        %v1399 = vpop.f32.mrb[0].mxu0
        %v1400 = vadd.f32 0.0, %v1399
        %v1401 = vpop.f32.mrb[0].mxu0
        %v1402 = vpop.f32.mrb[0].mxu0
        %v1403 = vadd.f32 0.0, %v1402
        %v1404 = vpop.f32.mrb[0].mxu0
        %1405 = vmatprep.mubr.bf16.mxu0 0
        %1406 = vmatmul.mubr.bf16.gmra.mrb[0].mxu0 %v1322
        %v1407 = vpop.f32.mrb[0].mxu0
        %v1408 = vadd.f32 0.0, %v1407
        %v1409 = vpop.f32.mrb[0].mxu0
        %v1410 = vpop.f32.mrb[0].mxu0
        %v1411 = vadd.f32 0.0, %v1410
        %v1412 = vpop.f32.mrb[0].mxu0
        %1413 = vmatprep.mubr.bf16.mxu0 0
        %1414 = vmatmul.mubr.bf16.gmra.mrb[0].mxu0 %v1323
        %v1415 = vpop.f32.mrb[0].mxu0
        %v1416 = vadd.f32 0.0, %v1415
        %v1417 = vpop.f32.mrb[0].mxu0
        %v1418 = vpop.f32.mrb[0].mxu0
        %v1419 = vadd.f32 0.0, %v1418
        %v1420 = vpop.f32.mrb[0].mxu0
        %1421 = vmatprep.mubr.bf16.mxu0 0
        %1422 = vmatmul.mubr.bf16.gmra.mrb[0].mxu0 %v1324
        %v1423 = vpop.f32.mrb[0].mxu0
        %v1424 = vadd.f32 0.0, %v1423
        %v1425 = vpop.f32.mrb[0].mxu0
        %v1426 = vpop.f32.mrb[0].mxu0
        %v1427 = vadd.f32 0.0, %v1426
        %v1428 = vpop.f32.mrb[0].mxu0
        %1429 = vdwg.mxu0
        %v1430 = vunpack.c.l.b16 %v1127
        %v1431 = vunpack.c.l.b16 %v1130
        %v1432 = vunpack.c.l.b16 %v1134
        %v1433 = vunpack.c.l.b16 %v1137
        %v1434 = vunpack.c.l.b16 %v1141
        %v1435 = vunpack.c.l.b16 %v1144
        %v1436 = vunpack.c.l.b16 %v1148
        %v1437 = vunpack.c.l.b16 %v1151
        %v1438 = vunpack.c.l.b16 %v1155
        %v1439 = vunpack.c.l.b16 %v1158
        %v1440 = vunpack.c.l.b16 %v1162
        %v1441 = vunpack.c.l.b16 %v1165
        %v1442 = vunpack.c.l.b16 %v1169
        %v1443 = vunpack.c.l.b16 %v1172
        %v1444 = vunpack.c.l.b16 %v1176
        %v1445 = vunpack.c.l.b16 %v1179
        %v1446 = vpack.c.b16 %v1431, %v1430
        %v1447 = vpack.c.b16 %v1433, %v1432
        %v1448 = vpack.c.b16 %v1435, %v1434
        %v1449 = vpack.c.b16 %v1437, %v1436
        %v1450 = vpack.c.b16 %v1439, %v1438
        %v1451 = vpack.c.b16 %v1441, %v1440
        %v1452 = vpack.c.b16 %v1443, %v1442
        %v1453 = vpack.c.b16 %v1445, %v1444
        %1462 = vmatprep.subr.bf16.mxu0 0
        %1463 = vmatpush1.bf16.msra.mxu0 %v1180
        %1464 = vmatprep.subr.bf16.mxu0 0
        %1465 = vmatpush1.bf16.msra.mxu0 %v1181
        %1466 = vmatprep.subr.bf16.mxu0 0
        %1467 = vmatpush1.bf16.msra.mxu0 %v1182
        %1468 = vmatprep.subr.bf16.mxu0 0
        %1469 = vmatpush1.bf16.msra.mxu0 %v1183
        %1470 = vmatprep.subr.bf16.mxu0 0
        %1471 = vmatpush1.bf16.msra.mxu0 %v1184
        %1472 = vmatprep.subr.bf16.mxu0 0
        %1473 = vmatpush1.bf16.msra.mxu0 %v1185
        %1474 = vmatprep.subr.bf16.mxu0 0
        %1475 = vmatpush1.bf16.msra.mxu0 %v1186
        %1476 = vmatprep.subr.bf16.mxu0 0
        %1477 = vmatpush1.bf16.msra.mxu0 %v1187
        %1478 = vmatprep.subr.bf16.mxu0 0
        %1479 = vmatpush1.bf16.msra.mxu0 0
        %1480 = vmatprep.subr.bf16.mxu0 0
        %1481 = vmatpush1.bf16.msra.mxu0 0
        %1482 = vmatprep.subr.bf16.mxu0 0
        %1483 = vmatpush1.bf16.msra.mxu0 0
        %1484 = vmatprep.subr.bf16.mxu0 0
        %1485 = vmatpush1.bf16.msra.mxu0 0
        %1486 = vmatprep.subr.bf16.mxu0 0
        %1487 = vmatpush1.bf16.msra.mxu0 0
        %1488 = vmatprep.subr.bf16.mxu0 0
        %1489 = vmatpush1.bf16.msra.mxu0 0
        %1490 = vmatprep.subr.bf16.mxu0 0
        %1491 = vmatpush1.bf16.msra.mxu0 0
        %1492 = vmatprep.subr.bf16.mxu0 0
        %1493 = vmatpush1.bf16.msra.mxu0 0
        %1494 = vmatprep.mubr.bf16.mxu0 0
        %1495 = vmatmul.mubr.bf16.gmra.mrb[0].mxu0 %v1446
        %v1496 = vpop.f32.mrb[0].mxu0
        %v1497 = vadd.f32 %v1368, %v1496
        %v1498 = vpop.f32.mrb[0].mxu0
        %v1499 = vpop.f32.mrb[0].mxu0
        %v1500 = vadd.f32 %v1371, %v1499
        %v1501 = vpop.f32.mrb[0].mxu0
        %1502 = vmatprep.mubr.bf16.mxu0 0
        %1503 = vmatmul.mubr.bf16.gmra.mrb[0].mxu0 %v1447
        %v1504 = vpop.f32.mrb[0].mxu0
        %v1505 = vadd.f32 %v1376, %v1504
        %v1506 = vpop.f32.mrb[0].mxu0
        %v1507 = vpop.f32.mrb[0].mxu0
        %v1508 = vadd.f32 %v1379, %v1507
        %v1509 = vpop.f32.mrb[0].mxu0
        %1510 = vmatprep.mubr.bf16.mxu0 0
        %1511 = vmatmul.mubr.bf16.gmra.mrb[0].mxu0 %v1448
        %v1512 = vpop.f32.mrb[0].mxu0
        %v1513 = vadd.f32 %v1384, %v1512
        %v1514 = vpop.f32.mrb[0].mxu0
        %v1515 = vpop.f32.mrb[0].mxu0
        %v1516 = vadd.f32 %v1387, %v1515
        %v1517 = vpop.f32.mrb[0].mxu0
        %1518 = vmatprep.mubr.bf16.mxu0 0
        %1519 = vmatmul.mubr.bf16.gmra.mrb[0].mxu0 %v1449
        %v1520 = vpop.f32.mrb[0].mxu0
        %v1521 = vadd.f32 %v1392, %v1520
        %v1522 = vpop.f32.mrb[0].mxu0
        %v1523 = vpop.f32.mrb[0].mxu0
        %v1524 = vadd.f32 %v1395, %v1523
        %v1525 = vpop.f32.mrb[0].mxu0
        %1526 = vmatprep.mubr.bf16.mxu0 0
        %1527 = vmatmul.mubr.bf16.gmra.mrb[0].mxu0 %v1450
        %v1528 = vpop.f32.mrb[0].mxu0
        %v1529 = vadd.f32 %v1400, %v1528
        %v1530 = vpop.f32.mrb[0].mxu0
        %v1531 = vpop.f32.mrb[0].mxu0
        %v1532 = vadd.f32 %v1403, %v1531
        %v1533 = vpop.f32.mrb[0].mxu0
        %1534 = vmatprep.mubr.bf16.mxu0 0
        %1535 = vmatmul.mubr.bf16.gmra.mrb[0].mxu0 %v1451
        %v1536 = vpop.f32.mrb[0].mxu0
        %v1537 = vadd.f32 %v1408, %v1536
        %v1538 = vpop.f32.mrb[0].mxu0
        %v1539 = vpop.f32.mrb[0].mxu0
        %v1540 = vadd.f32 %v1411, %v1539
        %v1541 = vpop.f32.mrb[0].mxu0
        %1542 = vmatprep.mubr.bf16.mxu0 0
        %1543 = vmatmul.mubr.bf16.gmra.mrb[0].mxu0 %v1452
        %v1544 = vpop.f32.mrb[0].mxu0
        %v1545 = vadd.f32 %v1416, %v1544
        %v1546 = vpop.f32.mrb[0].mxu0
        %v1547 = vpop.f32.mrb[0].mxu0
        %v1548 = vadd.f32 %v1419, %v1547
        %v1549 = vpop.f32.mrb[0].mxu0
        %1550 = vmatprep.mubr.bf16.mxu0 0
        %1551 = vmatmul.mubr.bf16.gmra.mrb[0].mxu0 %v1453
        %v1552 = vpop.f32.mrb[0].mxu0
        %v1553 = vadd.f32 %v1424, %v1552
        %v1554 = vpop.f32.mrb[0].mxu0
        %v1555 = vpop.f32.mrb[0].mxu0
        %v1556 = vadd.f32 %v1427, %v1555
        %v1557 = vpop.f32.mrb[0].mxu0
        %1558 = vdwg.mxu0
        %v1559 = vld [vmem:[%s1072 + $0x8] sm:$0xe]
        %v1560 = vld [vmem:[%s1072 + $0xc] sm:$0xf]
        %v1561 = vld [vmem:[%s1072 + $0x10] sm:$0x1]
        %v1562 = vld [vmem:[%s1072 + $0x1c] sm:$0xe]
        %v1563 = vld [vmem:[%s1072 + $0x20] sm:$0xf]
        %v1564 = vld [vmem:[%s1072 + $0x24] sm:$0x1]
        %v1565 = vld [vmem:[%s1072 + $0x30] sm:$0xe]
        %v1566 = vld [vmem:[%s1072 + $0x34] sm:$0xf]
        %v1567 = vld [vmem:[%s1072 + $0x38] sm:$0x1]
        %v1568 = vld [vmem:[%s1072 + $0x44] sm:$0xe]
        %v1569 = vld [vmem:[%s1072 + $0x48] sm:$0xf]
        %v1570 = vld [vmem:[%s1072 + $0x4c] sm:$0x1]
        %v1571 = vld [vmem:[%s1072 + $0x58] sm:$0xe]
        %v1572 = vld [vmem:[%s1072 + $0x5c] sm:$0xf]
        %v1573 = vld [vmem:[%s1072 + $0x60] sm:$0x1]
        %v1574 = vld [vmem:[%s1072 + $0x6c] sm:$0xe]
        %v1575 = vld [vmem:[%s1072 + $0x70] sm:$0xf]
        %v1576 = vld [vmem:[%s1072 + $0x74] sm:$0x1]
        %v1577 = vld [vmem:[%s1072 + $0x80] sm:$0xe]
        %v1578 = vld [vmem:[%s1072 + $0x84] sm:$0xf]
        %v1579 = vld [vmem:[%s1072 + $0x88] sm:$0x1]
        %v1580 = vld [vmem:[%s1072 + $0x94] sm:$0xe]
        %v1581 = vld [vmem:[%s1072 + $0x98] sm:$0xf]
        %v1582 = vld [vmem:[%s1072 + $0x9c] sm:$0x1]
        %vm1607 = vcmask 1042432
        %vm1608 = vcmask 1046532
        %vm1609 = vmor %vm1607, %vm1608
        %v1610 = vrot.slane %v1559, 5
        %v1611 = vrot.slane %v1610, 4
        %v1612 = vrot.slane %v1560, 5
        %v1613 = vsel %vm1609, %v1611, %v1612
        %v1614 = vrot.slane %v1612, 4
        %v1615 = vrot.slane %v1561, 5
        %v1616 = vsel %vm1609, %v1614, %v1615
        %v1617 = vrot.slane %v1562, 5
        %v1618 = vrot.slane %v1617, 4
        %v1619 = vrot.slane %v1563, 5
        %v1620 = vsel %vm1609, %v1618, %v1619
        %v1621 = vrot.slane %v1619, 4
        %v1622 = vrot.slane %v1564, 5
        %v1623 = vsel %vm1609, %v1621, %v1622
        %v1624 = vrot.slane %v1565, 5
        %v1625 = vrot.slane %v1624, 4
        %v1626 = vrot.slane %v1566, 5
        %v1627 = vsel %vm1609, %v1625, %v1626
        %v1628 = vrot.slane %v1626, 4
        %v1629 = vrot.slane %v1567, 5
        %v1630 = vsel %vm1609, %v1628, %v1629
        %v1631 = vrot.slane %v1568, 5
        %v1632 = vrot.slane %v1631, 4
        %v1633 = vrot.slane %v1569, 5
        %v1634 = vsel %vm1609, %v1632, %v1633
        %v1635 = vrot.slane %v1633, 4
        %v1636 = vrot.slane %v1570, 5
        %v1637 = vsel %vm1609, %v1635, %v1636
        %v1638 = vrot.slane %v1571, 5
        %v1639 = vrot.slane %v1638, 4
        %v1640 = vrot.slane %v1572, 5
        %v1641 = vsel %vm1609, %v1639, %v1640
        %v1642 = vrot.slane %v1640, 4
        %v1643 = vrot.slane %v1573, 5
        %v1644 = vsel %vm1609, %v1642, %v1643
        %v1645 = vrot.slane %v1574, 5
        %v1646 = vrot.slane %v1645, 4
        %v1647 = vrot.slane %v1575, 5
        %v1648 = vsel %vm1609, %v1646, %v1647
        %v1649 = vrot.slane %v1647, 4
        %v1650 = vrot.slane %v1576, 5
        %v1651 = vsel %vm1609, %v1649, %v1650
        %v1652 = vrot.slane %v1577, 5
        %v1653 = vrot.slane %v1652, 4
        %v1654 = vrot.slane %v1578, 5
        %v1655 = vsel %vm1609, %v1653, %v1654
        %v1656 = vrot.slane %v1654, 4
        %v1657 = vrot.slane %v1579, 5
        %v1658 = vsel %vm1609, %v1656, %v1657
        %v1659 = vrot.slane %v1580, 5
        %v1660 = vrot.slane %v1659, 4
        %v1661 = vrot.slane %v1581, 5
        %v1662 = vsel %vm1609, %v1660, %v1661
        %v1663 = vrot.slane %v1661, 4
        %v1664 = vrot.slane %v1582, 5
        %v1665 = vsel %vm1609, %v1663, %v1664
        %s1666 = scalar_lea.vmem [#allocation3], 128
        %v1667 = vld [vmem:[%s1666] sm:$0xff]
        %v1668 = vld [vmem:[%s1666 + $0x8] sm:$0xff]
        %v1669 = vld [vmem:[%s1666 + $0x10] sm:$0xff]
        %v1670 = vld [vmem:[%s1666 + $0x18] sm:$0xff]
        %v1671 = vld [vmem:[%s1666 + $0x20] sm:$0xff]
        %v1672 = vld [vmem:[%s1666 + $0x28] sm:$0xff]
        %v1673 = vld [vmem:[%s1666 + $0x30] sm:$0xff]
        %v1674 = vld [vmem:[%s1666 + $0x38] sm:$0xff]
        %v1675 = vunpack.c.l.b16 %v1613
        %v1676 = vunpack.c.l.b16 %v1616
        %v1677 = vunpack.c.l.b16 %v1620
        %v1678 = vunpack.c.l.b16 %v1623
        %v1679 = vunpack.c.l.b16 %v1627
        %v1680 = vunpack.c.l.b16 %v1630
        %v1681 = vunpack.c.l.b16 %v1634
        %v1682 = vunpack.c.l.b16 %v1637
        %v1683 = vunpack.c.l.b16 %v1641
        %v1684 = vunpack.c.l.b16 %v1644
        %v1685 = vunpack.c.l.b16 %v1648
        %v1686 = vunpack.c.l.b16 %v1651
        %v1687 = vunpack.c.l.b16 %v1655
        %v1688 = vunpack.c.l.b16 %v1658
        %v1689 = vunpack.c.l.b16 %v1662
        %v1690 = vunpack.c.l.b16 %v1665
        %v1691 = vpack.c.b16 %v1676, %v1675
        %v1692 = vpack.c.b16 %v1678, %v1677
        %v1693 = vpack.c.b16 %v1680, %v1679
        %v1694 = vpack.c.b16 %v1682, %v1681
        %v1695 = vpack.c.b16 %v1684, %v1683
        %v1696 = vpack.c.b16 %v1686, %v1685
        %v1697 = vpack.c.b16 %v1688, %v1687
        %v1698 = vpack.c.b16 %v1690, %v1689
        %1707 = vmatprep.subr.bf16.mxu0 0
        %1708 = vmatpush1.bf16.msra.mxu0 %v1667
        %1709 = vmatprep.subr.bf16.mxu0 0
        %1710 = vmatpush1.bf16.msra.mxu0 %v1668
        %1711 = vmatprep.subr.bf16.mxu0 0
        %1712 = vmatpush1.bf16.msra.mxu0 %v1669
        %1713 = vmatprep.subr.bf16.mxu0 0
        %1714 = vmatpush1.bf16.msra.mxu0 %v1670
        %1715 = vmatprep.subr.bf16.mxu0 0
        %1716 = vmatpush1.bf16.msra.mxu0 %v1671
        %1717 = vmatprep.subr.bf16.mxu0 0
        %1718 = vmatpush1.bf16.msra.mxu0 %v1672
        %1719 = vmatprep.subr.bf16.mxu0 0
        %1720 = vmatpush1.bf16.msra.mxu0 %v1673
        %1721 = vmatprep.subr.bf16.mxu0 0
        %1722 = vmatpush1.bf16.msra.mxu0 %v1674
        %1723 = vmatprep.subr.bf16.mxu0 0
        %1724 = vmatpush1.bf16.msra.mxu0 0
        %1725 = vmatprep.subr.bf16.mxu0 0
        %1726 = vmatpush1.bf16.msra.mxu0 0
        %1727 = vmatprep.subr.bf16.mxu0 0
        %1728 = vmatpush1.bf16.msra.mxu0 0
        %1729 = vmatprep.subr.bf16.mxu0 0
        %1730 = vmatpush1.bf16.msra.mxu0 0
        %1731 = vmatprep.subr.bf16.mxu0 0
        %1732 = vmatpush1.bf16.msra.mxu0 0
        %1733 = vmatprep.subr.bf16.mxu0 0
        %1734 = vmatpush1.bf16.msra.mxu0 0
        %1735 = vmatprep.subr.bf16.mxu0 0
        %1736 = vmatpush1.bf16.msra.mxu0 0
        %1737 = vmatprep.subr.bf16.mxu0 0
        %1738 = vmatpush1.bf16.msra.mxu0 0
        %1739 = vmatprep.mubr.bf16.mxu0 0
        %1740 = vmatmul.mubr.bf16.gmra.mrb[0].mxu0 %v1691
        %v1741 = vpop.f32.mrb[0].mxu0
        %v1742 = vadd.f32 0.0, %v1741
        %v1743 = vpop.f32.mrb[0].mxu0
        %v1744 = vpop.f32.mrb[0].mxu0
        %v1745 = vadd.f32 0.0, %v1744
        %v1746 = vpop.f32.mrb[0].mxu0
        %1747 = vmatprep.mubr.bf16.mxu0 0
        %1748 = vmatmul.mubr.bf16.gmra.mrb[0].mxu0 %v1692
        %v1749 = vpop.f32.mrb[0].mxu0
        %v1750 = vadd.f32 0.0, %v1749
        %v1751 = vpop.f32.mrb[0].mxu0
        %v1752 = vpop.f32.mrb[0].mxu0
        %v1753 = vadd.f32 0.0, %v1752
        %v1754 = vpop.f32.mrb[0].mxu0
        %1755 = vmatprep.mubr.bf16.mxu0 0
        %1756 = vmatmul.mubr.bf16.gmra.mrb[0].mxu0 %v1693
        %v1757 = vpop.f32.mrb[0].mxu0
        %v1758 = vadd.f32 0.0, %v1757
        %v1759 = vpop.f32.mrb[0].mxu0
        %v1760 = vpop.f32.mrb[0].mxu0
        %v1761 = vadd.f32 0.0, %v1760
        %v1762 = vpop.f32.mrb[0].mxu0
        %1763 = vmatprep.mubr.bf16.mxu0 0
        %1764 = vmatmul.mubr.bf16.gmra.mrb[0].mxu0 %v1694
        %v1765 = vpop.f32.mrb[0].mxu0
        %v1766 = vadd.f32 0.0, %v1765
        %v1767 = vpop.f32.mrb[0].mxu0
        %v1768 = vpop.f32.mrb[0].mxu0
        %v1769 = vadd.f32 0.0, %v1768
        %v1770 = vpop.f32.mrb[0].mxu0
        %1771 = vmatprep.mubr.bf16.mxu0 0
        %1772 = vmatmul.mubr.bf16.gmra.mrb[0].mxu0 %v1695
        %v1773 = vpop.f32.mrb[0].mxu0
        %v1774 = vadd.f32 0.0, %v1773
        %v1775 = vpop.f32.mrb[0].mxu0
        %v1776 = vpop.f32.mrb[0].mxu0
        %v1777 = vadd.f32 0.0, %v1776
        %v1778 = vpop.f32.mrb[0].mxu0
        %1779 = vmatprep.mubr.bf16.mxu0 0
        %1780 = vmatmul.mubr.bf16.gmra.mrb[0].mxu0 %v1696
        %v1781 = vpop.f32.mrb[0].mxu0
        %v1782 = vadd.f32 0.0, %v1781
        %v1783 = vpop.f32.mrb[0].mxu0
        %v1784 = vpop.f32.mrb[0].mxu0
        %v1785 = vadd.f32 0.0, %v1784
        %v1786 = vpop.f32.mrb[0].mxu0
        %1787 = vmatprep.mubr.bf16.mxu0 0
        %1788 = vmatmul.mubr.bf16.gmra.mrb[0].mxu0 %v1697
        %v1789 = vpop.f32.mrb[0].mxu0
        %v1790 = vadd.f32 0.0, %v1789
        %v1791 = vpop.f32.mrb[0].mxu0
        %v1792 = vpop.f32.mrb[0].mxu0
        %v1793 = vadd.f32 0.0, %v1792
        %v1794 = vpop.f32.mrb[0].mxu0
        %1795 = vmatprep.mubr.bf16.mxu0 0
        %1796 = vmatmul.mubr.bf16.gmra.mrb[0].mxu0 %v1698
        %v1797 = vpop.f32.mrb[0].mxu0
        %v1798 = vadd.f32 0.0, %v1797
        %v1799 = vpop.f32.mrb[0].mxu0
        %v1800 = vpop.f32.mrb[0].mxu0
        %v1801 = vadd.f32 0.0, %v1800
        %v1802 = vpop.f32.mrb[0].mxu0
        %1803 = vdwg.mxu0
        %v1804 = vadd.f32 %v1497, %v1742
        %v1805 = vadd.f32 %v1500, %v1745
        %v1806 = vadd.f32 %v1505, %v1750
        %v1807 = vadd.f32 %v1508, %v1753
        %v1808 = vadd.f32 %v1513, %v1758
        %v1809 = vadd.f32 %v1516, %v1761
        %v1810 = vadd.f32 %v1521, %v1766
        %v1811 = vadd.f32 %v1524, %v1769
        %v1812 = vadd.f32 %v1529, %v1774
        %v1813 = vadd.f32 %v1532, %v1777
        %v1814 = vadd.f32 %v1537, %v1782
        %v1815 = vadd.f32 %v1540, %v1785
        %v1816 = vadd.f32 %v1545, %v1790
        %v1817 = vadd.f32 %v1548, %v1793
        %v1818 = vadd.f32 %v1553, %v1798
        %v1819 = vadd.f32 %v1556, %v1801
        %v1820 = vld [vmem:[%s445] sm:$0x8]
        %v1821 = vld [vmem:[%s445 + $0x4] sm:$0xf]
        %v1822 = vld [vmem:[%s445 + $0x8] sm:$0x7]
        %v1823 = vld [vmem:[%s445 + $0x14] sm:$0x8]
        %v1824 = vld [vmem:[%s445 + $0x18] sm:$0xf]
        %v1825 = vld [vmem:[%s445 + $0x1c] sm:$0x7]
        %v1826 = vld [vmem:[%s445 + $0x28] sm:$0x8]
        %v1827 = vld [vmem:[%s445 + $0x2c] sm:$0xf]
        %v1828 = vld [vmem:[%s445 + $0x30] sm:$0x7]
        %v1829 = vld [vmem:[%s445 + $0x3c] sm:$0x8]
        %v1830 = vld [vmem:[%s445 + $0x40] sm:$0xf]
        %v1831 = vld [vmem:[%s445 + $0x44] sm:$0x7]
        %v1832 = vld [vmem:[%s445 + $0x50] sm:$0x8]
        %v1833 = vld [vmem:[%s445 + $0x54] sm:$0xf]
        %v1834 = vld [vmem:[%s445 + $0x58] sm:$0x7]
        %v1835 = vld [vmem:[%s445 + $0x64] sm:$0x8]
        %v1836 = vld [vmem:[%s445 + $0x68] sm:$0xf]
        %v1837 = vld [vmem:[%s445 + $0x6c] sm:$0x7]
        %v1838 = vld [vmem:[%s445 + $0x78] sm:$0x8]
        %v1839 = vld [vmem:[%s445 + $0x7c] sm:$0xf]
        %v1840 = vld [vmem:[%s445 + $0x80] sm:$0x7]
        %v1841 = vld [vmem:[%s445 + $0x8c] sm:$0x8]
        %v1842 = vld [vmem:[%s445 + $0x90] sm:$0xf]
        %v1843 = vld [vmem:[%s445 + $0x94] sm:$0x7]
        %v1868 = vrot.slane %v1820, 7
        %v1869 = vrot.slane %v1868, 4
        %v1870 = vrot.slane %v1821, 7
        %v1871 = vsel %vm1123, %v1869, %v1870
        %v1872 = vrot.slane %v1870, 4
        %v1873 = vrot.slane %v1822, 7
        %v1874 = vsel %vm1123, %v1872, %v1873
        %v1875 = vrot.slane %v1823, 7
        %v1876 = vrot.slane %v1875, 4
        %v1877 = vrot.slane %v1824, 7
        %v1878 = vsel %vm1123, %v1876, %v1877
        %v1879 = vrot.slane %v1877, 4
        %v1880 = vrot.slane %v1825, 7
        %v1881 = vsel %vm1123, %v1879, %v1880
        %v1882 = vrot.slane %v1826, 7
        %v1883 = vrot.slane %v1882, 4
        %v1884 = vrot.slane %v1827, 7
        %v1885 = vsel %vm1123, %v1883, %v1884
        %v1886 = vrot.slane %v1884, 4
        %v1887 = vrot.slane %v1828, 7
        %v1888 = vsel %vm1123, %v1886, %v1887
        %v1889 = vrot.slane %v1829, 7
        %v1890 = vrot.slane %v1889, 4
        %v1891 = vrot.slane %v1830, 7
        %v1892 = vsel %vm1123, %v1890, %v1891
        %v1893 = vrot.slane %v1891, 4
        %v1894 = vrot.slane %v1831, 7
        %v1895 = vsel %vm1123, %v1893, %v1894
        %v1896 = vrot.slane %v1832, 7
        %v1897 = vrot.slane %v1896, 4
        %v1898 = vrot.slane %v1833, 7
        %v1899 = vsel %vm1123, %v1897, %v1898
        %v1900 = vrot.slane %v1898, 4
        %v1901 = vrot.slane %v1834, 7
        %v1902 = vsel %vm1123, %v1900, %v1901
        %v1903 = vrot.slane %v1835, 7
        %v1904 = vrot.slane %v1903, 4
        %v1905 = vrot.slane %v1836, 7
        %v1906 = vsel %vm1123, %v1904, %v1905
        %v1907 = vrot.slane %v1905, 4
        %v1908 = vrot.slane %v1837, 7
        %v1909 = vsel %vm1123, %v1907, %v1908
        %v1910 = vrot.slane %v1838, 7
        %v1911 = vrot.slane %v1910, 4
        %v1912 = vrot.slane %v1839, 7
        %v1913 = vsel %vm1123, %v1911, %v1912
        %v1914 = vrot.slane %v1912, 4
        %v1915 = vrot.slane %v1840, 7
        %v1916 = vsel %vm1123, %v1914, %v1915
        %v1917 = vrot.slane %v1841, 7
        %v1918 = vrot.slane %v1917, 4
        %v1919 = vrot.slane %v1842, 7
        %v1920 = vsel %vm1123, %v1918, %v1919
        %v1921 = vrot.slane %v1919, 4
        %v1922 = vrot.slane %v1843, 7
        %v1923 = vsel %vm1123, %v1921, %v1922
        %s1924 = scalar_lea.vmem [#allocation3], 192
        %v1925 = vld [vmem:[%s1924] sm:$0xff]
        %v1926 = vld [vmem:[%s1924 + $0x8] sm:$0xff]
        %v1927 = vld [vmem:[%s1924 + $0x10] sm:$0xff]
        %v1928 = vld [vmem:[%s1924 + $0x18] sm:$0xff]
        %v1929 = vld [vmem:[%s1924 + $0x20] sm:$0xff]
        %v1930 = vld [vmem:[%s1924 + $0x28] sm:$0xff]
        %v1931 = vld [vmem:[%s1924 + $0x30] sm:$0xff]
        %v1932 = vld [vmem:[%s1924 + $0x38] sm:$0xff]
        %v1933 = vunpack.c.l.b16 %v1871
        %v1934 = vunpack.c.l.b16 %v1874
        %v1935 = vunpack.c.l.b16 %v1878
        %v1936 = vunpack.c.l.b16 %v1881
        %v1937 = vunpack.c.l.b16 %v1885
        %v1938 = vunpack.c.l.b16 %v1888
        %v1939 = vunpack.c.l.b16 %v1892
        %v1940 = vunpack.c.l.b16 %v1895
        %v1941 = vunpack.c.l.b16 %v1899
        %v1942 = vunpack.c.l.b16 %v1902
        %v1943 = vunpack.c.l.b16 %v1906
        %v1944 = vunpack.c.l.b16 %v1909
        %v1945 = vunpack.c.l.b16 %v1913
        %v1946 = vunpack.c.l.b16 %v1916
        %v1947 = vunpack.c.l.b16 %v1920
        %v1948 = vunpack.c.l.b16 %v1923
        %v1949 = vpack.c.b16 %v1934, %v1933
        %v1950 = vpack.c.b16 %v1936, %v1935
        %v1951 = vpack.c.b16 %v1938, %v1937
        %v1952 = vpack.c.b16 %v1940, %v1939
        %v1953 = vpack.c.b16 %v1942, %v1941
        %v1954 = vpack.c.b16 %v1944, %v1943
        %v1955 = vpack.c.b16 %v1946, %v1945
        %v1956 = vpack.c.b16 %v1948, %v1947
        %1965 = vmatprep.subr.bf16.mxu0 0
        %1966 = vmatpush1.bf16.msra.mxu0 %v1925
        %1967 = vmatprep.subr.bf16.mxu0 0
        %1968 = vmatpush1.bf16.msra.mxu0 %v1926
        %1969 = vmatprep.subr.bf16.mxu0 0
        %1970 = vmatpush1.bf16.msra.mxu0 %v1927
        %1971 = vmatprep.subr.bf16.mxu0 0
        %1972 = vmatpush1.bf16.msra.mxu0 %v1928
        %1973 = vmatprep.subr.bf16.mxu0 0
        %1974 = vmatpush1.bf16.msra.mxu0 %v1929
        %1975 = vmatprep.subr.bf16.mxu0 0
        %1976 = vmatpush1.bf16.msra.mxu0 %v1930
        %1977 = vmatprep.subr.bf16.mxu0 0
        %1978 = vmatpush1.bf16.msra.mxu0 %v1931
        %1979 = vmatprep.subr.bf16.mxu0 0
        %1980 = vmatpush1.bf16.msra.mxu0 %v1932
        %1981 = vmatprep.subr.bf16.mxu0 0
        %1982 = vmatpush1.bf16.msra.mxu0 0
        %1983 = vmatprep.subr.bf16.mxu0 0
        %1984 = vmatpush1.bf16.msra.mxu0 0
        %1985 = vmatprep.subr.bf16.mxu0 0
        %1986 = vmatpush1.bf16.msra.mxu0 0
        %1987 = vmatprep.subr.bf16.mxu0 0
        %1988 = vmatpush1.bf16.msra.mxu0 0
        %1989 = vmatprep.subr.bf16.mxu0 0
        %1990 = vmatpush1.bf16.msra.mxu0 0
        %1991 = vmatprep.subr.bf16.mxu0 0
        %1992 = vmatpush1.bf16.msra.mxu0 0
        %1993 = vmatprep.subr.bf16.mxu0 0
        %1994 = vmatpush1.bf16.msra.mxu0 0
        %1995 = vmatprep.subr.bf16.mxu0 0
        %1996 = vmatpush1.bf16.msra.mxu0 0
        %1997 = vmatprep.mubr.bf16.mxu0 0
        %1998 = vmatmul.mubr.bf16.gmra.mrb[0].mxu0 %v1949
        %v1999 = vpop.f32.mrb[0].mxu0
        %v2000 = vadd.f32 0.0, %v1999
        %v2001 = vpop.f32.mrb[0].mxu0
        %v2002 = vpop.f32.mrb[0].mxu0
        %v2003 = vadd.f32 0.0, %v2002
        %v2004 = vpop.f32.mrb[0].mxu0
        %2005 = vmatprep.mubr.bf16.mxu0 0
        %2006 = vmatmul.mubr.bf16.gmra.mrb[0].mxu0 %v1950
        %v2007 = vpop.f32.mrb[0].mxu0
        %v2008 = vadd.f32 0.0, %v2007
        %v2009 = vpop.f32.mrb[0].mxu0
        %v2010 = vpop.f32.mrb[0].mxu0
        %v2011 = vadd.f32 0.0, %v2010
        %v2012 = vpop.f32.mrb[0].mxu0
        %2013 = vmatprep.mubr.bf16.mxu0 0
        %2014 = vmatmul.mubr.bf16.gmra.mrb[0].mxu0 %v1951
        %v2015 = vpop.f32.mrb[0].mxu0
        %v2016 = vadd.f32 0.0, %v2015
        %v2017 = vpop.f32.mrb[0].mxu0
        %v2018 = vpop.f32.mrb[0].mxu0
        %v2019 = vadd.f32 0.0, %v2018
        %v2020 = vpop.f32.mrb[0].mxu0
        %2021 = vmatprep.mubr.bf16.mxu0 0
        %2022 = vmatmul.mubr.bf16.gmra.mrb[0].mxu0 %v1952
        %v2023 = vpop.f32.mrb[0].mxu0
        %v2024 = vadd.f32 0.0, %v2023
        %v2025 = vpop.f32.mrb[0].mxu0
        %v2026 = vpop.f32.mrb[0].mxu0
        %v2027 = vadd.f32 0.0, %v2026
        %v2028 = vpop.f32.mrb[0].mxu0
        %2029 = vmatprep.mubr.bf16.mxu0 0
        %2030 = vmatmul.mubr.bf16.gmra.mrb[0].mxu0 %v1953
        %v2031 = vpop.f32.mrb[0].mxu0
        %v2032 = vadd.f32 0.0, %v2031
        %v2033 = vpop.f32.mrb[0].mxu0
        %v2034 = vpop.f32.mrb[0].mxu0
        %v2035 = vadd.f32 0.0, %v2034
        %v2036 = vpop.f32.mrb[0].mxu0
        %2037 = vmatprep.mubr.bf16.mxu0 0
        %2038 = vmatmul.mubr.bf16.gmra.mrb[0].mxu0 %v1954
        %v2039 = vpop.f32.mrb[0].mxu0
        %v2040 = vadd.f32 0.0, %v2039
        %v2041 = vpop.f32.mrb[0].mxu0
        %v2042 = vpop.f32.mrb[0].mxu0
        %v2043 = vadd.f32 0.0, %v2042
        %v2044 = vpop.f32.mrb[0].mxu0
        %2045 = vmatprep.mubr.bf16.mxu0 0
        %2046 = vmatmul.mubr.bf16.gmra.mrb[0].mxu0 %v1955
        %v2047 = vpop.f32.mrb[0].mxu0
        %v2048 = vadd.f32 0.0, %v2047
        %v2049 = vpop.f32.mrb[0].mxu0
        %v2050 = vpop.f32.mrb[0].mxu0
        %v2051 = vadd.f32 0.0, %v2050
        %v2052 = vpop.f32.mrb[0].mxu0
        %2053 = vmatprep.mubr.bf16.mxu0 0
        %2054 = vmatmul.mubr.bf16.gmra.mrb[0].mxu0 %v1956
        %v2055 = vpop.f32.mrb[0].mxu0
        %v2056 = vadd.f32 0.0, %v2055
        %v2057 = vpop.f32.mrb[0].mxu0
        %v2058 = vpop.f32.mrb[0].mxu0
        %v2059 = vadd.f32 0.0, %v2058
        %v2060 = vpop.f32.mrb[0].mxu0
        %2061 = vdwg.mxu0
        %v2062 = vadd.f32 %v1804, %v2000
        %v2063 = vadd.f32 %v1805, %v2003
        %v2064 = vadd.f32 %v1806, %v2008
        %v2065 = vadd.f32 %v1807, %v2011
        %v2066 = vadd.f32 %v1808, %v2016
        %v2067 = vadd.f32 %v1809, %v2019
        %v2068 = vadd.f32 %v1810, %v2024
        %v2069 = vadd.f32 %v1811, %v2027
        %v2070 = vadd.f32 %v1812, %v2032
        %v2071 = vadd.f32 %v1813, %v2035
        %v2072 = vadd.f32 %v1814, %v2040
        %v2073 = vadd.f32 %v1815, %v2043
        %v2074 = vadd.f32 %v1816, %v2048
        %v2075 = vadd.f32 %v1817, %v2051
        %v2076 = vadd.f32 %v1818, %v2056
        %v2077 = vadd.f32 %v1819, %v2059
        %v2078 = vld [vmem:[%s445 + $0x4] sm:$0xc]
        %v2079 = vld [vmem:[%s445 + $0x8] sm:$0xf]
        %v2080 = vld [vmem:[%s445 + $0xc] sm:$0x3]
        %v2081 = vld [vmem:[%s445 + $0x18] sm:$0xc]
        %v2082 = vld [vmem:[%s445 + $0x1c] sm:$0xf]
        %v2083 = vld [vmem:[%s445 + $0x20] sm:$0x3]
        %v2084 = vld [vmem:[%s445 + $0x2c] sm:$0xc]
        %v2085 = vld [vmem:[%s445 + $0x30] sm:$0xf]
        %v2086 = vld [vmem:[%s445 + $0x34] sm:$0x3]
        %v2087 = vld [vmem:[%s445 + $0x40] sm:$0xc]
        %v2088 = vld [vmem:[%s445 + $0x44] sm:$0xf]
        %v2089 = vld [vmem:[%s445 + $0x48] sm:$0x3]
        %v2090 = vld [vmem:[%s445 + $0x54] sm:$0xc]
        %v2091 = vld [vmem:[%s445 + $0x58] sm:$0xf]
        %v2092 = vld [vmem:[%s445 + $0x5c] sm:$0x3]
        %v2093 = vld [vmem:[%s445 + $0x68] sm:$0xc]
        %v2094 = vld [vmem:[%s445 + $0x6c] sm:$0xf]
        %v2095 = vld [vmem:[%s445 + $0x70] sm:$0x3]
        %v2096 = vld [vmem:[%s445 + $0x7c] sm:$0xc]
        %v2097 = vld [vmem:[%s445 + $0x80] sm:$0xf]
        %v2098 = vld [vmem:[%s445 + $0x84] sm:$0x3]
        %v2099 = vld [vmem:[%s445 + $0x90] sm:$0xc]
        %v2100 = vld [vmem:[%s445 + $0x94] sm:$0xf]
        %v2101 = vld [vmem:[%s445 + $0x98] sm:$0x3]
        %v2126 = vrot.slane %v2078, 6
        %v2127 = vrot.slane %v2126, 4
        %v2128 = vrot.slane %v2079, 6
        %v2129 = vsel %vm496, %v2127, %v2128
        %v2130 = vrot.slane %v2128, 4
        %v2131 = vrot.slane %v2080, 6
        %v2132 = vsel %vm496, %v2130, %v2131
        %v2133 = vrot.slane %v2081, 6
        %v2134 = vrot.slane %v2133, 4
        %v2135 = vrot.slane %v2082, 6
        %v2136 = vsel %vm496, %v2134, %v2135
        %v2137 = vrot.slane %v2135, 4
        %v2138 = vrot.slane %v2083, 6
        %v2139 = vsel %vm496, %v2137, %v2138
        %v2140 = vrot.slane %v2084, 6
        %v2141 = vrot.slane %v2140, 4
        %v2142 = vrot.slane %v2085, 6
        %v2143 = vsel %vm496, %v2141, %v2142
        %v2144 = vrot.slane %v2142, 4
        %v2145 = vrot.slane %v2086, 6
        %v2146 = vsel %vm496, %v2144, %v2145
        %v2147 = vrot.slane %v2087, 6
        %v2148 = vrot.slane %v2147, 4
        %v2149 = vrot.slane %v2088, 6
        %v2150 = vsel %vm496, %v2148, %v2149
        %v2151 = vrot.slane %v2149, 4
        %v2152 = vrot.slane %v2089, 6
        %v2153 = vsel %vm496, %v2151, %v2152
        %v2154 = vrot.slane %v2090, 6
        %v2155 = vrot.slane %v2154, 4
        %v2156 = vrot.slane %v2091, 6
        %v2157 = vsel %vm496, %v2155, %v2156
        %v2158 = vrot.slane %v2156, 4
        %v2159 = vrot.slane %v2092, 6
        %v2160 = vsel %vm496, %v2158, %v2159
        %v2161 = vrot.slane %v2093, 6
        %v2162 = vrot.slane %v2161, 4
        %v2163 = vrot.slane %v2094, 6
        %v2164 = vsel %vm496, %v2162, %v2163
        %v2165 = vrot.slane %v2163, 4
        %v2166 = vrot.slane %v2095, 6
        %v2167 = vsel %vm496, %v2165, %v2166
        %v2168 = vrot.slane %v2096, 6
        %v2169 = vrot.slane %v2168, 4
        %v2170 = vrot.slane %v2097, 6
        %v2171 = vsel %vm496, %v2169, %v2170
        %v2172 = vrot.slane %v2170, 4
        %v2173 = vrot.slane %v2098, 6
        %v2174 = vsel %vm496, %v2172, %v2173
        %v2175 = vrot.slane %v2099, 6
        %v2176 = vrot.slane %v2175, 4
        %v2177 = vrot.slane %v2100, 6
        %v2178 = vsel %vm496, %v2176, %v2177
        %v2179 = vrot.slane %v2177, 4
        %v2180 = vrot.slane %v2101, 6
        %v2181 = vsel %vm496, %v2179, %v2180
        %s2182 = scalar_lea.vmem [#allocation3], 256
        %v2183 = vld [vmem:[%s2182] sm:$0xff]
        %v2184 = vld [vmem:[%s2182 + $0x8] sm:$0xff]
        %v2185 = vld [vmem:[%s2182 + $0x10] sm:$0xff]
        %v2186 = vld [vmem:[%s2182 + $0x18] sm:$0xff]
        %v2187 = vld [vmem:[%s2182 + $0x20] sm:$0xff]
        %v2188 = vld [vmem:[%s2182 + $0x28] sm:$0xff]
        %v2189 = vld [vmem:[%s2182 + $0x30] sm:$0xff]
        %v2190 = vld [vmem:[%s2182 + $0x38] sm:$0xff]
        %v2191 = vunpack.c.l.b16 %v2129
        %v2192 = vunpack.c.l.b16 %v2132
        %v2193 = vunpack.c.l.b16 %v2136
        %v2194 = vunpack.c.l.b16 %v2139
        %v2195 = vunpack.c.l.b16 %v2143
        %v2196 = vunpack.c.l.b16 %v2146
        %v2197 = vunpack.c.l.b16 %v2150
        %v2198 = vunpack.c.l.b16 %v2153
        %v2199 = vunpack.c.l.b16 %v2157
        %v2200 = vunpack.c.l.b16 %v2160
        %v2201 = vunpack.c.l.b16 %v2164
        %v2202 = vunpack.c.l.b16 %v2167
        %v2203 = vunpack.c.l.b16 %v2171
        %v2204 = vunpack.c.l.b16 %v2174
        %v2205 = vunpack.c.l.b16 %v2178
        %v2206 = vunpack.c.l.b16 %v2181
        %v2207 = vpack.c.b16 %v2192, %v2191
        %v2208 = vpack.c.b16 %v2194, %v2193
        %v2209 = vpack.c.b16 %v2196, %v2195
        %v2210 = vpack.c.b16 %v2198, %v2197
        %v2211 = vpack.c.b16 %v2200, %v2199
        %v2212 = vpack.c.b16 %v2202, %v2201
        %v2213 = vpack.c.b16 %v2204, %v2203
        %v2214 = vpack.c.b16 %v2206, %v2205
        %2223 = vmatprep.subr.bf16.mxu0 0
        %2224 = vmatpush1.bf16.msra.mxu0 %v2183
        %2225 = vmatprep.subr.bf16.mxu0 0
        %2226 = vmatpush1.bf16.msra.mxu0 %v2184
        %2227 = vmatprep.subr.bf16.mxu0 0
        %2228 = vmatpush1.bf16.msra.mxu0 %v2185
        %2229 = vmatprep.subr.bf16.mxu0 0
        %2230 = vmatpush1.bf16.msra.mxu0 %v2186
        %2231 = vmatprep.subr.bf16.mxu0 0
        %2232 = vmatpush1.bf16.msra.mxu0 %v2187
        %2233 = vmatprep.subr.bf16.mxu0 0
        %2234 = vmatpush1.bf16.msra.mxu0 %v2188
        %2235 = vmatprep.subr.bf16.mxu0 0
        %2236 = vmatpush1.bf16.msra.mxu0 %v2189
        %2237 = vmatprep.subr.bf16.mxu0 0
        %2238 = vmatpush1.bf16.msra.mxu0 %v2190
        %2239 = vmatprep.subr.bf16.mxu0 0
        %2240 = vmatpush1.bf16.msra.mxu0 0
        %2241 = vmatprep.subr.bf16.mxu0 0
        %2242 = vmatpush1.bf16.msra.mxu0 0
        %2243 = vmatprep.subr.bf16.mxu0 0
        %2244 = vmatpush1.bf16.msra.mxu0 0
        %2245 = vmatprep.subr.bf16.mxu0 0
        %2246 = vmatpush1.bf16.msra.mxu0 0
        %2247 = vmatprep.subr.bf16.mxu0 0
        %2248 = vmatpush1.bf16.msra.mxu0 0
        %2249 = vmatprep.subr.bf16.mxu0 0
        %2250 = vmatpush1.bf16.msra.mxu0 0
        %2251 = vmatprep.subr.bf16.mxu0 0
        %2252 = vmatpush1.bf16.msra.mxu0 0
        %2253 = vmatprep.subr.bf16.mxu0 0
        %2254 = vmatpush1.bf16.msra.mxu0 0
        %2255 = vmatprep.mubr.bf16.mxu0 0
        %2256 = vmatmul.mubr.bf16.gmra.mrb[0].mxu0 %v2207
        %v2257 = vpop.f32.mrb[0].mxu0
        %v2258 = vadd.f32 0.0, %v2257
        %v2259 = vpop.f32.mrb[0].mxu0
        %v2260 = vpop.f32.mrb[0].mxu0
        %v2261 = vadd.f32 0.0, %v2260
        %v2262 = vpop.f32.mrb[0].mxu0
        %2263 = vmatprep.mubr.bf16.mxu0 0
        %2264 = vmatmul.mubr.bf16.gmra.mrb[0].mxu0 %v2208
        %v2265 = vpop.f32.mrb[0].mxu0
        %v2266 = vadd.f32 0.0, %v2265
        %v2267 = vpop.f32.mrb[0].mxu0
        %v2268 = vpop.f32.mrb[0].mxu0
        %v2269 = vadd.f32 0.0, %v2268
        %v2270 = vpop.f32.mrb[0].mxu0
        %2271 = vmatprep.mubr.bf16.mxu0 0
        %2272 = vmatmul.mubr.bf16.gmra.mrb[0].mxu0 %v2209
        %v2273 = vpop.f32.mrb[0].mxu0
        %v2274 = vadd.f32 0.0, %v2273
        %v2275 = vpop.f32.mrb[0].mxu0
        %v2276 = vpop.f32.mrb[0].mxu0
        %v2277 = vadd.f32 0.0, %v2276
        %v2278 = vpop.f32.mrb[0].mxu0
        %2279 = vmatprep.mubr.bf16.mxu0 0
        %2280 = vmatmul.mubr.bf16.gmra.mrb[0].mxu0 %v2210
        %v2281 = vpop.f32.mrb[0].mxu0
        %v2282 = vadd.f32 0.0, %v2281
        %v2283 = vpop.f32.mrb[0].mxu0
        %v2284 = vpop.f32.mrb[0].mxu0
        %v2285 = vadd.f32 0.0, %v2284
        %v2286 = vpop.f32.mrb[0].mxu0
        %2287 = vmatprep.mubr.bf16.mxu0 0
        %2288 = vmatmul.mubr.bf16.gmra.mrb[0].mxu0 %v2211
        %v2289 = vpop.f32.mrb[0].mxu0
        %v2290 = vadd.f32 0.0, %v2289
        %v2291 = vpop.f32.mrb[0].mxu0
        %v2292 = vpop.f32.mrb[0].mxu0
        %v2293 = vadd.f32 0.0, %v2292
        %v2294 = vpop.f32.mrb[0].mxu0
        %2295 = vmatprep.mubr.bf16.mxu0 0
        %2296 = vmatmul.mubr.bf16.gmra.mrb[0].mxu0 %v2212
        %v2297 = vpop.f32.mrb[0].mxu0
        %v2298 = vadd.f32 0.0, %v2297
        %v2299 = vpop.f32.mrb[0].mxu0
        %v2300 = vpop.f32.mrb[0].mxu0
        %v2301 = vadd.f32 0.0, %v2300
        %v2302 = vpop.f32.mrb[0].mxu0
        %2303 = vmatprep.mubr.bf16.mxu0 0
        %2304 = vmatmul.mubr.bf16.gmra.mrb[0].mxu0 %v2213
        %v2305 = vpop.f32.mrb[0].mxu0
        %v2306 = vadd.f32 0.0, %v2305
        %v2307 = vpop.f32.mrb[0].mxu0
        %v2308 = vpop.f32.mrb[0].mxu0
        %v2309 = vadd.f32 0.0, %v2308
        %v2310 = vpop.f32.mrb[0].mxu0
        %2311 = vmatprep.mubr.bf16.mxu0 0
        %2312 = vmatmul.mubr.bf16.gmra.mrb[0].mxu0 %v2214
        %v2313 = vpop.f32.mrb[0].mxu0
        %v2314 = vadd.f32 0.0, %v2313
        %v2315 = vpop.f32.mrb[0].mxu0
        %v2316 = vpop.f32.mrb[0].mxu0
        %v2317 = vadd.f32 0.0, %v2316
        %v2318 = vpop.f32.mrb[0].mxu0
        %2319 = vdwg.mxu0
        %v2320 = vadd.f32 %v2062, %v2258
        %v2321 = vadd.f32 %v2063, %v2261
        %v2322 = vadd.f32 %v2064, %v2266
        %v2323 = vadd.f32 %v2065, %v2269
        %v2324 = vadd.f32 %v2066, %v2274
        %v2325 = vadd.f32 %v2067, %v2277
        %v2326 = vadd.f32 %v2068, %v2282
        %v2327 = vadd.f32 %v2069, %v2285
        %v2328 = vadd.f32 %v2070, %v2290
        %v2329 = vadd.f32 %v2071, %v2293
        %v2330 = vadd.f32 %v2072, %v2298
        %v2331 = vadd.f32 %v2073, %v2301
        %v2332 = vadd.f32 %v2074, %v2306
        %v2333 = vadd.f32 %v2075, %v2309
        %v2334 = vadd.f32 %v2076, %v2314
        %v2335 = vadd.f32 %v2077, %v2317
        %v2336 = vld [vmem:[%s445 + $0x8] sm:$0xe]
        %v2337 = vld [vmem:[%s445 + $0xc] sm:$0xf]
        %v2338 = vld [vmem:[%s445 + $0x10] sm:$0x1]
        %v2339 = vld [vmem:[%s445 + $0x1c] sm:$0xe]
        %v2340 = vld [vmem:[%s445 + $0x20] sm:$0xf]
        %v2341 = vld [vmem:[%s445 + $0x24] sm:$0x1]
        %v2342 = vld [vmem:[%s445 + $0x30] sm:$0xe]
        %v2343 = vld [vmem:[%s445 + $0x34] sm:$0xf]
        %v2344 = vld [vmem:[%s445 + $0x38] sm:$0x1]
        %v2345 = vld [vmem:[%s445 + $0x44] sm:$0xe]
        %v2346 = vld [vmem:[%s445 + $0x48] sm:$0xf]
        %v2347 = vld [vmem:[%s445 + $0x4c] sm:$0x1]
        %v2348 = vld [vmem:[%s445 + $0x58] sm:$0xe]
        %v2349 = vld [vmem:[%s445 + $0x5c] sm:$0xf]
        %v2350 = vld [vmem:[%s445 + $0x60] sm:$0x1]
        %v2351 = vld [vmem:[%s445 + $0x6c] sm:$0xe]
        %v2352 = vld [vmem:[%s445 + $0x70] sm:$0xf]
        %v2353 = vld [vmem:[%s445 + $0x74] sm:$0x1]
        %v2354 = vld [vmem:[%s445 + $0x80] sm:$0xe]
        %v2355 = vld [vmem:[%s445 + $0x84] sm:$0xf]
        %v2356 = vld [vmem:[%s445 + $0x88] sm:$0x1]
        %v2357 = vld [vmem:[%s445 + $0x94] sm:$0xe]
        %v2358 = vld [vmem:[%s445 + $0x98] sm:$0xf]
        %v2359 = vld [vmem:[%s445 + $0x9c] sm:$0x1]
        %v2384 = vrot.slane %v2336, 5
        %v2385 = vrot.slane %v2384, 4
        %v2386 = vrot.slane %v2337, 5
        %v2387 = vsel %vm1609, %v2385, %v2386
        %v2388 = vrot.slane %v2386, 4
        %v2389 = vrot.slane %v2338, 5
        %v2390 = vsel %vm1609, %v2388, %v2389
        %v2391 = vrot.slane %v2339, 5
        %v2392 = vrot.slane %v2391, 4
        %v2393 = vrot.slane %v2340, 5
        %v2394 = vsel %vm1609, %v2392, %v2393
        %v2395 = vrot.slane %v2393, 4
        %v2396 = vrot.slane %v2341, 5
        %v2397 = vsel %vm1609, %v2395, %v2396
        %v2398 = vrot.slane %v2342, 5
        %v2399 = vrot.slane %v2398, 4
        %v2400 = vrot.slane %v2343, 5
        %v2401 = vsel %vm1609, %v2399, %v2400
        %v2402 = vrot.slane %v2400, 4
        %v2403 = vrot.slane %v2344, 5
        %v2404 = vsel %vm1609, %v2402, %v2403
        %v2405 = vrot.slane %v2345, 5
        %v2406 = vrot.slane %v2405, 4
        %v2407 = vrot.slane %v2346, 5
        %v2408 = vsel %vm1609, %v2406, %v2407
        %v2409 = vrot.slane %v2407, 4
        %v2410 = vrot.slane %v2347, 5
        %v2411 = vsel %vm1609, %v2409, %v2410
        %v2412 = vrot.slane %v2348, 5
        %v2413 = vrot.slane %v2412, 4
        %v2414 = vrot.slane %v2349, 5
        %v2415 = vsel %vm1609, %v2413, %v2414
        %v2416 = vrot.slane %v2414, 4
        %v2417 = vrot.slane %v2350, 5
        %v2418 = vsel %vm1609, %v2416, %v2417
        %v2419 = vrot.slane %v2351, 5
        %v2420 = vrot.slane %v2419, 4
        %v2421 = vrot.slane %v2352, 5
        %v2422 = vsel %vm1609, %v2420, %v2421
        %v2423 = vrot.slane %v2421, 4
        %v2424 = vrot.slane %v2353, 5
        %v2425 = vsel %vm1609, %v2423, %v2424
        %v2426 = vrot.slane %v2354, 5
        %v2427 = vrot.slane %v2426, 4
        %v2428 = vrot.slane %v2355, 5
        %v2429 = vsel %vm1609, %v2427, %v2428
        %v2430 = vrot.slane %v2428, 4
        %v2431 = vrot.slane %v2356, 5
        %v2432 = vsel %vm1609, %v2430, %v2431
        %v2433 = vrot.slane %v2357, 5
        %v2434 = vrot.slane %v2433, 4
        %v2435 = vrot.slane %v2358, 5
        %v2436 = vsel %vm1609, %v2434, %v2435
        %v2437 = vrot.slane %v2435, 4
        %v2438 = vrot.slane %v2359, 5
        %v2439 = vsel %vm1609, %v2437, %v2438
        %s2440 = scalar_lea.vmem [#allocation3], 320
        %v2441 = vld [vmem:[%s2440] sm:$0xff]
        %v2442 = vld [vmem:[%s2440 + $0x8] sm:$0xff]
        %v2443 = vld [vmem:[%s2440 + $0x10] sm:$0xff]
        %v2444 = vld [vmem:[%s2440 + $0x18] sm:$0xff]
        %v2445 = vld [vmem:[%s2440 + $0x20] sm:$0xff]
        %v2446 = vld [vmem:[%s2440 + $0x28] sm:$0xff]
        %v2447 = vld [vmem:[%s2440 + $0x30] sm:$0xff]
        %v2448 = vld [vmem:[%s2440 + $0x38] sm:$0xff]
        %v2449 = vunpack.c.l.b16 %v2387
        %v2450 = vunpack.c.l.b16 %v2390
        %v2451 = vunpack.c.l.b16 %v2394
        %v2452 = vunpack.c.l.b16 %v2397
        %v2453 = vunpack.c.l.b16 %v2401
        %v2454 = vunpack.c.l.b16 %v2404
        %v2455 = vunpack.c.l.b16 %v2408
        %v2456 = vunpack.c.l.b16 %v2411
        %v2457 = vunpack.c.l.b16 %v2415
        %v2458 = vunpack.c.l.b16 %v2418
        %v2459 = vunpack.c.l.b16 %v2422
        %v2460 = vunpack.c.l.b16 %v2425
        %v2461 = vunpack.c.l.b16 %v2429
        %v2462 = vunpack.c.l.b16 %v2432
        %v2463 = vunpack.c.l.b16 %v2436
        %v2464 = vunpack.c.l.b16 %v2439
        %v2465 = vpack.c.b16 %v2450, %v2449
        %v2466 = vpack.c.b16 %v2452, %v2451
        %v2467 = vpack.c.b16 %v2454, %v2453
        %v2468 = vpack.c.b16 %v2456, %v2455
        %v2469 = vpack.c.b16 %v2458, %v2457
        %v2470 = vpack.c.b16 %v2460, %v2459
        %v2471 = vpack.c.b16 %v2462, %v2461
        %v2472 = vpack.c.b16 %v2464, %v2463
        %2481 = vmatprep.subr.bf16.mxu0 0
        %2482 = vmatpush1.bf16.msra.mxu0 %v2441
        %2483 = vmatprep.subr.bf16.mxu0 0
        %2484 = vmatpush1.bf16.msra.mxu0 %v2442
        %2485 = vmatprep.subr.bf16.mxu0 0
        %2486 = vmatpush1.bf16.msra.mxu0 %v2443
        %2487 = vmatprep.subr.bf16.mxu0 0
        %2488 = vmatpush1.bf16.msra.mxu0 %v2444
        %2489 = vmatprep.subr.bf16.mxu0 0
        %2490 = vmatpush1.bf16.msra.mxu0 %v2445
        %2491 = vmatprep.subr.bf16.mxu0 0
        %2492 = vmatpush1.bf16.msra.mxu0 %v2446
        %2493 = vmatprep.subr.bf16.mxu0 0
        %2494 = vmatpush1.bf16.msra.mxu0 %v2447
        %2495 = vmatprep.subr.bf16.mxu0 0
        %2496 = vmatpush1.bf16.msra.mxu0 %v2448
        %2497 = vmatprep.subr.bf16.mxu0 0
        %2498 = vmatpush1.bf16.msra.mxu0 0
        %2499 = vmatprep.subr.bf16.mxu0 0
        %2500 = vmatpush1.bf16.msra.mxu0 0
        %2501 = vmatprep.subr.bf16.mxu0 0
        %2502 = vmatpush1.bf16.msra.mxu0 0
        %2503 = vmatprep.subr.bf16.mxu0 0
        %2504 = vmatpush1.bf16.msra.mxu0 0
        %2505 = vmatprep.subr.bf16.mxu0 0
        %2506 = vmatpush1.bf16.msra.mxu0 0
        %2507 = vmatprep.subr.bf16.mxu0 0
        %2508 = vmatpush1.bf16.msra.mxu0 0
        %2509 = vmatprep.subr.bf16.mxu0 0
        %2510 = vmatpush1.bf16.msra.mxu0 0
        %2511 = vmatprep.subr.bf16.mxu0 0
        %2512 = vmatpush1.bf16.msra.mxu0 0
        %2513 = vmatprep.mubr.bf16.mxu0 0
        %2514 = vmatmul.mubr.bf16.gmra.mrb[0].mxu0 %v2465
        %v2515 = vpop.f32.mrb[0].mxu0
        %v2516 = vadd.f32 0.0, %v2515
        %v2517 = vpop.f32.mrb[0].mxu0
        %v2518 = vpop.f32.mrb[0].mxu0
        %v2519 = vadd.f32 0.0, %v2518
        %v2520 = vpop.f32.mrb[0].mxu0
        %2521 = vmatprep.mubr.bf16.mxu0 0
        %2522 = vmatmul.mubr.bf16.gmra.mrb[0].mxu0 %v2466
        %v2523 = vpop.f32.mrb[0].mxu0
        %v2524 = vadd.f32 0.0, %v2523
        %v2525 = vpop.f32.mrb[0].mxu0
        %v2526 = vpop.f32.mrb[0].mxu0
        %v2527 = vadd.f32 0.0, %v2526
        %v2528 = vpop.f32.mrb[0].mxu0
        %2529 = vmatprep.mubr.bf16.mxu0 0
        %2530 = vmatmul.mubr.bf16.gmra.mrb[0].mxu0 %v2467
        %v2531 = vpop.f32.mrb[0].mxu0
        %v2532 = vadd.f32 0.0, %v2531
        %v2533 = vpop.f32.mrb[0].mxu0
        %v2534 = vpop.f32.mrb[0].mxu0
        %v2535 = vadd.f32 0.0, %v2534
        %v2536 = vpop.f32.mrb[0].mxu0
        %2537 = vmatprep.mubr.bf16.mxu0 0
        %2538 = vmatmul.mubr.bf16.gmra.mrb[0].mxu0 %v2468
        %v2539 = vpop.f32.mrb[0].mxu0
        %v2540 = vadd.f32 0.0, %v2539
        %v2541 = vpop.f32.mrb[0].mxu0
        %v2542 = vpop.f32.mrb[0].mxu0
        %v2543 = vadd.f32 0.0, %v2542
        %v2544 = vpop.f32.mrb[0].mxu0
        %2545 = vmatprep.mubr.bf16.mxu0 0
        %2546 = vmatmul.mubr.bf16.gmra.mrb[0].mxu0 %v2469
        %v2547 = vpop.f32.mrb[0].mxu0
        %v2548 = vadd.f32 0.0, %v2547
        %v2549 = vpop.f32.mrb[0].mxu0
        %v2550 = vpop.f32.mrb[0].mxu0
        %v2551 = vadd.f32 0.0, %v2550
        %v2552 = vpop.f32.mrb[0].mxu0
        %2553 = vmatprep.mubr.bf16.mxu0 0
        %2554 = vmatmul.mubr.bf16.gmra.mrb[0].mxu0 %v2470
        %v2555 = vpop.f32.mrb[0].mxu0
        %v2556 = vadd.f32 0.0, %v2555
        %v2557 = vpop.f32.mrb[0].mxu0
        %v2558 = vpop.f32.mrb[0].mxu0
        %v2559 = vadd.f32 0.0, %v2558
        %v2560 = vpop.f32.mrb[0].mxu0
        %2561 = vmatprep.mubr.bf16.mxu0 0
        %2562 = vmatmul.mubr.bf16.gmra.mrb[0].mxu0 %v2471
        %v2563 = vpop.f32.mrb[0].mxu0
        %v2564 = vadd.f32 0.0, %v2563
        %v2565 = vpop.f32.mrb[0].mxu0
        %v2566 = vpop.f32.mrb[0].mxu0
        %v2567 = vadd.f32 0.0, %v2566
        %v2568 = vpop.f32.mrb[0].mxu0
        %2569 = vmatprep.mubr.bf16.mxu0 0
        %2570 = vmatmul.mubr.bf16.gmra.mrb[0].mxu0 %v2472
        %v2571 = vpop.f32.mrb[0].mxu0
        %v2572 = vadd.f32 0.0, %v2571
        %v2573 = vpop.f32.mrb[0].mxu0
        %v2574 = vpop.f32.mrb[0].mxu0
        %v2575 = vadd.f32 0.0, %v2574
        %v2576 = vpop.f32.mrb[0].mxu0
        %2577 = vdwg.mxu0
        %v2578 = vadd.f32 %v2320, %v2516
        %v2579 = vadd.f32 %v2321, %v2519
        %v2580 = vadd.f32 %v2322, %v2524
        %v2581 = vadd.f32 %v2323, %v2527
        %v2582 = vadd.f32 %v2324, %v2532
        %v2583 = vadd.f32 %v2325, %v2535
        %v2584 = vadd.f32 %v2326, %v2540
        %v2585 = vadd.f32 %v2327, %v2543
        %v2586 = vadd.f32 %v2328, %v2548
        %v2587 = vadd.f32 %v2329, %v2551
        %v2588 = vadd.f32 %v2330, %v2556
        %v2589 = vadd.f32 %v2331, %v2559
        %v2590 = vadd.f32 %v2332, %v2564
        %v2591 = vadd.f32 %v2333, %v2567
        %v2592 = vadd.f32 %v2334, %v2572
        %v2593 = vadd.f32 %v2335, %v2575
        %s2594 = scalar_lea.vmem [#allocation2], 360
        %v2595 = vld [vmem:[%s2594] sm:$0x8]
        %v2596 = vld [vmem:[%s2594 + $0x4] sm:$0xf]
        %v2597 = vld [vmem:[%s2594 + $0x8] sm:$0x7]
        %v2598 = vld [vmem:[%s2594 + $0x14] sm:$0x8]
        %v2599 = vld [vmem:[%s2594 + $0x18] sm:$0xf]
        %v2600 = vld [vmem:[%s2594 + $0x1c] sm:$0x7]
        %v2601 = vld [vmem:[%s2594 + $0x28] sm:$0x8]
        %v2602 = vld [vmem:[%s2594 + $0x2c] sm:$0xf]
        %v2603 = vld [vmem:[%s2594 + $0x30] sm:$0x7]
        %v2604 = vld [vmem:[%s2594 + $0x3c] sm:$0x8]
        %v2605 = vld [vmem:[%s2594 + $0x40] sm:$0xf]
        %v2606 = vld [vmem:[%s2594 + $0x44] sm:$0x7]
        %v2607 = vld [vmem:[%s2594 + $0x50] sm:$0x8]
        %v2608 = vld [vmem:[%s2594 + $0x54] sm:$0xf]
        %v2609 = vld [vmem:[%s2594 + $0x58] sm:$0x7]
        %v2610 = vld [vmem:[%s2594 + $0x64] sm:$0x8]
        %v2611 = vld [vmem:[%s2594 + $0x68] sm:$0xf]
        %v2612 = vld [vmem:[%s2594 + $0x6c] sm:$0x7]
        %v2613 = vld [vmem:[%s2594 + $0x78] sm:$0x8]
        %v2614 = vld [vmem:[%s2594 + $0x7c] sm:$0xf]
        %v2615 = vld [vmem:[%s2594 + $0x80] sm:$0x7]
        %v2616 = vld [vmem:[%s2594 + $0x8c] sm:$0x8]
        %v2617 = vld [vmem:[%s2594 + $0x90] sm:$0xf]
        %v2618 = vld [vmem:[%s2594 + $0x94] sm:$0x7]
        %v2643 = vrot.slane %v2595, 7
        %v2644 = vrot.slane %v2643, 4
        %v2645 = vrot.slane %v2596, 7
        %v2646 = vsel %vm1123, %v2644, %v2645
        %v2647 = vrot.slane %v2645, 4
        %v2648 = vrot.slane %v2597, 7
        %v2649 = vsel %vm1123, %v2647, %v2648
        %v2650 = vrot.slane %v2598, 7
        %v2651 = vrot.slane %v2650, 4
        %v2652 = vrot.slane %v2599, 7
        %v2653 = vsel %vm1123, %v2651, %v2652
        %v2654 = vrot.slane %v2652, 4
        %v2655 = vrot.slane %v2600, 7
        %v2656 = vsel %vm1123, %v2654, %v2655
        %v2657 = vrot.slane %v2601, 7
        %v2658 = vrot.slane %v2657, 4
        %v2659 = vrot.slane %v2602, 7
        %v2660 = vsel %vm1123, %v2658, %v2659
        %v2661 = vrot.slane %v2659, 4
        %v2662 = vrot.slane %v2603, 7
        %v2663 = vsel %vm1123, %v2661, %v2662
        %v2664 = vrot.slane %v2604, 7
        %v2665 = vrot.slane %v2664, 4
        %v2666 = vrot.slane %v2605, 7
        %v2667 = vsel %vm1123, %v2665, %v2666
        %v2668 = vrot.slane %v2666, 4
        %v2669 = vrot.slane %v2606, 7
        %v2670 = vsel %vm1123, %v2668, %v2669
        %v2671 = vrot.slane %v2607, 7
        %v2672 = vrot.slane %v2671, 4
        %v2673 = vrot.slane %v2608, 7
        %v2674 = vsel %vm1123, %v2672, %v2673
        %v2675 = vrot.slane %v2673, 4
        %v2676 = vrot.slane %v2609, 7
        %v2677 = vsel %vm1123, %v2675, %v2676
        %v2678 = vrot.slane %v2610, 7
        %v2679 = vrot.slane %v2678, 4
        %v2680 = vrot.slane %v2611, 7
        %v2681 = vsel %vm1123, %v2679, %v2680
        %v2682 = vrot.slane %v2680, 4
        %v2683 = vrot.slane %v2612, 7
        %v2684 = vsel %vm1123, %v2682, %v2683
        %v2685 = vrot.slane %v2613, 7
        %v2686 = vrot.slane %v2685, 4
        %v2687 = vrot.slane %v2614, 7
        %v2688 = vsel %vm1123, %v2686, %v2687
        %v2689 = vrot.slane %v2687, 4
        %v2690 = vrot.slane %v2615, 7
        %v2691 = vsel %vm1123, %v2689, %v2690
        %v2692 = vrot.slane %v2616, 7
        %v2693 = vrot.slane %v2692, 4
        %v2694 = vrot.slane %v2617, 7
        %v2695 = vsel %vm1123, %v2693, %v2694
        %v2696 = vrot.slane %v2694, 4
        %v2697 = vrot.slane %v2618, 7
        %v2698 = vsel %vm1123, %v2696, %v2697
        %s2699 = scalar_lea.vmem [#allocation3], 384
        %v2700 = vld [vmem:[%s2699] sm:$0xff]
        %v2701 = vld [vmem:[%s2699 + $0x8] sm:$0xff]
        %v2702 = vld [vmem:[%s2699 + $0x10] sm:$0xff]
        %v2703 = vld [vmem:[%s2699 + $0x18] sm:$0xff]
        %v2704 = vld [vmem:[%s2699 + $0x20] sm:$0xff]
        %v2705 = vld [vmem:[%s2699 + $0x28] sm:$0xff]
        %v2706 = vld [vmem:[%s2699 + $0x30] sm:$0xff]
        %v2707 = vld [vmem:[%s2699 + $0x38] sm:$0xff]
        %v2708 = vunpack.c.l.b16 %v2646
        %v2709 = vunpack.c.l.b16 %v2649
        %v2710 = vunpack.c.l.b16 %v2653
        %v2711 = vunpack.c.l.b16 %v2656
        %v2712 = vunpack.c.l.b16 %v2660
        %v2713 = vunpack.c.l.b16 %v2663
        %v2714 = vunpack.c.l.b16 %v2667
        %v2715 = vunpack.c.l.b16 %v2670
        %v2716 = vunpack.c.l.b16 %v2674
        %v2717 = vunpack.c.l.b16 %v2677
        %v2718 = vunpack.c.l.b16 %v2681
        %v2719 = vunpack.c.l.b16 %v2684
        %v2720 = vunpack.c.l.b16 %v2688
        %v2721 = vunpack.c.l.b16 %v2691
        %v2722 = vunpack.c.l.b16 %v2695
        %v2723 = vunpack.c.l.b16 %v2698
        %v2724 = vpack.c.b16 %v2709, %v2708
        %v2725 = vpack.c.b16 %v2711, %v2710
        %v2726 = vpack.c.b16 %v2713, %v2712
        %v2727 = vpack.c.b16 %v2715, %v2714
        %v2728 = vpack.c.b16 %v2717, %v2716
        %v2729 = vpack.c.b16 %v2719, %v2718
        %v2730 = vpack.c.b16 %v2721, %v2720
        %v2731 = vpack.c.b16 %v2723, %v2722
        %2740 = vmatprep.subr.bf16.mxu0 0
        %2741 = vmatpush1.bf16.msra.mxu0 %v2700
        %2742 = vmatprep.subr.bf16.mxu0 0
        %2743 = vmatpush1.bf16.msra.mxu0 %v2701
        %2744 = vmatprep.subr.bf16.mxu0 0
        %2745 = vmatpush1.bf16.msra.mxu0 %v2702
        %2746 = vmatprep.subr.bf16.mxu0 0
        %2747 = vmatpush1.bf16.msra.mxu0 %v2703
        %2748 = vmatprep.subr.bf16.mxu0 0
        %2749 = vmatpush1.bf16.msra.mxu0 %v2704
        %2750 = vmatprep.subr.bf16.mxu0 0
        %2751 = vmatpush1.bf16.msra.mxu0 %v2705
        %2752 = vmatprep.subr.bf16.mxu0 0
        %2753 = vmatpush1.bf16.msra.mxu0 %v2706
        %2754 = vmatprep.subr.bf16.mxu0 0
        %2755 = vmatpush1.bf16.msra.mxu0 %v2707
        %2756 = vmatprep.subr.bf16.mxu0 0
        %2757 = vmatpush1.bf16.msra.mxu0 0
        %2758 = vmatprep.subr.bf16.mxu0 0
        %2759 = vmatpush1.bf16.msra.mxu0 0
        %2760 = vmatprep.subr.bf16.mxu0 0
        %2761 = vmatpush1.bf16.msra.mxu0 0
        %2762 = vmatprep.subr.bf16.mxu0 0
        %2763 = vmatpush1.bf16.msra.mxu0 0
        %2764 = vmatprep.subr.bf16.mxu0 0
        %2765 = vmatpush1.bf16.msra.mxu0 0
        %2766 = vmatprep.subr.bf16.mxu0 0
        %2767 = vmatpush1.bf16.msra.mxu0 0
        %2768 = vmatprep.subr.bf16.mxu0 0
        %2769 = vmatpush1.bf16.msra.mxu0 0
        %2770 = vmatprep.subr.bf16.mxu0 0
        %2771 = vmatpush1.bf16.msra.mxu0 0
        %2772 = vmatprep.mubr.bf16.mxu0 0
        %2773 = vmatmul.mubr.bf16.gmra.mrb[0].mxu0 %v2724
        %v2774 = vpop.f32.mrb[0].mxu0
        %v2775 = vadd.f32 0.0, %v2774
        %v2776 = vpop.f32.mrb[0].mxu0
        %v2777 = vpop.f32.mrb[0].mxu0
        %v2778 = vadd.f32 0.0, %v2777
        %v2779 = vpop.f32.mrb[0].mxu0
        %2780 = vmatprep.mubr.bf16.mxu0 0
        %2781 = vmatmul.mubr.bf16.gmra.mrb[0].mxu0 %v2725
        %v2782 = vpop.f32.mrb[0].mxu0
        %v2783 = vadd.f32 0.0, %v2782
        %v2784 = vpop.f32.mrb[0].mxu0
        %v2785 = vpop.f32.mrb[0].mxu0
        %v2786 = vadd.f32 0.0, %v2785
        %v2787 = vpop.f32.mrb[0].mxu0
        %2788 = vmatprep.mubr.bf16.mxu0 0
        %2789 = vmatmul.mubr.bf16.gmra.mrb[0].mxu0 %v2726
        %v2790 = vpop.f32.mrb[0].mxu0
        %v2791 = vadd.f32 0.0, %v2790
        %v2792 = vpop.f32.mrb[0].mxu0
        %v2793 = vpop.f32.mrb[0].mxu0
        %v2794 = vadd.f32 0.0, %v2793
        %v2795 = vpop.f32.mrb[0].mxu0
        %2796 = vmatprep.mubr.bf16.mxu0 0
        %2797 = vmatmul.mubr.bf16.gmra.mrb[0].mxu0 %v2727
        %v2798 = vpop.f32.mrb[0].mxu0
        %v2799 = vadd.f32 0.0, %v2798
        %v2800 = vpop.f32.mrb[0].mxu0
        %v2801 = vpop.f32.mrb[0].mxu0
        %v2802 = vadd.f32 0.0, %v2801
        %v2803 = vpop.f32.mrb[0].mxu0
        %2804 = vmatprep.mubr.bf16.mxu0 0
        %2805 = vmatmul.mubr.bf16.gmra.mrb[0].mxu0 %v2728
        %v2806 = vpop.f32.mrb[0].mxu0
        %v2807 = vadd.f32 0.0, %v2806
        %v2808 = vpop.f32.mrb[0].mxu0
        %v2809 = vpop.f32.mrb[0].mxu0
        %v2810 = vadd.f32 0.0, %v2809
        %v2811 = vpop.f32.mrb[0].mxu0
        %2812 = vmatprep.mubr.bf16.mxu0 0
        %2813 = vmatmul.mubr.bf16.gmra.mrb[0].mxu0 %v2729
        %v2814 = vpop.f32.mrb[0].mxu0
        %v2815 = vadd.f32 0.0, %v2814
        %v2816 = vpop.f32.mrb[0].mxu0
        %v2817 = vpop.f32.mrb[0].mxu0
        %v2818 = vadd.f32 0.0, %v2817
        %v2819 = vpop.f32.mrb[0].mxu0
        %2820 = vmatprep.mubr.bf16.mxu0 0
        %2821 = vmatmul.mubr.bf16.gmra.mrb[0].mxu0 %v2730
        %v2822 = vpop.f32.mrb[0].mxu0
        %v2823 = vadd.f32 0.0, %v2822
        %v2824 = vpop.f32.mrb[0].mxu0
        %v2825 = vpop.f32.mrb[0].mxu0
        %v2826 = vadd.f32 0.0, %v2825
        %v2827 = vpop.f32.mrb[0].mxu0
        %2828 = vmatprep.mubr.bf16.mxu0 0
        %2829 = vmatmul.mubr.bf16.gmra.mrb[0].mxu0 %v2731
        %v2830 = vpop.f32.mrb[0].mxu0
        %v2831 = vadd.f32 0.0, %v2830
        %v2832 = vpop.f32.mrb[0].mxu0
        %v2833 = vpop.f32.mrb[0].mxu0
        %v2834 = vadd.f32 0.0, %v2833
        %v2835 = vpop.f32.mrb[0].mxu0
        %2836 = vdwg.mxu0
        %v2837 = vadd.f32 %v2578, %v2775
        %v2838 = vadd.f32 %v2579, %v2778
        %v2839 = vadd.f32 %v2580, %v2783
        %v2840 = vadd.f32 %v2581, %v2786
        %v2841 = vadd.f32 %v2582, %v2791
        %v2842 = vadd.f32 %v2583, %v2794
        %v2843 = vadd.f32 %v2584, %v2799
        %v2844 = vadd.f32 %v2585, %v2802
        %v2845 = vadd.f32 %v2586, %v2807
        %v2846 = vadd.f32 %v2587, %v2810
        %v2847 = vadd.f32 %v2588, %v2815
        %v2848 = vadd.f32 %v2589, %v2818
        %v2849 = vadd.f32 %v2590, %v2823
        %v2850 = vadd.f32 %v2591, %v2826
        %v2851 = vadd.f32 %v2592, %v2831
        %v2852 = vadd.f32 %v2593, %v2834
        %v2853 = vld [vmem:[%s2594 + $0x4] sm:$0xc]
        %v2854 = vld [vmem:[%s2594 + $0x8] sm:$0xf]
        %v2855 = vld [vmem:[%s2594 + $0xc] sm:$0x3]
        %v2856 = vld [vmem:[%s2594 + $0x18] sm:$0xc]
        %v2857 = vld [vmem:[%s2594 + $0x1c] sm:$0xf]
        %v2858 = vld [vmem:[%s2594 + $0x20] sm:$0x3]
        %v2859 = vld [vmem:[%s2594 + $0x2c] sm:$0xc]
        %v2860 = vld [vmem:[%s2594 + $0x30] sm:$0xf]
        %v2861 = vld [vmem:[%s2594 + $0x34] sm:$0x3]
        %v2862 = vld [vmem:[%s2594 + $0x40] sm:$0xc]
        %v2863 = vld [vmem:[%s2594 + $0x44] sm:$0xf]
        %v2864 = vld [vmem:[%s2594 + $0x48] sm:$0x3]
        %v2865 = vld [vmem:[%s2594 + $0x54] sm:$0xc]
        %v2866 = vld [vmem:[%s2594 + $0x58] sm:$0xf]
        %v2867 = vld [vmem:[%s2594 + $0x5c] sm:$0x3]
        %v2868 = vld [vmem:[%s2594 + $0x68] sm:$0xc]
        %v2869 = vld [vmem:[%s2594 + $0x6c] sm:$0xf]
        %v2870 = vld [vmem:[%s2594 + $0x70] sm:$0x3]
        %v2871 = vld [vmem:[%s2594 + $0x7c] sm:$0xc]
        %v2872 = vld [vmem:[%s2594 + $0x80] sm:$0xf]
        %v2873 = vld [vmem:[%s2594 + $0x84] sm:$0x3]
        %v2874 = vld [vmem:[%s2594 + $0x90] sm:$0xc]
        %v2875 = vld [vmem:[%s2594 + $0x94] sm:$0xf]
        %v2876 = vld [vmem:[%s2594 + $0x98] sm:$0x3]
        %v2901 = vrot.slane %v2853, 6
        %v2902 = vrot.slane %v2901, 4
        %v2903 = vrot.slane %v2854, 6
        %v2904 = vsel %vm496, %v2902, %v2903
        %v2905 = vrot.slane %v2903, 4
        %v2906 = vrot.slane %v2855, 6
        %v2907 = vsel %vm496, %v2905, %v2906
        %v2908 = vrot.slane %v2856, 6
        %v2909 = vrot.slane %v2908, 4
        %v2910 = vrot.slane %v2857, 6
        %v2911 = vsel %vm496, %v2909, %v2910
        %v2912 = vrot.slane %v2910, 4
        %v2913 = vrot.slane %v2858, 6
        %v2914 = vsel %vm496, %v2912, %v2913
        %v2915 = vrot.slane %v2859, 6
        %v2916 = vrot.slane %v2915, 4
        %v2917 = vrot.slane %v2860, 6
        %v2918 = vsel %vm496, %v2916, %v2917
        %v2919 = vrot.slane %v2917, 4
        %v2920 = vrot.slane %v2861, 6
        %v2921 = vsel %vm496, %v2919, %v2920
        %v2922 = vrot.slane %v2862, 6
        %v2923 = vrot.slane %v2922, 4
        %v2924 = vrot.slane %v2863, 6
        %v2925 = vsel %vm496, %v2923, %v2924
        %v2926 = vrot.slane %v2924, 4
        %v2927 = vrot.slane %v2864, 6
        %v2928 = vsel %vm496, %v2926, %v2927
        %v2929 = vrot.slane %v2865, 6
        %v2930 = vrot.slane %v2929, 4
        %v2931 = vrot.slane %v2866, 6
        %v2932 = vsel %vm496, %v2930, %v2931
        %v2933 = vrot.slane %v2931, 4
        %v2934 = vrot.slane %v2867, 6
        %v2935 = vsel %vm496, %v2933, %v2934
        %v2936 = vrot.slane %v2868, 6
        %v2937 = vrot.slane %v2936, 4
        %v2938 = vrot.slane %v2869, 6
        %v2939 = vsel %vm496, %v2937, %v2938
        %v2940 = vrot.slane %v2938, 4
        %v2941 = vrot.slane %v2870, 6
        %v2942 = vsel %vm496, %v2940, %v2941
        %v2943 = vrot.slane %v2871, 6
        %v2944 = vrot.slane %v2943, 4
        %v2945 = vrot.slane %v2872, 6
        %v2946 = vsel %vm496, %v2944, %v2945
        %v2947 = vrot.slane %v2945, 4
        %v2948 = vrot.slane %v2873, 6
        %v2949 = vsel %vm496, %v2947, %v2948
        %v2950 = vrot.slane %v2874, 6
        %v2951 = vrot.slane %v2950, 4
        %v2952 = vrot.slane %v2875, 6
        %v2953 = vsel %vm496, %v2951, %v2952
        %v2954 = vrot.slane %v2952, 4
        %v2955 = vrot.slane %v2876, 6
        %v2956 = vsel %vm496, %v2954, %v2955
        %s2957 = scalar_lea.vmem [#allocation3], 448
        %v2958 = vld [vmem:[%s2957] sm:$0xff]
        %v2959 = vld [vmem:[%s2957 + $0x8] sm:$0xff]
        %v2960 = vld [vmem:[%s2957 + $0x10] sm:$0xff]
        %v2961 = vld [vmem:[%s2957 + $0x18] sm:$0xff]
        %v2962 = vld [vmem:[%s2957 + $0x20] sm:$0xff]
        %v2963 = vld [vmem:[%s2957 + $0x28] sm:$0xff]
        %v2964 = vld [vmem:[%s2957 + $0x30] sm:$0xff]
        %v2965 = vld [vmem:[%s2957 + $0x38] sm:$0xff]
        %v2966 = vunpack.c.l.b16 %v2904
        %v2967 = vunpack.c.l.b16 %v2907
        %v2968 = vunpack.c.l.b16 %v2911
        %v2969 = vunpack.c.l.b16 %v2914
        %v2970 = vunpack.c.l.b16 %v2918
        %v2971 = vunpack.c.l.b16 %v2921
        %v2972 = vunpack.c.l.b16 %v2925
        %v2973 = vunpack.c.l.b16 %v2928
        %v2974 = vunpack.c.l.b16 %v2932
        %v2975 = vunpack.c.l.b16 %v2935
        %v2976 = vunpack.c.l.b16 %v2939
        %v2977 = vunpack.c.l.b16 %v2942
        %v2978 = vunpack.c.l.b16 %v2946
        %v2979 = vunpack.c.l.b16 %v2949
        %v2980 = vunpack.c.l.b16 %v2953
        %v2981 = vunpack.c.l.b16 %v2956
        %v2982 = vpack.c.b16 %v2967, %v2966
        %v2983 = vpack.c.b16 %v2969, %v2968
        %v2984 = vpack.c.b16 %v2971, %v2970
        %v2985 = vpack.c.b16 %v2973, %v2972
        %v2986 = vpack.c.b16 %v2975, %v2974
        %v2987 = vpack.c.b16 %v2977, %v2976
        %v2988 = vpack.c.b16 %v2979, %v2978
        %v2989 = vpack.c.b16 %v2981, %v2980
        %2998 = vmatprep.subr.bf16.mxu0 0
        %2999 = vmatpush1.bf16.msra.mxu0 %v2958
        %3000 = vmatprep.subr.bf16.mxu0 0
        %3001 = vmatpush1.bf16.msra.mxu0 %v2959
        %3002 = vmatprep.subr.bf16.mxu0 0
        %3003 = vmatpush1.bf16.msra.mxu0 %v2960
        %3004 = vmatprep.subr.bf16.mxu0 0
        %3005 = vmatpush1.bf16.msra.mxu0 %v2961
        %3006 = vmatprep.subr.bf16.mxu0 0
        %3007 = vmatpush1.bf16.msra.mxu0 %v2962
        %3008 = vmatprep.subr.bf16.mxu0 0
        %3009 = vmatpush1.bf16.msra.mxu0 %v2963
        %3010 = vmatprep.subr.bf16.mxu0 0
        %3011 = vmatpush1.bf16.msra.mxu0 %v2964
        %3012 = vmatprep.subr.bf16.mxu0 0
        %3013 = vmatpush1.bf16.msra.mxu0 %v2965
        %3014 = vmatprep.subr.bf16.mxu0 0
        %3015 = vmatpush1.bf16.msra.mxu0 0
        %3016 = vmatprep.subr.bf16.mxu0 0
        %3017 = vmatpush1.bf16.msra.mxu0 0
        %3018 = vmatprep.subr.bf16.mxu0 0
        %3019 = vmatpush1.bf16.msra.mxu0 0
        %3020 = vmatprep.subr.bf16.mxu0 0
        %3021 = vmatpush1.bf16.msra.mxu0 0
        %3022 = vmatprep.subr.bf16.mxu0 0
        %3023 = vmatpush1.bf16.msra.mxu0 0
        %3024 = vmatprep.subr.bf16.mxu0 0
        %3025 = vmatpush1.bf16.msra.mxu0 0
        %3026 = vmatprep.subr.bf16.mxu0 0
        %3027 = vmatpush1.bf16.msra.mxu0 0
        %3028 = vmatprep.subr.bf16.mxu0 0
        %3029 = vmatpush1.bf16.msra.mxu0 0
        %3030 = vmatprep.mubr.bf16.mxu0 0
        %3031 = vmatmul.mubr.bf16.gmra.mrb[0].mxu0 %v2982
        %v3032 = vpop.f32.mrb[0].mxu0
        %v3033 = vadd.f32 0.0, %v3032
        %v3034 = vpop.f32.mrb[0].mxu0
        %v3035 = vpop.f32.mrb[0].mxu0
        %v3036 = vadd.f32 0.0, %v3035
        %v3037 = vpop.f32.mrb[0].mxu0
        %3038 = vmatprep.mubr.bf16.mxu0 0
        %3039 = vmatmul.mubr.bf16.gmra.mrb[0].mxu0 %v2983
        %v3040 = vpop.f32.mrb[0].mxu0
        %v3041 = vadd.f32 0.0, %v3040
        %v3042 = vpop.f32.mrb[0].mxu0
        %v3043 = vpop.f32.mrb[0].mxu0
        %v3044 = vadd.f32 0.0, %v3043
        %v3045 = vpop.f32.mrb[0].mxu0
        %3046 = vmatprep.mubr.bf16.mxu0 0
        %3047 = vmatmul.mubr.bf16.gmra.mrb[0].mxu0 %v2984
        %v3048 = vpop.f32.mrb[0].mxu0
        %v3049 = vadd.f32 0.0, %v3048
        %v3050 = vpop.f32.mrb[0].mxu0
        %v3051 = vpop.f32.mrb[0].mxu0
        %v3052 = vadd.f32 0.0, %v3051
        %v3053 = vpop.f32.mrb[0].mxu0
        %3054 = vmatprep.mubr.bf16.mxu0 0
        %3055 = vmatmul.mubr.bf16.gmra.mrb[0].mxu0 %v2985
        %v3056 = vpop.f32.mrb[0].mxu0
        %v3057 = vadd.f32 0.0, %v3056
        %v3058 = vpop.f32.mrb[0].mxu0
        %v3059 = vpop.f32.mrb[0].mxu0
        %v3060 = vadd.f32 0.0, %v3059
        %v3061 = vpop.f32.mrb[0].mxu0
        %3062 = vmatprep.mubr.bf16.mxu0 0
        %3063 = vmatmul.mubr.bf16.gmra.mrb[0].mxu0 %v2986
        %v3064 = vpop.f32.mrb[0].mxu0
        %v3065 = vadd.f32 0.0, %v3064
        %v3066 = vpop.f32.mrb[0].mxu0
        %v3067 = vpop.f32.mrb[0].mxu0
        %v3068 = vadd.f32 0.0, %v3067
        %v3069 = vpop.f32.mrb[0].mxu0
        %3070 = vmatprep.mubr.bf16.mxu0 0
        %3071 = vmatmul.mubr.bf16.gmra.mrb[0].mxu0 %v2987
        %v3072 = vpop.f32.mrb[0].mxu0
        %v3073 = vadd.f32 0.0, %v3072
        %v3074 = vpop.f32.mrb[0].mxu0
        %v3075 = vpop.f32.mrb[0].mxu0
        %v3076 = vadd.f32 0.0, %v3075
        %v3077 = vpop.f32.mrb[0].mxu0
        %3078 = vmatprep.mubr.bf16.mxu0 0
        %3079 = vmatmul.mubr.bf16.gmra.mrb[0].mxu0 %v2988
        %v3080 = vpop.f32.mrb[0].mxu0
        %v3081 = vadd.f32 0.0, %v3080
        %v3082 = vpop.f32.mrb[0].mxu0
        %v3083 = vpop.f32.mrb[0].mxu0
        %v3084 = vadd.f32 0.0, %v3083
        %v3085 = vpop.f32.mrb[0].mxu0
        %3086 = vmatprep.mubr.bf16.mxu0 0
        %3087 = vmatmul.mubr.bf16.gmra.mrb[0].mxu0 %v2989
        %v3088 = vpop.f32.mrb[0].mxu0
        %v3089 = vadd.f32 0.0, %v3088
        %v3090 = vpop.f32.mrb[0].mxu0
        %v3091 = vpop.f32.mrb[0].mxu0
        %v3092 = vadd.f32 0.0, %v3091
        %v3093 = vpop.f32.mrb[0].mxu0
        %3094 = vdwg.mxu0
        %v3095 = vadd.f32 %v2837, %v3033
        %v3096 = vadd.f32 %v2838, %v3036
        %v3097 = vadd.f32 %v2839, %v3041
        %v3098 = vadd.f32 %v2840, %v3044
        %v3099 = vadd.f32 %v2841, %v3049
        %v3100 = vadd.f32 %v2842, %v3052
        %v3101 = vadd.f32 %v2843, %v3057
        %v3102 = vadd.f32 %v2844, %v3060
        %v3103 = vadd.f32 %v2845, %v3065
        %v3104 = vadd.f32 %v2846, %v3068
        %v3105 = vadd.f32 %v2847, %v3073
        %v3106 = vadd.f32 %v2848, %v3076
        %v3107 = vadd.f32 %v2849, %v3081
        %v3108 = vadd.f32 %v2850, %v3084
        %v3109 = vadd.f32 %v2851, %v3089
        %v3110 = vadd.f32 %v2852, %v3092
        %v3111 = vld [vmem:[%s2594 + $0x8] sm:$0xe]
        %v3112 = vld [vmem:[%s2594 + $0xc] sm:$0xf]
        %v3113 = vld [vmem:[%s2594 + $0x10] sm:$0x1]
        %v3114 = vld [vmem:[%s2594 + $0x1c] sm:$0xe]
        %v3115 = vld [vmem:[%s2594 + $0x20] sm:$0xf]
        %v3116 = vld [vmem:[%s2594 + $0x24] sm:$0x1]
        %v3117 = vld [vmem:[%s2594 + $0x30] sm:$0xe]
        %v3118 = vld [vmem:[%s2594 + $0x34] sm:$0xf]
        %v3119 = vld [vmem:[%s2594 + $0x38] sm:$0x1]
        %v3120 = vld [vmem:[%s2594 + $0x44] sm:$0xe]
        %v3121 = vld [vmem:[%s2594 + $0x48] sm:$0xf]
        %v3122 = vld [vmem:[%s2594 + $0x4c] sm:$0x1]
        %v3123 = vld [vmem:[%s2594 + $0x58] sm:$0xe]
        %v3124 = vld [vmem:[%s2594 + $0x5c] sm:$0xf]
        %v3125 = vld [vmem:[%s2594 + $0x60] sm:$0x1]
        %v3126 = vld [vmem:[%s2594 + $0x6c] sm:$0xe]
        %v3127 = vld [vmem:[%s2594 + $0x70] sm:$0xf]
        %v3128 = vld [vmem:[%s2594 + $0x74] sm:$0x1]
        %v3129 = vld [vmem:[%s2594 + $0x80] sm:$0xe]
        %v3130 = vld [vmem:[%s2594 + $0x84] sm:$0xf]
        %v3131 = vld [vmem:[%s2594 + $0x88] sm:$0x1]
        %v3132 = vld [vmem:[%s2594 + $0x94] sm:$0xe]
        %v3133 = vld [vmem:[%s2594 + $0x98] sm:$0xf]
        %v3134 = vld [vmem:[%s2594 + $0x9c] sm:$0x1]
        %v3159 = vrot.slane %v3111, 5
        %v3160 = vrot.slane %v3159, 4
        %v3161 = vrot.slane %v3112, 5
        %v3162 = vsel %vm1609, %v3160, %v3161
        %v3163 = vrot.slane %v3161, 4
        %v3164 = vrot.slane %v3113, 5
        %v3165 = vsel %vm1609, %v3163, %v3164
        %v3166 = vrot.slane %v3114, 5
        %v3167 = vrot.slane %v3166, 4
        %v3168 = vrot.slane %v3115, 5
        %v3169 = vsel %vm1609, %v3167, %v3168
        %v3170 = vrot.slane %v3168, 4
        %v3171 = vrot.slane %v3116, 5
        %v3172 = vsel %vm1609, %v3170, %v3171
        %v3173 = vrot.slane %v3117, 5
        %v3174 = vrot.slane %v3173, 4
        %v3175 = vrot.slane %v3118, 5
        %v3176 = vsel %vm1609, %v3174, %v3175
        %v3177 = vrot.slane %v3175, 4
        %v3178 = vrot.slane %v3119, 5
        %v3179 = vsel %vm1609, %v3177, %v3178
        %v3180 = vrot.slane %v3120, 5
        %v3181 = vrot.slane %v3180, 4
        %v3182 = vrot.slane %v3121, 5
        %v3183 = vsel %vm1609, %v3181, %v3182
        %v3184 = vrot.slane %v3182, 4
        %v3185 = vrot.slane %v3122, 5
        %v3186 = vsel %vm1609, %v3184, %v3185
        %v3187 = vrot.slane %v3123, 5
        %v3188 = vrot.slane %v3187, 4
        %v3189 = vrot.slane %v3124, 5
        %v3190 = vsel %vm1609, %v3188, %v3189
        %v3191 = vrot.slane %v3189, 4
        %v3192 = vrot.slane %v3125, 5
        %v3193 = vsel %vm1609, %v3191, %v3192
        %v3194 = vrot.slane %v3126, 5
        %v3195 = vrot.slane %v3194, 4
        %v3196 = vrot.slane %v3127, 5
        %v3197 = vsel %vm1609, %v3195, %v3196
        %v3198 = vrot.slane %v3196, 4
        %v3199 = vrot.slane %v3128, 5
        %v3200 = vsel %vm1609, %v3198, %v3199
        %v3201 = vrot.slane %v3129, 5
        %v3202 = vrot.slane %v3201, 4
        %v3203 = vrot.slane %v3130, 5
        %v3204 = vsel %vm1609, %v3202, %v3203
        %v3205 = vrot.slane %v3203, 4
        %v3206 = vrot.slane %v3131, 5
        %v3207 = vsel %vm1609, %v3205, %v3206
        %v3208 = vrot.slane %v3132, 5
        %v3209 = vrot.slane %v3208, 4
        %v3210 = vrot.slane %v3133, 5
        %v3211 = vsel %vm1609, %v3209, %v3210
        %v3212 = vrot.slane %v3210, 4
        %v3213 = vrot.slane %v3134, 5
        %v3214 = vsel %vm1609, %v3212, %v3213
        %s3215 = scalar_lea.vmem [#allocation3], 512
        %v3216 = vld [vmem:[%s3215] sm:$0xff]
        %v3217 = vld [vmem:[%s3215 + $0x8] sm:$0xff]
        %v3218 = vld [vmem:[%s3215 + $0x10] sm:$0xff]
        %v3219 = vld [vmem:[%s3215 + $0x18] sm:$0xff]
        %v3220 = vld [vmem:[%s3215 + $0x20] sm:$0xff]
        %v3221 = vld [vmem:[%s3215 + $0x28] sm:$0xff]
        %v3222 = vld [vmem:[%s3215 + $0x30] sm:$0xff]
        %v3223 = vld [vmem:[%s3215 + $0x38] sm:$0xff]
        %v3224 = vunpack.c.l.b16 %v3162
        %v3225 = vunpack.c.l.b16 %v3165
        %v3226 = vunpack.c.l.b16 %v3169
        %v3227 = vunpack.c.l.b16 %v3172
        %v3228 = vunpack.c.l.b16 %v3176
        %v3229 = vunpack.c.l.b16 %v3179
        %v3230 = vunpack.c.l.b16 %v3183
        %v3231 = vunpack.c.l.b16 %v3186
        %v3232 = vunpack.c.l.b16 %v3190
        %v3233 = vunpack.c.l.b16 %v3193
        %v3234 = vunpack.c.l.b16 %v3197
        %v3235 = vunpack.c.l.b16 %v3200
        %v3236 = vunpack.c.l.b16 %v3204
        %v3237 = vunpack.c.l.b16 %v3207
        %v3238 = vunpack.c.l.b16 %v3211
        %v3239 = vunpack.c.l.b16 %v3214
        %v3240 = vpack.c.b16 %v3225, %v3224
        %v3241 = vpack.c.b16 %v3227, %v3226
        %v3242 = vpack.c.b16 %v3229, %v3228
        %v3243 = vpack.c.b16 %v3231, %v3230
        %v3244 = vpack.c.b16 %v3233, %v3232
        %v3245 = vpack.c.b16 %v3235, %v3234
        %v3246 = vpack.c.b16 %v3237, %v3236
        %v3247 = vpack.c.b16 %v3239, %v3238
        %3256 = vmatprep.subr.bf16.mxu0 0
        %3257 = vmatpush1.bf16.msra.mxu0 %v3216
        %3258 = vmatprep.subr.bf16.mxu0 0
        %3259 = vmatpush1.bf16.msra.mxu0 %v3217
        %3260 = vmatprep.subr.bf16.mxu0 0
        %3261 = vmatpush1.bf16.msra.mxu0 %v3218
        %3262 = vmatprep.subr.bf16.mxu0 0
        %3263 = vmatpush1.bf16.msra.mxu0 %v3219
        %3264 = vmatprep.subr.bf16.mxu0 0
        %3265 = vmatpush1.bf16.msra.mxu0 %v3220
        %3266 = vmatprep.subr.bf16.mxu0 0
        %3267 = vmatpush1.bf16.msra.mxu0 %v3221
        %3268 = vmatprep.subr.bf16.mxu0 0
        %3269 = vmatpush1.bf16.msra.mxu0 %v3222
        %3270 = vmatprep.subr.bf16.mxu0 0
        %3271 = vmatpush1.bf16.msra.mxu0 %v3223
        %3272 = vmatprep.subr.bf16.mxu0 0
        %3273 = vmatpush1.bf16.msra.mxu0 0
        %3274 = vmatprep.subr.bf16.mxu0 0
        %3275 = vmatpush1.bf16.msra.mxu0 0
        %3276 = vmatprep.subr.bf16.mxu0 0
        %3277 = vmatpush1.bf16.msra.mxu0 0
        %3278 = vmatprep.subr.bf16.mxu0 0
        %3279 = vmatpush1.bf16.msra.mxu0 0
        %3280 = vmatprep.subr.bf16.mxu0 0
        %3281 = vmatpush1.bf16.msra.mxu0 0
        %3282 = vmatprep.subr.bf16.mxu0 0
        %3283 = vmatpush1.bf16.msra.mxu0 0
        %3284 = vmatprep.subr.bf16.mxu0 0
        %3285 = vmatpush1.bf16.msra.mxu0 0
        %3286 = vmatprep.subr.bf16.mxu0 0
        %3287 = vmatpush1.bf16.msra.mxu0 0
        %3288 = vmatprep.mubr.bf16.mxu0 0
        %3289 = vmatmul.mubr.bf16.gmra.mrb[0].mxu0 %v3240
        %v3290 = vpop.f32.mrb[0].mxu0
        %v3291 = vadd.f32 0.0, %v3290
        %v3292 = vpop.f32.mrb[0].mxu0
        %v3293 = vpop.f32.mrb[0].mxu0
        %v3294 = vadd.f32 0.0, %v3293
        %v3295 = vpop.f32.mrb[0].mxu0
        %3296 = vmatprep.mubr.bf16.mxu0 0
        %3297 = vmatmul.mubr.bf16.gmra.mrb[0].mxu0 %v3241
        %v3298 = vpop.f32.mrb[0].mxu0
        %v3299 = vadd.f32 0.0, %v3298
        %v3300 = vpop.f32.mrb[0].mxu0
        %v3301 = vpop.f32.mrb[0].mxu0
        %v3302 = vadd.f32 0.0, %v3301
        %v3303 = vpop.f32.mrb[0].mxu0
        %3304 = vmatprep.mubr.bf16.mxu0 0
        %3305 = vmatmul.mubr.bf16.gmra.mrb[0].mxu0 %v3242
        %v3306 = vpop.f32.mrb[0].mxu0
        %v3307 = vadd.f32 0.0, %v3306
        %v3308 = vpop.f32.mrb[0].mxu0
        %v3309 = vpop.f32.mrb[0].mxu0
        %v3310 = vadd.f32 0.0, %v3309
        %v3311 = vpop.f32.mrb[0].mxu0
        %3312 = vmatprep.mubr.bf16.mxu0 0
        %3313 = vmatmul.mubr.bf16.gmra.mrb[0].mxu0 %v3243
        %v3314 = vpop.f32.mrb[0].mxu0
        %v3315 = vadd.f32 0.0, %v3314
        %v3316 = vpop.f32.mrb[0].mxu0
        %v3317 = vpop.f32.mrb[0].mxu0
        %v3318 = vadd.f32 0.0, %v3317
        %v3319 = vpop.f32.mrb[0].mxu0
        %3320 = vmatprep.mubr.bf16.mxu0 0
        %3321 = vmatmul.mubr.bf16.gmra.mrb[0].mxu0 %v3244
        %v3322 = vpop.f32.mrb[0].mxu0
        %v3323 = vadd.f32 0.0, %v3322
        %v3324 = vpop.f32.mrb[0].mxu0
        %v3325 = vpop.f32.mrb[0].mxu0
        %v3326 = vadd.f32 0.0, %v3325
        %v3327 = vpop.f32.mrb[0].mxu0
        %3328 = vmatprep.mubr.bf16.mxu0 0
        %3329 = vmatmul.mubr.bf16.gmra.mrb[0].mxu0 %v3245
        %v3330 = vpop.f32.mrb[0].mxu0
        %v3331 = vadd.f32 0.0, %v3330
        %v3332 = vpop.f32.mrb[0].mxu0
        %v3333 = vpop.f32.mrb[0].mxu0
        %v3334 = vadd.f32 0.0, %v3333
        %v3335 = vpop.f32.mrb[0].mxu0
        %3336 = vmatprep.mubr.bf16.mxu0 0
        %3337 = vmatmul.mubr.bf16.gmra.mrb[0].mxu0 %v3246
        %v3338 = vpop.f32.mrb[0].mxu0
        %v3339 = vadd.f32 0.0, %v3338
        %v3340 = vpop.f32.mrb[0].mxu0
        %v3341 = vpop.f32.mrb[0].mxu0
        %v3342 = vadd.f32 0.0, %v3341
        %v3343 = vpop.f32.mrb[0].mxu0
        %3344 = vmatprep.mubr.bf16.mxu0 0
        %3345 = vmatmul.mubr.bf16.gmra.mrb[0].mxu0 %v3247
        %v3346 = vpop.f32.mrb[0].mxu0
        %v3347 = vadd.f32 0.0, %v3346
        %v3348 = vpop.f32.mrb[0].mxu0
        %v3349 = vpop.f32.mrb[0].mxu0
        %v3350 = vadd.f32 0.0, %v3349
        %v3351 = vpop.f32.mrb[0].mxu0
        %3352 = vdwg.mxu0
        %v3353 = vadd.f32 %v3095, %v3291
        %v3354 = vadd.f32 %v3096, %v3294
        %v3355 = vadd.f32 %v3097, %v3299
        %v3356 = vadd.f32 %v3098, %v3302
        %v3357 = vadd.f32 %v3099, %v3307
        %v3358 = vadd.f32 %v3100, %v3310
        %v3359 = vadd.f32 %v3101, %v3315
        %v3360 = vadd.f32 %v3102, %v3318
        %v3361 = vadd.f32 %v3103, %v3323
        %v3362 = vadd.f32 %v3104, %v3326
        %v3363 = vadd.f32 %v3105, %v3331
        %v3364 = vadd.f32 %v3106, %v3334
        %v3365 = vadd.f32 %v3107, %v3339
        %v3366 = vadd.f32 %v3108, %v3342
        %v3367 = vadd.f32 %v3109, %v3347
        %v3368 = vadd.f32 %v3110, %v3350
        %v3369 = vld [vmem:[#allocation12 + $0x1] sm:$0x1]
        %v3370 = vlaneseq
        %v3371 = vshrl.u32 %v3370, 7
        %v3372 = vsub.s32 0, %v3371
        %v3373 = vrot.slane %v3369, %v3372
        %v3374 = vmul.f32 %v3353, %v3373
        %v3375 = vmul.f32 %v3354, %v3373
        %v3376 = vmul.f32 %v3355, %v3373
        %v3377 = vmul.f32 %v3356, %v3373
        %v3378 = vmul.f32 %v3357, %v3373
        %v3379 = vmul.f32 %v3358, %v3373
        %v3380 = vmul.f32 %v3359, %v3373
        %v3381 = vmul.f32 %v3360, %v3373
        %v3382 = vmul.f32 %v3361, %v3373
        %v3383 = vmul.f32 %v3362, %v3373
        %v3384 = vmul.f32 %v3363, %v3373
        %v3385 = vmul.f32 %v3364, %v3373
        %v3386 = vmul.f32 %v3365, %v3373
        %v3387 = vmul.f32 %v3366, %v3373
        %v3388 = vmul.f32 %v3367, %v3373
        %v3389 = vmul.f32 %v3368, %v3373
        %v3390 = vld [vmem:[#allocation14 + $0x1] sm:$0x1]
        %v3391 = vlaneseq
        %v3392 = vshrl.u32 %v3391, 7
        %v3393 = vsub.s32 0, %v3392
        %v3394 = vrot.slane %v3390, %v3393
        %v3395 = vadd.f32 %v3374, %v3394
        %v3396 = vadd.f32 %v3375, %v3394
        %v3397 = vadd.f32 %v3376, %v3394
        %v3398 = vadd.f32 %v3377, %v3394
        %v3399 = vadd.f32 %v3378, %v3394
        %v3400 = vadd.f32 %v3379, %v3394
        %v3401 = vadd.f32 %v3380, %v3394
        %v3402 = vadd.f32 %v3381, %v3394
        %v3403 = vadd.f32 %v3382, %v3394
        %v3404 = vadd.f32 %v3383, %v3394
        %v3405 = vadd.f32 %v3384, %v3394
        %v3406 = vadd.f32 %v3385, %v3394
        %v3407 = vadd.f32 %v3386, %v3394
        %v3408 = vadd.f32 %v3387, %v3394
        %v3409 = vadd.f32 %v3388, %v3394
        %v3410 = vadd.f32 %v3389, %v3394
        %vm3411 = vcmp.gt.f32.partialorder %v3395, 0.0
        %vm3412 = vcmp.gt.f32.partialorder %v3396, 0.0
        %vm3413 = vcmp.gt.f32.partialorder %v3397, 0.0
        %vm3414 = vcmp.gt.f32.partialorder %v3398, 0.0
        %vm3415 = vcmp.gt.f32.partialorder %v3399, 0.0
        %vm3416 = vcmp.gt.f32.partialorder %v3400, 0.0
        %vm3417 = vcmp.gt.f32.partialorder %v3401, 0.0
        %vm3418 = vcmp.gt.f32.partialorder %v3402, 0.0
        %vm3419 = vcmp.gt.f32.partialorder %v3403, 0.0
        %vm3420 = vcmp.gt.f32.partialorder %v3404, 0.0
        %vm3421 = vcmp.gt.f32.partialorder %v3405, 0.0
        %vm3422 = vcmp.gt.f32.partialorder %v3406, 0.0
        %vm3423 = vcmp.gt.f32.partialorder %v3407, 0.0
        %vm3424 = vcmp.gt.f32.partialorder %v3408, 0.0
        %vm3425 = vcmp.gt.f32.partialorder %v3409, 0.0
        %vm3426 = vcmp.gt.f32.partialorder %v3410, 0.0
        %v3427 = vmul.f32 %v3395, 0.01
        %v3428 = vmul.f32 %v3396, 0.01
        %v3429 = vmul.f32 %v3397, 0.01
        %v3430 = vmul.f32 %v3398, 0.01
        %v3431 = vmul.f32 %v3399, 0.01
        %v3432 = vmul.f32 %v3400, 0.01
        %v3433 = vmul.f32 %v3401, 0.01
        %v3434 = vmul.f32 %v3402, 0.01
        %v3435 = vmul.f32 %v3403, 0.01
        %v3436 = vmul.f32 %v3404, 0.01
        %v3437 = vmul.f32 %v3405, 0.01
        %v3438 = vmul.f32 %v3406, 0.01
        %v3439 = vmul.f32 %v3407, 0.01
        %v3440 = vmul.f32 %v3408, 0.01
        %v3441 = vmul.f32 %v3409, 0.01
        %v3442 = vmul.f32 %v3410, 0.01
        %v3443 = vsel %vm3411, %v3395, %v3427
        %v3444 = vsel %vm3412, %v3396, %v3428
        %v3445 = vsel %vm3413, %v3397, %v3429
        %v3446 = vsel %vm3414, %v3398, %v3430
        %v3447 = vsel %vm3415, %v3399, %v3431
        %v3448 = vsel %vm3416, %v3400, %v3432
        %v3449 = vsel %vm3417, %v3401, %v3433
        %v3450 = vsel %vm3418, %v3402, %v3434
        %v3451 = vsel %vm3419, %v3403, %v3435
        %v3452 = vsel %vm3420, %v3404, %v3436
        %v3453 = vsel %vm3421, %v3405, %v3437
        %v3454 = vsel %vm3422, %v3406, %v3438
        %v3455 = vsel %vm3423, %v3407, %v3439
        %v3456 = vsel %vm3424, %v3408, %v3440
        %v3457 = vsel %vm3425, %v3409, %v3441
        %v3458 = vsel %vm3426, %v3410, %v3442
        %v3459 = vld [vmem:[#allocation5] sm:$0xff]
        %v3460 = vld [vmem:[#allocation5 + $0x8] sm:$0xff]
        %v3461 = vld [vmem:[#allocation5 + $0x10] sm:$0xff]
        %v3462 = vld [vmem:[#allocation5 + $0x18] sm:$0xff]
        %v3463 = vld [vmem:[#allocation5 + $0x20] sm:$0xff]
        %v3464 = vld [vmem:[#allocation5 + $0x28] sm:$0xff]
        %v3465 = vld [vmem:[#allocation5 + $0x30] sm:$0xff]
        %v3466 = vld [vmem:[#allocation5 + $0x38] sm:$0xff]
        %v3467 = vld [vmem:[#allocation5 + $0x40] sm:$0xff]
        %v3468 = vld [vmem:[#allocation5 + $0x48] sm:$0xff]
        %v3469 = vld [vmem:[#allocation5 + $0x50] sm:$0xff]
        %v3470 = vld [vmem:[#allocation5 + $0x58] sm:$0xff]
        %v3471 = vld [vmem:[#allocation5 + $0x60] sm:$0xff]
        %v3472 = vld [vmem:[#allocation5 + $0x68] sm:$0xff]
        %v3473 = vld [vmem:[#allocation5 + $0x70] sm:$0xff]
        %v3474 = vld [vmem:[#allocation5 + $0x78] sm:$0xff]
        %v3475 = vpack.c.bf16 %v3444, %v3443
        %v3476 = vpack.c.bf16 %v3446, %v3445
        %v3477 = vpack.c.bf16 %v3448, %v3447
        %v3478 = vpack.c.bf16 %v3450, %v3449
        %v3479 = vpack.c.bf16 %v3452, %v3451
        %v3480 = vpack.c.bf16 %v3454, %v3453
        %v3481 = vpack.c.bf16 %v3456, %v3455
        %v3482 = vpack.c.bf16 %v3458, %v3457
        %s3483 = scalar_lea.vmem [#allocation11], 64
        %v3484 = vld [vmem:[%s3483] sm:$0xf]
        %v3485 = vld [vmem:[%s3483 + $0x4] sm:$0xf]
        %v3486 = vld [vmem:[%s3483 + $0x8] sm:$0xf]
        %v3487 = vld [vmem:[%s3483 + $0xc] sm:$0xf]
        %v3488 = vld [vmem:[%s3483 + $0x10] sm:$0xf]
        %v3489 = vld [vmem:[%s3483 + $0x14] sm:$0xf]
        %v3490 = vld [vmem:[%s3483 + $0x18] sm:$0xf]
        %v3491 = vld [vmem:[%s3483 + $0x1c] sm:$0xf]
        %v3492 = vld [vmem:[%s3483 + $0x20] sm:$0xf]
        %v3493 = vld [vmem:[%s3483 + $0x24] sm:$0xf]
        %v3494 = vld [vmem:[%s3483 + $0x28] sm:$0xf]
        %v3495 = vld [vmem:[%s3483 + $0x2c] sm:$0xf]
        %v3496 = vld [vmem:[%s3483 + $0x30] sm:$0xf]
        %v3497 = vld [vmem:[%s3483 + $0x34] sm:$0xf]
        %v3498 = vld [vmem:[%s3483 + $0x38] sm:$0xf]
        %v3499 = vld [vmem:[%s3483 + $0x3c] sm:$0xf]
        %v3516 = vunpack.c.l.b16 %v3484
        %v3517 = vunpack.c.l.b16 %v3485
        %v3518 = vunpack.c.l.b16 %v3486
        %v3519 = vunpack.c.l.b16 %v3487
        %v3520 = vunpack.c.l.b16 %v3488
        %v3521 = vunpack.c.l.b16 %v3489
        %v3522 = vunpack.c.l.b16 %v3490
        %v3523 = vunpack.c.l.b16 %v3491
        %v3524 = vunpack.c.l.b16 %v3492
        %v3525 = vunpack.c.l.b16 %v3493
        %v3526 = vunpack.c.l.b16 %v3494
        %v3527 = vunpack.c.l.b16 %v3495
        %v3528 = vunpack.c.l.b16 %v3496
        %v3529 = vunpack.c.l.b16 %v3497
        %v3530 = vunpack.c.l.b16 %v3498
        %v3531 = vunpack.c.l.b16 %v3499
        %v3532 = vpack.c.b16 %v3517, %v3516
        %v3533 = vpack.c.b16 %v3519, %v3518
        %v3534 = vpack.c.b16 %v3521, %v3520
        %v3535 = vpack.c.b16 %v3523, %v3522
        %v3536 = vpack.c.b16 %v3525, %v3524
        %v3537 = vpack.c.b16 %v3527, %v3526
        %v3538 = vpack.c.b16 %v3529, %v3528
        %v3539 = vpack.c.b16 %v3531, %v3530
        %3548 = vmatprep.subr.bf16.mxu0 0
        %3549 = vmatpush1.bf16.msra.mxu0 %v3532
        %3550 = vmatprep.subr.bf16.mxu0 0
        %3551 = vmatpush1.bf16.msra.mxu0 %v3533
        %3552 = vmatprep.subr.bf16.mxu0 0
        %3553 = vmatpush1.bf16.msra.mxu0 %v3534
        %3554 = vmatprep.subr.bf16.mxu0 0
        %3555 = vmatpush1.bf16.msra.mxu0 %v3535
        %3556 = vmatprep.subr.bf16.mxu0 0
        %3557 = vmatpush1.bf16.msra.mxu0 %v3536
        %3558 = vmatprep.subr.bf16.mxu0 0
        %3559 = vmatpush1.bf16.msra.mxu0 %v3537
        %3560 = vmatprep.subr.bf16.mxu0 0
        %3561 = vmatpush1.bf16.msra.mxu0 %v3538
        %3562 = vmatprep.subr.bf16.mxu0 0
        %3563 = vmatpush1.bf16.msra.mxu0 %v3539
        %3564 = vmatprep.subr.bf16.mxu0 0
        %3565 = vmatpush1.bf16.msra.mxu0 0
        %3566 = vmatprep.subr.bf16.mxu0 0
        %3567 = vmatpush1.bf16.msra.mxu0 0
        %3568 = vmatprep.subr.bf16.mxu0 0
        %3569 = vmatpush1.bf16.msra.mxu0 0
        %3570 = vmatprep.subr.bf16.mxu0 0
        %3571 = vmatpush1.bf16.msra.mxu0 0
        %3572 = vmatprep.subr.bf16.mxu0 0
        %3573 = vmatpush1.bf16.msra.mxu0 0
        %3574 = vmatprep.subr.bf16.mxu0 0
        %3575 = vmatpush1.bf16.msra.mxu0 0
        %3576 = vmatprep.subr.bf16.mxu0 0
        %3577 = vmatpush1.bf16.msra.mxu0 0
        %3578 = vmatprep.subr.bf16.mxu0 0
        %3579 = vmatpush1.bf16.msra.mxu0 0
        %3580 = vmatprep.mubr.bf16.mxu0 0
        %3581 = vmatmul.mubr.bf16.gmra.mrb[0].mxu0 %v3475
        %v3582 = vpop.f32.mrb[0].mxu0
        %v3583 = vadd.f32 0.0, %v3582
        %v3584 = vpop.f32.mrb[0].mxu0
        %v3585 = vpop.f32.mrb[0].mxu0
        %v3586 = vadd.f32 0.0, %v3585
        %v3587 = vpop.f32.mrb[0].mxu0
        %3588 = vmatprep.mubr.bf16.mxu0 0
        %3589 = vmatmul.mubr.bf16.gmra.mrb[0].mxu0 %v3476
        %v3590 = vpop.f32.mrb[0].mxu0
        %v3591 = vadd.f32 0.0, %v3590
        %v3592 = vpop.f32.mrb[0].mxu0
        %v3593 = vpop.f32.mrb[0].mxu0
        %v3594 = vadd.f32 0.0, %v3593
        %v3595 = vpop.f32.mrb[0].mxu0
        %3596 = vmatprep.mubr.bf16.mxu0 0
        %3597 = vmatmul.mubr.bf16.gmra.mrb[0].mxu0 %v3477
        %v3598 = vpop.f32.mrb[0].mxu0
        %v3599 = vadd.f32 0.0, %v3598
        %v3600 = vpop.f32.mrb[0].mxu0
        %v3601 = vpop.f32.mrb[0].mxu0
        %v3602 = vadd.f32 0.0, %v3601
        %v3603 = vpop.f32.mrb[0].mxu0
        %3604 = vmatprep.mubr.bf16.mxu0 0
        %3605 = vmatmul.mubr.bf16.gmra.mrb[0].mxu0 %v3478
        %v3606 = vpop.f32.mrb[0].mxu0
        %v3607 = vadd.f32 0.0, %v3606
        %v3608 = vpop.f32.mrb[0].mxu0
        %v3609 = vpop.f32.mrb[0].mxu0
        %v3610 = vadd.f32 0.0, %v3609
        %v3611 = vpop.f32.mrb[0].mxu0
        %3612 = vmatprep.mubr.bf16.mxu0 0
        %3613 = vmatmul.mubr.bf16.gmra.mrb[0].mxu0 %v3479
        %v3614 = vpop.f32.mrb[0].mxu0
        %v3615 = vadd.f32 0.0, %v3614
        %v3616 = vpop.f32.mrb[0].mxu0
        %v3617 = vpop.f32.mrb[0].mxu0
        %v3618 = vadd.f32 0.0, %v3617
        %v3619 = vpop.f32.mrb[0].mxu0
        %3620 = vmatprep.mubr.bf16.mxu0 0
        %3621 = vmatmul.mubr.bf16.gmra.mrb[0].mxu0 %v3480
        %v3622 = vpop.f32.mrb[0].mxu0
        %v3623 = vadd.f32 0.0, %v3622
        %v3624 = vpop.f32.mrb[0].mxu0
        %v3625 = vpop.f32.mrb[0].mxu0
        %v3626 = vadd.f32 0.0, %v3625
        %v3627 = vpop.f32.mrb[0].mxu0
        %3628 = vmatprep.mubr.bf16.mxu0 0
        %3629 = vmatmul.mubr.bf16.gmra.mrb[0].mxu0 %v3481
        %v3630 = vpop.f32.mrb[0].mxu0
        %v3631 = vadd.f32 0.0, %v3630
        %v3632 = vpop.f32.mrb[0].mxu0
        %v3633 = vpop.f32.mrb[0].mxu0
        %v3634 = vadd.f32 0.0, %v3633
        %v3635 = vpop.f32.mrb[0].mxu0
        %3636 = vmatprep.mubr.bf16.mxu0 0
        %3637 = vmatmul.mubr.bf16.gmra.mrb[0].mxu0 %v3482
        %v3638 = vpop.f32.mrb[0].mxu0
        %v3639 = vadd.f32 0.0, %v3638
        %v3640 = vpop.f32.mrb[0].mxu0
        %v3641 = vpop.f32.mrb[0].mxu0
        %v3642 = vadd.f32 0.0, %v3641
        %v3643 = vpop.f32.mrb[0].mxu0
        %3644 = vdwg.mxu0
        %v3645 = vadd.f32 %v3459, %v3583
        %v3646 = vadd.f32 %v3460, %v3586
        %v3647 = vadd.f32 %v3461, %v3591
        %v3648 = vadd.f32 %v3462, %v3594
        %v3649 = vadd.f32 %v3463, %v3599
        %v3650 = vadd.f32 %v3464, %v3602
        %v3651 = vadd.f32 %v3465, %v3607
        %v3652 = vadd.f32 %v3466, %v3610
        %v3653 = vadd.f32 %v3467, %v3615
        %v3654 = vadd.f32 %v3468, %v3618
        %v3655 = vadd.f32 %v3469, %v3623
        %v3656 = vadd.f32 %v3470, %v3626
        %v3657 = vadd.f32 %v3471, %v3631
        %v3658 = vadd.f32 %v3472, %v3634
        %v3659 = vadd.f32 %v3473, %v3639
        %v3660 = vadd.f32 %v3474, %v3642
        %3661 = vst [vmem:[#allocation5] sm:$0xff] %v3645
        %3662 = vst [vmem:[#allocation5 + $0x8] sm:$0xff] %v3646
        %3663 = vst [vmem:[#allocation5 + $0x10] sm:$0xff] %v3647
        %3664 = vst [vmem:[#allocation5 + $0x18] sm:$0xff] %v3648
        %3665 = vst [vmem:[#allocation5 + $0x20] sm:$0xff] %v3649
        %3666 = vst [vmem:[#allocation5 + $0x28] sm:$0xff] %v3650
        %3667 = vst [vmem:[#allocation5 + $0x30] sm:$0xff] %v3651
        %3668 = vst [vmem:[#allocation5 + $0x38] sm:$0xff] %v3652
        %3669 = vst [vmem:[#allocation5 + $0x40] sm:$0xff] %v3653
        %3670 = vst [vmem:[#allocation5 + $0x48] sm:$0xff] %v3654
        %3671 = vst [vmem:[#allocation5 + $0x50] sm:$0xff] %v3655
        %3672 = vst [vmem:[#allocation5 + $0x58] sm:$0xff] %v3656
        %3673 = vst [vmem:[#allocation5 + $0x60] sm:$0xff] %v3657
        %3674 = vst [vmem:[#allocation5 + $0x68] sm:$0xff] %v3658
        %3675 = vst [vmem:[#allocation5 + $0x70] sm:$0xff] %v3659
        %3676 = vst [vmem:[#allocation5 + $0x78] sm:$0xff] %v3660
        %s3677 = sshll.u32 %s1055, 4
        %3678 = dma.done %s1060, %s3677
        %s3679 = scalar_lea.hbm %s3, 18432
        // Predicated region
        $region89: #{tpu_custom_call.1} parent=47 // pred_check
          _
        $region90: #{tpu_custom_call.1} parent=47 // pred_check_branch
          %3681 = sbr.rel target = $region92
        $region91: #{tpu_custom_call.1} parent=47 // pred_region
          %3682 = sst [smem:[#allocation21]] [#allocation28]
          %3683 = sst [smem:[#allocation22]] [#allocation27]
        $region92: #{tpu_custom_call.1} parent=47 // pred_fallthru
          _
        %3685 = shalt.err (0)
        %s3687 = sshll.u32 [#allocation3], 4
        %s3688 = int_to_ptr.vmem [resolvable:$true] %s3687
        %3690 = dma.hbm_to_vmem [thread:$0]  %s3679, 9216, %s3688, %s405
        %v3691 = vld [vmem:[#allocation2] sm:$0xf]
        %v3692 = vld [vmem:[#allocation2 + $0x4] sm:$0xf]
        %v3693 = vld [vmem:[#allocation2 + $0x14] sm:$0xf]
        %v3694 = vld [vmem:[#allocation2 + $0x18] sm:$0xf]
        %v3695 = vld [vmem:[#allocation2 + $0x28] sm:$0xf]
        %v3696 = vld [vmem:[#allocation2 + $0x2c] sm:$0xf]
        %v3697 = vld [vmem:[#allocation2 + $0x3c] sm:$0xf]
        %v3698 = vld [vmem:[#allocation2 + $0x40] sm:$0xf]
        %v3699 = vld [vmem:[#allocation2 + $0x50] sm:$0xf]
        %v3700 = vld [vmem:[#allocation2 + $0x54] sm:$0xf]
        %v3701 = vld [vmem:[#allocation2 + $0x64] sm:$0xf]
        %v3702 = vld [vmem:[#allocation2 + $0x68] sm:$0xf]
        %v3703 = vld [vmem:[#allocation2 + $0x78] sm:$0xf]
        %v3704 = vld [vmem:[#allocation2 + $0x7c] sm:$0xf]
        %v3705 = vld [vmem:[#allocation2 + $0x8c] sm:$0xf]
        %v3706 = vld [vmem:[#allocation2 + $0x90] sm:$0xf]
        %v3707 = vld [vmem:[%s1059] sm:$0xff]
        %v3708 = vld [vmem:[%s1059 + $0x8] sm:$0xff]
        %v3709 = vld [vmem:[%s1059 + $0x10] sm:$0xff]
        %v3710 = vld [vmem:[%s1059 + $0x18] sm:$0xff]
        %v3711 = vld [vmem:[%s1059 + $0x20] sm:$0xff]
        %v3712 = vld [vmem:[%s1059 + $0x28] sm:$0xff]
        %v3713 = vld [vmem:[%s1059 + $0x30] sm:$0xff]
        %v3714 = vld [vmem:[%s1059 + $0x38] sm:$0xff]
        %v3715 = vld [vmem:[#allocation2 + $0x4] sm:$0xc]
        %v3716 = vld [vmem:[#allocation2 + $0x8] sm:$0xf]
        %v3717 = vld [vmem:[#allocation2 + $0xc] sm:$0x3]
        %v3718 = vld [vmem:[#allocation2 + $0x18] sm:$0xc]
        %v3719 = vld [vmem:[#allocation2 + $0x1c] sm:$0xf]
        %v3720 = vld [vmem:[#allocation2 + $0x20] sm:$0x3]
        %v3721 = vld [vmem:[#allocation2 + $0x2c] sm:$0xc]
        %v3722 = vld [vmem:[#allocation2 + $0x30] sm:$0xf]
        %v3723 = vld [vmem:[#allocation2 + $0x34] sm:$0x3]
        %v3724 = vld [vmem:[#allocation2 + $0x40] sm:$0xc]
        %v3725 = vld [vmem:[#allocation2 + $0x44] sm:$0xf]
        %v3726 = vld [vmem:[#allocation2 + $0x48] sm:$0x3]
        %v3727 = vld [vmem:[#allocation2 + $0x54] sm:$0xc]
        %v3728 = vld [vmem:[#allocation2 + $0x58] sm:$0xf]
        %v3729 = vld [vmem:[#allocation2 + $0x5c] sm:$0x3]
        %v3730 = vld [vmem:[#allocation2 + $0x68] sm:$0xc]
        %v3731 = vld [vmem:[#allocation2 + $0x6c] sm:$0xf]
        %v3732 = vld [vmem:[#allocation2 + $0x70] sm:$0x3]
        %v3733 = vld [vmem:[#allocation2 + $0x7c] sm:$0xc]
        %v3734 = vld [vmem:[#allocation2 + $0x80] sm:$0xf]
        %v3735 = vld [vmem:[#allocation2 + $0x84] sm:$0x3]
        %v3736 = vld [vmem:[#allocation2 + $0x90] sm:$0xc]
        %v3737 = vld [vmem:[#allocation2 + $0x94] sm:$0xf]
        %v3738 = vld [vmem:[#allocation2 + $0x98] sm:$0x3]
        %v3763 = vrot.slane %v3715, 6
        %v3764 = vrot.slane %v3763, 4
        %v3765 = vrot.slane %v3716, 6
        %v3766 = vsel %vm496, %v3764, %v3765
        %v3767 = vrot.slane %v3765, 4
        %v3768 = vrot.slane %v3717, 6
        %v3769 = vsel %vm496, %v3767, %v3768
        %v3770 = vrot.slane %v3718, 6
        %v3771 = vrot.slane %v3770, 4
        %v3772 = vrot.slane %v3719, 6
        %v3773 = vsel %vm496, %v3771, %v3772
        %v3774 = vrot.slane %v3772, 4
        %v3775 = vrot.slane %v3720, 6
        %v3776 = vsel %vm496, %v3774, %v3775
        %v3777 = vrot.slane %v3721, 6
        %v3778 = vrot.slane %v3777, 4
        %v3779 = vrot.slane %v3722, 6
        %v3780 = vsel %vm496, %v3778, %v3779
        %v3781 = vrot.slane %v3779, 4
        %v3782 = vrot.slane %v3723, 6
        %v3783 = vsel %vm496, %v3781, %v3782
        %v3784 = vrot.slane %v3724, 6
        %v3785 = vrot.slane %v3784, 4
        %v3786 = vrot.slane %v3725, 6
        %v3787 = vsel %vm496, %v3785, %v3786
        %v3788 = vrot.slane %v3786, 4
        %v3789 = vrot.slane %v3726, 6
        %v3790 = vsel %vm496, %v3788, %v3789
        %v3791 = vrot.slane %v3727, 6
        %v3792 = vrot.slane %v3791, 4
        %v3793 = vrot.slane %v3728, 6
        %v3794 = vsel %vm496, %v3792, %v3793
        %v3795 = vrot.slane %v3793, 4
        %v3796 = vrot.slane %v3729, 6
        %v3797 = vsel %vm496, %v3795, %v3796
        %v3798 = vrot.slane %v3730, 6
        %v3799 = vrot.slane %v3798, 4
        %v3800 = vrot.slane %v3731, 6
        %v3801 = vsel %vm496, %v3799, %v3800
        %v3802 = vrot.slane %v3800, 4
        %v3803 = vrot.slane %v3732, 6
        %v3804 = vsel %vm496, %v3802, %v3803
        %v3805 = vrot.slane %v3733, 6
        %v3806 = vrot.slane %v3805, 4
        %v3807 = vrot.slane %v3734, 6
        %v3808 = vsel %vm496, %v3806, %v3807
        %v3809 = vrot.slane %v3807, 4
        %v3810 = vrot.slane %v3735, 6
        %v3811 = vsel %vm496, %v3809, %v3810
        %v3812 = vrot.slane %v3736, 6
        %v3813 = vrot.slane %v3812, 4
        %v3814 = vrot.slane %v3737, 6
        %v3815 = vsel %vm496, %v3813, %v3814
        %v3816 = vrot.slane %v3814, 4
        %v3817 = vrot.slane %v3738, 6
        %v3818 = vsel %vm496, %v3816, %v3817
        %s3819 = scalar_lea.vmem [#allocation3], 640
        %v3820 = vld [vmem:[%s3819] sm:$0xff]
        %v3821 = vld [vmem:[%s3819 + $0x8] sm:$0xff]
        %v3822 = vld [vmem:[%s3819 + $0x10] sm:$0xff]
        %v3823 = vld [vmem:[%s3819 + $0x18] sm:$0xff]
        %v3824 = vld [vmem:[%s3819 + $0x20] sm:$0xff]
        %v3825 = vld [vmem:[%s3819 + $0x28] sm:$0xff]
        %v3826 = vld [vmem:[%s3819 + $0x30] sm:$0xff]
        %v3827 = vld [vmem:[%s3819 + $0x38] sm:$0xff]
        %v3828 = vunpack.c.l.b16 %v3766
        %v3829 = vunpack.c.l.b16 %v3769
        %v3830 = vunpack.c.l.b16 %v3773
        %v3831 = vunpack.c.l.b16 %v3776
        %v3832 = vunpack.c.l.b16 %v3780
        %v3833 = vunpack.c.l.b16 %v3783
        %v3834 = vunpack.c.l.b16 %v3787
        %v3835 = vunpack.c.l.b16 %v3790
        %v3836 = vunpack.c.l.b16 %v3794
        %v3837 = vunpack.c.l.b16 %v3797
        %v3838 = vunpack.c.l.b16 %v3801
        %v3839 = vunpack.c.l.b16 %v3804
        %v3840 = vunpack.c.l.b16 %v3808
        %v3841 = vunpack.c.l.b16 %v3811
        %v3842 = vunpack.c.l.b16 %v3815
        %v3843 = vunpack.c.l.b16 %v3818
        %v3844 = vpack.c.b16 %v3829, %v3828
        %v3845 = vpack.c.b16 %v3831, %v3830
        %v3846 = vpack.c.b16 %v3833, %v3832
        %v3847 = vpack.c.b16 %v3835, %v3834
        %v3848 = vpack.c.b16 %v3837, %v3836
        %v3849 = vpack.c.b16 %v3839, %v3838
        %v3850 = vpack.c.b16 %v3841, %v3840
        %v3851 = vpack.c.b16 %v3843, %v3842
        %3860 = vmatprep.subr.bf16.mxu0 0
        %3861 = vmatpush1.bf16.msra.mxu0 %v3820
        %3862 = vmatprep.subr.bf16.mxu0 0
        %3863 = vmatpush1.bf16.msra.mxu0 %v3821
        %3864 = vmatprep.subr.bf16.mxu0 0
        %3865 = vmatpush1.bf16.msra.mxu0 %v3822
        %3866 = vmatprep.subr.bf16.mxu0 0
        %3867 = vmatpush1.bf16.msra.mxu0 %v3823
        %3868 = vmatprep.subr.bf16.mxu0 0
        %3869 = vmatpush1.bf16.msra.mxu0 %v3824
        %3870 = vmatprep.subr.bf16.mxu0 0
        %3871 = vmatpush1.bf16.msra.mxu0 %v3825
        %3872 = vmatprep.subr.bf16.mxu0 0
        %3873 = vmatpush1.bf16.msra.mxu0 %v3826
        %3874 = vmatprep.subr.bf16.mxu0 0
        %3875 = vmatpush1.bf16.msra.mxu0 %v3827
        %3876 = vmatprep.subr.bf16.mxu0 0
        %3877 = vmatpush1.bf16.msra.mxu0 0
        %3878 = vmatprep.subr.bf16.mxu0 0
        %3879 = vmatpush1.bf16.msra.mxu0 0
        %3880 = vmatprep.subr.bf16.mxu0 0
        %3881 = vmatpush1.bf16.msra.mxu0 0
        %3882 = vmatprep.subr.bf16.mxu0 0
        %3883 = vmatpush1.bf16.msra.mxu0 0
        %3884 = vmatprep.subr.bf16.mxu0 0
        %3885 = vmatpush1.bf16.msra.mxu0 0
        %3886 = vmatprep.subr.bf16.mxu0 0
        %3887 = vmatpush1.bf16.msra.mxu0 0
        %3888 = vmatprep.subr.bf16.mxu0 0
        %3889 = vmatpush1.bf16.msra.mxu0 0
        %3890 = vmatprep.subr.bf16.mxu0 0
        %3891 = vmatpush1.bf16.msra.mxu0 0
        %3892 = vmatprep.mubr.bf16.mxu0 0
        %3893 = vmatmul.mubr.bf16.gmra.mrb[0].mxu0 %v3844
        %v3894 = vpop.f32.mrb[0].mxu0
        %v3895 = vadd.f32 0.0, %v3894
        %v3896 = vpop.f32.mrb[0].mxu0
        %v3897 = vpop.f32.mrb[0].mxu0
        %v3898 = vadd.f32 0.0, %v3897
        %v3899 = vpop.f32.mrb[0].mxu0
        %3900 = vmatprep.mubr.bf16.mxu0 0
        %3901 = vmatmul.mubr.bf16.gmra.mrb[0].mxu0 %v3845
        %v3902 = vpop.f32.mrb[0].mxu0
        %v3903 = vadd.f32 0.0, %v3902
        %v3904 = vpop.f32.mrb[0].mxu0
        %v3905 = vpop.f32.mrb[0].mxu0
        %v3906 = vadd.f32 0.0, %v3905
        %v3907 = vpop.f32.mrb[0].mxu0
        %3908 = vmatprep.mubr.bf16.mxu0 0
        %3909 = vmatmul.mubr.bf16.gmra.mrb[0].mxu0 %v3846
        %v3910 = vpop.f32.mrb[0].mxu0
        %v3911 = vadd.f32 0.0, %v3910
        %v3912 = vpop.f32.mrb[0].mxu0
        %v3913 = vpop.f32.mrb[0].mxu0
        %v3914 = vadd.f32 0.0, %v3913
        %v3915 = vpop.f32.mrb[0].mxu0
        %3916 = vmatprep.mubr.bf16.mxu0 0
        %3917 = vmatmul.mubr.bf16.gmra.mrb[0].mxu0 %v3847
        %v3918 = vpop.f32.mrb[0].mxu0
        %v3919 = vadd.f32 0.0, %v3918
        %v3920 = vpop.f32.mrb[0].mxu0
        %v3921 = vpop.f32.mrb[0].mxu0
        %v3922 = vadd.f32 0.0, %v3921
        %v3923 = vpop.f32.mrb[0].mxu0
        %3924 = vmatprep.mubr.bf16.mxu0 0
        %3925 = vmatmul.mubr.bf16.gmra.mrb[0].mxu0 %v3848
        %v3926 = vpop.f32.mrb[0].mxu0
        %v3927 = vadd.f32 0.0, %v3926
        %v3928 = vpop.f32.mrb[0].mxu0
        %v3929 = vpop.f32.mrb[0].mxu0
        %v3930 = vadd.f32 0.0, %v3929
        %v3931 = vpop.f32.mrb[0].mxu0
        %3932 = vmatprep.mubr.bf16.mxu0 0
        %3933 = vmatmul.mubr.bf16.gmra.mrb[0].mxu0 %v3849
        %v3934 = vpop.f32.mrb[0].mxu0
        %v3935 = vadd.f32 0.0, %v3934
        %v3936 = vpop.f32.mrb[0].mxu0
        %v3937 = vpop.f32.mrb[0].mxu0
        %v3938 = vadd.f32 0.0, %v3937
        %v3939 = vpop.f32.mrb[0].mxu0
        %3940 = vmatprep.mubr.bf16.mxu0 0
        %3941 = vmatmul.mubr.bf16.gmra.mrb[0].mxu0 %v3850
        %v3942 = vpop.f32.mrb[0].mxu0
        %v3943 = vadd.f32 0.0, %v3942
        %v3944 = vpop.f32.mrb[0].mxu0
        %v3945 = vpop.f32.mrb[0].mxu0
        %v3946 = vadd.f32 0.0, %v3945
        %v3947 = vpop.f32.mrb[0].mxu0
        %3948 = vmatprep.mubr.bf16.mxu0 0
        %3949 = vmatmul.mubr.bf16.gmra.mrb[0].mxu0 %v3851
        %v3950 = vpop.f32.mrb[0].mxu0
        %v3951 = vadd.f32 0.0, %v3950
        %v3952 = vpop.f32.mrb[0].mxu0
        %v3953 = vpop.f32.mrb[0].mxu0
        %v3954 = vadd.f32 0.0, %v3953
        %v3955 = vpop.f32.mrb[0].mxu0
        %3956 = vdwg.mxu0
        %v3973 = vunpack.c.l.b16 %v3691
        %v3974 = vunpack.c.l.b16 %v3692
        %v3975 = vunpack.c.l.b16 %v3693
        %v3976 = vunpack.c.l.b16 %v3694
        %v3977 = vunpack.c.l.b16 %v3695
        %v3978 = vunpack.c.l.b16 %v3696
        %v3979 = vunpack.c.l.b16 %v3697
        %v3980 = vunpack.c.l.b16 %v3698
        %v3981 = vunpack.c.l.b16 %v3699
        %v3982 = vunpack.c.l.b16 %v3700
        %v3983 = vunpack.c.l.b16 %v3701
        %v3984 = vunpack.c.l.b16 %v3702
        %v3985 = vunpack.c.l.b16 %v3703
        %v3986 = vunpack.c.l.b16 %v3704
        %v3987 = vunpack.c.l.b16 %v3705
        %v3988 = vunpack.c.l.b16 %v3706
        %v3989 = vpack.c.b16 %v3974, %v3973
        %v3990 = vpack.c.b16 %v3976, %v3975
        %v3991 = vpack.c.b16 %v3978, %v3977
        %v3992 = vpack.c.b16 %v3980, %v3979
        %v3993 = vpack.c.b16 %v3982, %v3981
        %v3994 = vpack.c.b16 %v3984, %v3983
        %v3995 = vpack.c.b16 %v3986, %v3985
        %v3996 = vpack.c.b16 %v3988, %v3987
        %4005 = vmatprep.subr.bf16.mxu0 0
        %4006 = vmatpush1.bf16.msra.mxu0 %v3707
        %4007 = vmatprep.subr.bf16.mxu0 0
        %4008 = vmatpush1.bf16.msra.mxu0 %v3708
        %4009 = vmatprep.subr.bf16.mxu0 0
        %4010 = vmatpush1.bf16.msra.mxu0 %v3709
        %4011 = vmatprep.subr.bf16.mxu0 0
        %4012 = vmatpush1.bf16.msra.mxu0 %v3710
        %4013 = vmatprep.subr.bf16.mxu0 0
        %4014 = vmatpush1.bf16.msra.mxu0 %v3711
        %4015 = vmatprep.subr.bf16.mxu0 0
        %4016 = vmatpush1.bf16.msra.mxu0 %v3712
        %4017 = vmatprep.subr.bf16.mxu0 0
        %4018 = vmatpush1.bf16.msra.mxu0 %v3713
        %4019 = vmatprep.subr.bf16.mxu0 0
        %4020 = vmatpush1.bf16.msra.mxu0 %v3714
        %4021 = vmatprep.subr.bf16.mxu0 0
        %4022 = vmatpush1.bf16.msra.mxu0 0
        %4023 = vmatprep.subr.bf16.mxu0 0
        %4024 = vmatpush1.bf16.msra.mxu0 0
        %4025 = vmatprep.subr.bf16.mxu0 0
        %4026 = vmatpush1.bf16.msra.mxu0 0
        %4027 = vmatprep.subr.bf16.mxu0 0
        %4028 = vmatpush1.bf16.msra.mxu0 0
        %4029 = vmatprep.subr.bf16.mxu0 0
        %4030 = vmatpush1.bf16.msra.mxu0 0
        %4031 = vmatprep.subr.bf16.mxu0 0
        %4032 = vmatpush1.bf16.msra.mxu0 0
        %4033 = vmatprep.subr.bf16.mxu0 0
        %4034 = vmatpush1.bf16.msra.mxu0 0
        %4035 = vmatprep.subr.bf16.mxu0 0
        %4036 = vmatpush1.bf16.msra.mxu0 0
        %4037 = vmatprep.mubr.bf16.mxu0 0
        %4038 = vmatmul.mubr.bf16.gmra.mrb[0].mxu0 %v3989
        %v4039 = vpop.f32.mrb[0].mxu0
        %v4040 = vadd.f32 %v3895, %v4039
        %v4041 = vpop.f32.mrb[0].mxu0
        %v4042 = vpop.f32.mrb[0].mxu0
        %v4043 = vadd.f32 %v3898, %v4042
        %v4044 = vpop.f32.mrb[0].mxu0
        %4045 = vmatprep.mubr.bf16.mxu0 0
        %4046 = vmatmul.mubr.bf16.gmra.mrb[0].mxu0 %v3990
        %v4047 = vpop.f32.mrb[0].mxu0
        %v4048 = vadd.f32 %v3903, %v4047
        %v4049 = vpop.f32.mrb[0].mxu0
        %v4050 = vpop.f32.mrb[0].mxu0
        %v4051 = vadd.f32 %v3906, %v4050
        %v4052 = vpop.f32.mrb[0].mxu0
        %4053 = vmatprep.mubr.bf16.mxu0 0
        %4054 = vmatmul.mubr.bf16.gmra.mrb[0].mxu0 %v3991
        %v4055 = vpop.f32.mrb[0].mxu0
        %v4056 = vadd.f32 %v3911, %v4055
        %v4057 = vpop.f32.mrb[0].mxu0
        %v4058 = vpop.f32.mrb[0].mxu0
        %v4059 = vadd.f32 %v3914, %v4058
        %v4060 = vpop.f32.mrb[0].mxu0
        %4061 = vmatprep.mubr.bf16.mxu0 0
        %4062 = vmatmul.mubr.bf16.gmra.mrb[0].mxu0 %v3992
        %v4063 = vpop.f32.mrb[0].mxu0
        %v4064 = vadd.f32 %v3919, %v4063
        %v4065 = vpop.f32.mrb[0].mxu0
        %v4066 = vpop.f32.mrb[0].mxu0
        %v4067 = vadd.f32 %v3922, %v4066
        %v4068 = vpop.f32.mrb[0].mxu0
        %4069 = vmatprep.mubr.bf16.mxu0 0
        %4070 = vmatmul.mubr.bf16.gmra.mrb[0].mxu0 %v3993
        %v4071 = vpop.f32.mrb[0].mxu0
        %v4072 = vadd.f32 %v3927, %v4071
        %v4073 = vpop.f32.mrb[0].mxu0
        %v4074 = vpop.f32.mrb[0].mxu0
        %v4075 = vadd.f32 %v3930, %v4074
        %v4076 = vpop.f32.mrb[0].mxu0
        %4077 = vmatprep.mubr.bf16.mxu0 0
        %4078 = vmatmul.mubr.bf16.gmra.mrb[0].mxu0 %v3994
        %v4079 = vpop.f32.mrb[0].mxu0
        %v4080 = vadd.f32 %v3935, %v4079
        %v4081 = vpop.f32.mrb[0].mxu0
        %v4082 = vpop.f32.mrb[0].mxu0
        %v4083 = vadd.f32 %v3938, %v4082
        %v4084 = vpop.f32.mrb[0].mxu0
        %4085 = vmatprep.mubr.bf16.mxu0 0
        %4086 = vmatmul.mubr.bf16.gmra.mrb[0].mxu0 %v3995
        %v4087 = vpop.f32.mrb[0].mxu0
        %v4088 = vadd.f32 %v3943, %v4087
        %v4089 = vpop.f32.mrb[0].mxu0
        %v4090 = vpop.f32.mrb[0].mxu0
        %v4091 = vadd.f32 %v3946, %v4090
        %v4092 = vpop.f32.mrb[0].mxu0
        %4093 = vmatprep.mubr.bf16.mxu0 0
        %4094 = vmatmul.mubr.bf16.gmra.mrb[0].mxu0 %v3996
        %v4095 = vpop.f32.mrb[0].mxu0
        %v4096 = vadd.f32 %v3951, %v4095
        %v4097 = vpop.f32.mrb[0].mxu0
        %v4098 = vpop.f32.mrb[0].mxu0
        %v4099 = vadd.f32 %v3954, %v4098
        %v4100 = vpop.f32.mrb[0].mxu0
        %4101 = vdwg.mxu0
        %v4102 = vld [vmem:[#allocation2 + $0xc] sm:$0xf]
        %v4103 = vld [vmem:[#allocation2 + $0x10] sm:$0xf]
        %v4104 = vld [vmem:[#allocation2 + $0x20] sm:$0xf]
        %v4105 = vld [vmem:[#allocation2 + $0x24] sm:$0xf]
        %v4106 = vld [vmem:[#allocation2 + $0x34] sm:$0xf]
        %v4107 = vld [vmem:[#allocation2 + $0x38] sm:$0xf]
        %v4108 = vld [vmem:[#allocation2 + $0x48] sm:$0xf]
        %v4109 = vld [vmem:[#allocation2 + $0x4c] sm:$0xf]
        %v4110 = vld [vmem:[#allocation2 + $0x5c] sm:$0xf]
        %v4111 = vld [vmem:[#allocation2 + $0x60] sm:$0xf]
        %v4112 = vld [vmem:[#allocation2 + $0x70] sm:$0xf]
        %v4113 = vld [vmem:[#allocation2 + $0x74] sm:$0xf]
        %v4114 = vld [vmem:[#allocation2 + $0x84] sm:$0xf]
        %v4115 = vld [vmem:[#allocation2 + $0x88] sm:$0xf]
        %v4116 = vld [vmem:[#allocation2 + $0x98] sm:$0xf]
        %v4117 = vld [vmem:[#allocation2 + $0x9c] sm:$0xf]
        %s4118 = scalar_lea.vmem [#allocation3], 704
        %v4119 = vld [vmem:[%s4118] sm:$0xff]
        %v4120 = vld [vmem:[%s4118 + $0x8] sm:$0xff]
        %v4121 = vld [vmem:[%s4118 + $0x10] sm:$0xff]
        %v4122 = vld [vmem:[%s4118 + $0x18] sm:$0xff]
        %v4123 = vld [vmem:[%s4118 + $0x20] sm:$0xff]
        %v4124 = vld [vmem:[%s4118 + $0x28] sm:$0xff]
        %v4125 = vld [vmem:[%s4118 + $0x30] sm:$0xff]
        %v4126 = vld [vmem:[%s4118 + $0x38] sm:$0xff]
        %v4143 = vunpack.c.l.b16 %v4102
        %v4144 = vunpack.c.l.b16 %v4103
        %v4145 = vunpack.c.l.b16 %v4104
        %v4146 = vunpack.c.l.b16 %v4105
        %v4147 = vunpack.c.l.b16 %v4106
        %v4148 = vunpack.c.l.b16 %v4107
        %v4149 = vunpack.c.l.b16 %v4108
        %v4150 = vunpack.c.l.b16 %v4109
        %v4151 = vunpack.c.l.b16 %v4110
        %v4152 = vunpack.c.l.b16 %v4111
        %v4153 = vunpack.c.l.b16 %v4112
        %v4154 = vunpack.c.l.b16 %v4113
        %v4155 = vunpack.c.l.b16 %v4114
        %v4156 = vunpack.c.l.b16 %v4115
        %v4157 = vunpack.c.l.b16 %v4116
        %v4158 = vunpack.c.l.b16 %v4117
        %v4159 = vpack.c.b16 %v4144, %v4143
        %v4160 = vpack.c.b16 %v4146, %v4145
        %v4161 = vpack.c.b16 %v4148, %v4147
        %v4162 = vpack.c.b16 %v4150, %v4149
        %v4163 = vpack.c.b16 %v4152, %v4151
        %v4164 = vpack.c.b16 %v4154, %v4153
        %v4165 = vpack.c.b16 %v4156, %v4155
        %v4166 = vpack.c.b16 %v4158, %v4157
        %4175 = vmatprep.subr.bf16.mxu0 0
        %4176 = vmatpush1.bf16.msra.mxu0 %v4119
        %4177 = vmatprep.subr.bf16.mxu0 0
        %4178 = vmatpush1.bf16.msra.mxu0 %v4120
        %4179 = vmatprep.subr.bf16.mxu0 0
        %4180 = vmatpush1.bf16.msra.mxu0 %v4121
        %4181 = vmatprep.subr.bf16.mxu0 0
        %4182 = vmatpush1.bf16.msra.mxu0 %v4122
        %4183 = vmatprep.subr.bf16.mxu0 0
        %4184 = vmatpush1.bf16.msra.mxu0 %v4123
        %4185 = vmatprep.subr.bf16.mxu0 0
        %4186 = vmatpush1.bf16.msra.mxu0 %v4124
        %4187 = vmatprep.subr.bf16.mxu0 0
        %4188 = vmatpush1.bf16.msra.mxu0 %v4125
        %4189 = vmatprep.subr.bf16.mxu0 0
        %4190 = vmatpush1.bf16.msra.mxu0 %v4126
        %4191 = vmatprep.subr.bf16.mxu0 0
        %4192 = vmatpush1.bf16.msra.mxu0 0
        %4193 = vmatprep.subr.bf16.mxu0 0
        %4194 = vmatpush1.bf16.msra.mxu0 0
        %4195 = vmatprep.subr.bf16.mxu0 0
        %4196 = vmatpush1.bf16.msra.mxu0 0
        %4197 = vmatprep.subr.bf16.mxu0 0
        %4198 = vmatpush1.bf16.msra.mxu0 0
        %4199 = vmatprep.subr.bf16.mxu0 0
        %4200 = vmatpush1.bf16.msra.mxu0 0
        %4201 = vmatprep.subr.bf16.mxu0 0
        %4202 = vmatpush1.bf16.msra.mxu0 0
        %4203 = vmatprep.subr.bf16.mxu0 0
        %4204 = vmatpush1.bf16.msra.mxu0 0
        %4205 = vmatprep.subr.bf16.mxu0 0
        %4206 = vmatpush1.bf16.msra.mxu0 0
        %4207 = vmatprep.mubr.bf16.mxu0 0
        %4208 = vmatmul.mubr.bf16.gmra.mrb[0].mxu0 %v4159
        %v4209 = vpop.f32.mrb[0].mxu0
        %v4210 = vadd.f32 0.0, %v4209
        %v4211 = vpop.f32.mrb[0].mxu0
        %v4212 = vpop.f32.mrb[0].mxu0
        %v4213 = vadd.f32 0.0, %v4212
        %v4214 = vpop.f32.mrb[0].mxu0
        %4215 = vmatprep.mubr.bf16.mxu0 0
        %4216 = vmatmul.mubr.bf16.gmra.mrb[0].mxu0 %v4160
        %v4217 = vpop.f32.mrb[0].mxu0
        %v4218 = vadd.f32 0.0, %v4217
        %v4219 = vpop.f32.mrb[0].mxu0
        %v4220 = vpop.f32.mrb[0].mxu0
        %v4221 = vadd.f32 0.0, %v4220
        %v4222 = vpop.f32.mrb[0].mxu0
        %4223 = vmatprep.mubr.bf16.mxu0 0
        %4224 = vmatmul.mubr.bf16.gmra.mrb[0].mxu0 %v4161
        %v4225 = vpop.f32.mrb[0].mxu0
        %v4226 = vadd.f32 0.0, %v4225
        %v4227 = vpop.f32.mrb[0].mxu0
        %v4228 = vpop.f32.mrb[0].mxu0
        %v4229 = vadd.f32 0.0, %v4228
        %v4230 = vpop.f32.mrb[0].mxu0
        %4231 = vmatprep.mubr.bf16.mxu0 0
        %4232 = vmatmul.mubr.bf16.gmra.mrb[0].mxu0 %v4162
        %v4233 = vpop.f32.mrb[0].mxu0
        %v4234 = vadd.f32 0.0, %v4233
        %v4235 = vpop.f32.mrb[0].mxu0
        %v4236 = vpop.f32.mrb[0].mxu0
        %v4237 = vadd.f32 0.0, %v4236
        %v4238 = vpop.f32.mrb[0].mxu0
        %4239 = vmatprep.mubr.bf16.mxu0 0
        %4240 = vmatmul.mubr.bf16.gmra.mrb[0].mxu0 %v4163
        %v4241 = vpop.f32.mrb[0].mxu0
        %v4242 = vadd.f32 0.0, %v4241
        %v4243 = vpop.f32.mrb[0].mxu0
        %v4244 = vpop.f32.mrb[0].mxu0
        %v4245 = vadd.f32 0.0, %v4244
        %v4246 = vpop.f32.mrb[0].mxu0
        %4247 = vmatprep.mubr.bf16.mxu0 0
        %4248 = vmatmul.mubr.bf16.gmra.mrb[0].mxu0 %v4164
        %v4249 = vpop.f32.mrb[0].mxu0
        %v4250 = vadd.f32 0.0, %v4249
        %v4251 = vpop.f32.mrb[0].mxu0
        %v4252 = vpop.f32.mrb[0].mxu0
        %v4253 = vadd.f32 0.0, %v4252
        %v4254 = vpop.f32.mrb[0].mxu0
        %4255 = vmatprep.mubr.bf16.mxu0 0
        %4256 = vmatmul.mubr.bf16.gmra.mrb[0].mxu0 %v4165
        %v4257 = vpop.f32.mrb[0].mxu0
        %v4258 = vadd.f32 0.0, %v4257
        %v4259 = vpop.f32.mrb[0].mxu0
        %v4260 = vpop.f32.mrb[0].mxu0
        %v4261 = vadd.f32 0.0, %v4260
        %v4262 = vpop.f32.mrb[0].mxu0
        %4263 = vmatprep.mubr.bf16.mxu0 0
        %4264 = vmatmul.mubr.bf16.gmra.mrb[0].mxu0 %v4166
        %v4265 = vpop.f32.mrb[0].mxu0
        %v4266 = vadd.f32 0.0, %v4265
        %v4267 = vpop.f32.mrb[0].mxu0
        %v4268 = vpop.f32.mrb[0].mxu0
        %v4269 = vadd.f32 0.0, %v4268
        %v4270 = vpop.f32.mrb[0].mxu0
        %4271 = vdwg.mxu0
        %v4272 = vadd.f32 %v4040, %v4210
        %v4273 = vadd.f32 %v4043, %v4213
        %v4274 = vadd.f32 %v4048, %v4218
        %v4275 = vadd.f32 %v4051, %v4221
        %v4276 = vadd.f32 %v4056, %v4226
        %v4277 = vadd.f32 %v4059, %v4229
        %v4278 = vadd.f32 %v4064, %v4234
        %v4279 = vadd.f32 %v4067, %v4237
        %v4280 = vadd.f32 %v4072, %v4242
        %v4281 = vadd.f32 %v4075, %v4245
        %v4282 = vadd.f32 %v4080, %v4250
        %v4283 = vadd.f32 %v4083, %v4253
        %v4284 = vadd.f32 %v4088, %v4258
        %v4285 = vadd.f32 %v4091, %v4261
        %v4286 = vadd.f32 %v4096, %v4266
        %v4287 = vadd.f32 %v4099, %v4269
        %v4288 = vld [vmem:[%s445] sm:$0xf]
        %v4289 = vld [vmem:[%s445 + $0x4] sm:$0xf]
        %v4290 = vld [vmem:[%s445 + $0x14] sm:$0xf]
        %v4291 = vld [vmem:[%s445 + $0x18] sm:$0xf]
        %v4292 = vld [vmem:[%s445 + $0x28] sm:$0xf]
        %v4293 = vld [vmem:[%s445 + $0x2c] sm:$0xf]
        %v4294 = vld [vmem:[%s445 + $0x3c] sm:$0xf]
        %v4295 = vld [vmem:[%s445 + $0x40] sm:$0xf]
        %v4296 = vld [vmem:[%s445 + $0x50] sm:$0xf]
        %v4297 = vld [vmem:[%s445 + $0x54] sm:$0xf]
        %v4298 = vld [vmem:[%s445 + $0x64] sm:$0xf]
        %v4299 = vld [vmem:[%s445 + $0x68] sm:$0xf]
        %v4300 = vld [vmem:[%s445 + $0x78] sm:$0xf]
        %v4301 = vld [vmem:[%s445 + $0x7c] sm:$0xf]
        %v4302 = vld [vmem:[%s445 + $0x8c] sm:$0xf]
        %v4303 = vld [vmem:[%s445 + $0x90] sm:$0xf]
        %s4304 = scalar_lea.vmem [#allocation3], 768
        %v4305 = vld [vmem:[%s4304] sm:$0xff]
        %v4306 = vld [vmem:[%s4304 + $0x8] sm:$0xff]
        %v4307 = vld [vmem:[%s4304 + $0x10] sm:$0xff]
        %v4308 = vld [vmem:[%s4304 + $0x18] sm:$0xff]
        %v4309 = vld [vmem:[%s4304 + $0x20] sm:$0xff]
        %v4310 = vld [vmem:[%s4304 + $0x28] sm:$0xff]
        %v4311 = vld [vmem:[%s4304 + $0x30] sm:$0xff]
        %v4312 = vld [vmem:[%s4304 + $0x38] sm:$0xff]
        %v4329 = vunpack.c.l.b16 %v4288
        %v4330 = vunpack.c.l.b16 %v4289
        %v4331 = vunpack.c.l.b16 %v4290
        %v4332 = vunpack.c.l.b16 %v4291
        %v4333 = vunpack.c.l.b16 %v4292
        %v4334 = vunpack.c.l.b16 %v4293
        %v4335 = vunpack.c.l.b16 %v4294
        %v4336 = vunpack.c.l.b16 %v4295
        %v4337 = vunpack.c.l.b16 %v4296
        %v4338 = vunpack.c.l.b16 %v4297
        %v4339 = vunpack.c.l.b16 %v4298
        %v4340 = vunpack.c.l.b16 %v4299
        %v4341 = vunpack.c.l.b16 %v4300
        %v4342 = vunpack.c.l.b16 %v4301
        %v4343 = vunpack.c.l.b16 %v4302
        %v4344 = vunpack.c.l.b16 %v4303
        %v4345 = vpack.c.b16 %v4330, %v4329
        %v4346 = vpack.c.b16 %v4332, %v4331
        %v4347 = vpack.c.b16 %v4334, %v4333
        %v4348 = vpack.c.b16 %v4336, %v4335
        %v4349 = vpack.c.b16 %v4338, %v4337
        %v4350 = vpack.c.b16 %v4340, %v4339
        %v4351 = vpack.c.b16 %v4342, %v4341
        %v4352 = vpack.c.b16 %v4344, %v4343
        %4361 = vmatprep.subr.bf16.mxu0 0
        %4362 = vmatpush1.bf16.msra.mxu0 %v4305
        %4363 = vmatprep.subr.bf16.mxu0 0
        %4364 = vmatpush1.bf16.msra.mxu0 %v4306
        %4365 = vmatprep.subr.bf16.mxu0 0
        %4366 = vmatpush1.bf16.msra.mxu0 %v4307
        %4367 = vmatprep.subr.bf16.mxu0 0
        %4368 = vmatpush1.bf16.msra.mxu0 %v4308
        %4369 = vmatprep.subr.bf16.mxu0 0
        %4370 = vmatpush1.bf16.msra.mxu0 %v4309
        %4371 = vmatprep.subr.bf16.mxu0 0
        %4372 = vmatpush1.bf16.msra.mxu0 %v4310
        %4373 = vmatprep.subr.bf16.mxu0 0
        %4374 = vmatpush1.bf16.msra.mxu0 %v4311
        %4375 = vmatprep.subr.bf16.mxu0 0
        %4376 = vmatpush1.bf16.msra.mxu0 %v4312
        %4377 = vmatprep.subr.bf16.mxu0 0
        %4378 = vmatpush1.bf16.msra.mxu0 0
        %4379 = vmatprep.subr.bf16.mxu0 0
        %4380 = vmatpush1.bf16.msra.mxu0 0
        %4381 = vmatprep.subr.bf16.mxu0 0
        %4382 = vmatpush1.bf16.msra.mxu0 0
        %4383 = vmatprep.subr.bf16.mxu0 0
        %4384 = vmatpush1.bf16.msra.mxu0 0
        %4385 = vmatprep.subr.bf16.mxu0 0
        %4386 = vmatpush1.bf16.msra.mxu0 0
        %4387 = vmatprep.subr.bf16.mxu0 0
        %4388 = vmatpush1.bf16.msra.mxu0 0
        %4389 = vmatprep.subr.bf16.mxu0 0
        %4390 = vmatpush1.bf16.msra.mxu0 0
        %4391 = vmatprep.subr.bf16.mxu0 0
        %4392 = vmatpush1.bf16.msra.mxu0 0
        %4393 = vmatprep.mubr.bf16.mxu0 0
        %4394 = vmatmul.mubr.bf16.gmra.mrb[0].mxu0 %v4345
        %v4395 = vpop.f32.mrb[0].mxu0
        %v4396 = vadd.f32 0.0, %v4395
        %v4397 = vpop.f32.mrb[0].mxu0
        %v4398 = vpop.f32.mrb[0].mxu0
        %v4399 = vadd.f32 0.0, %v4398
        %v4400 = vpop.f32.mrb[0].mxu0
        %4401 = vmatprep.mubr.bf16.mxu0 0
        %4402 = vmatmul.mubr.bf16.gmra.mrb[0].mxu0 %v4346
        %v4403 = vpop.f32.mrb[0].mxu0
        %v4404 = vadd.f32 0.0, %v4403
        %v4405 = vpop.f32.mrb[0].mxu0
        %v4406 = vpop.f32.mrb[0].mxu0
        %v4407 = vadd.f32 0.0, %v4406
        %v4408 = vpop.f32.mrb[0].mxu0
        %4409 = vmatprep.mubr.bf16.mxu0 0
        %4410 = vmatmul.mubr.bf16.gmra.mrb[0].mxu0 %v4347
        %v4411 = vpop.f32.mrb[0].mxu0
        %v4412 = vadd.f32 0.0, %v4411
        %v4413 = vpop.f32.mrb[0].mxu0
        %v4414 = vpop.f32.mrb[0].mxu0
        %v4415 = vadd.f32 0.0, %v4414
        %v4416 = vpop.f32.mrb[0].mxu0
        %4417 = vmatprep.mubr.bf16.mxu0 0
        %4418 = vmatmul.mubr.bf16.gmra.mrb[0].mxu0 %v4348
        %v4419 = vpop.f32.mrb[0].mxu0
        %v4420 = vadd.f32 0.0, %v4419
        %v4421 = vpop.f32.mrb[0].mxu0
        %v4422 = vpop.f32.mrb[0].mxu0
        %v4423 = vadd.f32 0.0, %v4422
        %v4424 = vpop.f32.mrb[0].mxu0
        %4425 = vmatprep.mubr.bf16.mxu0 0
        %4426 = vmatmul.mubr.bf16.gmra.mrb[0].mxu0 %v4349
        %v4427 = vpop.f32.mrb[0].mxu0
        %v4428 = vadd.f32 0.0, %v4427
        %v4429 = vpop.f32.mrb[0].mxu0
        %v4430 = vpop.f32.mrb[0].mxu0
        %v4431 = vadd.f32 0.0, %v4430
        %v4432 = vpop.f32.mrb[0].mxu0
        %4433 = vmatprep.mubr.bf16.mxu0 0
        %4434 = vmatmul.mubr.bf16.gmra.mrb[0].mxu0 %v4350
        %v4435 = vpop.f32.mrb[0].mxu0
        %v4436 = vadd.f32 0.0, %v4435
        %v4437 = vpop.f32.mrb[0].mxu0
        %v4438 = vpop.f32.mrb[0].mxu0
        %v4439 = vadd.f32 0.0, %v4438
        %v4440 = vpop.f32.mrb[0].mxu0
        %4441 = vmatprep.mubr.bf16.mxu0 0
        %4442 = vmatmul.mubr.bf16.gmra.mrb[0].mxu0 %v4351
        %v4443 = vpop.f32.mrb[0].mxu0
        %v4444 = vadd.f32 0.0, %v4443
        %v4445 = vpop.f32.mrb[0].mxu0
        %v4446 = vpop.f32.mrb[0].mxu0
        %v4447 = vadd.f32 0.0, %v4446
        %v4448 = vpop.f32.mrb[0].mxu0
        %4449 = vmatprep.mubr.bf16.mxu0 0
        %4450 = vmatmul.mubr.bf16.gmra.mrb[0].mxu0 %v4352
        %v4451 = vpop.f32.mrb[0].mxu0
        %v4452 = vadd.f32 0.0, %v4451
        %v4453 = vpop.f32.mrb[0].mxu0
        %v4454 = vpop.f32.mrb[0].mxu0
        %v4455 = vadd.f32 0.0, %v4454
        %v4456 = vpop.f32.mrb[0].mxu0
        %4457 = vdwg.mxu0
        %v4458 = vadd.f32 %v4272, %v4396
        %v4459 = vadd.f32 %v4273, %v4399
        %v4460 = vadd.f32 %v4274, %v4404
        %v4461 = vadd.f32 %v4275, %v4407
        %v4462 = vadd.f32 %v4276, %v4412
        %v4463 = vadd.f32 %v4277, %v4415
        %v4464 = vadd.f32 %v4278, %v4420
        %v4465 = vadd.f32 %v4279, %v4423
        %v4466 = vadd.f32 %v4280, %v4428
        %v4467 = vadd.f32 %v4281, %v4431
        %v4468 = vadd.f32 %v4282, %v4436
        %v4469 = vadd.f32 %v4283, %v4439
        %v4470 = vadd.f32 %v4284, %v4444
        %v4471 = vadd.f32 %v4285, %v4447
        %v4472 = vadd.f32 %v4286, %v4452
        %v4473 = vadd.f32 %v4287, %v4455
        %v4474 = vld [vmem:[%s445 + $0x4] sm:$0xc]
        %v4475 = vld [vmem:[%s445 + $0x8] sm:$0xf]
        %v4476 = vld [vmem:[%s445 + $0xc] sm:$0x3]
        %v4477 = vld [vmem:[%s445 + $0x18] sm:$0xc]
        %v4478 = vld [vmem:[%s445 + $0x1c] sm:$0xf]
        %v4479 = vld [vmem:[%s445 + $0x20] sm:$0x3]
        %v4480 = vld [vmem:[%s445 + $0x2c] sm:$0xc]
        %v4481 = vld [vmem:[%s445 + $0x30] sm:$0xf]
        %v4482 = vld [vmem:[%s445 + $0x34] sm:$0x3]
        %v4483 = vld [vmem:[%s445 + $0x40] sm:$0xc]
        %v4484 = vld [vmem:[%s445 + $0x44] sm:$0xf]
        %v4485 = vld [vmem:[%s445 + $0x48] sm:$0x3]
        %v4486 = vld [vmem:[%s445 + $0x54] sm:$0xc]
        %v4487 = vld [vmem:[%s445 + $0x58] sm:$0xf]
        %v4488 = vld [vmem:[%s445 + $0x5c] sm:$0x3]
        %v4489 = vld [vmem:[%s445 + $0x68] sm:$0xc]
        %v4490 = vld [vmem:[%s445 + $0x6c] sm:$0xf]
        %v4491 = vld [vmem:[%s445 + $0x70] sm:$0x3]
        %v4492 = vld [vmem:[%s445 + $0x7c] sm:$0xc]
        %v4493 = vld [vmem:[%s445 + $0x80] sm:$0xf]
        %v4494 = vld [vmem:[%s445 + $0x84] sm:$0x3]
        %v4495 = vld [vmem:[%s445 + $0x90] sm:$0xc]
        %v4496 = vld [vmem:[%s445 + $0x94] sm:$0xf]
        %v4497 = vld [vmem:[%s445 + $0x98] sm:$0x3]
        %v4522 = vrot.slane %v4474, 6
        %v4523 = vrot.slane %v4522, 4
        %v4524 = vrot.slane %v4475, 6
        %v4525 = vsel %vm496, %v4523, %v4524
        %v4526 = vrot.slane %v4524, 4
        %v4527 = vrot.slane %v4476, 6
        %v4528 = vsel %vm496, %v4526, %v4527
        %v4529 = vrot.slane %v4477, 6
        %v4530 = vrot.slane %v4529, 4
        %v4531 = vrot.slane %v4478, 6
        %v4532 = vsel %vm496, %v4530, %v4531
        %v4533 = vrot.slane %v4531, 4
        %v4534 = vrot.slane %v4479, 6
        %v4535 = vsel %vm496, %v4533, %v4534
        %v4536 = vrot.slane %v4480, 6
        %v4537 = vrot.slane %v4536, 4
        %v4538 = vrot.slane %v4481, 6
        %v4539 = vsel %vm496, %v4537, %v4538
        %v4540 = vrot.slane %v4538, 4
        %v4541 = vrot.slane %v4482, 6
        %v4542 = vsel %vm496, %v4540, %v4541
        %v4543 = vrot.slane %v4483, 6
        %v4544 = vrot.slane %v4543, 4
        %v4545 = vrot.slane %v4484, 6
        %v4546 = vsel %vm496, %v4544, %v4545
        %v4547 = vrot.slane %v4545, 4
        %v4548 = vrot.slane %v4485, 6
        %v4549 = vsel %vm496, %v4547, %v4548
        %v4550 = vrot.slane %v4486, 6
        %v4551 = vrot.slane %v4550, 4
        %v4552 = vrot.slane %v4487, 6
        %v4553 = vsel %vm496, %v4551, %v4552
        %v4554 = vrot.slane %v4552, 4
        %v4555 = vrot.slane %v4488, 6
        %v4556 = vsel %vm496, %v4554, %v4555
        %v4557 = vrot.slane %v4489, 6
        %v4558 = vrot.slane %v4557, 4
        %v4559 = vrot.slane %v4490, 6
        %v4560 = vsel %vm496, %v4558, %v4559
        %v4561 = vrot.slane %v4559, 4
        %v4562 = vrot.slane %v4491, 6
        %v4563 = vsel %vm496, %v4561, %v4562
        %v4564 = vrot.slane %v4492, 6
        %v4565 = vrot.slane %v4564, 4
        %v4566 = vrot.slane %v4493, 6
        %v4567 = vsel %vm496, %v4565, %v4566
        %v4568 = vrot.slane %v4566, 4
        %v4569 = vrot.slane %v4494, 6
        %v4570 = vsel %vm496, %v4568, %v4569
        %v4571 = vrot.slane %v4495, 6
        %v4572 = vrot.slane %v4571, 4
        %v4573 = vrot.slane %v4496, 6
        %v4574 = vsel %vm496, %v4572, %v4573
        %v4575 = vrot.slane %v4573, 4
        %v4576 = vrot.slane %v4497, 6
        %v4577 = vsel %vm496, %v4575, %v4576
        %s4578 = scalar_lea.vmem [#allocation3], 832
        %v4579 = vld [vmem:[%s4578] sm:$0xff]
        %v4580 = vld [vmem:[%s4578 + $0x8] sm:$0xff]
        %v4581 = vld [vmem:[%s4578 + $0x10] sm:$0xff]
        %v4582 = vld [vmem:[%s4578 + $0x18] sm:$0xff]
        %v4583 = vld [vmem:[%s4578 + $0x20] sm:$0xff]
        %v4584 = vld [vmem:[%s4578 + $0x28] sm:$0xff]
        %v4585 = vld [vmem:[%s4578 + $0x30] sm:$0xff]
        %v4586 = vld [vmem:[%s4578 + $0x38] sm:$0xff]
        %v4587 = vunpack.c.l.b16 %v4525
        %v4588 = vunpack.c.l.b16 %v4528
        %v4589 = vunpack.c.l.b16 %v4532
        %v4590 = vunpack.c.l.b16 %v4535
        %v4591 = vunpack.c.l.b16 %v4539
        %v4592 = vunpack.c.l.b16 %v4542
        %v4593 = vunpack.c.l.b16 %v4546
        %v4594 = vunpack.c.l.b16 %v4549
        %v4595 = vunpack.c.l.b16 %v4553
        %v4596 = vunpack.c.l.b16 %v4556
        %v4597 = vunpack.c.l.b16 %v4560
        %v4598 = vunpack.c.l.b16 %v4563
        %v4599 = vunpack.c.l.b16 %v4567
        %v4600 = vunpack.c.l.b16 %v4570
        %v4601 = vunpack.c.l.b16 %v4574
        %v4602 = vunpack.c.l.b16 %v4577
        %v4603 = vpack.c.b16 %v4588, %v4587
        %v4604 = vpack.c.b16 %v4590, %v4589
        %v4605 = vpack.c.b16 %v4592, %v4591
        %v4606 = vpack.c.b16 %v4594, %v4593
        %v4607 = vpack.c.b16 %v4596, %v4595
        %v4608 = vpack.c.b16 %v4598, %v4597
        %v4609 = vpack.c.b16 %v4600, %v4599
        %v4610 = vpack.c.b16 %v4602, %v4601
        %4619 = vmatprep.subr.bf16.mxu0 0
        %4620 = vmatpush1.bf16.msra.mxu0 %v4579
        %4621 = vmatprep.subr.bf16.mxu0 0
        %4622 = vmatpush1.bf16.msra.mxu0 %v4580
        %4623 = vmatprep.subr.bf16.mxu0 0
        %4624 = vmatpush1.bf16.msra.mxu0 %v4581
        %4625 = vmatprep.subr.bf16.mxu0 0
        %4626 = vmatpush1.bf16.msra.mxu0 %v4582
        %4627 = vmatprep.subr.bf16.mxu0 0
        %4628 = vmatpush1.bf16.msra.mxu0 %v4583
        %4629 = vmatprep.subr.bf16.mxu0 0
        %4630 = vmatpush1.bf16.msra.mxu0 %v4584
        %4631 = vmatprep.subr.bf16.mxu0 0
        %4632 = vmatpush1.bf16.msra.mxu0 %v4585
        %4633 = vmatprep.subr.bf16.mxu0 0
        %4634 = vmatpush1.bf16.msra.mxu0 %v4586
        %4635 = vmatprep.subr.bf16.mxu0 0
        %4636 = vmatpush1.bf16.msra.mxu0 0
        %4637 = vmatprep.subr.bf16.mxu0 0
        %4638 = vmatpush1.bf16.msra.mxu0 0
        %4639 = vmatprep.subr.bf16.mxu0 0
        %4640 = vmatpush1.bf16.msra.mxu0 0
        %4641 = vmatprep.subr.bf16.mxu0 0
        %4642 = vmatpush1.bf16.msra.mxu0 0
        %4643 = vmatprep.subr.bf16.mxu0 0
        %4644 = vmatpush1.bf16.msra.mxu0 0
        %4645 = vmatprep.subr.bf16.mxu0 0
        %4646 = vmatpush1.bf16.msra.mxu0 0
        %4647 = vmatprep.subr.bf16.mxu0 0
        %4648 = vmatpush1.bf16.msra.mxu0 0
        %4649 = vmatprep.subr.bf16.mxu0 0
        %4650 = vmatpush1.bf16.msra.mxu0 0
        %4651 = vmatprep.mubr.bf16.mxu0 0
        %4652 = vmatmul.mubr.bf16.gmra.mrb[0].mxu0 %v4603
        %v4653 = vpop.f32.mrb[0].mxu0
        %v4654 = vadd.f32 0.0, %v4653
        %v4655 = vpop.f32.mrb[0].mxu0
        %v4656 = vpop.f32.mrb[0].mxu0
        %v4657 = vadd.f32 0.0, %v4656
        %v4658 = vpop.f32.mrb[0].mxu0
        %4659 = vmatprep.mubr.bf16.mxu0 0
        %4660 = vmatmul.mubr.bf16.gmra.mrb[0].mxu0 %v4604
        %v4661 = vpop.f32.mrb[0].mxu0
        %v4662 = vadd.f32 0.0, %v4661
        %v4663 = vpop.f32.mrb[0].mxu0
        %v4664 = vpop.f32.mrb[0].mxu0
        %v4665 = vadd.f32 0.0, %v4664
        %v4666 = vpop.f32.mrb[0].mxu0
        %4667 = vmatprep.mubr.bf16.mxu0 0
        %4668 = vmatmul.mubr.bf16.gmra.mrb[0].mxu0 %v4605
        %v4669 = vpop.f32.mrb[0].mxu0
        %v4670 = vadd.f32 0.0, %v4669
        %v4671 = vpop.f32.mrb[0].mxu0
        %v4672 = vpop.f32.mrb[0].mxu0
        %v4673 = vadd.f32 0.0, %v4672
        %v4674 = vpop.f32.mrb[0].mxu0
        %4675 = vmatprep.mubr.bf16.mxu0 0
        %4676 = vmatmul.mubr.bf16.gmra.mrb[0].mxu0 %v4606
        %v4677 = vpop.f32.mrb[0].mxu0
        %v4678 = vadd.f32 0.0, %v4677
        %v4679 = vpop.f32.mrb[0].mxu0
        %v4680 = vpop.f32.mrb[0].mxu0
        %v4681 = vadd.f32 0.0, %v4680
        %v4682 = vpop.f32.mrb[0].mxu0
        %4683 = vmatprep.mubr.bf16.mxu0 0
        %4684 = vmatmul.mubr.bf16.gmra.mrb[0].mxu0 %v4607
        %v4685 = vpop.f32.mrb[0].mxu0
        %v4686 = vadd.f32 0.0, %v4685
        %v4687 = vpop.f32.mrb[0].mxu0
        %v4688 = vpop.f32.mrb[0].mxu0
        %v4689 = vadd.f32 0.0, %v4688
        %v4690 = vpop.f32.mrb[0].mxu0
        %4691 = vmatprep.mubr.bf16.mxu0 0
        %4692 = vmatmul.mubr.bf16.gmra.mrb[0].mxu0 %v4608
        %v4693 = vpop.f32.mrb[0].mxu0
        %v4694 = vadd.f32 0.0, %v4693
        %v4695 = vpop.f32.mrb[0].mxu0
        %v4696 = vpop.f32.mrb[0].mxu0
        %v4697 = vadd.f32 0.0, %v4696
        %v4698 = vpop.f32.mrb[0].mxu0
        %4699 = vmatprep.mubr.bf16.mxu0 0
        %4700 = vmatmul.mubr.bf16.gmra.mrb[0].mxu0 %v4609
        %v4701 = vpop.f32.mrb[0].mxu0
        %v4702 = vadd.f32 0.0, %v4701
        %v4703 = vpop.f32.mrb[0].mxu0
        %v4704 = vpop.f32.mrb[0].mxu0
        %v4705 = vadd.f32 0.0, %v4704
        %v4706 = vpop.f32.mrb[0].mxu0
        %4707 = vmatprep.mubr.bf16.mxu0 0
        %4708 = vmatmul.mubr.bf16.gmra.mrb[0].mxu0 %v4610
        %v4709 = vpop.f32.mrb[0].mxu0
        %v4710 = vadd.f32 0.0, %v4709
        %v4711 = vpop.f32.mrb[0].mxu0
        %v4712 = vpop.f32.mrb[0].mxu0
        %v4713 = vadd.f32 0.0, %v4712
        %v4714 = vpop.f32.mrb[0].mxu0
        %4715 = vdwg.mxu0
        %v4716 = vadd.f32 %v4458, %v4654
        %v4717 = vadd.f32 %v4459, %v4657
        %v4718 = vadd.f32 %v4460, %v4662
        %v4719 = vadd.f32 %v4461, %v4665
        %v4720 = vadd.f32 %v4462, %v4670
        %v4721 = vadd.f32 %v4463, %v4673
        %v4722 = vadd.f32 %v4464, %v4678
        %v4723 = vadd.f32 %v4465, %v4681
        %v4724 = vadd.f32 %v4466, %v4686
        %v4725 = vadd.f32 %v4467, %v4689
        %v4726 = vadd.f32 %v4468, %v4694
        %v4727 = vadd.f32 %v4469, %v4697
        %v4728 = vadd.f32 %v4470, %v4702
        %v4729 = vadd.f32 %v4471, %v4705
        %v4730 = vadd.f32 %v4472, %v4710
        %v4731 = vadd.f32 %v4473, %v4713
        %v4732 = vld [vmem:[%s445 + $0xc] sm:$0xf]
        %v4733 = vld [vmem:[%s445 + $0x10] sm:$0xf]
        %v4734 = vld [vmem:[%s445 + $0x20] sm:$0xf]
        %v4735 = vld [vmem:[%s445 + $0x24] sm:$0xf]
        %v4736 = vld [vmem:[%s445 + $0x34] sm:$0xf]
        %v4737 = vld [vmem:[%s445 + $0x38] sm:$0xf]
        %v4738 = vld [vmem:[%s445 + $0x48] sm:$0xf]
        %v4739 = vld [vmem:[%s445 + $0x4c] sm:$0xf]
        %v4740 = vld [vmem:[%s445 + $0x5c] sm:$0xf]
        %v4741 = vld [vmem:[%s445 + $0x60] sm:$0xf]
        %v4742 = vld [vmem:[%s445 + $0x70] sm:$0xf]
        %v4743 = vld [vmem:[%s445 + $0x74] sm:$0xf]
        %v4744 = vld [vmem:[%s445 + $0x84] sm:$0xf]
        %v4745 = vld [vmem:[%s445 + $0x88] sm:$0xf]
        %v4746 = vld [vmem:[%s445 + $0x98] sm:$0xf]
        %v4747 = vld [vmem:[%s445 + $0x9c] sm:$0xf]
        %s4748 = scalar_lea.vmem [#allocation3], 896
        %v4749 = vld [vmem:[%s4748] sm:$0xff]
        %v4750 = vld [vmem:[%s4748 + $0x8] sm:$0xff]
        %v4751 = vld [vmem:[%s4748 + $0x10] sm:$0xff]
        %v4752 = vld [vmem:[%s4748 + $0x18] sm:$0xff]
        %v4753 = vld [vmem:[%s4748 + $0x20] sm:$0xff]
        %v4754 = vld [vmem:[%s4748 + $0x28] sm:$0xff]
        %v4755 = vld [vmem:[%s4748 + $0x30] sm:$0xff]
        %v4756 = vld [vmem:[%s4748 + $0x38] sm:$0xff]
        %v4773 = vunpack.c.l.b16 %v4732
        %v4774 = vunpack.c.l.b16 %v4733
        %v4775 = vunpack.c.l.b16 %v4734
        %v4776 = vunpack.c.l.b16 %v4735
        %v4777 = vunpack.c.l.b16 %v4736
        %v4778 = vunpack.c.l.b16 %v4737
        %v4779 = vunpack.c.l.b16 %v4738
        %v4780 = vunpack.c.l.b16 %v4739
        %v4781 = vunpack.c.l.b16 %v4740
        %v4782 = vunpack.c.l.b16 %v4741
        %v4783 = vunpack.c.l.b16 %v4742
        %v4784 = vunpack.c.l.b16 %v4743
        %v4785 = vunpack.c.l.b16 %v4744
        %v4786 = vunpack.c.l.b16 %v4745
        %v4787 = vunpack.c.l.b16 %v4746
        %v4788 = vunpack.c.l.b16 %v4747
        %v4789 = vpack.c.b16 %v4774, %v4773
        %v4790 = vpack.c.b16 %v4776, %v4775
        %v4791 = vpack.c.b16 %v4778, %v4777
        %v4792 = vpack.c.b16 %v4780, %v4779
        %v4793 = vpack.c.b16 %v4782, %v4781
        %v4794 = vpack.c.b16 %v4784, %v4783
        %v4795 = vpack.c.b16 %v4786, %v4785
        %v4796 = vpack.c.b16 %v4788, %v4787
        %4805 = vmatprep.subr.bf16.mxu0 0
        %4806 = vmatpush1.bf16.msra.mxu0 %v4749
        %4807 = vmatprep.subr.bf16.mxu0 0
        %4808 = vmatpush1.bf16.msra.mxu0 %v4750
        %4809 = vmatprep.subr.bf16.mxu0 0
        %4810 = vmatpush1.bf16.msra.mxu0 %v4751
        %4811 = vmatprep.subr.bf16.mxu0 0
        %4812 = vmatpush1.bf16.msra.mxu0 %v4752
        %4813 = vmatprep.subr.bf16.mxu0 0
        %4814 = vmatpush1.bf16.msra.mxu0 %v4753
        %4815 = vmatprep.subr.bf16.mxu0 0
        %4816 = vmatpush1.bf16.msra.mxu0 %v4754
        %4817 = vmatprep.subr.bf16.mxu0 0
        %4818 = vmatpush1.bf16.msra.mxu0 %v4755
        %4819 = vmatprep.subr.bf16.mxu0 0
        %4820 = vmatpush1.bf16.msra.mxu0 %v4756
        %4821 = vmatprep.subr.bf16.mxu0 0
        %4822 = vmatpush1.bf16.msra.mxu0 0
        %4823 = vmatprep.subr.bf16.mxu0 0
        %4824 = vmatpush1.bf16.msra.mxu0 0
        %4825 = vmatprep.subr.bf16.mxu0 0
        %4826 = vmatpush1.bf16.msra.mxu0 0
        %4827 = vmatprep.subr.bf16.mxu0 0
        %4828 = vmatpush1.bf16.msra.mxu0 0
        %4829 = vmatprep.subr.bf16.mxu0 0
        %4830 = vmatpush1.bf16.msra.mxu0 0
        %4831 = vmatprep.subr.bf16.mxu0 0
        %4832 = vmatpush1.bf16.msra.mxu0 0
        %4833 = vmatprep.subr.bf16.mxu0 0
        %4834 = vmatpush1.bf16.msra.mxu0 0
        %4835 = vmatprep.subr.bf16.mxu0 0
        %4836 = vmatpush1.bf16.msra.mxu0 0
        %4837 = vmatprep.mubr.bf16.mxu0 0
        %4838 = vmatmul.mubr.bf16.gmra.mrb[0].mxu0 %v4789
        %v4839 = vpop.f32.mrb[0].mxu0
        %v4840 = vadd.f32 0.0, %v4839
        %v4841 = vpop.f32.mrb[0].mxu0
        %v4842 = vpop.f32.mrb[0].mxu0
        %v4843 = vadd.f32 0.0, %v4842
        %v4844 = vpop.f32.mrb[0].mxu0
        %4845 = vmatprep.mubr.bf16.mxu0 0
        %4846 = vmatmul.mubr.bf16.gmra.mrb[0].mxu0 %v4790
        %v4847 = vpop.f32.mrb[0].mxu0
        %v4848 = vadd.f32 0.0, %v4847
        %v4849 = vpop.f32.mrb[0].mxu0
        %v4850 = vpop.f32.mrb[0].mxu0
        %v4851 = vadd.f32 0.0, %v4850
        %v4852 = vpop.f32.mrb[0].mxu0
        %4853 = vmatprep.mubr.bf16.mxu0 0
        %4854 = vmatmul.mubr.bf16.gmra.mrb[0].mxu0 %v4791
        %v4855 = vpop.f32.mrb[0].mxu0
        %v4856 = vadd.f32 0.0, %v4855
        %v4857 = vpop.f32.mrb[0].mxu0
        %v4858 = vpop.f32.mrb[0].mxu0
        %v4859 = vadd.f32 0.0, %v4858
        %v4860 = vpop.f32.mrb[0].mxu0
        %4861 = vmatprep.mubr.bf16.mxu0 0
        %4862 = vmatmul.mubr.bf16.gmra.mrb[0].mxu0 %v4792
        %v4863 = vpop.f32.mrb[0].mxu0
        %v4864 = vadd.f32 0.0, %v4863
        %v4865 = vpop.f32.mrb[0].mxu0
        %v4866 = vpop.f32.mrb[0].mxu0
        %v4867 = vadd.f32 0.0, %v4866
        %v4868 = vpop.f32.mrb[0].mxu0
        %4869 = vmatprep.mubr.bf16.mxu0 0
        %4870 = vmatmul.mubr.bf16.gmra.mrb[0].mxu0 %v4793
        %v4871 = vpop.f32.mrb[0].mxu0
        %v4872 = vadd.f32 0.0, %v4871
        %v4873 = vpop.f32.mrb[0].mxu0
        %v4874 = vpop.f32.mrb[0].mxu0
        %v4875 = vadd.f32 0.0, %v4874
        %v4876 = vpop.f32.mrb[0].mxu0
        %4877 = vmatprep.mubr.bf16.mxu0 0
        %4878 = vmatmul.mubr.bf16.gmra.mrb[0].mxu0 %v4794
        %v4879 = vpop.f32.mrb[0].mxu0
        %v4880 = vadd.f32 0.0, %v4879
        %v4881 = vpop.f32.mrb[0].mxu0
        %v4882 = vpop.f32.mrb[0].mxu0
        %v4883 = vadd.f32 0.0, %v4882
        %v4884 = vpop.f32.mrb[0].mxu0
        %4885 = vmatprep.mubr.bf16.mxu0 0
        %4886 = vmatmul.mubr.bf16.gmra.mrb[0].mxu0 %v4795
        %v4887 = vpop.f32.mrb[0].mxu0
        %v4888 = vadd.f32 0.0, %v4887
        %v4889 = vpop.f32.mrb[0].mxu0
        %v4890 = vpop.f32.mrb[0].mxu0
        %v4891 = vadd.f32 0.0, %v4890
        %v4892 = vpop.f32.mrb[0].mxu0
        %4893 = vmatprep.mubr.bf16.mxu0 0
        %4894 = vmatmul.mubr.bf16.gmra.mrb[0].mxu0 %v4796
        %v4895 = vpop.f32.mrb[0].mxu0
        %v4896 = vadd.f32 0.0, %v4895
        %v4897 = vpop.f32.mrb[0].mxu0
        %v4898 = vpop.f32.mrb[0].mxu0
        %v4899 = vadd.f32 0.0, %v4898
        %v4900 = vpop.f32.mrb[0].mxu0
        %4901 = vdwg.mxu0
        %v4902 = vadd.f32 %v4716, %v4840
        %v4903 = vadd.f32 %v4717, %v4843
        %v4904 = vadd.f32 %v4718, %v4848
        %v4905 = vadd.f32 %v4719, %v4851
        %v4906 = vadd.f32 %v4720, %v4856
        %v4907 = vadd.f32 %v4721, %v4859
        %v4908 = vadd.f32 %v4722, %v4864
        %v4909 = vadd.f32 %v4723, %v4867
        %v4910 = vadd.f32 %v4724, %v4872
        %v4911 = vadd.f32 %v4725, %v4875
        %v4912 = vadd.f32 %v4726, %v4880
        %v4913 = vadd.f32 %v4727, %v4883
        %v4914 = vadd.f32 %v4728, %v4888
        %v4915 = vadd.f32 %v4729, %v4891
        %v4916 = vadd.f32 %v4730, %v4896
        %v4917 = vadd.f32 %v4731, %v4899
        %s4918 = scalar_lea.vmem [#allocation2], 480
        %v4919 = vld [vmem:[%s4918] sm:$0xf]
        %v4920 = vld [vmem:[%s4918 + $0x4] sm:$0xf]
        %v4921 = vld [vmem:[%s4918 + $0x14] sm:$0xf]
        %v4922 = vld [vmem:[%s4918 + $0x18] sm:$0xf]
        %v4923 = vld [vmem:[%s4918 + $0x28] sm:$0xf]
        %v4924 = vld [vmem:[%s4918 + $0x2c] sm:$0xf]
        %v4925 = vld [vmem:[%s4918 + $0x3c] sm:$0xf]
        %v4926 = vld [vmem:[%s4918 + $0x40] sm:$0xf]
        %v4927 = vld [vmem:[%s4918 + $0x50] sm:$0xf]
        %v4928 = vld [vmem:[%s4918 + $0x54] sm:$0xf]
        %v4929 = vld [vmem:[%s4918 + $0x64] sm:$0xf]
        %v4930 = vld [vmem:[%s4918 + $0x68] sm:$0xf]
        %v4931 = vld [vmem:[%s4918 + $0x78] sm:$0xf]
        %v4932 = vld [vmem:[%s4918 + $0x7c] sm:$0xf]
        %v4933 = vld [vmem:[%s4918 + $0x8c] sm:$0xf]
        %v4934 = vld [vmem:[%s4918 + $0x90] sm:$0xf]
        %s4935 = scalar_lea.vmem [#allocation3], 960
        %v4936 = vld [vmem:[%s4935] sm:$0xff]
        %v4937 = vld [vmem:[%s4935 + $0x8] sm:$0xff]
        %v4938 = vld [vmem:[%s4935 + $0x10] sm:$0xff]
        %v4939 = vld [vmem:[%s4935 + $0x18] sm:$0xff]
        %v4940 = vld [vmem:[%s4935 + $0x20] sm:$0xff]
        %v4941 = vld [vmem:[%s4935 + $0x28] sm:$0xff]
        %v4942 = vld [vmem:[%s4935 + $0x30] sm:$0xff]
        %v4943 = vld [vmem:[%s4935 + $0x38] sm:$0xff]
        %v4960 = vunpack.c.l.b16 %v4919
        %v4961 = vunpack.c.l.b16 %v4920
        %v4962 = vunpack.c.l.b16 %v4921
        %v4963 = vunpack.c.l.b16 %v4922
        %v4964 = vunpack.c.l.b16 %v4923
        %v4965 = vunpack.c.l.b16 %v4924
        %v4966 = vunpack.c.l.b16 %v4925
        %v4967 = vunpack.c.l.b16 %v4926
        %v4968 = vunpack.c.l.b16 %v4927
        %v4969 = vunpack.c.l.b16 %v4928
        %v4970 = vunpack.c.l.b16 %v4929
        %v4971 = vunpack.c.l.b16 %v4930
        %v4972 = vunpack.c.l.b16 %v4931
        %v4973 = vunpack.c.l.b16 %v4932
        %v4974 = vunpack.c.l.b16 %v4933
        %v4975 = vunpack.c.l.b16 %v4934
        %v4976 = vpack.c.b16 %v4961, %v4960
        %v4977 = vpack.c.b16 %v4963, %v4962
        %v4978 = vpack.c.b16 %v4965, %v4964
        %v4979 = vpack.c.b16 %v4967, %v4966
        %v4980 = vpack.c.b16 %v4969, %v4968
        %v4981 = vpack.c.b16 %v4971, %v4970
        %v4982 = vpack.c.b16 %v4973, %v4972
        %v4983 = vpack.c.b16 %v4975, %v4974
        %4992 = vmatprep.subr.bf16.mxu0 0
        %4993 = vmatpush1.bf16.msra.mxu0 %v4936
        %4994 = vmatprep.subr.bf16.mxu0 0
        %4995 = vmatpush1.bf16.msra.mxu0 %v4937
        %4996 = vmatprep.subr.bf16.mxu0 0
        %4997 = vmatpush1.bf16.msra.mxu0 %v4938
        %4998 = vmatprep.subr.bf16.mxu0 0
        %4999 = vmatpush1.bf16.msra.mxu0 %v4939
        %5000 = vmatprep.subr.bf16.mxu0 0
        %5001 = vmatpush1.bf16.msra.mxu0 %v4940
        %5002 = vmatprep.subr.bf16.mxu0 0
        %5003 = vmatpush1.bf16.msra.mxu0 %v4941
        %5004 = vmatprep.subr.bf16.mxu0 0
        %5005 = vmatpush1.bf16.msra.mxu0 %v4942
        %5006 = vmatprep.subr.bf16.mxu0 0
        %5007 = vmatpush1.bf16.msra.mxu0 %v4943
        %5008 = vmatprep.subr.bf16.mxu0 0
        %5009 = vmatpush1.bf16.msra.mxu0 0
        %5010 = vmatprep.subr.bf16.mxu0 0
        %5011 = vmatpush1.bf16.msra.mxu0 0
        %5012 = vmatprep.subr.bf16.mxu0 0
        %5013 = vmatpush1.bf16.msra.mxu0 0
        %5014 = vmatprep.subr.bf16.mxu0 0
        %5015 = vmatpush1.bf16.msra.mxu0 0
        %5016 = vmatprep.subr.bf16.mxu0 0
        %5017 = vmatpush1.bf16.msra.mxu0 0
        %5018 = vmatprep.subr.bf16.mxu0 0
        %5019 = vmatpush1.bf16.msra.mxu0 0
        %5020 = vmatprep.subr.bf16.mxu0 0
        %5021 = vmatpush1.bf16.msra.mxu0 0
        %5022 = vmatprep.subr.bf16.mxu0 0
        %5023 = vmatpush1.bf16.msra.mxu0 0
        %5024 = vmatprep.mubr.bf16.mxu0 0
        %5025 = vmatmul.mubr.bf16.gmra.mrb[0].mxu0 %v4976
        %v5026 = vpop.f32.mrb[0].mxu0
        %v5027 = vadd.f32 0.0, %v5026
        %v5028 = vpop.f32.mrb[0].mxu0
        %v5029 = vpop.f32.mrb[0].mxu0
        %v5030 = vadd.f32 0.0, %v5029
        %v5031 = vpop.f32.mrb[0].mxu0
        %5032 = vmatprep.mubr.bf16.mxu0 0
        %5033 = vmatmul.mubr.bf16.gmra.mrb[0].mxu0 %v4977
        %v5034 = vpop.f32.mrb[0].mxu0
        %v5035 = vadd.f32 0.0, %v5034
        %v5036 = vpop.f32.mrb[0].mxu0
        %v5037 = vpop.f32.mrb[0].mxu0
        %v5038 = vadd.f32 0.0, %v5037
        %v5039 = vpop.f32.mrb[0].mxu0
        %5040 = vmatprep.mubr.bf16.mxu0 0
        %5041 = vmatmul.mubr.bf16.gmra.mrb[0].mxu0 %v4978
        %v5042 = vpop.f32.mrb[0].mxu0
        %v5043 = vadd.f32 0.0, %v5042
        %v5044 = vpop.f32.mrb[0].mxu0
        %v5045 = vpop.f32.mrb[0].mxu0
        %v5046 = vadd.f32 0.0, %v5045
        %v5047 = vpop.f32.mrb[0].mxu0
        %5048 = vmatprep.mubr.bf16.mxu0 0
        %5049 = vmatmul.mubr.bf16.gmra.mrb[0].mxu0 %v4979
        %v5050 = vpop.f32.mrb[0].mxu0
        %v5051 = vadd.f32 0.0, %v5050
        %v5052 = vpop.f32.mrb[0].mxu0
        %v5053 = vpop.f32.mrb[0].mxu0
        %v5054 = vadd.f32 0.0, %v5053
        %v5055 = vpop.f32.mrb[0].mxu0
        %5056 = vmatprep.mubr.bf16.mxu0 0
        %5057 = vmatmul.mubr.bf16.gmra.mrb[0].mxu0 %v4980
        %v5058 = vpop.f32.mrb[0].mxu0
        %v5059 = vadd.f32 0.0, %v5058
        %v5060 = vpop.f32.mrb[0].mxu0
        %v5061 = vpop.f32.mrb[0].mxu0
        %v5062 = vadd.f32 0.0, %v5061
        %v5063 = vpop.f32.mrb[0].mxu0
        %5064 = vmatprep.mubr.bf16.mxu0 0
        %5065 = vmatmul.mubr.bf16.gmra.mrb[0].mxu0 %v4981
        %v5066 = vpop.f32.mrb[0].mxu0
        %v5067 = vadd.f32 0.0, %v5066
        %v5068 = vpop.f32.mrb[0].mxu0
        %v5069 = vpop.f32.mrb[0].mxu0
        %v5070 = vadd.f32 0.0, %v5069
        %v5071 = vpop.f32.mrb[0].mxu0
        %5072 = vmatprep.mubr.bf16.mxu0 0
        %5073 = vmatmul.mubr.bf16.gmra.mrb[0].mxu0 %v4982
        %v5074 = vpop.f32.mrb[0].mxu0
        %v5075 = vadd.f32 0.0, %v5074
        %v5076 = vpop.f32.mrb[0].mxu0
        %v5077 = vpop.f32.mrb[0].mxu0
        %v5078 = vadd.f32 0.0, %v5077
        %v5079 = vpop.f32.mrb[0].mxu0
        %5080 = vmatprep.mubr.bf16.mxu0 0
        %5081 = vmatmul.mubr.bf16.gmra.mrb[0].mxu0 %v4983
        %v5082 = vpop.f32.mrb[0].mxu0
        %v5083 = vadd.f32 0.0, %v5082
        %v5084 = vpop.f32.mrb[0].mxu0
        %v5085 = vpop.f32.mrb[0].mxu0
        %v5086 = vadd.f32 0.0, %v5085
        %v5087 = vpop.f32.mrb[0].mxu0
        %5088 = vdwg.mxu0
        %v5089 = vadd.f32 %v4902, %v5027
        %v5090 = vadd.f32 %v4903, %v5030
        %v5091 = vadd.f32 %v4904, %v5035
        %v5092 = vadd.f32 %v4905, %v5038
        %v5093 = vadd.f32 %v4906, %v5043
        %v5094 = vadd.f32 %v4907, %v5046
        %v5095 = vadd.f32 %v4908, %v5051
        %v5096 = vadd.f32 %v4909, %v5054
        %v5097 = vadd.f32 %v4910, %v5059
        %v5098 = vadd.f32 %v4911, %v5062
        %v5099 = vadd.f32 %v4912, %v5067
        %v5100 = vadd.f32 %v4913, %v5070
        %v5101 = vadd.f32 %v4914, %v5075
        %v5102 = vadd.f32 %v4915, %v5078
        %v5103 = vadd.f32 %v4916, %v5083
        %v5104 = vadd.f32 %v4917, %v5086
        %v5105 = vld [vmem:[%s4918 + $0x4] sm:$0xc]
        %v5106 = vld [vmem:[%s4918 + $0x8] sm:$0xf]
        %v5107 = vld [vmem:[%s4918 + $0xc] sm:$0x3]
        %v5108 = vld [vmem:[%s4918 + $0x18] sm:$0xc]
        %v5109 = vld [vmem:[%s4918 + $0x1c] sm:$0xf]
        %v5110 = vld [vmem:[%s4918 + $0x20] sm:$0x3]
        %v5111 = vld [vmem:[%s4918 + $0x2c] sm:$0xc]
        %v5112 = vld [vmem:[%s4918 + $0x30] sm:$0xf]
        %v5113 = vld [vmem:[%s4918 + $0x34] sm:$0x3]
        %v5114 = vld [vmem:[%s4918 + $0x40] sm:$0xc]
        %v5115 = vld [vmem:[%s4918 + $0x44] sm:$0xf]
        %v5116 = vld [vmem:[%s4918 + $0x48] sm:$0x3]
        %v5117 = vld [vmem:[%s4918 + $0x54] sm:$0xc]
        %v5118 = vld [vmem:[%s4918 + $0x58] sm:$0xf]
        %v5119 = vld [vmem:[%s4918 + $0x5c] sm:$0x3]
        %v5120 = vld [vmem:[%s4918 + $0x68] sm:$0xc]
        %v5121 = vld [vmem:[%s4918 + $0x6c] sm:$0xf]
        %v5122 = vld [vmem:[%s4918 + $0x70] sm:$0x3]
        %v5123 = vld [vmem:[%s4918 + $0x7c] sm:$0xc]
        %v5124 = vld [vmem:[%s4918 + $0x80] sm:$0xf]
        %v5125 = vld [vmem:[%s4918 + $0x84] sm:$0x3]
        %v5126 = vld [vmem:[%s4918 + $0x90] sm:$0xc]
        %v5127 = vld [vmem:[%s4918 + $0x94] sm:$0xf]
        %v5128 = vld [vmem:[%s4918 + $0x98] sm:$0x3]
        %v5153 = vrot.slane %v5105, 6
        %v5154 = vrot.slane %v5153, 4
        %v5155 = vrot.slane %v5106, 6
        %v5156 = vsel %vm496, %v5154, %v5155
        %v5157 = vrot.slane %v5155, 4
        %v5158 = vrot.slane %v5107, 6
        %v5159 = vsel %vm496, %v5157, %v5158
        %v5160 = vrot.slane %v5108, 6
        %v5161 = vrot.slane %v5160, 4
        %v5162 = vrot.slane %v5109, 6
        %v5163 = vsel %vm496, %v5161, %v5162
        %v5164 = vrot.slane %v5162, 4
        %v5165 = vrot.slane %v5110, 6
        %v5166 = vsel %vm496, %v5164, %v5165
        %v5167 = vrot.slane %v5111, 6
        %v5168 = vrot.slane %v5167, 4
        %v5169 = vrot.slane %v5112, 6
        %v5170 = vsel %vm496, %v5168, %v5169
        %v5171 = vrot.slane %v5169, 4
        %v5172 = vrot.slane %v5113, 6
        %v5173 = vsel %vm496, %v5171, %v5172
        %v5174 = vrot.slane %v5114, 6
        %v5175 = vrot.slane %v5174, 4
        %v5176 = vrot.slane %v5115, 6
        %v5177 = vsel %vm496, %v5175, %v5176
        %v5178 = vrot.slane %v5176, 4
        %v5179 = vrot.slane %v5116, 6
        %v5180 = vsel %vm496, %v5178, %v5179
        %v5181 = vrot.slane %v5117, 6
        %v5182 = vrot.slane %v5181, 4
        %v5183 = vrot.slane %v5118, 6
        %v5184 = vsel %vm496, %v5182, %v5183
        %v5185 = vrot.slane %v5183, 4
        %v5186 = vrot.slane %v5119, 6
        %v5187 = vsel %vm496, %v5185, %v5186
        %v5188 = vrot.slane %v5120, 6
        %v5189 = vrot.slane %v5188, 4
        %v5190 = vrot.slane %v5121, 6
        %v5191 = vsel %vm496, %v5189, %v5190
        %v5192 = vrot.slane %v5190, 4
        %v5193 = vrot.slane %v5122, 6
        %v5194 = vsel %vm496, %v5192, %v5193
        %v5195 = vrot.slane %v5123, 6
        %v5196 = vrot.slane %v5195, 4
        %v5197 = vrot.slane %v5124, 6
        %v5198 = vsel %vm496, %v5196, %v5197
        %v5199 = vrot.slane %v5197, 4
        %v5200 = vrot.slane %v5125, 6
        %v5201 = vsel %vm496, %v5199, %v5200
        %v5202 = vrot.slane %v5126, 6
        %v5203 = vrot.slane %v5202, 4
        %v5204 = vrot.slane %v5127, 6
        %v5205 = vsel %vm496, %v5203, %v5204
        %v5206 = vrot.slane %v5204, 4
        %v5207 = vrot.slane %v5128, 6
        %v5208 = vsel %vm496, %v5206, %v5207
        %s5209 = scalar_lea.vmem [#allocation3], 1024
        %v5210 = vld [vmem:[%s5209] sm:$0xff]
        %v5211 = vld [vmem:[%s5209 + $0x8] sm:$0xff]
        %v5212 = vld [vmem:[%s5209 + $0x10] sm:$0xff]
        %v5213 = vld [vmem:[%s5209 + $0x18] sm:$0xff]
        %v5214 = vld [vmem:[%s5209 + $0x20] sm:$0xff]
        %v5215 = vld [vmem:[%s5209 + $0x28] sm:$0xff]
        %v5216 = vld [vmem:[%s5209 + $0x30] sm:$0xff]
        %v5217 = vld [vmem:[%s5209 + $0x38] sm:$0xff]
        %v5218 = vunpack.c.l.b16 %v5156
        %v5219 = vunpack.c.l.b16 %v5159
        %v5220 = vunpack.c.l.b16 %v5163
        %v5221 = vunpack.c.l.b16 %v5166
        %v5222 = vunpack.c.l.b16 %v5170
        %v5223 = vunpack.c.l.b16 %v5173
        %v5224 = vunpack.c.l.b16 %v5177
        %v5225 = vunpack.c.l.b16 %v5180
        %v5226 = vunpack.c.l.b16 %v5184
        %v5227 = vunpack.c.l.b16 %v5187
        %v5228 = vunpack.c.l.b16 %v5191
        %v5229 = vunpack.c.l.b16 %v5194
        %v5230 = vunpack.c.l.b16 %v5198
        %v5231 = vunpack.c.l.b16 %v5201
        %v5232 = vunpack.c.l.b16 %v5205
        %v5233 = vunpack.c.l.b16 %v5208
        %v5234 = vpack.c.b16 %v5219, %v5218
        %v5235 = vpack.c.b16 %v5221, %v5220
        %v5236 = vpack.c.b16 %v5223, %v5222
        %v5237 = vpack.c.b16 %v5225, %v5224
        %v5238 = vpack.c.b16 %v5227, %v5226
        %v5239 = vpack.c.b16 %v5229, %v5228
        %v5240 = vpack.c.b16 %v5231, %v5230
        %v5241 = vpack.c.b16 %v5233, %v5232
        %5250 = vmatprep.subr.bf16.mxu0 0
        %5251 = vmatpush1.bf16.msra.mxu0 %v5210
        %5252 = vmatprep.subr.bf16.mxu0 0
        %5253 = vmatpush1.bf16.msra.mxu0 %v5211
        %5254 = vmatprep.subr.bf16.mxu0 0
        %5255 = vmatpush1.bf16.msra.mxu0 %v5212
        %5256 = vmatprep.subr.bf16.mxu0 0
        %5257 = vmatpush1.bf16.msra.mxu0 %v5213
        %5258 = vmatprep.subr.bf16.mxu0 0
        %5259 = vmatpush1.bf16.msra.mxu0 %v5214
        %5260 = vmatprep.subr.bf16.mxu0 0
        %5261 = vmatpush1.bf16.msra.mxu0 %v5215
        %5262 = vmatprep.subr.bf16.mxu0 0
        %5263 = vmatpush1.bf16.msra.mxu0 %v5216
        %5264 = vmatprep.subr.bf16.mxu0 0
        %5265 = vmatpush1.bf16.msra.mxu0 %v5217
        %5266 = vmatprep.subr.bf16.mxu0 0
        %5267 = vmatpush1.bf16.msra.mxu0 0
        %5268 = vmatprep.subr.bf16.mxu0 0
        %5269 = vmatpush1.bf16.msra.mxu0 0
        %5270 = vmatprep.subr.bf16.mxu0 0
        %5271 = vmatpush1.bf16.msra.mxu0 0
        %5272 = vmatprep.subr.bf16.mxu0 0
        %5273 = vmatpush1.bf16.msra.mxu0 0
        %5274 = vmatprep.subr.bf16.mxu0 0
        %5275 = vmatpush1.bf16.msra.mxu0 0
        %5276 = vmatprep.subr.bf16.mxu0 0
        %5277 = vmatpush1.bf16.msra.mxu0 0
        %5278 = vmatprep.subr.bf16.mxu0 0
        %5279 = vmatpush1.bf16.msra.mxu0 0
        %5280 = vmatprep.subr.bf16.mxu0 0
        %5281 = vmatpush1.bf16.msra.mxu0 0
        %5282 = vmatprep.mubr.bf16.mxu0 0
        %5283 = vmatmul.mubr.bf16.gmra.mrb[0].mxu0 %v5234
        %v5284 = vpop.f32.mrb[0].mxu0
        %v5285 = vadd.f32 0.0, %v5284
        %v5286 = vpop.f32.mrb[0].mxu0
        %v5287 = vpop.f32.mrb[0].mxu0
        %v5288 = vadd.f32 0.0, %v5287
        %v5289 = vpop.f32.mrb[0].mxu0
        %5290 = vmatprep.mubr.bf16.mxu0 0
        %5291 = vmatmul.mubr.bf16.gmra.mrb[0].mxu0 %v5235
        %v5292 = vpop.f32.mrb[0].mxu0
        %v5293 = vadd.f32 0.0, %v5292
        %v5294 = vpop.f32.mrb[0].mxu0
        %v5295 = vpop.f32.mrb[0].mxu0
        %v5296 = vadd.f32 0.0, %v5295
        %v5297 = vpop.f32.mrb[0].mxu0
        %5298 = vmatprep.mubr.bf16.mxu0 0
        %5299 = vmatmul.mubr.bf16.gmra.mrb[0].mxu0 %v5236
        %v5300 = vpop.f32.mrb[0].mxu0
        %v5301 = vadd.f32 0.0, %v5300
        %v5302 = vpop.f32.mrb[0].mxu0
        %v5303 = vpop.f32.mrb[0].mxu0
        %v5304 = vadd.f32 0.0, %v5303
        %v5305 = vpop.f32.mrb[0].mxu0
        %5306 = vmatprep.mubr.bf16.mxu0 0
        %5307 = vmatmul.mubr.bf16.gmra.mrb[0].mxu0 %v5237
        %v5308 = vpop.f32.mrb[0].mxu0
        %v5309 = vadd.f32 0.0, %v5308
        %v5310 = vpop.f32.mrb[0].mxu0
        %v5311 = vpop.f32.mrb[0].mxu0
        %v5312 = vadd.f32 0.0, %v5311
        %v5313 = vpop.f32.mrb[0].mxu0
        %5314 = vmatprep.mubr.bf16.mxu0 0
        %5315 = vmatmul.mubr.bf16.gmra.mrb[0].mxu0 %v5238
        %v5316 = vpop.f32.mrb[0].mxu0
        %v5317 = vadd.f32 0.0, %v5316
        %v5318 = vpop.f32.mrb[0].mxu0
        %v5319 = vpop.f32.mrb[0].mxu0
        %v5320 = vadd.f32 0.0, %v5319
        %v5321 = vpop.f32.mrb[0].mxu0
        %5322 = vmatprep.mubr.bf16.mxu0 0
        %5323 = vmatmul.mubr.bf16.gmra.mrb[0].mxu0 %v5239
        %v5324 = vpop.f32.mrb[0].mxu0
        %v5325 = vadd.f32 0.0, %v5324
        %v5326 = vpop.f32.mrb[0].mxu0
        %v5327 = vpop.f32.mrb[0].mxu0
        %v5328 = vadd.f32 0.0, %v5327
        %v5329 = vpop.f32.mrb[0].mxu0
        %5330 = vmatprep.mubr.bf16.mxu0 0
        %5331 = vmatmul.mubr.bf16.gmra.mrb[0].mxu0 %v5240
        %v5332 = vpop.f32.mrb[0].mxu0
        %v5333 = vadd.f32 0.0, %v5332
        %v5334 = vpop.f32.mrb[0].mxu0
        %v5335 = vpop.f32.mrb[0].mxu0
        %v5336 = vadd.f32 0.0, %v5335
        %v5337 = vpop.f32.mrb[0].mxu0
        %5338 = vmatprep.mubr.bf16.mxu0 0
        %5339 = vmatmul.mubr.bf16.gmra.mrb[0].mxu0 %v5241
        %v5340 = vpop.f32.mrb[0].mxu0
        %v5341 = vadd.f32 0.0, %v5340
        %v5342 = vpop.f32.mrb[0].mxu0
        %v5343 = vpop.f32.mrb[0].mxu0
        %v5344 = vadd.f32 0.0, %v5343
        %v5345 = vpop.f32.mrb[0].mxu0
        %5346 = vdwg.mxu0
        %v5347 = vadd.f32 %v5089, %v5285
        %v5348 = vadd.f32 %v5090, %v5288
        %v5349 = vadd.f32 %v5091, %v5293
        %v5350 = vadd.f32 %v5092, %v5296
        %v5351 = vadd.f32 %v5093, %v5301
        %v5352 = vadd.f32 %v5094, %v5304
        %v5353 = vadd.f32 %v5095, %v5309
        %v5354 = vadd.f32 %v5096, %v5312
        %v5355 = vadd.f32 %v5097, %v5317
        %v5356 = vadd.f32 %v5098, %v5320
        %v5357 = vadd.f32 %v5099, %v5325
        %v5358 = vadd.f32 %v5100, %v5328
        %v5359 = vadd.f32 %v5101, %v5333
        %v5360 = vadd.f32 %v5102, %v5336
        %v5361 = vadd.f32 %v5103, %v5341
        %v5362 = vadd.f32 %v5104, %v5344
        %v5363 = vld [vmem:[%s4918 + $0xc] sm:$0xf]
        %v5364 = vld [vmem:[%s4918 + $0x10] sm:$0xf]
        %v5365 = vld [vmem:[%s4918 + $0x20] sm:$0xf]
        %v5366 = vld [vmem:[%s4918 + $0x24] sm:$0xf]
        %v5367 = vld [vmem:[%s4918 + $0x34] sm:$0xf]
        %v5368 = vld [vmem:[%s4918 + $0x38] sm:$0xf]
        %v5369 = vld [vmem:[%s4918 + $0x48] sm:$0xf]
        %v5370 = vld [vmem:[%s4918 + $0x4c] sm:$0xf]
        %v5371 = vld [vmem:[%s4918 + $0x5c] sm:$0xf]
        %v5372 = vld [vmem:[%s4918 + $0x60] sm:$0xf]
        %v5373 = vld [vmem:[%s4918 + $0x70] sm:$0xf]
        %v5374 = vld [vmem:[%s4918 + $0x74] sm:$0xf]
        %v5375 = vld [vmem:[%s4918 + $0x84] sm:$0xf]
        %v5376 = vld [vmem:[%s4918 + $0x88] sm:$0xf]
        %v5377 = vld [vmem:[%s4918 + $0x98] sm:$0xf]
        %v5378 = vld [vmem:[%s4918 + $0x9c] sm:$0xf]
        %s5379 = scalar_lea.vmem [#allocation3], 1088
        %v5380 = vld [vmem:[%s5379] sm:$0xff]
        %v5381 = vld [vmem:[%s5379 + $0x8] sm:$0xff]
        %v5382 = vld [vmem:[%s5379 + $0x10] sm:$0xff]
        %v5383 = vld [vmem:[%s5379 + $0x18] sm:$0xff]
        %v5384 = vld [vmem:[%s5379 + $0x20] sm:$0xff]
        %v5385 = vld [vmem:[%s5379 + $0x28] sm:$0xff]
        %v5386 = vld [vmem:[%s5379 + $0x30] sm:$0xff]
        %v5387 = vld [vmem:[%s5379 + $0x38] sm:$0xff]
        %v5404 = vunpack.c.l.b16 %v5363
        %v5405 = vunpack.c.l.b16 %v5364
        %v5406 = vunpack.c.l.b16 %v5365
        %v5407 = vunpack.c.l.b16 %v5366
        %v5408 = vunpack.c.l.b16 %v5367
        %v5409 = vunpack.c.l.b16 %v5368
        %v5410 = vunpack.c.l.b16 %v5369
        %v5411 = vunpack.c.l.b16 %v5370
        %v5412 = vunpack.c.l.b16 %v5371
        %v5413 = vunpack.c.l.b16 %v5372
        %v5414 = vunpack.c.l.b16 %v5373
        %v5415 = vunpack.c.l.b16 %v5374
        %v5416 = vunpack.c.l.b16 %v5375
        %v5417 = vunpack.c.l.b16 %v5376
        %v5418 = vunpack.c.l.b16 %v5377
        %v5419 = vunpack.c.l.b16 %v5378
        %v5420 = vpack.c.b16 %v5405, %v5404
        %v5421 = vpack.c.b16 %v5407, %v5406
        %v5422 = vpack.c.b16 %v5409, %v5408
        %v5423 = vpack.c.b16 %v5411, %v5410
        %v5424 = vpack.c.b16 %v5413, %v5412
        %v5425 = vpack.c.b16 %v5415, %v5414
        %v5426 = vpack.c.b16 %v5417, %v5416
        %v5427 = vpack.c.b16 %v5419, %v5418
        %5436 = vmatprep.subr.bf16.mxu0 0
        %5437 = vmatpush1.bf16.msra.mxu0 %v5380
        %5438 = vmatprep.subr.bf16.mxu0 0
        %5439 = vmatpush1.bf16.msra.mxu0 %v5381
        %5440 = vmatprep.subr.bf16.mxu0 0
        %5441 = vmatpush1.bf16.msra.mxu0 %v5382
        %5442 = vmatprep.subr.bf16.mxu0 0
        %5443 = vmatpush1.bf16.msra.mxu0 %v5383
        %5444 = vmatprep.subr.bf16.mxu0 0
        %5445 = vmatpush1.bf16.msra.mxu0 %v5384
        %5446 = vmatprep.subr.bf16.mxu0 0
        %5447 = vmatpush1.bf16.msra.mxu0 %v5385
        %5448 = vmatprep.subr.bf16.mxu0 0
        %5449 = vmatpush1.bf16.msra.mxu0 %v5386
        %5450 = vmatprep.subr.bf16.mxu0 0
        %5451 = vmatpush1.bf16.msra.mxu0 %v5387
        %5452 = vmatprep.subr.bf16.mxu0 0
        %5453 = vmatpush1.bf16.msra.mxu0 0
        %5454 = vmatprep.subr.bf16.mxu0 0
        %5455 = vmatpush1.bf16.msra.mxu0 0
        %5456 = vmatprep.subr.bf16.mxu0 0
        %5457 = vmatpush1.bf16.msra.mxu0 0
        %5458 = vmatprep.subr.bf16.mxu0 0
        %5459 = vmatpush1.bf16.msra.mxu0 0
        %5460 = vmatprep.subr.bf16.mxu0 0
        %5461 = vmatpush1.bf16.msra.mxu0 0
        %5462 = vmatprep.subr.bf16.mxu0 0
        %5463 = vmatpush1.bf16.msra.mxu0 0
        %5464 = vmatprep.subr.bf16.mxu0 0
        %5465 = vmatpush1.bf16.msra.mxu0 0
        %5466 = vmatprep.subr.bf16.mxu0 0
        %5467 = vmatpush1.bf16.msra.mxu0 0
        %5468 = vmatprep.mubr.bf16.mxu0 0
        %5469 = vmatmul.mubr.bf16.gmra.mrb[0].mxu0 %v5420
        %v5470 = vpop.f32.mrb[0].mxu0
        %v5471 = vadd.f32 0.0, %v5470
        %v5472 = vpop.f32.mrb[0].mxu0
        %v5473 = vpop.f32.mrb[0].mxu0
        %v5474 = vadd.f32 0.0, %v5473
        %v5475 = vpop.f32.mrb[0].mxu0
        %5476 = vmatprep.mubr.bf16.mxu0 0
        %5477 = vmatmul.mubr.bf16.gmra.mrb[0].mxu0 %v5421
        %v5478 = vpop.f32.mrb[0].mxu0
        %v5479 = vadd.f32 0.0, %v5478
        %v5480 = vpop.f32.mrb[0].mxu0
        %v5481 = vpop.f32.mrb[0].mxu0
        %v5482 = vadd.f32 0.0, %v5481
        %v5483 = vpop.f32.mrb[0].mxu0
        %5484 = vmatprep.mubr.bf16.mxu0 0
        %5485 = vmatmul.mubr.bf16.gmra.mrb[0].mxu0 %v5422
        %v5486 = vpop.f32.mrb[0].mxu0
        %v5487 = vadd.f32 0.0, %v5486
        %v5488 = vpop.f32.mrb[0].mxu0
        %v5489 = vpop.f32.mrb[0].mxu0
        %v5490 = vadd.f32 0.0, %v5489
        %v5491 = vpop.f32.mrb[0].mxu0
        %5492 = vmatprep.mubr.bf16.mxu0 0
        %5493 = vmatmul.mubr.bf16.gmra.mrb[0].mxu0 %v5423
        %v5494 = vpop.f32.mrb[0].mxu0
        %v5495 = vadd.f32 0.0, %v5494
        %v5496 = vpop.f32.mrb[0].mxu0
        %v5497 = vpop.f32.mrb[0].mxu0
        %v5498 = vadd.f32 0.0, %v5497
        %v5499 = vpop.f32.mrb[0].mxu0
        %5500 = vmatprep.mubr.bf16.mxu0 0
        %5501 = vmatmul.mubr.bf16.gmra.mrb[0].mxu0 %v5424
        %v5502 = vpop.f32.mrb[0].mxu0
        %v5503 = vadd.f32 0.0, %v5502
        %v5504 = vpop.f32.mrb[0].mxu0
        %v5505 = vpop.f32.mrb[0].mxu0
        %v5506 = vadd.f32 0.0, %v5505
        %v5507 = vpop.f32.mrb[0].mxu0
        %5508 = vmatprep.mubr.bf16.mxu0 0
        %5509 = vmatmul.mubr.bf16.gmra.mrb[0].mxu0 %v5425
        %v5510 = vpop.f32.mrb[0].mxu0
        %v5511 = vadd.f32 0.0, %v5510
        %v5512 = vpop.f32.mrb[0].mxu0
        %v5513 = vpop.f32.mrb[0].mxu0
        %v5514 = vadd.f32 0.0, %v5513
        %v5515 = vpop.f32.mrb[0].mxu0
        %5516 = vmatprep.mubr.bf16.mxu0 0
        %5517 = vmatmul.mubr.bf16.gmra.mrb[0].mxu0 %v5426
        %v5518 = vpop.f32.mrb[0].mxu0
        %v5519 = vadd.f32 0.0, %v5518
        %v5520 = vpop.f32.mrb[0].mxu0
        %v5521 = vpop.f32.mrb[0].mxu0
        %v5522 = vadd.f32 0.0, %v5521
        %v5523 = vpop.f32.mrb[0].mxu0
        %5524 = vmatprep.mubr.bf16.mxu0 0
        %5525 = vmatmul.mubr.bf16.gmra.mrb[0].mxu0 %v5427
        %v5526 = vpop.f32.mrb[0].mxu0
        %v5527 = vadd.f32 0.0, %v5526
        %v5528 = vpop.f32.mrb[0].mxu0
        %v5529 = vpop.f32.mrb[0].mxu0
        %v5530 = vadd.f32 0.0, %v5529
        %v5531 = vpop.f32.mrb[0].mxu0
        %5532 = vdwg.mxu0
        %v5533 = vadd.f32 %v5347, %v5471
        %v5534 = vadd.f32 %v5348, %v5474
        %v5535 = vadd.f32 %v5349, %v5479
        %v5536 = vadd.f32 %v5350, %v5482
        %v5537 = vadd.f32 %v5351, %v5487
        %v5538 = vadd.f32 %v5352, %v5490
        %v5539 = vadd.f32 %v5353, %v5495
        %v5540 = vadd.f32 %v5354, %v5498
        %v5541 = vadd.f32 %v5355, %v5503
        %v5542 = vadd.f32 %v5356, %v5506
        %v5543 = vadd.f32 %v5357, %v5511
        %v5544 = vadd.f32 %v5358, %v5514
        %v5545 = vadd.f32 %v5359, %v5519
        %v5546 = vadd.f32 %v5360, %v5522
        %v5547 = vadd.f32 %v5361, %v5527
        %v5548 = vadd.f32 %v5362, %v5530
        %v5549 = vld [vmem:[#allocation12 + $0x2] sm:$0x1]
        %v5550 = vlaneseq
        %v5551 = vshrl.u32 %v5550, 7
        %v5552 = vsub.s32 0, %v5551
        %v5553 = vrot.slane %v5549, %v5552
        %v5554 = vmul.f32 %v5533, %v5553
        %v5555 = vmul.f32 %v5534, %v5553
        %v5556 = vmul.f32 %v5535, %v5553
        %v5557 = vmul.f32 %v5536, %v5553
        %v5558 = vmul.f32 %v5537, %v5553
        %v5559 = vmul.f32 %v5538, %v5553
        %v5560 = vmul.f32 %v5539, %v5553
        %v5561 = vmul.f32 %v5540, %v5553
        %v5562 = vmul.f32 %v5541, %v5553
        %v5563 = vmul.f32 %v5542, %v5553
        %v5564 = vmul.f32 %v5543, %v5553
        %v5565 = vmul.f32 %v5544, %v5553
        %v5566 = vmul.f32 %v5545, %v5553
        %v5567 = vmul.f32 %v5546, %v5553
        %v5568 = vmul.f32 %v5547, %v5553
        %v5569 = vmul.f32 %v5548, %v5553
        %v5570 = vld [vmem:[#allocation14 + $0x2] sm:$0x1]
        %v5571 = vlaneseq
        %v5572 = vshrl.u32 %v5571, 7
        %v5573 = vsub.s32 0, %v5572
        %v5574 = vrot.slane %v5570, %v5573
        %v5575 = vadd.f32 %v5554, %v5574
        %v5576 = vadd.f32 %v5555, %v5574
        %v5577 = vadd.f32 %v5556, %v5574
        %v5578 = vadd.f32 %v5557, %v5574
        %v5579 = vadd.f32 %v5558, %v5574
        %v5580 = vadd.f32 %v5559, %v5574
        %v5581 = vadd.f32 %v5560, %v5574
        %v5582 = vadd.f32 %v5561, %v5574
        %v5583 = vadd.f32 %v5562, %v5574
        %v5584 = vadd.f32 %v5563, %v5574
        %v5585 = vadd.f32 %v5564, %v5574
        %v5586 = vadd.f32 %v5565, %v5574
        %v5587 = vadd.f32 %v5566, %v5574
        %v5588 = vadd.f32 %v5567, %v5574
        %v5589 = vadd.f32 %v5568, %v5574
        %v5590 = vadd.f32 %v5569, %v5574
        %vm5591 = vcmp.gt.f32.partialorder %v5575, 0.0
        %vm5592 = vcmp.gt.f32.partialorder %v5576, 0.0
        %vm5593 = vcmp.gt.f32.partialorder %v5577, 0.0
        %vm5594 = vcmp.gt.f32.partialorder %v5578, 0.0
        %vm5595 = vcmp.gt.f32.partialorder %v5579, 0.0
        %vm5596 = vcmp.gt.f32.partialorder %v5580, 0.0
        %vm5597 = vcmp.gt.f32.partialorder %v5581, 0.0
        %vm5598 = vcmp.gt.f32.partialorder %v5582, 0.0
        %vm5599 = vcmp.gt.f32.partialorder %v5583, 0.0
        %vm5600 = vcmp.gt.f32.partialorder %v5584, 0.0
        %vm5601 = vcmp.gt.f32.partialorder %v5585, 0.0
        %vm5602 = vcmp.gt.f32.partialorder %v5586, 0.0
        %vm5603 = vcmp.gt.f32.partialorder %v5587, 0.0
        %vm5604 = vcmp.gt.f32.partialorder %v5588, 0.0
        %vm5605 = vcmp.gt.f32.partialorder %v5589, 0.0
        %vm5606 = vcmp.gt.f32.partialorder %v5590, 0.0
        %v5607 = vmul.f32 %v5575, 0.01
        %v5608 = vmul.f32 %v5576, 0.01
        %v5609 = vmul.f32 %v5577, 0.01
        %v5610 = vmul.f32 %v5578, 0.01
        %v5611 = vmul.f32 %v5579, 0.01
        %v5612 = vmul.f32 %v5580, 0.01
        %v5613 = vmul.f32 %v5581, 0.01
        %v5614 = vmul.f32 %v5582, 0.01
        %v5615 = vmul.f32 %v5583, 0.01
        %v5616 = vmul.f32 %v5584, 0.01
        %v5617 = vmul.f32 %v5585, 0.01
        %v5618 = vmul.f32 %v5586, 0.01
        %v5619 = vmul.f32 %v5587, 0.01
        %v5620 = vmul.f32 %v5588, 0.01
        %v5621 = vmul.f32 %v5589, 0.01
        %v5622 = vmul.f32 %v5590, 0.01
        %v5623 = vsel %vm5591, %v5575, %v5607
        %v5624 = vsel %vm5592, %v5576, %v5608
        %v5625 = vsel %vm5593, %v5577, %v5609
        %v5626 = vsel %vm5594, %v5578, %v5610
        %v5627 = vsel %vm5595, %v5579, %v5611
        %v5628 = vsel %vm5596, %v5580, %v5612
        %v5629 = vsel %vm5597, %v5581, %v5613
        %v5630 = vsel %vm5598, %v5582, %v5614
        %v5631 = vsel %vm5599, %v5583, %v5615
        %v5632 = vsel %vm5600, %v5584, %v5616
        %v5633 = vsel %vm5601, %v5585, %v5617
        %v5634 = vsel %vm5602, %v5586, %v5618
        %v5635 = vsel %vm5603, %v5587, %v5619
        %v5636 = vsel %vm5604, %v5588, %v5620
        %v5637 = vsel %vm5605, %v5589, %v5621
        %v5638 = vsel %vm5606, %v5590, %v5622
        %v5639 = vld [vmem:[#allocation5] sm:$0xff]
        %v5640 = vld [vmem:[#allocation5 + $0x8] sm:$0xff]
        %v5641 = vld [vmem:[#allocation5 + $0x10] sm:$0xff]
        %v5642 = vld [vmem:[#allocation5 + $0x18] sm:$0xff]
        %v5643 = vld [vmem:[#allocation5 + $0x20] sm:$0xff]
        %v5644 = vld [vmem:[#allocation5 + $0x28] sm:$0xff]
        %v5645 = vld [vmem:[#allocation5 + $0x30] sm:$0xff]
        %v5646 = vld [vmem:[#allocation5 + $0x38] sm:$0xff]
        %v5647 = vld [vmem:[#allocation5 + $0x40] sm:$0xff]
        %v5648 = vld [vmem:[#allocation5 + $0x48] sm:$0xff]
        %v5649 = vld [vmem:[#allocation5 + $0x50] sm:$0xff]
        %v5650 = vld [vmem:[#allocation5 + $0x58] sm:$0xff]
        %v5651 = vld [vmem:[#allocation5 + $0x60] sm:$0xff]
        %v5652 = vld [vmem:[#allocation5 + $0x68] sm:$0xff]
        %v5653 = vld [vmem:[#allocation5 + $0x70] sm:$0xff]
        %v5654 = vld [vmem:[#allocation5 + $0x78] sm:$0xff]
        %v5655 = vpack.c.bf16 %v5624, %v5623
        %v5656 = vpack.c.bf16 %v5626, %v5625
        %v5657 = vpack.c.bf16 %v5628, %v5627
        %v5658 = vpack.c.bf16 %v5630, %v5629
        %v5659 = vpack.c.bf16 %v5632, %v5631
        %v5660 = vpack.c.bf16 %v5634, %v5633
        %v5661 = vpack.c.bf16 %v5636, %v5635
        %v5662 = vpack.c.bf16 %v5638, %v5637
        %s5663 = scalar_lea.vmem [#allocation11], 128
        %v5664 = vld [vmem:[%s5663] sm:$0xf]
        %v5665 = vld [vmem:[%s5663 + $0x4] sm:$0xf]
        %v5666 = vld [vmem:[%s5663 + $0x8] sm:$0xf]
        %v5667 = vld [vmem:[%s5663 + $0xc] sm:$0xf]
        %v5668 = vld [vmem:[%s5663 + $0x10] sm:$0xf]
        %v5669 = vld [vmem:[%s5663 + $0x14] sm:$0xf]
        %v5670 = vld [vmem:[%s5663 + $0x18] sm:$0xf]
        %v5671 = vld [vmem:[%s5663 + $0x1c] sm:$0xf]
        %v5672 = vld [vmem:[%s5663 + $0x20] sm:$0xf]
        %v5673 = vld [vmem:[%s5663 + $0x24] sm:$0xf]
        %v5674 = vld [vmem:[%s5663 + $0x28] sm:$0xf]
        %v5675 = vld [vmem:[%s5663 + $0x2c] sm:$0xf]
        %v5676 = vld [vmem:[%s5663 + $0x30] sm:$0xf]
        %v5677 = vld [vmem:[%s5663 + $0x34] sm:$0xf]
        %v5678 = vld [vmem:[%s5663 + $0x38] sm:$0xf]
        %v5679 = vld [vmem:[%s5663 + $0x3c] sm:$0xf]
        %v5696 = vunpack.c.l.b16 %v5664
        %v5697 = vunpack.c.l.b16 %v5665
        %v5698 = vunpack.c.l.b16 %v5666
        %v5699 = vunpack.c.l.b16 %v5667
        %v5700 = vunpack.c.l.b16 %v5668
        %v5701 = vunpack.c.l.b16 %v5669
        %v5702 = vunpack.c.l.b16 %v5670
        %v5703 = vunpack.c.l.b16 %v5671
        %v5704 = vunpack.c.l.b16 %v5672
        %v5705 = vunpack.c.l.b16 %v5673
        %v5706 = vunpack.c.l.b16 %v5674
        %v5707 = vunpack.c.l.b16 %v5675
        %v5708 = vunpack.c.l.b16 %v5676
        %v5709 = vunpack.c.l.b16 %v5677
        %v5710 = vunpack.c.l.b16 %v5678
        %v5711 = vunpack.c.l.b16 %v5679
        %v5712 = vpack.c.b16 %v5697, %v5696
        %v5713 = vpack.c.b16 %v5699, %v5698
        %v5714 = vpack.c.b16 %v5701, %v5700
        %v5715 = vpack.c.b16 %v5703, %v5702
        %v5716 = vpack.c.b16 %v5705, %v5704
        %v5717 = vpack.c.b16 %v5707, %v5706
        %v5718 = vpack.c.b16 %v5709, %v5708
        %v5719 = vpack.c.b16 %v5711, %v5710
        %5728 = vmatprep.subr.bf16.mxu0 0
        %5729 = vmatpush1.bf16.msra.mxu0 %v5712
        %5730 = vmatprep.subr.bf16.mxu0 0
        %5731 = vmatpush1.bf16.msra.mxu0 %v5713
        %5732 = vmatprep.subr.bf16.mxu0 0
        %5733 = vmatpush1.bf16.msra.mxu0 %v5714
        %5734 = vmatprep.subr.bf16.mxu0 0
        %5735 = vmatpush1.bf16.msra.mxu0 %v5715
        %5736 = vmatprep.subr.bf16.mxu0 0
        %5737 = vmatpush1.bf16.msra.mxu0 %v5716
        %5738 = vmatprep.subr.bf16.mxu0 0
        %5739 = vmatpush1.bf16.msra.mxu0 %v5717
        %5740 = vmatprep.subr.bf16.mxu0 0
        %5741 = vmatpush1.bf16.msra.mxu0 %v5718
        %5742 = vmatprep.subr.bf16.mxu0 0
        %5743 = vmatpush1.bf16.msra.mxu0 %v5719
        %5744 = vmatprep.subr.bf16.mxu0 0
        %5745 = vmatpush1.bf16.msra.mxu0 0
        %5746 = vmatprep.subr.bf16.mxu0 0
        %5747 = vmatpush1.bf16.msra.mxu0 0
        %5748 = vmatprep.subr.bf16.mxu0 0
        %5749 = vmatpush1.bf16.msra.mxu0 0
        %5750 = vmatprep.subr.bf16.mxu0 0
        %5751 = vmatpush1.bf16.msra.mxu0 0
        %5752 = vmatprep.subr.bf16.mxu0 0
        %5753 = vmatpush1.bf16.msra.mxu0 0
        %5754 = vmatprep.subr.bf16.mxu0 0
        %5755 = vmatpush1.bf16.msra.mxu0 0
        %5756 = vmatprep.subr.bf16.mxu0 0
        %5757 = vmatpush1.bf16.msra.mxu0 0
        %5758 = vmatprep.subr.bf16.mxu0 0
        %5759 = vmatpush1.bf16.msra.mxu0 0
        %5760 = vmatprep.mubr.bf16.mxu0 0
        %5761 = vmatmul.mubr.bf16.gmra.mrb[0].mxu0 %v5655
        %v5762 = vpop.f32.mrb[0].mxu0
        %v5763 = vadd.f32 0.0, %v5762
        %v5764 = vpop.f32.mrb[0].mxu0
        %v5765 = vpop.f32.mrb[0].mxu0
        %v5766 = vadd.f32 0.0, %v5765
        %v5767 = vpop.f32.mrb[0].mxu0
        %5768 = vmatprep.mubr.bf16.mxu0 0
        %5769 = vmatmul.mubr.bf16.gmra.mrb[0].mxu0 %v5656
        %v5770 = vpop.f32.mrb[0].mxu0
        %v5771 = vadd.f32 0.0, %v5770
        %v5772 = vpop.f32.mrb[0].mxu0
        %v5773 = vpop.f32.mrb[0].mxu0
        %v5774 = vadd.f32 0.0, %v5773
        %v5775 = vpop.f32.mrb[0].mxu0
        %5776 = vmatprep.mubr.bf16.mxu0 0
        %5777 = vmatmul.mubr.bf16.gmra.mrb[0].mxu0 %v5657
        %v5778 = vpop.f32.mrb[0].mxu0
        %v5779 = vadd.f32 0.0, %v5778
        %v5780 = vpop.f32.mrb[0].mxu0
        %v5781 = vpop.f32.mrb[0].mxu0
        %v5782 = vadd.f32 0.0, %v5781
        %v5783 = vpop.f32.mrb[0].mxu0
        %5784 = vmatprep.mubr.bf16.mxu0 0
        %5785 = vmatmul.mubr.bf16.gmra.mrb[0].mxu0 %v5658
        %v5786 = vpop.f32.mrb[0].mxu0
        %v5787 = vadd.f32 0.0, %v5786
        %v5788 = vpop.f32.mrb[0].mxu0
        %v5789 = vpop.f32.mrb[0].mxu0
        %v5790 = vadd.f32 0.0, %v5789
        %v5791 = vpop.f32.mrb[0].mxu0
        %5792 = vmatprep.mubr.bf16.mxu0 0
        %5793 = vmatmul.mubr.bf16.gmra.mrb[0].mxu0 %v5659
        %v5794 = vpop.f32.mrb[0].mxu0
        %v5795 = vadd.f32 0.0, %v5794
        %v5796 = vpop.f32.mrb[0].mxu0
        %v5797 = vpop.f32.mrb[0].mxu0
        %v5798 = vadd.f32 0.0, %v5797
        %v5799 = vpop.f32.mrb[0].mxu0
        %5800 = vmatprep.mubr.bf16.mxu0 0
        %5801 = vmatmul.mubr.bf16.gmra.mrb[0].mxu0 %v5660
        %v5802 = vpop.f32.mrb[0].mxu0
        %v5803 = vadd.f32 0.0, %v5802
        %v5804 = vpop.f32.mrb[0].mxu0
        %v5805 = vpop.f32.mrb[0].mxu0
        %v5806 = vadd.f32 0.0, %v5805
        %v5807 = vpop.f32.mrb[0].mxu0
        %5808 = vmatprep.mubr.bf16.mxu0 0
        %5809 = vmatmul.mubr.bf16.gmra.mrb[0].mxu0 %v5661
        %v5810 = vpop.f32.mrb[0].mxu0
        %v5811 = vadd.f32 0.0, %v5810
        %v5812 = vpop.f32.mrb[0].mxu0
        %v5813 = vpop.f32.mrb[0].mxu0
        %v5814 = vadd.f32 0.0, %v5813
        %v5815 = vpop.f32.mrb[0].mxu0
        %5816 = vmatprep.mubr.bf16.mxu0 0
        %5817 = vmatmul.mubr.bf16.gmra.mrb[0].mxu0 %v5662
        %v5818 = vpop.f32.mrb[0].mxu0
        %v5819 = vadd.f32 0.0, %v5818
        %v5820 = vpop.f32.mrb[0].mxu0
        %v5821 = vpop.f32.mrb[0].mxu0
        %v5822 = vadd.f32 0.0, %v5821
        %v5823 = vpop.f32.mrb[0].mxu0
        %5824 = vdwg.mxu0
        %v5825 = vadd.f32 %v5639, %v5763
        %v5826 = vadd.f32 %v5640, %v5766
        %v5827 = vadd.f32 %v5641, %v5771
        %v5828 = vadd.f32 %v5642, %v5774
        %v5829 = vadd.f32 %v5643, %v5779
        %v5830 = vadd.f32 %v5644, %v5782
        %v5831 = vadd.f32 %v5645, %v5787
        %v5832 = vadd.f32 %v5646, %v5790
        %v5833 = vadd.f32 %v5647, %v5795
        %v5834 = vadd.f32 %v5648, %v5798
        %v5835 = vadd.f32 %v5649, %v5803
        %v5836 = vadd.f32 %v5650, %v5806
        %v5837 = vadd.f32 %v5651, %v5811
        %v5838 = vadd.f32 %v5652, %v5814
        %v5839 = vadd.f32 %v5653, %v5819
        %v5840 = vadd.f32 %v5654, %v5822
        %5841 = vst [vmem:[#allocation5] sm:$0xff] %v5825
        %5842 = vst [vmem:[#allocation5 + $0x8] sm:$0xff] %v5826
        %5843 = vst [vmem:[#allocation5 + $0x10] sm:$0xff] %v5827
        %5844 = vst [vmem:[#allocation5 + $0x18] sm:$0xff] %v5828
        %5845 = vst [vmem:[#allocation5 + $0x20] sm:$0xff] %v5829
        %5846 = vst [vmem:[#allocation5 + $0x28] sm:$0xff] %v5830
        %5847 = vst [vmem:[#allocation5 + $0x30] sm:$0xff] %v5831
        %5848 = vst [vmem:[#allocation5 + $0x38] sm:$0xff] %v5832
        %5849 = vst [vmem:[#allocation5 + $0x40] sm:$0xff] %v5833
        %5850 = vst [vmem:[#allocation5 + $0x48] sm:$0xff] %v5834
        %5851 = vst [vmem:[#allocation5 + $0x50] sm:$0xff] %v5835
        %5852 = vst [vmem:[#allocation5 + $0x58] sm:$0xff] %v5836
        %5853 = vst [vmem:[#allocation5 + $0x60] sm:$0xff] %v5837
        %5854 = vst [vmem:[#allocation5 + $0x68] sm:$0xff] %v5838
        %5855 = vst [vmem:[#allocation5 + $0x70] sm:$0xff] %v5839
        %5856 = vst [vmem:[#allocation5 + $0x78] sm:$0xff] %v5840
        %s5857 = sshll.u32 %s1055, 4
        %5858 = dma.done %s405, %s5857
        %v5859 = vld [vmem:[%s445 + $0x4] sm:$0xc]
        %v5860 = vld [vmem:[%s445 + $0x8] sm:$0xf]
        %v5861 = vld [vmem:[%s445 + $0xc] sm:$0x3]
        %v5862 = vld [vmem:[%s445 + $0x18] sm:$0xc]
        %v5863 = vld [vmem:[%s445 + $0x1c] sm:$0xf]
        %v5864 = vld [vmem:[%s445 + $0x20] sm:$0x3]
        %v5865 = vld [vmem:[%s445 + $0x2c] sm:$0xc]
        %v5866 = vld [vmem:[%s445 + $0x30] sm:$0xf]
        %v5867 = vld [vmem:[%s445 + $0x34] sm:$0x3]
        %v5868 = vld [vmem:[%s445 + $0x40] sm:$0xc]
        %v5869 = vld [vmem:[%s445 + $0x44] sm:$0xf]
        %v5870 = vld [vmem:[%s445 + $0x48] sm:$0x3]
        %v5871 = vld [vmem:[%s445 + $0x54] sm:$0xc]
        %v5872 = vld [vmem:[%s445 + $0x58] sm:$0xf]
        %v5873 = vld [vmem:[%s445 + $0x5c] sm:$0x3]
        %v5874 = vld [vmem:[%s445 + $0x68] sm:$0xc]
        %v5875 = vld [vmem:[%s445 + $0x6c] sm:$0xf]
        %v5876 = vld [vmem:[%s445 + $0x70] sm:$0x3]
        %v5877 = vld [vmem:[%s445 + $0x7c] sm:$0xc]
        %v5878 = vld [vmem:[%s445 + $0x80] sm:$0xf]
        %v5879 = vld [vmem:[%s445 + $0x84] sm:$0x3]
        %v5880 = vld [vmem:[%s445 + $0x90] sm:$0xc]
        %v5881 = vld [vmem:[%s445 + $0x94] sm:$0xf]
        %v5882 = vld [vmem:[%s445 + $0x98] sm:$0x3]
        %v5907 = vrot.slane %v5859, 6
        %v5908 = vrot.slane %v5907, 4
        %v5909 = vrot.slane %v5860, 6
        %v5910 = vsel %vm496, %v5908, %v5909
        %v5911 = vrot.slane %v5909, 4
        %v5912 = vrot.slane %v5861, 6
        %v5913 = vsel %vm496, %v5911, %v5912
        %v5914 = vrot.slane %v5862, 6
        %v5915 = vrot.slane %v5914, 4
        %v5916 = vrot.slane %v5863, 6
        %v5917 = vsel %vm496, %v5915, %v5916
        %v5918 = vrot.slane %v5916, 4
        %v5919 = vrot.slane %v5864, 6
        %v5920 = vsel %vm496, %v5918, %v5919
        %v5921 = vrot.slane %v5865, 6
        %v5922 = vrot.slane %v5921, 4
        %v5923 = vrot.slane %v5866, 6
        %v5924 = vsel %vm496, %v5922, %v5923
        %v5925 = vrot.slane %v5923, 4
        %v5926 = vrot.slane %v5867, 6
        %v5927 = vsel %vm496, %v5925, %v5926
        %v5928 = vrot.slane %v5868, 6
        %v5929 = vrot.slane %v5928, 4
        %v5930 = vrot.slane %v5869, 6
        %v5931 = vsel %vm496, %v5929, %v5930
        %v5932 = vrot.slane %v5930, 4
        %v5933 = vrot.slane %v5870, 6
        %v5934 = vsel %vm496, %v5932, %v5933
        %v5935 = vrot.slane %v5871, 6
        %v5936 = vrot.slane %v5935, 4
        %v5937 = vrot.slane %v5872, 6
        %v5938 = vsel %vm496, %v5936, %v5937
        %v5939 = vrot.slane %v5937, 4
        %v5940 = vrot.slane %v5873, 6
        %v5941 = vsel %vm496, %v5939, %v5940
        %v5942 = vrot.slane %v5874, 6
        %v5943 = vrot.slane %v5942, 4
        %v5944 = vrot.slane %v5875, 6
        %v5945 = vsel %vm496, %v5943, %v5944
        %v5946 = vrot.slane %v5944, 4
        %v5947 = vrot.slane %v5876, 6
        %v5948 = vsel %vm496, %v5946, %v5947
        %v5949 = vrot.slane %v5877, 6
        %v5950 = vrot.slane %v5949, 4
        %v5951 = vrot.slane %v5878, 6
        %v5952 = vsel %vm496, %v5950, %v5951
        %v5953 = vrot.slane %v5951, 4
        %v5954 = vrot.slane %v5879, 6
        %v5955 = vsel %vm496, %v5953, %v5954
        %v5956 = vrot.slane %v5880, 6
        %v5957 = vrot.slane %v5956, 4
        %v5958 = vrot.slane %v5881, 6
        %v5959 = vsel %vm496, %v5957, %v5958
        %v5960 = vrot.slane %v5958, 4
        %v5961 = vrot.slane %v5882, 6
        %v5962 = vsel %vm496, %v5960, %v5961
        %v5963 = vld [vmem:[%s2182] sm:$0xff]
        %v5964 = vld [vmem:[%s2182 + $0x8] sm:$0xff]
        %v5965 = vld [vmem:[%s2182 + $0x10] sm:$0xff]
        %v5966 = vld [vmem:[%s2182 + $0x18] sm:$0xff]
        %v5967 = vld [vmem:[%s2182 + $0x20] sm:$0xff]
        %v5968 = vld [vmem:[%s2182 + $0x28] sm:$0xff]
        %v5969 = vld [vmem:[%s2182 + $0x30] sm:$0xff]
        %v5970 = vld [vmem:[%s2182 + $0x38] sm:$0xff]
        %v5971 = vunpack.c.l.b16 %v5910
        %v5972 = vunpack.c.l.b16 %v5913
        %v5973 = vunpack.c.l.b16 %v5917
        %v5974 = vunpack.c.l.b16 %v5920
        %v5975 = vunpack.c.l.b16 %v5924
        %v5976 = vunpack.c.l.b16 %v5927
        %v5977 = vunpack.c.l.b16 %v5931
        %v5978 = vunpack.c.l.b16 %v5934
        %v5979 = vunpack.c.l.b16 %v5938
        %v5980 = vunpack.c.l.b16 %v5941
        %v5981 = vunpack.c.l.b16 %v5945
        %v5982 = vunpack.c.l.b16 %v5948
        %v5983 = vunpack.c.l.b16 %v5952
        %v5984 = vunpack.c.l.b16 %v5955
        %v5985 = vunpack.c.l.b16 %v5959
        %v5986 = vunpack.c.l.b16 %v5962
        %v5987 = vpack.c.b16 %v5972, %v5971
        %v5988 = vpack.c.b16 %v5974, %v5973
        %v5989 = vpack.c.b16 %v5976, %v5975
        %v5990 = vpack.c.b16 %v5978, %v5977
        %v5991 = vpack.c.b16 %v5980, %v5979
        %v5992 = vpack.c.b16 %v5982, %v5981
        %v5993 = vpack.c.b16 %v5984, %v5983
        %v5994 = vpack.c.b16 %v5986, %v5985
        %6003 = vmatprep.subr.bf16.mxu0 0
        %6004 = vmatpush1.bf16.msra.mxu0 %v5963
        %6005 = vmatprep.subr.bf16.mxu0 0
        %6006 = vmatpush1.bf16.msra.mxu0 %v5964
        %6007 = vmatprep.subr.bf16.mxu0 0
        %6008 = vmatpush1.bf16.msra.mxu0 %v5965
        %6009 = vmatprep.subr.bf16.mxu0 0
        %6010 = vmatpush1.bf16.msra.mxu0 %v5966
        %6011 = vmatprep.subr.bf16.mxu0 0
        %6012 = vmatpush1.bf16.msra.mxu0 %v5967
        %6013 = vmatprep.subr.bf16.mxu0 0
        %6014 = vmatpush1.bf16.msra.mxu0 %v5968
        %6015 = vmatprep.subr.bf16.mxu0 0
        %6016 = vmatpush1.bf16.msra.mxu0 %v5969
        %6017 = vmatprep.subr.bf16.mxu0 0
        %6018 = vmatpush1.bf16.msra.mxu0 %v5970
        %6019 = vmatprep.subr.bf16.mxu0 0
        %6020 = vmatpush1.bf16.msra.mxu0 0
        %6021 = vmatprep.subr.bf16.mxu0 0
        %6022 = vmatpush1.bf16.msra.mxu0 0
        %6023 = vmatprep.subr.bf16.mxu0 0
        %6024 = vmatpush1.bf16.msra.mxu0 0
        %6025 = vmatprep.subr.bf16.mxu0 0
        %6026 = vmatpush1.bf16.msra.mxu0 0
        %6027 = vmatprep.subr.bf16.mxu0 0
        %6028 = vmatpush1.bf16.msra.mxu0 0
        %6029 = vmatprep.subr.bf16.mxu0 0
        %6030 = vmatpush1.bf16.msra.mxu0 0
        %6031 = vmatprep.subr.bf16.mxu0 0
        %6032 = vmatpush1.bf16.msra.mxu0 0
        %6033 = vmatprep.subr.bf16.mxu0 0
        %6034 = vmatpush1.bf16.msra.mxu0 0
        %6035 = vmatprep.mubr.bf16.mxu0 0
        %6036 = vmatmul.mubr.bf16.gmra.mrb[0].mxu0 %v5987
        %v6037 = vpop.f32.mrb[0].mxu0
        %v6038 = vadd.f32 0.0, %v6037
        %v6039 = vpop.f32.mrb[0].mxu0
        %v6040 = vpop.f32.mrb[0].mxu0
        %v6041 = vadd.f32 0.0, %v6040
        %v6042 = vpop.f32.mrb[0].mxu0
        %6043 = vmatprep.mubr.bf16.mxu0 0
        %6044 = vmatmul.mubr.bf16.gmra.mrb[0].mxu0 %v5988
        %v6045 = vpop.f32.mrb[0].mxu0
        %v6046 = vadd.f32 0.0, %v6045
        %v6047 = vpop.f32.mrb[0].mxu0
        %v6048 = vpop.f32.mrb[0].mxu0
        %v6049 = vadd.f32 0.0, %v6048
        %v6050 = vpop.f32.mrb[0].mxu0
        %6051 = vmatprep.mubr.bf16.mxu0 0
        %6052 = vmatmul.mubr.bf16.gmra.mrb[0].mxu0 %v5989
        %v6053 = vpop.f32.mrb[0].mxu0
        %v6054 = vadd.f32 0.0, %v6053
        %v6055 = vpop.f32.mrb[0].mxu0
        %v6056 = vpop.f32.mrb[0].mxu0
        %v6057 = vadd.f32 0.0, %v6056
        %v6058 = vpop.f32.mrb[0].mxu0
        %6059 = vmatprep.mubr.bf16.mxu0 0
        %6060 = vmatmul.mubr.bf16.gmra.mrb[0].mxu0 %v5990
        %v6061 = vpop.f32.mrb[0].mxu0
        %v6062 = vadd.f32 0.0, %v6061
        %v6063 = vpop.f32.mrb[0].mxu0
        %v6064 = vpop.f32.mrb[0].mxu0
        %v6065 = vadd.f32 0.0, %v6064
        %v6066 = vpop.f32.mrb[0].mxu0
        %6067 = vmatprep.mubr.bf16.mxu0 0
        %6068 = vmatmul.mubr.bf16.gmra.mrb[0].mxu0 %v5991
        %v6069 = vpop.f32.mrb[0].mxu0
        %v6070 = vadd.f32 0.0, %v6069
        %v6071 = vpop.f32.mrb[0].mxu0
        %v6072 = vpop.f32.mrb[0].mxu0
        %v6073 = vadd.f32 0.0, %v6072
        %v6074 = vpop.f32.mrb[0].mxu0
        %6075 = vmatprep.mubr.bf16.mxu0 0
        %6076 = vmatmul.mubr.bf16.gmra.mrb[0].mxu0 %v5992
        %v6077 = vpop.f32.mrb[0].mxu0
        %v6078 = vadd.f32 0.0, %v6077
        %v6079 = vpop.f32.mrb[0].mxu0
        %v6080 = vpop.f32.mrb[0].mxu0
        %v6081 = vadd.f32 0.0, %v6080
        %v6082 = vpop.f32.mrb[0].mxu0
        %6083 = vmatprep.mubr.bf16.mxu0 0
        %6084 = vmatmul.mubr.bf16.gmra.mrb[0].mxu0 %v5993
        %v6085 = vpop.f32.mrb[0].mxu0
        %v6086 = vadd.f32 0.0, %v6085
        %v6087 = vpop.f32.mrb[0].mxu0
        %v6088 = vpop.f32.mrb[0].mxu0
        %v6089 = vadd.f32 0.0, %v6088
        %v6090 = vpop.f32.mrb[0].mxu0
        %6091 = vmatprep.mubr.bf16.mxu0 0
        %6092 = vmatmul.mubr.bf16.gmra.mrb[0].mxu0 %v5994
        %v6093 = vpop.f32.mrb[0].mxu0
        %v6094 = vadd.f32 0.0, %v6093
        %v6095 = vpop.f32.mrb[0].mxu0
        %v6096 = vpop.f32.mrb[0].mxu0
        %v6097 = vadd.f32 0.0, %v6096
        %v6098 = vpop.f32.mrb[0].mxu0
        %6099 = vdwg.mxu0
        %v6100 = vld [vmem:[#allocation12 + $0x3] sm:$0x1]
        %v6101 = vlaneseq
        %v6102 = vshrl.u32 %v6101, 7
        %v6103 = vsub.s32 0, %v6102
        %v6104 = vrot.slane %v6100, %v6103
        %v6105 = vmul.f32 %v6038, %v6104
        %v6106 = vmul.f32 %v6041, %v6104
        %v6107 = vmul.f32 %v6046, %v6104
        %v6108 = vmul.f32 %v6049, %v6104
        %v6109 = vmul.f32 %v6054, %v6104
        %v6110 = vmul.f32 %v6057, %v6104
        %v6111 = vmul.f32 %v6062, %v6104
        %v6112 = vmul.f32 %v6065, %v6104
        %v6113 = vmul.f32 %v6070, %v6104
        %v6114 = vmul.f32 %v6073, %v6104
        %v6115 = vmul.f32 %v6078, %v6104
        %v6116 = vmul.f32 %v6081, %v6104
        %v6117 = vmul.f32 %v6086, %v6104
        %v6118 = vmul.f32 %v6089, %v6104
        %v6119 = vmul.f32 %v6094, %v6104
        %v6120 = vmul.f32 %v6097, %v6104
        %v6121 = vld [vmem:[#allocation14 + $0x3] sm:$0x1]
        %v6122 = vlaneseq
        %v6123 = vshrl.u32 %v6122, 7
        %v6124 = vsub.s32 0, %v6123
        %v6125 = vrot.slane %v6121, %v6124
        %v6126 = vadd.f32 %v6105, %v6125
        %v6127 = vadd.f32 %v6106, %v6125
        %v6128 = vadd.f32 %v6107, %v6125
        %v6129 = vadd.f32 %v6108, %v6125
        %v6130 = vadd.f32 %v6109, %v6125
        %v6131 = vadd.f32 %v6110, %v6125
        %v6132 = vadd.f32 %v6111, %v6125
        %v6133 = vadd.f32 %v6112, %v6125
        %v6134 = vadd.f32 %v6113, %v6125
        %v6135 = vadd.f32 %v6114, %v6125
        %v6136 = vadd.f32 %v6115, %v6125
        %v6137 = vadd.f32 %v6116, %v6125
        %v6138 = vadd.f32 %v6117, %v6125
        %v6139 = vadd.f32 %v6118, %v6125
        %v6140 = vadd.f32 %v6119, %v6125
        %v6141 = vadd.f32 %v6120, %v6125
        %vm6142 = vcmp.gt.f32.partialorder %v6126, 0.0
        %vm6143 = vcmp.gt.f32.partialorder %v6127, 0.0
        %vm6144 = vcmp.gt.f32.partialorder %v6128, 0.0
        %vm6145 = vcmp.gt.f32.partialorder %v6129, 0.0
        %vm6146 = vcmp.gt.f32.partialorder %v6130, 0.0
        %vm6147 = vcmp.gt.f32.partialorder %v6131, 0.0
        %vm6148 = vcmp.gt.f32.partialorder %v6132, 0.0
        %vm6149 = vcmp.gt.f32.partialorder %v6133, 0.0
        %vm6150 = vcmp.gt.f32.partialorder %v6134, 0.0
        %vm6151 = vcmp.gt.f32.partialorder %v6135, 0.0
        %vm6152 = vcmp.gt.f32.partialorder %v6136, 0.0
        %vm6153 = vcmp.gt.f32.partialorder %v6137, 0.0
        %vm6154 = vcmp.gt.f32.partialorder %v6138, 0.0
        %vm6155 = vcmp.gt.f32.partialorder %v6139, 0.0
        %vm6156 = vcmp.gt.f32.partialorder %v6140, 0.0
        %vm6157 = vcmp.gt.f32.partialorder %v6141, 0.0
        %v6158 = vmul.f32 %v6126, 0.01
        %v6159 = vmul.f32 %v6127, 0.01
        %v6160 = vmul.f32 %v6128, 0.01
        %v6161 = vmul.f32 %v6129, 0.01
        %v6162 = vmul.f32 %v6130, 0.01
        %v6163 = vmul.f32 %v6131, 0.01
        %v6164 = vmul.f32 %v6132, 0.01
        %v6165 = vmul.f32 %v6133, 0.01
        %v6166 = vmul.f32 %v6134, 0.01
        %v6167 = vmul.f32 %v6135, 0.01
        %v6168 = vmul.f32 %v6136, 0.01
        %v6169 = vmul.f32 %v6137, 0.01
        %v6170 = vmul.f32 %v6138, 0.01
        %v6171 = vmul.f32 %v6139, 0.01
        %v6172 = vmul.f32 %v6140, 0.01
        %v6173 = vmul.f32 %v6141, 0.01
        %v6174 = vsel %vm6142, %v6126, %v6158
        %v6175 = vsel %vm6143, %v6127, %v6159
        %v6176 = vsel %vm6144, %v6128, %v6160
        %v6177 = vsel %vm6145, %v6129, %v6161
        %v6178 = vsel %vm6146, %v6130, %v6162
        %v6179 = vsel %vm6147, %v6131, %v6163
        %v6180 = vsel %vm6148, %v6132, %v6164
        %v6181 = vsel %vm6149, %v6133, %v6165
        %v6182 = vsel %vm6150, %v6134, %v6166
        %v6183 = vsel %vm6151, %v6135, %v6167
        %v6184 = vsel %vm6152, %v6136, %v6168
        %v6185 = vsel %vm6153, %v6137, %v6169
        %v6186 = vsel %vm6154, %v6138, %v6170
        %v6187 = vsel %vm6155, %v6139, %v6171
        %v6188 = vsel %vm6156, %v6140, %v6172
        %v6189 = vsel %vm6157, %v6141, %v6173
        %v6190 = vld [vmem:[#allocation5] sm:$0xff]
        %v6191 = vld [vmem:[#allocation5 + $0x8] sm:$0xff]
        %v6192 = vld [vmem:[#allocation5 + $0x10] sm:$0xff]
        %v6193 = vld [vmem:[#allocation5 + $0x18] sm:$0xff]
        %v6194 = vld [vmem:[#allocation5 + $0x20] sm:$0xff]
        %v6195 = vld [vmem:[#allocation5 + $0x28] sm:$0xff]
        %v6196 = vld [vmem:[#allocation5 + $0x30] sm:$0xff]
        %v6197 = vld [vmem:[#allocation5 + $0x38] sm:$0xff]
        %v6198 = vld [vmem:[#allocation5 + $0x40] sm:$0xff]
        %v6199 = vld [vmem:[#allocation5 + $0x48] sm:$0xff]
        %v6200 = vld [vmem:[#allocation5 + $0x50] sm:$0xff]
        %v6201 = vld [vmem:[#allocation5 + $0x58] sm:$0xff]
        %v6202 = vld [vmem:[#allocation5 + $0x60] sm:$0xff]
        %v6203 = vld [vmem:[#allocation5 + $0x68] sm:$0xff]
        %v6204 = vld [vmem:[#allocation5 + $0x70] sm:$0xff]
        %v6205 = vld [vmem:[#allocation5 + $0x78] sm:$0xff]
        %v6206 = vpack.c.bf16 %v6175, %v6174
        %v6207 = vpack.c.bf16 %v6177, %v6176
        %v6208 = vpack.c.bf16 %v6179, %v6178
        %v6209 = vpack.c.bf16 %v6181, %v6180
        %v6210 = vpack.c.bf16 %v6183, %v6182
        %v6211 = vpack.c.bf16 %v6185, %v6184
        %v6212 = vpack.c.bf16 %v6187, %v6186
        %v6213 = vpack.c.bf16 %v6189, %v6188
        %s6214 = scalar_lea.vmem [#allocation11], 192
        %v6215 = vld [vmem:[%s6214] sm:$0xf]
        %v6216 = vld [vmem:[%s6214 + $0x4] sm:$0xf]
        %v6217 = vld [vmem:[%s6214 + $0x8] sm:$0xf]
        %v6218 = vld [vmem:[%s6214 + $0xc] sm:$0xf]
        %v6219 = vld [vmem:[%s6214 + $0x10] sm:$0xf]
        %v6220 = vld [vmem:[%s6214 + $0x14] sm:$0xf]
        %v6221 = vld [vmem:[%s6214 + $0x18] sm:$0xf]
        %v6222 = vld [vmem:[%s6214 + $0x1c] sm:$0xf]
        %v6223 = vld [vmem:[%s6214 + $0x20] sm:$0xf]
        %v6224 = vld [vmem:[%s6214 + $0x24] sm:$0xf]
        %v6225 = vld [vmem:[%s6214 + $0x28] sm:$0xf]
        %v6226 = vld [vmem:[%s6214 + $0x2c] sm:$0xf]
        %v6227 = vld [vmem:[%s6214 + $0x30] sm:$0xf]
        %v6228 = vld [vmem:[%s6214 + $0x34] sm:$0xf]
        %v6229 = vld [vmem:[%s6214 + $0x38] sm:$0xf]
        %v6230 = vld [vmem:[%s6214 + $0x3c] sm:$0xf]
        %v6247 = vunpack.c.l.b16 %v6215
        %v6248 = vunpack.c.l.b16 %v6216
        %v6249 = vunpack.c.l.b16 %v6217
        %v6250 = vunpack.c.l.b16 %v6218
        %v6251 = vunpack.c.l.b16 %v6219
        %v6252 = vunpack.c.l.b16 %v6220
        %v6253 = vunpack.c.l.b16 %v6221
        %v6254 = vunpack.c.l.b16 %v6222
        %v6255 = vunpack.c.l.b16 %v6223
        %v6256 = vunpack.c.l.b16 %v6224
        %v6257 = vunpack.c.l.b16 %v6225
        %v6258 = vunpack.c.l.b16 %v6226
        %v6259 = vunpack.c.l.b16 %v6227
        %v6260 = vunpack.c.l.b16 %v6228
        %v6261 = vunpack.c.l.b16 %v6229
        %v6262 = vunpack.c.l.b16 %v6230
        %v6263 = vpack.c.b16 %v6248, %v6247
        %v6264 = vpack.c.b16 %v6250, %v6249
        %v6265 = vpack.c.b16 %v6252, %v6251
        %v6266 = vpack.c.b16 %v6254, %v6253
        %v6267 = vpack.c.b16 %v6256, %v6255
        %v6268 = vpack.c.b16 %v6258, %v6257
        %v6269 = vpack.c.b16 %v6260, %v6259
        %v6270 = vpack.c.b16 %v6262, %v6261
        %6279 = vmatprep.subr.bf16.mxu0 0
        %6280 = vmatpush1.bf16.msra.mxu0 %v6263
        %6281 = vmatprep.subr.bf16.mxu0 0
        %6282 = vmatpush1.bf16.msra.mxu0 %v6264
        %6283 = vmatprep.subr.bf16.mxu0 0
        %6284 = vmatpush1.bf16.msra.mxu0 %v6265
        %6285 = vmatprep.subr.bf16.mxu0 0
        %6286 = vmatpush1.bf16.msra.mxu0 %v6266
        %6287 = vmatprep.subr.bf16.mxu0 0
        %6288 = vmatpush1.bf16.msra.mxu0 %v6267
        %6289 = vmatprep.subr.bf16.mxu0 0
        %6290 = vmatpush1.bf16.msra.mxu0 %v6268
        %6291 = vmatprep.subr.bf16.mxu0 0
        %6292 = vmatpush1.bf16.msra.mxu0 %v6269
        %6293 = vmatprep.subr.bf16.mxu0 0
        %6294 = vmatpush1.bf16.msra.mxu0 %v6270
        %6295 = vmatprep.subr.bf16.mxu0 0
        %6296 = vmatpush1.bf16.msra.mxu0 0
        %6297 = vmatprep.subr.bf16.mxu0 0
        %6298 = vmatpush1.bf16.msra.mxu0 0
        %6299 = vmatprep.subr.bf16.mxu0 0
        %6300 = vmatpush1.bf16.msra.mxu0 0
        %6301 = vmatprep.subr.bf16.mxu0 0
        %6302 = vmatpush1.bf16.msra.mxu0 0
        %6303 = vmatprep.subr.bf16.mxu0 0
        %6304 = vmatpush1.bf16.msra.mxu0 0
        %6305 = vmatprep.subr.bf16.mxu0 0
        %6306 = vmatpush1.bf16.msra.mxu0 0
        %6307 = vmatprep.subr.bf16.mxu0 0
        %6308 = vmatpush1.bf16.msra.mxu0 0
        %6309 = vmatprep.subr.bf16.mxu0 0
        %6310 = vmatpush1.bf16.msra.mxu0 0
        %6311 = vmatprep.mubr.bf16.mxu0 0
        %6312 = vmatmul.mubr.bf16.gmra.mrb[0].mxu0 %v6206
        %v6313 = vpop.f32.mrb[0].mxu0
        %v6314 = vadd.f32 0.0, %v6313
        %v6315 = vpop.f32.mrb[0].mxu0
        %v6316 = vpop.f32.mrb[0].mxu0
        %v6317 = vadd.f32 0.0, %v6316
        %v6318 = vpop.f32.mrb[0].mxu0
        %6319 = vmatprep.mubr.bf16.mxu0 0
        %6320 = vmatmul.mubr.bf16.gmra.mrb[0].mxu0 %v6207
        %v6321 = vpop.f32.mrb[0].mxu0
        %v6322 = vadd.f32 0.0, %v6321
        %v6323 = vpop.f32.mrb[0].mxu0
        %v6324 = vpop.f32.mrb[0].mxu0
        %v6325 = vadd.f32 0.0, %v6324
        %v6326 = vpop.f32.mrb[0].mxu0
        %6327 = vmatprep.mubr.bf16.mxu0 0
        %6328 = vmatmul.mubr.bf16.gmra.mrb[0].mxu0 %v6208
        %v6329 = vpop.f32.mrb[0].mxu0
        %v6330 = vadd.f32 0.0, %v6329
        %v6331 = vpop.f32.mrb[0].mxu0
        %v6332 = vpop.f32.mrb[0].mxu0
        %v6333 = vadd.f32 0.0, %v6332
        %v6334 = vpop.f32.mrb[0].mxu0
        %6335 = vmatprep.mubr.bf16.mxu0 0
        %6336 = vmatmul.mubr.bf16.gmra.mrb[0].mxu0 %v6209
        %v6337 = vpop.f32.mrb[0].mxu0
        %v6338 = vadd.f32 0.0, %v6337
        %v6339 = vpop.f32.mrb[0].mxu0
        %v6340 = vpop.f32.mrb[0].mxu0
        %v6341 = vadd.f32 0.0, %v6340
        %v6342 = vpop.f32.mrb[0].mxu0
        %6343 = vmatprep.mubr.bf16.mxu0 0
        %6344 = vmatmul.mubr.bf16.gmra.mrb[0].mxu0 %v6210
        %v6345 = vpop.f32.mrb[0].mxu0
        %v6346 = vadd.f32 0.0, %v6345
        %v6347 = vpop.f32.mrb[0].mxu0
        %v6348 = vpop.f32.mrb[0].mxu0
        %v6349 = vadd.f32 0.0, %v6348
        %v6350 = vpop.f32.mrb[0].mxu0
        %6351 = vmatprep.mubr.bf16.mxu0 0
        %6352 = vmatmul.mubr.bf16.gmra.mrb[0].mxu0 %v6211
        %v6353 = vpop.f32.mrb[0].mxu0
        %v6354 = vadd.f32 0.0, %v6353
        %v6355 = vpop.f32.mrb[0].mxu0
        %v6356 = vpop.f32.mrb[0].mxu0
        %v6357 = vadd.f32 0.0, %v6356
        %v6358 = vpop.f32.mrb[0].mxu0
        %6359 = vmatprep.mubr.bf16.mxu0 0
        %6360 = vmatmul.mubr.bf16.gmra.mrb[0].mxu0 %v6212
        %v6361 = vpop.f32.mrb[0].mxu0
        %v6362 = vadd.f32 0.0, %v6361
        %v6363 = vpop.f32.mrb[0].mxu0
        %v6364 = vpop.f32.mrb[0].mxu0
        %v6365 = vadd.f32 0.0, %v6364
        %v6366 = vpop.f32.mrb[0].mxu0
        %6367 = vmatprep.mubr.bf16.mxu0 0
        %6368 = vmatmul.mubr.bf16.gmra.mrb[0].mxu0 %v6213
        %v6369 = vpop.f32.mrb[0].mxu0
        %v6370 = vadd.f32 0.0, %v6369
        %v6371 = vpop.f32.mrb[0].mxu0
        %v6372 = vpop.f32.mrb[0].mxu0
        %v6373 = vadd.f32 0.0, %v6372
        %v6374 = vpop.f32.mrb[0].mxu0
        %6375 = vdwg.mxu0
        %v6376 = vadd.f32 %v6190, %v6314
        %v6377 = vadd.f32 %v6191, %v6317
        %v6378 = vadd.f32 %v6192, %v6322
        %v6379 = vadd.f32 %v6193, %v6325
        %v6380 = vadd.f32 %v6194, %v6330
        %v6381 = vadd.f32 %v6195, %v6333
        %v6382 = vadd.f32 %v6196, %v6338
        %v6383 = vadd.f32 %v6197, %v6341
        %v6384 = vadd.f32 %v6198, %v6346
        %v6385 = vadd.f32 %v6199, %v6349
        %v6386 = vadd.f32 %v6200, %v6354
        %v6387 = vadd.f32 %v6201, %v6357
        %v6388 = vadd.f32 %v6202, %v6362
        %v6389 = vadd.f32 %v6203, %v6365
        %v6390 = vadd.f32 %v6204, %v6370
        %v6391 = vadd.f32 %v6205, %v6373
        %6392 = vst [vmem:[#allocation5] sm:$0xff] %v6376
        %6393 = vst [vmem:[#allocation5 + $0x8] sm:$0xff] %v6377
        %6394 = vst [vmem:[#allocation5 + $0x10] sm:$0xff] %v6378
        %6395 = vst [vmem:[#allocation5 + $0x18] sm:$0xff] %v6379
        %6396 = vst [vmem:[#allocation5 + $0x20] sm:$0xff] %v6380
        %6397 = vst [vmem:[#allocation5 + $0x28] sm:$0xff] %v6381
        %6398 = vst [vmem:[#allocation5 + $0x30] sm:$0xff] %v6382
        %6399 = vst [vmem:[#allocation5 + $0x38] sm:$0xff] %v6383
        %6400 = vst [vmem:[#allocation5 + $0x40] sm:$0xff] %v6384
        %6401 = vst [vmem:[#allocation5 + $0x48] sm:$0xff] %v6385
        %6402 = vst [vmem:[#allocation5 + $0x50] sm:$0xff] %v6386
        %6403 = vst [vmem:[#allocation5 + $0x58] sm:$0xff] %v6387
        %6404 = vst [vmem:[#allocation5 + $0x60] sm:$0xff] %v6388
        %6405 = vst [vmem:[#allocation5 + $0x68] sm:$0xff] %v6389
        %6406 = vst [vmem:[#allocation5 + $0x70] sm:$0xff] %v6390
        %6407 = vst [vmem:[#allocation5 + $0x78] sm:$0xff] %v6391
        %v6408 = vld [vmem:[#allocation5] sm:$0xff]
        %v6409 = vld [vmem:[#allocation5 + $0x8] sm:$0xff]
        %v6410 = vld [vmem:[#allocation5 + $0x10] sm:$0xff]
        %v6411 = vld [vmem:[#allocation5 + $0x18] sm:$0xff]
        %v6412 = vld [vmem:[#allocation5 + $0x20] sm:$0xff]
        %v6413 = vld [vmem:[#allocation5 + $0x28] sm:$0xff]
        %v6414 = vld [vmem:[#allocation5 + $0x30] sm:$0xff]
        %v6415 = vld [vmem:[#allocation5 + $0x38] sm:$0xff]
        %v6416 = vld [vmem:[#allocation5 + $0x40] sm:$0xff]
        %v6417 = vld [vmem:[#allocation5 + $0x48] sm:$0xff]
        %v6418 = vld [vmem:[#allocation5 + $0x50] sm:$0xff]
        %v6419 = vld [vmem:[#allocation5 + $0x58] sm:$0xff]
        %v6420 = vld [vmem:[#allocation5 + $0x60] sm:$0xff]
        %v6421 = vld [vmem:[#allocation5 + $0x68] sm:$0xff]
        %v6422 = vld [vmem:[#allocation5 + $0x70] sm:$0xff]
        %v6423 = vld [vmem:[#allocation5 + $0x78] sm:$0xff]
        %v6424 = vld [vmem:[#allocation15] sm:$0x1]
        %v6426 = vlaneseq
        %v6427 = vshrl.u32 %v6426, 7
        %v6428 = vsub.s32 0, %v6427
        %v6429 = vrot.slane %v6424, %v6428
        %v6431 = vmul.f32 %v6408, %v6429
        %v6432 = vmul.f32 %v6409, %v6429
        %v6433 = vmul.f32 %v6410, %v6429
        %v6434 = vmul.f32 %v6411, %v6429
        %v6435 = vmul.f32 %v6412, %v6429
        %v6436 = vmul.f32 %v6413, %v6429
        %v6437 = vmul.f32 %v6414, %v6429
        %v6438 = vmul.f32 %v6415, %v6429
        %v6439 = vmul.f32 %v6416, %v6429
        %v6440 = vmul.f32 %v6417, %v6429
        %v6441 = vmul.f32 %v6418, %v6429
        %v6442 = vmul.f32 %v6419, %v6429
        %v6443 = vmul.f32 %v6420, %v6429
        %v6444 = vmul.f32 %v6421, %v6429
        %v6445 = vmul.f32 %v6422, %v6429
        %v6446 = vmul.f32 %v6423, %v6429
        %v6447 = vld [vmem:[#allocation17] sm:$0x1]
        %v6449 = vlaneseq
        %v6450 = vshrl.u32 %v6449, 7
        %v6451 = vsub.s32 0, %v6450
        %v6452 = vrot.slane %v6447, %v6451
        %v6454 = vadd.f32 %v6431, %v6452
        %v6455 = vadd.f32 %v6432, %v6452
        %v6456 = vadd.f32 %v6433, %v6452
        %v6457 = vadd.f32 %v6434, %v6452
        %v6458 = vadd.f32 %v6435, %v6452
        %v6459 = vadd.f32 %v6436, %v6452
        %v6460 = vadd.f32 %v6437, %v6452
        %v6461 = vadd.f32 %v6438, %v6452
        %v6462 = vadd.f32 %v6439, %v6452
        %v6463 = vadd.f32 %v6440, %v6452
        %v6464 = vadd.f32 %v6441, %v6452
        %v6465 = vadd.f32 %v6442, %v6452
        %v6466 = vadd.f32 %v6443, %v6452
        %v6467 = vadd.f32 %v6444, %v6452
        %v6468 = vadd.f32 %v6445, %v6452
        %v6469 = vadd.f32 %v6446, %v6452
        %vm6470 = vcmp.gt.f32.partialorder %v6454, 0.0
        %vm6471 = vcmp.gt.f32.partialorder %v6455, 0.0
        %vm6472 = vcmp.gt.f32.partialorder %v6456, 0.0
        %vm6473 = vcmp.gt.f32.partialorder %v6457, 0.0
        %vm6474 = vcmp.gt.f32.partialorder %v6458, 0.0
        %vm6475 = vcmp.gt.f32.partialorder %v6459, 0.0
        %vm6476 = vcmp.gt.f32.partialorder %v6460, 0.0
        %vm6477 = vcmp.gt.f32.partialorder %v6461, 0.0
        %vm6478 = vcmp.gt.f32.partialorder %v6462, 0.0
        %vm6479 = vcmp.gt.f32.partialorder %v6463, 0.0
        %vm6480 = vcmp.gt.f32.partialorder %v6464, 0.0
        %vm6481 = vcmp.gt.f32.partialorder %v6465, 0.0
        %vm6482 = vcmp.gt.f32.partialorder %v6466, 0.0
        %vm6483 = vcmp.gt.f32.partialorder %v6467, 0.0
        %vm6484 = vcmp.gt.f32.partialorder %v6468, 0.0
        %vm6485 = vcmp.gt.f32.partialorder %v6469, 0.0
        %v6486 = vmul.f32 %v6454, 0.01
        %v6487 = vmul.f32 %v6455, 0.01
        %v6488 = vmul.f32 %v6456, 0.01
        %v6489 = vmul.f32 %v6457, 0.01
        %v6490 = vmul.f32 %v6458, 0.01
        %v6491 = vmul.f32 %v6459, 0.01
        %v6492 = vmul.f32 %v6460, 0.01
        %v6493 = vmul.f32 %v6461, 0.01
        %v6494 = vmul.f32 %v6462, 0.01
        %v6495 = vmul.f32 %v6463, 0.01
        %v6496 = vmul.f32 %v6464, 0.01
        %v6497 = vmul.f32 %v6465, 0.01
        %v6498 = vmul.f32 %v6466, 0.01
        %v6499 = vmul.f32 %v6467, 0.01
        %v6500 = vmul.f32 %v6468, 0.01
        %v6501 = vmul.f32 %v6469, 0.01
        %v6502 = vsel %vm6470, %v6454, %v6486
        %v6503 = vsel %vm6471, %v6455, %v6487
        %v6504 = vsel %vm6472, %v6456, %v6488
        %v6505 = vsel %vm6473, %v6457, %v6489
        %v6506 = vsel %vm6474, %v6458, %v6490
        %v6507 = vsel %vm6475, %v6459, %v6491
        %v6508 = vsel %vm6476, %v6460, %v6492
        %v6509 = vsel %vm6477, %v6461, %v6493
        %v6510 = vsel %vm6478, %v6462, %v6494
        %v6511 = vsel %vm6479, %v6463, %v6495
        %v6512 = vsel %vm6480, %v6464, %v6496
        %v6513 = vsel %vm6481, %v6465, %v6497
        %v6514 = vsel %vm6482, %v6466, %v6498
        %v6515 = vsel %vm6483, %v6467, %v6499
        %v6516 = vsel %vm6484, %v6468, %v6500
        %v6517 = vsel %vm6485, %v6469, %v6501
        %6518 = vst [vmem:[%s385] sm:$0xff] %v6502
        %6519 = vst [vmem:[%s385 + $0x8] sm:$0xff] %v6503
        %6520 = vst [vmem:[%s385 + $0x10] sm:$0xff] %v6504
        %6521 = vst [vmem:[%s385 + $0x18] sm:$0xff] %v6505
        %6522 = vst [vmem:[%s385 + $0x20] sm:$0xff] %v6506
        %6523 = vst [vmem:[%s385 + $0x28] sm:$0xff] %v6507
        %6524 = vst [vmem:[%s385 + $0x30] sm:$0xff] %v6508
        %6525 = vst [vmem:[%s385 + $0x38] sm:$0xff] %v6509
        %6526 = vst [vmem:[%s385 + $0x40] sm:$0xff] %v6510
        %6527 = vst [vmem:[%s385 + $0x48] sm:$0xff] %v6511
        %6528 = vst [vmem:[%s385 + $0x50] sm:$0xff] %v6512
        %6529 = vst [vmem:[%s385 + $0x58] sm:$0xff] %v6513
        %6530 = vst [vmem:[%s385 + $0x60] sm:$0xff] %v6514
        %6531 = vst [vmem:[%s385 + $0x68] sm:$0xff] %v6515
        %6532 = vst [vmem:[%s385 + $0x70] sm:$0xff] %v6516
        %6533 = vst [vmem:[%s385 + $0x78] sm:$0xff] %v6517
        %s6534 = sand.u32 %s203, 1
        %s6535 = scalar_lea.sflag [#allocation8], %s6534
        %s6536 = sand.u32 %s203, 1
        %s6537 = smul.addr %s6536, 128
        %s6538 = scalar_lea.vmem [#allocation18], %s6537
        // Predicated region
        $region93: #{tpu_custom_call.1} parent=47 // pred_check
          %p6539 = pneg %p213
        $region94: #{tpu_custom_call.1} parent=47 // pred_check_branch
          %6541 = sbr.rel (%p6539) target = $region96
        $region95: #{tpu_custom_call.1} parent=47 // pred_region
          %s6542 = smul.u32 8, %s34
          %s6544 = ssub.s32 2048, 2048
          %6545 = vsyncadd %s6535, %s6544
          %s6546 = smul.addr %s6542, 2
          %s6547 = smul.addr %s33, 32
          %s6548 = sadd.s32 %s6546, %s6547
          %s6549 = smul.addr %s6548, 128
          %s6550 = scalar_lea.hbm %s9, %s6549
          %s6551 = sshll.u32 %s6538, 4
          %s6552 = int_to_ptr.vmem [resolvable:$true] %s6551
          %6557 = dma.vmem_to_hbm [thread:$0]  %s6552, 2048, %s6550, %s6535, 128, 128, 8
        $region96: #{tpu_custom_call.1} parent=47 // pred_fallthru
          _
      $region48: #{tpu_custom_call.1} parent=5 // pred_fallthru
        _
      %p6558 = scmp.le.s32.totalorder 2, %s24
      // Predicated region
      $region97: #{tpu_custom_call.1} parent=5 // pred_check
        %p6559 = pneg %p6558
      $region98: #{tpu_custom_call.1} parent=5 // pred_check_branch
        %6561 = sbr.rel (%p6559) target = $region100
      $region99: #{tpu_custom_call.1} parent=5 // pred_region
        %s6562 = ssub.s32 %s24, 2
        // Predicated region
        $region101: #{tpu_custom_call.1} parent=99 // pred_check
          %p6563 = pneg %p219
        $region102: #{tpu_custom_call.1} parent=99 // pred_check_branch
          %6565 = sbr.rel (%p6563) target = $region104
        $region103: #{tpu_custom_call.1} parent=99 // pred_region
          %s6566 = sand.u32 %s204, 1
          %s6567 = scalar_lea.sflag [#allocation8], %s6566
          %s6568 = sand.u32 %s204, 1
          %s6569 = smul.addr %s6568, 128
          %s6570 = scalar_lea.vmem [#allocation18], %s6569
          %6571 = dma.done %s6567, 2048
        $region104: #{tpu_custom_call.1} parent=99 // pred_fallthru
          _
      $region100: #{tpu_custom_call.1} parent=5 // pred_fallthru
        _
    $region6: #{tpu_custom_call.1} parent=1 // loop_footer
      %s28 = sadd.s32 1, %s24
    $region7: #{tpu_custom_call.1} parent=1 // loop_footer_branch
      %23 = sbr.rel target = $region3
    $region8: #{tpu_custom_call.1} parent=1 // loop_exit
      _
    %6572 = vsyncpa [#allocation7], 1
    %s6573 = scalar_lea.sflag [#allocation7], 1
    %6574 = vsyncpa %s6573, 1
    %6575 = vsyncpa [#allocation10], 1
    %6576 = vsyncpa [#allocation13], 1
    %6577 = vsyncpa [#allocation16], 1
    %6578 = vsyncpa [#allocation8], 1
    %s6579 = scalar_lea.sflag [#allocation8], 1
    %6580 = vsyncpa %s6579, 1
  %6581 = vsyncmov [#allocation4]
  %s6582 = vpop.sfrf %6581
  %p6583 = scmp.eq.s32.totalorder %s6582, 0
  %p6584 = pneg %p6583
  %6586 = shalt.err (%p6584)
  %s6587 = scalar_lea.sflag [#allocation4], 1
  %6588 = vsyncmov %s6587
  %s6589 = vpop.sfrf %6588
  %p6590 = scmp.eq.s32.totalorder %s6589, 0
  %p6591 = pneg %p6590
  %6593 = shalt.err (%p6591)
  %s6594 = scalar_lea.sflag [#allocation4], 2
  %6595 = vsyncmov %s6594
  %s6596 = vpop.sfrf %6595
  %p6597 = scmp.eq.s32.totalorder %s6596, 0
  %p6598 = pneg %p6597
  %6600 = shalt.err (%p6598)

</llo_original>
